<compile_context>
chip_gen: v7x
topology: tpu7x:2x2x1
jax: 0.10.0
libtpu: 0.0.40
codegen_flags: <defaults>
</compile_context>

<pallas_src>
import jax
import jax.numpy as jnp
from jax.experimental import pallas as pl
from jax.experimental.pallas import tpu as pltpu

CFG_MLP5 = [2048, 1024, 512, 256, 128]
INIT_IN_DIM = 2
N_CLASS = 25
BN_EPS = 1e-5

N_MAIN = len(CFG_MLP5) + 1                       # 6 Linear(+BN) layers in `main`
DIMS = [INIT_IN_DIM] + CFG_MLP5 + [INIT_IN_DIM]  # [2, 2048, 1024, 512, 256, 128, 2]

N_W1_CHUNKS = 4
W1_CHUNK = DIMS[2] // N_W1_CHUNKS                # 1024 / 4 = 256
INT8_LAYERS = (1, 2)                             # the two dominant weights


def _mlp_kernel(x_ref,
                w0_ref, c0_ref,
                w1_hbm, s1_ref, c1_ref,
                w2_hbm, s2_ref, c2_ref,
                w3_hbm, c3_ref,
                w4_hbm, c4_ref,
                w5_ref, c5_ref,
                wc_ref, bc_ref,
                out_ref, feat_ref,
                w1_v, w2_v, w3_v, w4_v, sem):
    step = pl.program_id(0)

    def w1_chunk_copy(c):
        # w1 is pre-chunked on the host to [N_W1_CHUNKS, 2048, W1_CHUNK] so the
        # per-chunk DMA is a plain leading-index slice.
        return pltpu.make_async_copy(w1_hbm.at[c], w1_v.at[c], sem.at[c])

    def w2_copy():
        return pltpu.make_async_copy(w2_hbm, w2_v, sem.at[N_W1_CHUNKS])

    def w3_copy():
        return pltpu.make_async_copy(w3_hbm, w3_v, sem.at[N_W1_CHUNKS + 1])

    def w4_copy():
        return pltpu.make_async_copy(w4_hbm, w4_v, sem.at[N_W1_CHUNKS + 2])

    # Weights are streamed into persistent VMEM scratch only on the first grid
    # step; later batch tiles reuse the resident copies (weight amortization).
    @pl.when(step == 0)
    def _():
        for c in range(N_W1_CHUNKS):          # W1 first: it is the critical wait.
            w1_chunk_copy(c).start()

    x = x_ref[...]                                            # [TB, 2] f32

    # Layer 0: Linear(2, 2048) + folded eval-BN + ReLU, as VPU broadcast
    # mul-adds (a K=2 matmul wastes an MXU weight push for almost no work).
    w0 = w0_ref[...].astype(jnp.float32)                      # [2, 2048]
    h = x[:, 0:1] * w0[0:1, :] + x[:, 1:2] * w0[1:2, :] + c0_ref[...]
    h = jnp.maximum(h, 0.0)

    # Layer 1: Linear(2048, 1024) + folded BN + ReLU.  int8-stored weight,
    # streamed in column chunks; each chunk's dot hides under the DMA tail.
    hb = h.astype(jnp.bfloat16)
    parts = []
    for c in range(N_W1_CHUNKS):
        @pl.when(step == 0)
        def _(c=c):
            w1_chunk_copy(c).wait()
            if c == 0:
                # Deferred so they do not contend with the critical W1 stream.
                w2_copy().start()
                w3_copy().start()
                w4_copy().start()
        wl = w1_v[c].astype(jnp.float32).astype(jnp.bfloat16)  # exact int->bf16
        parts.append(jnp.dot(hb, wl, preferred_element_type=jnp.float32))
    h = jnp.concatenate(parts, axis=-1) * s1_ref[...] + c1_ref[...]
    h = jnp.maximum(h, 0.0)

    # Layer 2: Linear(1024, 512) + folded BN + ReLU (int8-stored weight).
    @pl.when(step == 0)
    def _():
        w2_copy().wait()
    w2 = w2_v[...].astype(jnp.float32).astype(jnp.bfloat16)
    h = (jnp.dot(h.astype(jnp.bfloat16), w2, preferred_element_type=jnp.float32)
         * s2_ref[...] + c2_ref[...])
    h = jnp.maximum(h, 0.0)

    # Layer 3: Linear(512, 256) + folded BN + ReLU (bf16-stored, streamed).
    @pl.when(step == 0)
    def _():
        w3_copy().wait()
    h = (jnp.dot(h.astype(jnp.bfloat16), w3_v[...],
                 preferred_element_type=jnp.float32) + c3_ref[...])
    h = jnp.maximum(h, 0.0)

    # Layer 4: Linear(256, 128) + folded BN + ReLU (bf16-stored, streamed).
    @pl.when(step == 0)
    def _():
        w4_copy().wait()
    h = (jnp.dot(h.astype(jnp.bfloat16), w4_v[...],
                 preferred_element_type=jnp.float32) + c4_ref[...])
    h = jnp.maximum(h, 0.0)

    # Layer 5: Linear(128, 2) + folded BN (no ReLU)  ->  feature.
    feat = (jnp.dot(h.astype(jnp.bfloat16), w5_ref[...],
                    preferred_element_type=jnp.float32) + c5_ref[...])
    feat_ref[...] = feat.astype(feat_ref.dtype)

    # Classifier: Linear(2, 25) as VPU broadcast mul-adds (K=2 again).
    wc = wc_ref[...].astype(jnp.float32)                      # [2, 25]
    out = feat[:, 0:1] * wc[0:1, :] + feat[:, 1:2] * wc[1:2, :] + bc_ref[...]
    out_ref[...] = out.astype(out_ref.dtype)


def prenet_dre_mlp_forward(x, params, *, tile_b=8):
    """x: [B, init_in_dim] f32.  params: flat tuple from fold_params()."""
    batch = x.shape[0]
    padded = ((batch + tile_b - 1) // tile_b) * tile_b
    if padded != batch:
        x = jnp.pad(x, ((0, padded - batch), (0, 0)))
    n_tiles = padded // tile_b

    vmem = pl.BlockSpec(memory_space=pltpu.MemorySpace.VMEM)
    hbm = pl.BlockSpec(memory_space=pl.ANY)      # manually streamed weights
    in_specs = [
        pl.BlockSpec((tile_b, INIT_IN_DIM), lambda i: (i, 0)),   # x (batch-tiled)
        vmem, vmem,          # w0, c0
        hbm, vmem, vmem,     # w1 (int8 chunks, streamed), s1, c1
        hbm, vmem, vmem,     # w2 (int8, streamed), s2, c2
        hbm, vmem,           # w3 (bf16, streamed), c3
        hbm, vmem,           # w4 (bf16, streamed), c4
        vmem, vmem,          # w5, c5
        vmem, vmem,          # wc, bc
    ]
    out_specs = (
        pl.BlockSpec((tile_b, N_CLASS), lambda i: (i, 0)),
        pl.BlockSpec((tile_b, INIT_IN_DIM), lambda i: (i, 0)),
    )
    scratch_shapes = [
        pltpu.VMEM((N_W1_CHUNKS, DIMS[1], W1_CHUNK), jnp.int8),  # W1  2048x1024
        pltpu.VMEM((DIMS[2], DIMS[3]), jnp.int8),                # W2  1024x512
        pltpu.VMEM((DIMS[3], DIMS[4]), jnp.bfloat16),            # W3  512x256
        pltpu.VMEM((DIMS[4], DIMS[5]), jnp.bfloat16),            # W4  256x128
        pltpu.SemaphoreType.DMA((N_W1_CHUNKS + 3,)),
    ]

    # Advisory cost hint: ~2*B*5.4M flops vs ~3 MB of (mostly int8) weights.
    flops = 2 * padded * (sum(DIMS[i] * DIMS[i + 1] for i in range(N_MAIN))
                          + INIT_IN_DIM * N_CLASS)
    weight_bytes = sum(int(p.size) * p.dtype.itemsize for p in params)
    io_bytes = 4 * padded * (2 * INIT_IN_DIM + N_CLASS)
    cost = pl.CostEstimate(flops=flops, transcendentals=0,
                           bytes_accessed=weight_bytes + io_bytes)

    out, feature = pl.pallas_call(
        _mlp_kernel,
        grid=(n_tiles,),
        out_shape=(
            jax.ShapeDtypeStruct((padded, N_CLASS), jnp.float32),
            jax.ShapeDtypeStruct((padded, INIT_IN_DIM), jnp.float32),
        ),
        in_specs=in_specs,
        out_specs=out_specs,
        scratch_shapes=scratch_shapes,
        compiler_params=pltpu.CompilerParams(
            # "arbitrary": batch tiles must run sequentially on one core so the
            # weights loaded at step 0 stay resident for every later tile.
            dimension_semantics=("arbitrary",),
            # Actual residency ~3 MB scratch + a few MB of cast temporaries;
            # 24 MiB is conservative and fits v7x's 64 MiB physical VMEM.
            vmem_limit_bytes=24 * 1024 * 1024,
        ),
        cost_estimate=cost,
    )(x, *params)
    return out[:batch], feature[:batch]


# ----------------------------- parameters -----------------------------------

def init_raw_params(key):
    """Deterministic raw parameters mirroring the PyTorch module's layers."""
    raw_main = []
    for i in range(N_MAIN):
        d_in, d_out = DIMS[i], DIMS[i + 1]
        key, kw, kb, kg, kbe, km, kv = jax.random.split(key, 7)
        raw_main.append(dict(
            w=0.02 * jax.random.normal(kw, (d_in, d_out), jnp.float32),
            b=0.02 * jax.random.normal(kb, (1, d_out), jnp.float32),
            gamma=1.0 + 0.1 * jax.random.normal(kg, (1, d_out), jnp.float32),
            beta=0.1 * jax.random.normal(kbe, (1, d_out), jnp.float32),
            mean=0.1 * jax.random.normal(km, (1, d_out), jnp.float32),
            var=jax.random.uniform(kv, (1, d_out), jnp.float32, 0.5, 1.5),
        ))
    key, kw, kb = jax.random.split(key, 3)
    raw_cls = dict(
        w=0.02 * jax.random.normal(kw, (INIT_IN_DIM, N_CLASS), jnp.float32),
        b=0.02 * jax.random.normal(kb, (1, N_CLASS), jnp.float32),
    )
    return raw_main, raw_cls


def _quantize_int8_per_col(w):
    """Symmetric per-output-column int8 quantization; returns (q, scale)."""
    amax = jnp.max(jnp.abs(w), axis=0, keepdims=True)
    scale = jnp.where(amax > 0, amax / 127.0, 1.0).astype(jnp.float32)
    q = jnp.clip(jnp.round(w / scale), -127.0, 127.0).astype(jnp.int8)
    return q, scale


def fold_params(raw_main, raw_cls):
    """Fold eval-mode BN into each Linear; int8-quantize the two big weights
    (BN scale folded before quantization), bf16-cast the rest.  W1 is
    pre-chunked along its output columns for the chunked manual DMA."""
    params = []
    for layer, p in enumerate(raw_main):
        bn_scale = p['gamma'] / jnp.sqrt(p['var'] + BN_EPS)     # (1, d_out)
        shift = p['beta'] - p['mean'] * bn_scale
        w_fold = p['w'] * bn_scale
        c = p['b'] * bn_scale + shift                           # (1, d_out) f32
        if layer in INT8_LAYERS:
            q, qs = _quantize_int8_per_col(w_fold)
            if layer == 1:                                      # chunk along N
                q = q.reshape(DIMS[1], N_W1_CHUNKS, W1_CHUNK).transpose(1, 0, 2)
            params += [q, qs, c]
        else:
            params += [w_fold.astype(jnp.bfloat16), c]
    params += [raw_cls['w'].astype(jnp.bfloat16), raw_cls['b']]
    return tuple(params)


# ----------------------------- references -----------------------------------

def reference_forward_matched(x, params):
    """Plain-JAX reference reproducing the kernel's folded bf16/int8 math."""
    (w0, c0, q1, s1, c1, q2, s2, c2, w3, c3, w4, c4, w5, c5, wc, bc) = params
    w0f = w0.astype(jnp.float32)
    h = x[:, 0:1] * w0f[0:1, :] + x[:, 1:2] * w0f[1:2, :] + c0
    h = jnp.maximum(h, 0.0)
    q1_full = jnp.swapaxes(q1, 0, 1).reshape(DIMS[1], DIMS[2])  # un-chunk
    for q, s, c in ((q1_full, s1, c1), (q2, s2, c2)):
        wb = q.astype(jnp.float32).astype(jnp.bfloat16)
        h = (jnp.dot(h.astype(jnp.bfloat16), wb,
                     preferred_element_type=jnp.float32) * s + c)
        h = jnp.maximum(h, 0.0)
    for w, c in ((w3, c3), (w4, c4)):
        h = (jnp.dot(h.astype(jnp.bfloat16), w,
                     preferred_element_type=jnp.float32) + c)
        h = jnp.maximum(h, 0.0)
    feature = (jnp.dot(h.astype(jnp.bfloat16), w5,
                       preferred_element_type=jnp.float32) + c5)
    wcf = wc.astype(jnp.float32)
    out = feature[:, 0:1] * wcf[0:1, :] + feature[:, 1:2] * wcf[1:2, :] + bc
    return out, feature


def reference_forward_f32(x, raw_main, raw_cls):
    """Unfolded float32 reference: Linear + eval-mode BatchNorm1d (+ ReLU,
    Dropout=identity) — mirrors the PyTorch module in eval()."""
    h = x
    for layer, p in enumerate(raw_main):
        h = h @ p['w'] + p['b']
        h = (h - p['mean']) / jnp.sqrt(p['var'] + BN_EPS) * p['gamma'] + p['beta']
        if layer < N_MAIN - 1:
            h = jnp.maximum(h, 0.0)
    feature = h
    out = feature @ raw_cls['w'] + raw_cls['b']
    return out, feature


# ------------------------------- main ----------------------------------------

if __name__ == "__main__":
    key = jax.random.PRNGKey(0)
    key, kx = jax.random.split(key)
    batch, tile_b = 16, 8           # 2 grid steps: weights loaded once, reused
    x = jax.random.normal(kx, (batch, INIT_IN_DIM), jnp.float32)

    raw_main, raw_cls = init_raw_params(key)
    params = fold_params(raw_main, raw_cls)

    out, feature = prenet_dre_mlp_forward(x, params, tile_b=tile_b)
    out = jax.block_until_ready(out)
    feature = jax.block_until_ready(feature)
    assert out.shape == (batch, N_CLASS)
    assert feature.shape == (batch, INIT_IN_DIM)

    # 1) Precision-matched reference (identical folded bf16/int8 math).
    out_m, feat_m = reference_forward_matched(x, params)
    assert jnp.allclose(out, out_m, atol=2e-3, rtol=2e-2), \
        f"out vs matched ref: max err {jnp.max(jnp.abs(out - out_m))}"
    assert jnp.allclose(feature, feat_m, atol=2e-3, rtol=2e-2), \
        f"feature vs matched ref: max err {jnp.max(jnp.abs(feature - feat_m))}"

    # 2) Unfolded float32 Linear+BN reference (validates the BN fold and the
    #    bf16/int8 weight-storage decisions end to end).
    out_f, feat_f = reference_forward_f32(x, raw_main, raw_cls)
    assert jnp.allclose(out, out_f, atol=2e-2, rtol=1e-1), \
        f"out vs f32 ref: max err {jnp.max(jnp.abs(out - out_f))}"
    assert jnp.allclose(feature, feat_f, atol=2e-2, rtol=1e-1), \
        f"feature vs f32 ref: max err {jnp.max(jnp.abs(feature - feat_f))}"

    print("KERNEL_OK")
</pallas_src>

<mosaic_0001>
module attributes {stable_mosaic.version = 11 : i64} {
  func.func @_mlp_kernel(%arg0: i32, %arg1: memref<8x2xf32, #tpu.memory_space<vmem>>, %arg2: memref<2x2048xbf16, #tpu.memory_space<vmem>>, %arg3: memref<1x2048xf32, #tpu.memory_space<vmem>>, %arg4: memref<4x2048x256xi8, #tpu.memory_space<any>>, %arg5: memref<1x1024xf32, #tpu.memory_space<vmem>>, %arg6: memref<1x1024xf32, #tpu.memory_space<vmem>>, %arg7: memref<1024x512xi8, #tpu.memory_space<any>>, %arg8: memref<1x512xf32, #tpu.memory_space<vmem>>, %arg9: memref<1x512xf32, #tpu.memory_space<vmem>>, %arg10: memref<512x256xbf16, #tpu.memory_space<any>>, %arg11: memref<1x256xf32, #tpu.memory_space<vmem>>, %arg12: memref<256x128xbf16, #tpu.memory_space<any>>, %arg13: memref<1x128xf32, #tpu.memory_space<vmem>>, %arg14: memref<128x2xbf16, #tpu.memory_space<vmem>>, %arg15: memref<1x2xf32, #tpu.memory_space<vmem>>, %arg16: memref<2x25xbf16, #tpu.memory_space<vmem>>, %arg17: memref<1x25xf32, #tpu.memory_space<vmem>>, %arg18: memref<8x25xf32, #tpu.memory_space<vmem>>, %arg19: memref<8x2xf32, #tpu.memory_space<vmem>>, %arg20: memref<4x2048x256xi8, #tpu.memory_space<vmem>>, %arg21: memref<1024x512xi8, #tpu.memory_space<vmem>>, %arg22: memref<512x256xbf16, #tpu.memory_space<vmem>>, %arg23: memref<256x128xbf16, #tpu.memory_space<vmem>>, %arg24: memref<7x!tpu.dma_semaphore, #tpu.memory_space<semaphore_mem>>) attributes {dimension_semantics = [#tpu.dimension_semantics<arbitrary>], iteration_bounds = array<i64: 2>, scalar_prefetch = 0 : i64, scratch_operands = 5 : i64, tpu.core_type = #tpu.core_type<tc>, window_params = [{transform_indices = @transform_0, window_bounds = array<i64: 8, 2>}, {pipeline_mode = #tpu.pipeline_mode<synchronous>, transform_indices = @transform_1, window_bounds = array<i64: 2, 2048>}, {pipeline_mode = #tpu.pipeline_mode<synchronous>, transform_indices = @transform_2, window_bounds = array<i64: 1, 2048>}, {}, {pipeline_mode = #tpu.pipeline_mode<synchronous>, transform_indices = @transform_4, window_bounds = array<i64: 1, 1024>}, {pipeline_mode = #tpu.pipeline_mode<synchronous>, transform_indices = @transform_5, window_bounds = array<i64: 1, 1024>}, {}, {pipeline_mode = #tpu.pipeline_mode<synchronous>, transform_indices = @transform_7, window_bounds = array<i64: 1, 512>}, {pipeline_mode = #tpu.pipeline_mode<synchronous>, transform_indices = @transform_8, window_bounds = array<i64: 1, 512>}, {}, {pipeline_mode = #tpu.pipeline_mode<synchronous>, transform_indices = @transform_10, window_bounds = array<i64: 1, 256>}, {}, {pipeline_mode = #tpu.pipeline_mode<synchronous>, transform_indices = @transform_12, window_bounds = array<i64: 1, 128>}, {pipeline_mode = #tpu.pipeline_mode<synchronous>, transform_indices = @transform_13, window_bounds = array<i64: 128, 2>}, {pipeline_mode = #tpu.pipeline_mode<synchronous>, transform_indices = @transform_14, window_bounds = array<i64: 1, 2>}, {pipeline_mode = #tpu.pipeline_mode<synchronous>, transform_indices = @transform_15, window_bounds = array<i64: 2, 25>}, {pipeline_mode = #tpu.pipeline_mode<synchronous>, transform_indices = @transform_16, window_bounds = array<i64: 1, 25>}, {transform_indices = @transform_17, window_bounds = array<i64: 8, 25>}, {transform_indices = @transform_18, window_bounds = array<i64: 8, 2>}]} {
    %c0_i32 = arith.constant 0 : i32
    %0 = arith.cmpi eq, %arg0, %c0_i32 : i32
    %1 = arith.extui %0 : i1 to i32
    %c0_i32_0 = arith.constant 0 : i32
    %2 = arith.cmpi ne, %1, %c0_i32_0 : i32
    scf.if %2 {
      %c0_i32_71 = arith.constant 0 : i32
      %c0_i32_72 = arith.constant 0 : i32
      %c0_i32_73 = arith.constant 0 : i32
      %c0_i32_74 = arith.constant 0 : i32
      %c0_i32_75 = arith.constant 0 : i32
      %126 = tpu.memref_slice %arg4[%c0_i32_71, %c0_i32_74, %c0_i32_75] : memref<4x2048x256xi8, #tpu.memory_space<any>> -> memref<1x2048x256xi8, #tpu.memory_space<any>>
      %127 = tpu.memref_squeeze %126 : memref<1x2048x256xi8, #tpu.memory_space<any>> -> memref<2048x256xi8, #tpu.memory_space<any>>
      %c0_i32_76 = arith.constant 0 : i32
      %c0_i32_77 = arith.constant 0 : i32
      %128 = tpu.memref_slice %arg20[%c0_i32_72, %c0_i32_76, %c0_i32_77] : memref<4x2048x256xi8, #tpu.memory_space<vmem>> -> memref<1x2048x256xi8, #tpu.memory_space<vmem>>
      %129 = tpu.memref_squeeze %128 : memref<1x2048x256xi8, #tpu.memory_space<vmem>> -> memref<2048x256xi8, #tpu.memory_space<vmem>>
      %130 = tpu.memref_slice %arg24[%c0_i32_73] : memref<7x!tpu.dma_semaphore, #tpu.memory_space<semaphore_mem>> -> memref<1x!tpu.dma_semaphore, #tpu.memory_space<semaphore_mem>>
      %131 = tpu.memref_squeeze %130 : memref<1x!tpu.dma_semaphore, #tpu.memory_space<semaphore_mem>> -> memref<!tpu.dma_semaphore, #tpu.memory_space<semaphore_mem>>
      tpu.enqueue_dma source(%127 : memref<2048x256xi8, #tpu.memory_space<any>>) target(%129 : memref<2048x256xi8, #tpu.memory_space<vmem>>) target_semaphore(%131 : memref<!tpu.dma_semaphore, #tpu.memory_space<semaphore_mem>>)
      %c1_i32 = arith.constant 1 : i32
      %c1_i32_78 = arith.constant 1 : i32
      %c1_i32_79 = arith.constant 1 : i32
      %c0_i32_80 = arith.constant 0 : i32
      %c0_i32_81 = arith.constant 0 : i32
      %132 = tpu.memref_slice %arg4[%c1_i32, %c0_i32_80, %c0_i32_81] : memref<4x2048x256xi8, #tpu.memory_space<any>> -> memref<1x2048x256xi8, #tpu.memory_space<any>>
      %133 = tpu.memref_squeeze %132 : memref<1x2048x256xi8, #tpu.memory_space<any>> -> memref<2048x256xi8, #tpu.memory_space<any>>
      %c0_i32_82 = arith.constant 0 : i32
      %c0_i32_83 = arith.constant 0 : i32
      %134 = tpu.memref_slice %arg20[%c1_i32_78, %c0_i32_82, %c0_i32_83] : memref<4x2048x256xi8, #tpu.memory_space<vmem>> -> memref<1x2048x256xi8, #tpu.memory_space<vmem>>
      %135 = tpu.memref_squeeze %134 : memref<1x2048x256xi8, #tpu.memory_space<vmem>> -> memref<2048x256xi8, #tpu.memory_space<vmem>>
      %136 = tpu.memref_slice %arg24[%c1_i32_79] : memref<7x!tpu.dma_semaphore, #tpu.memory_space<semaphore_mem>> -> memref<1x!tpu.dma_semaphore, #tpu.memory_space<semaphore_mem>>
      %137 = tpu.memref_squeeze %136 : memref<1x!tpu.dma_semaphore, #tpu.memory_space<semaphore_mem>> -> memref<!tpu.dma_semaphore, #tpu.memory_space<semaphore_mem>>
      tpu.enqueue_dma source(%133 : memref<2048x256xi8, #tpu.memory_space<any>>) target(%135 : memref<2048x256xi8, #tpu.memory_space<vmem>>) target_semaphore(%137 : memref<!tpu.dma_semaphore, #tpu.memory_space<semaphore_mem>>)
      %c2_i32 = arith.constant 2 : i32
      %c2_i32_84 = arith.constant 2 : i32
      %c2_i32_85 = arith.constant 2 : i32
      %c0_i32_86 = arith.constant 0 : i32
      %c0_i32_87 = arith.constant 0 : i32
      %138 = tpu.memref_slice %arg4[%c2_i32, %c0_i32_86, %c0_i32_87] : memref<4x2048x256xi8, #tpu.memory_space<any>> -> memref<1x2048x256xi8, #tpu.memory_space<any>>
      %139 = tpu.memref_squeeze %138 : memref<1x2048x256xi8, #tpu.memory_space<any>> -> memref<2048x256xi8, #tpu.memory_space<any>>
      %c0_i32_88 = arith.constant 0 : i32
      %c0_i32_89 = arith.constant 0 : i32
      %140 = tpu.memref_slice %arg20[%c2_i32_84, %c0_i32_88, %c0_i32_89] : memref<4x2048x256xi8, #tpu.memory_space<vmem>> -> memref<1x2048x256xi8, #tpu.memory_space<vmem>>
      %141 = tpu.memref_squeeze %140 : memref<1x2048x256xi8, #tpu.memory_space<vmem>> -> memref<2048x256xi8, #tpu.memory_space<vmem>>
      %142 = tpu.memref_slice %arg24[%c2_i32_85] : memref<7x!tpu.dma_semaphore, #tpu.memory_space<semaphore_mem>> -> memref<1x!tpu.dma_semaphore, #tpu.memory_space<semaphore_mem>>
      %143 = tpu.memref_squeeze %142 : memref<1x!tpu.dma_semaphore, #tpu.memory_space<semaphore_mem>> -> memref<!tpu.dma_semaphore, #tpu.memory_space<semaphore_mem>>
      tpu.enqueue_dma source(%139 : memref<2048x256xi8, #tpu.memory_space<any>>) target(%141 : memref<2048x256xi8, #tpu.memory_space<vmem>>) target_semaphore(%143 : memref<!tpu.dma_semaphore, #tpu.memory_space<semaphore_mem>>)
      %c3_i32 = arith.constant 3 : i32
      %c3_i32_90 = arith.constant 3 : i32
      %c3_i32_91 = arith.constant 3 : i32
      %c0_i32_92 = arith.constant 0 : i32
      %c0_i32_93 = arith.constant 0 : i32
      %144 = tpu.memref_slice %arg4[%c3_i32, %c0_i32_92, %c0_i32_93] : memref<4x2048x256xi8, #tpu.memory_space<any>> -> memref<1x2048x256xi8, #tpu.memory_space<any>>
      %145 = tpu.memref_squeeze %144 : memref<1x2048x256xi8, #tpu.memory_space<any>> -> memref<2048x256xi8, #tpu.memory_space<any>>
      %c0_i32_94 = arith.constant 0 : i32
      %c0_i32_95 = arith.constant 0 : i32
      %146 = tpu.memref_slice %arg20[%c3_i32_90, %c0_i32_94, %c0_i32_95] : memref<4x2048x256xi8, #tpu.memory_space<vmem>> -> memref<1x2048x256xi8, #tpu.memory_space<vmem>>
      %147 = tpu.memref_squeeze %146 : memref<1x2048x256xi8, #tpu.memory_space<vmem>> -> memref<2048x256xi8, #tpu.memory_space<vmem>>
      %148 = tpu.memref_slice %arg24[%c3_i32_91] : memref<7x!tpu.dma_semaphore, #tpu.memory_space<semaphore_mem>> -> memref<1x!tpu.dma_semaphore, #tpu.memory_space<semaphore_mem>>
      %149 = tpu.memref_squeeze %148 : memref<1x!tpu.dma_semaphore, #tpu.memory_space<semaphore_mem>> -> memref<!tpu.dma_semaphore, #tpu.memory_space<semaphore_mem>>
      tpu.enqueue_dma source(%145 : memref<2048x256xi8, #tpu.memory_space<any>>) target(%147 : memref<2048x256xi8, #tpu.memory_space<vmem>>) target_semaphore(%149 : memref<!tpu.dma_semaphore, #tpu.memory_space<semaphore_mem>>)
    } else {
    }
    %c0 = arith.constant 0 : index
    %c0_1 = arith.constant 0 : index
    %3 = vector.load %arg1[%c0, %c0_1] : memref<8x2xf32, #tpu.memory_space<vmem>>, vector<8x2xf32>
    %c0_2 = arith.constant 0 : index
    %c0_3 = arith.constant 0 : index
    %4 = vector.load %arg2[%c0_2, %c0_3] : memref<2x2048xbf16, #tpu.memory_space<vmem>>, vector<2x2048xbf16>
    %5 = arith.extf %4 : vector<2x2048xbf16> to vector<2x2048xf32>
    %6 = vector.extract_strided_slice %3 {offsets = [0, 0], sizes = [8, 1], strides = [1, 1]} : vector<8x2xf32> to vector<8x1xf32>
    %7 = vector.extract_strided_slice %5 {offsets = [0, 0], sizes = [1, 2048], strides = [1, 1]} : vector<2x2048xf32> to vector<1x2048xf32>
    %8 = vector.broadcast %6 : vector<8x1xf32> to vector<8x2048xf32>
    %9 = vector.broadcast %7 : vector<1x2048xf32> to vector<8x2048xf32>
    %10 = arith.mulf %8, %9 : vector<8x2048xf32>
    %11 = vector.extract_strided_slice %3 {offsets = [0, 1], sizes = [8, 1], strides = [1, 1]} : vector<8x2xf32> to vector<8x1xf32>
    %12 = vector.extract_strided_slice %5 {offsets = [1, 0], sizes = [1, 2048], strides = [1, 1]} : vector<2x2048xf32> to vector<1x2048xf32>
    %13 = vector.broadcast %11 : vector<8x1xf32> to vector<8x2048xf32>
    %14 = vector.broadcast %12 : vector<1x2048xf32> to vector<8x2048xf32>
    %15 = arith.mulf %13, %14 : vector<8x2048xf32>
    %16 = arith.addf %10, %15 : vector<8x2048xf32>
    %c0_4 = arith.constant 0 : index
    %c0_5 = arith.constant 0 : index
    %17 = vector.load %arg3[%c0_4, %c0_5] : memref<1x2048xf32, #tpu.memory_space<vmem>>, vector<1x2048xf32>
    %18 = vector.broadcast %17 : vector<1x2048xf32> to vector<8x2048xf32>
    %19 = arith.addf %16, %18 : vector<8x2048xf32>
    %cst = arith.constant 0.000000e+00 : f32
    %20 = vector.broadcast %cst : f32 to vector<8x2048xf32>
    %21 = arith.maximumf %19, %20 : vector<8x2048xf32>
    %22 = arith.truncf %21 : vector<8x2048xf32> to vector<8x2048xbf16>
    %c0_i32_6 = arith.constant 0 : i32
    %23 = arith.cmpi eq, %arg0, %c0_i32_6 : i32
    %24 = arith.extui %23 : i1 to i32
    %c0_i32_7 = arith.constant 0 : i32
    %25 = arith.cmpi ne, %24, %c0_i32_7 : i32
    scf.if %25 {
      %c0_i32_71 = arith.constant 0 : i32
      %c0_i32_72 = arith.constant 0 : i32
      %c0_i32_73 = arith.constant 0 : i32
      %c0_i32_74 = arith.constant 0 : i32
      %c0_i32_75 = arith.constant 0 : i32
      %126 = tpu.memref_slice %arg4[%c0_i32_71, %c0_i32_74, %c0_i32_75] : memref<4x2048x256xi8, #tpu.memory_space<any>> -> memref<1x2048x256xi8, #tpu.memory_space<any>>
      %127 = tpu.memref_squeeze %126 : memref<1x2048x256xi8, #tpu.memory_space<any>> -> memref<2048x256xi8, #tpu.memory_space<any>>
      %c0_i32_76 = arith.constant 0 : i32
      %c0_i32_77 = arith.constant 0 : i32
      %128 = tpu.memref_slice %arg20[%c0_i32_72, %c0_i32_76, %c0_i32_77] : memref<4x2048x256xi8, #tpu.memory_space<vmem>> -> memref<1x2048x256xi8, #tpu.memory_space<vmem>>
      %129 = tpu.memref_squeeze %128 : memref<1x2048x256xi8, #tpu.memory_space<vmem>> -> memref<2048x256xi8, #tpu.memory_space<vmem>>
      %130 = tpu.memref_slice %arg24[%c0_i32_73] : memref<7x!tpu.dma_semaphore, #tpu.memory_space<semaphore_mem>> -> memref<1x!tpu.dma_semaphore, #tpu.memory_space<semaphore_mem>>
      %131 = tpu.memref_squeeze %130 : memref<1x!tpu.dma_semaphore, #tpu.memory_space<semaphore_mem>> -> memref<!tpu.dma_semaphore, #tpu.memory_space<semaphore_mem>>
      tpu.wait_dma2 semaphore(%131 : memref<!tpu.dma_semaphore, #tpu.memory_space<semaphore_mem>>) src(%127 : memref<2048x256xi8, #tpu.memory_space<any>>) dst(%129 : memref<2048x256xi8, #tpu.memory_space<vmem>>)
      %c4_i32 = arith.constant 4 : i32
      %132 = tpu.memref_slice %arg24[%c4_i32] : memref<7x!tpu.dma_semaphore, #tpu.memory_space<semaphore_mem>> -> memref<1x!tpu.dma_semaphore, #tpu.memory_space<semaphore_mem>>
      %133 = tpu.memref_squeeze %132 : memref<1x!tpu.dma_semaphore, #tpu.memory_space<semaphore_mem>> -> memref<!tpu.dma_semaphore, #tpu.memory_space<semaphore_mem>>
      tpu.enqueue_dma source(%arg7 : memref<1024x512xi8, #tpu.memory_space<any>>) target(%arg21 : memref<1024x512xi8, #tpu.memory_space<vmem>>) target_semaphore(%133 : memref<!tpu.dma_semaphore, #tpu.memory_space<semaphore_mem>>)
      %c5_i32 = arith.constant 5 : i32
      %134 = tpu.memref_slice %arg24[%c5_i32] : memref<7x!tpu.dma_semaphore, #tpu.memory_space<semaphore_mem>> -> memref<1x!tpu.dma_semaphore, #tpu.memory_space<semaphore_mem>>
      %135 = tpu.memref_squeeze %134 : memref<1x!tpu.dma_semaphore, #tpu.memory_space<semaphore_mem>> -> memref<!tpu.dma_semaphore, #tpu.memory_space<semaphore_mem>>
      tpu.enqueue_dma source(%arg10 : memref<512x256xbf16, #tpu.memory_space<any>>) target(%arg22 : memref<512x256xbf16, #tpu.memory_space<vmem>>) target_semaphore(%135 : memref<!tpu.dma_semaphore, #tpu.memory_space<semaphore_mem>>)
      %c6_i32 = arith.constant 6 : i32
      %136 = tpu.memref_slice %arg24[%c6_i32] : memref<7x!tpu.dma_semaphore, #tpu.memory_space<semaphore_mem>> -> memref<1x!tpu.dma_semaphore, #tpu.memory_space<semaphore_mem>>
      %137 = tpu.memref_squeeze %136 : memref<1x!tpu.dma_semaphore, #tpu.memory_space<semaphore_mem>> -> memref<!tpu.dma_semaphore, #tpu.memory_space<semaphore_mem>>
      tpu.enqueue_dma source(%arg12 : memref<256x128xbf16, #tpu.memory_space<any>>) target(%arg23 : memref<256x128xbf16, #tpu.memory_space<vmem>>) target_semaphore(%137 : memref<!tpu.dma_semaphore, #tpu.memory_space<semaphore_mem>>)
    } else {
    }
    %c0_8 = arith.constant 0 : index
    %c0_9 = arith.constant 0 : index
    %c0_10 = arith.constant 0 : index
    %26 = vector.load %arg20[%c0_8, %c0_9, %c0_10] : memref<4x2048x256xi8, #tpu.memory_space<vmem>>, vector<1x2048x256xi8>
    %27 = vector.shape_cast %26 : vector<1x2048x256xi8> to vector<2048x256xi8>
    %28 = arith.sitofp %27 : vector<2048x256xi8> to vector<2048x256xf32>
    %29 = arith.truncf %28 : vector<2048x256xf32> to vector<2048x256xbf16>
    %cst_11 = arith.constant dense<0.000000e+00> : vector<8x256xf32>
    %30 = tpu.matmul %22, %29, %cst_11 {dimension_numbers = #tpu.dot_dimension_numbers<[1], [0], [0], [1], [0, 0, 1, 1], [], []>} : vector<8x2048xbf16>, vector<2048x256xbf16>, vector<8x256xf32> -> vector<8x256xf32>
    %c0_i32_12 = arith.constant 0 : i32
    %31 = arith.cmpi eq, %arg0, %c0_i32_12 : i32
    %32 = arith.extui %31 : i1 to i32
    %c0_i32_13 = arith.constant 0 : i32
    %33 = arith.cmpi ne, %32, %c0_i32_13 : i32
    scf.if %33 {
      %c1_i32 = arith.constant 1 : i32
      %c1_i32_71 = arith.constant 1 : i32
      %c1_i32_72 = arith.constant 1 : i32
      %c0_i32_73 = arith.constant 0 : i32
      %c0_i32_74 = arith.constant 0 : i32
      %126 = tpu.memref_slice %arg4[%c1_i32, %c0_i32_73, %c0_i32_74] : memref<4x2048x256xi8, #tpu.memory_space<any>> -> memref<1x2048x256xi8, #tpu.memory_space<any>>
      %127 = tpu.memref_squeeze %126 : memref<1x2048x256xi8, #tpu.memory_space<any>> -> memref<2048x256xi8, #tpu.memory_space<any>>
      %c0_i32_75 = arith.constant 0 : i32
      %c0_i32_76 = arith.constant 0 : i32
      %128 = tpu.memref_slice %arg20[%c1_i32_71, %c0_i32_75, %c0_i32_76] : memref<4x2048x256xi8, #tpu.memory_space<vmem>> -> memref<1x2048x256xi8, #tpu.memory_space<vmem>>
      %129 = tpu.memref_squeeze %128 : memref<1x2048x256xi8, #tpu.memory_space<vmem>> -> memref<2048x256xi8, #tpu.memory_space<vmem>>
      %130 = tpu.memref_slice %arg24[%c1_i32_72] : memref<7x!tpu.dma_semaphore, #tpu.memory_space<semaphore_mem>> -> memref<1x!tpu.dma_semaphore, #tpu.memory_space<semaphore_mem>>
      %131 = tpu.memref_squeeze %130 : memref<1x!tpu.dma_semaphore, #tpu.memory_space<semaphore_mem>> -> memref<!tpu.dma_semaphore, #tpu.memory_space<semaphore_mem>>
      tpu.wait_dma2 semaphore(%131 : memref<!tpu.dma_semaphore, #tpu.memory_space<semaphore_mem>>) src(%127 : memref<2048x256xi8, #tpu.memory_space<any>>) dst(%129 : memref<2048x256xi8, #tpu.memory_space<vmem>>)
    } else {
    }
    %c1 = arith.constant 1 : index
    %c0_14 = arith.constant 0 : index
    %c0_15 = arith.constant 0 : index
    %34 = vector.load %arg20[%c1, %c0_14, %c0_15] : memref<4x2048x256xi8, #tpu.memory_space<vmem>>, vector<1x2048x256xi8>
    %35 = vector.shape_cast %34 : vector<1x2048x256xi8> to vector<2048x256xi8>
    %36 = arith.sitofp %35 : vector<2048x256xi8> to vector<2048x256xf32>
    %37 = arith.truncf %36 : vector<2048x256xf32> to vector<2048x256xbf16>
    %cst_16 = arith.constant dense<0.000000e+00> : vector<8x256xf32>
    %38 = tpu.matmul %22, %37, %cst_16 {dimension_numbers = #tpu.dot_dimension_numbers<[1], [0], [0], [1], [0, 0, 1, 1], [], []>} : vector<8x2048xbf16>, vector<2048x256xbf16>, vector<8x256xf32> -> vector<8x256xf32>
    %c0_i32_17 = arith.constant 0 : i32
    %39 = arith.cmpi eq, %arg0, %c0_i32_17 : i32
    %40 = arith.extui %39 : i1 to i32
    %c0_i32_18 = arith.constant 0 : i32
    %41 = arith.cmpi ne, %40, %c0_i32_18 : i32
    scf.if %41 {
      %c2_i32 = arith.constant 2 : i32
      %c2_i32_71 = arith.constant 2 : i32
      %c2_i32_72 = arith.constant 2 : i32
      %c0_i32_73 = arith.constant 0 : i32
      %c0_i32_74 = arith.constant 0 : i32
      %126 = tpu.memref_slice %arg4[%c2_i32, %c0_i32_73, %c0_i32_74] : memref<4x2048x256xi8, #tpu.memory_space<any>> -> memref<1x2048x256xi8, #tpu.memory_space<any>>
      %127 = tpu.memref_squeeze %126 : memref<1x2048x256xi8, #tpu.memory_space<any>> -> memref<2048x256xi8, #tpu.memory_space<any>>
      %c0_i32_75 = arith.constant 0 : i32
      %c0_i32_76 = arith.constant 0 : i32
      %128 = tpu.memref_slice %arg20[%c2_i32_71, %c0_i32_75, %c0_i32_76] : memref<4x2048x256xi8, #tpu.memory_space<vmem>> -> memref<1x2048x256xi8, #tpu.memory_space<vmem>>
      %129 = tpu.memref_squeeze %128 : memref<1x2048x256xi8, #tpu.memory_space<vmem>> -> memref<2048x256xi8, #tpu.memory_space<vmem>>
      %130 = tpu.memref_slice %arg24[%c2_i32_72] : memref<7x!tpu.dma_semaphore, #tpu.memory_space<semaphore_mem>> -> memref<1x!tpu.dma_semaphore, #tpu.memory_space<semaphore_mem>>
      %131 = tpu.memref_squeeze %130 : memref<1x!tpu.dma_semaphore, #tpu.memory_space<semaphore_mem>> -> memref<!tpu.dma_semaphore, #tpu.memory_space<semaphore_mem>>
      tpu.wait_dma2 semaphore(%131 : memref<!tpu.dma_semaphore, #tpu.memory_space<semaphore_mem>>) src(%127 : memref<2048x256xi8, #tpu.memory_space<any>>) dst(%129 : memref<2048x256xi8, #tpu.memory_space<vmem>>)
    } else {
    }
    %c2 = arith.constant 2 : index
    %c0_19 = arith.constant 0 : index
    %c0_20 = arith.constant 0 : index
    %42 = vector.load %arg20[%c2, %c0_19, %c0_20] : memref<4x2048x256xi8, #tpu.memory_space<vmem>>, vector<1x2048x256xi8>
    %43 = vector.shape_cast %42 : vector<1x2048x256xi8> to vector<2048x256xi8>
    %44 = arith.sitofp %43 : vector<2048x256xi8> to vector<2048x256xf32>
    %45 = arith.truncf %44 : vector<2048x256xf32> to vector<2048x256xbf16>
    %cst_21 = arith.constant dense<0.000000e+00> : vector<8x256xf32>
    %46 = tpu.matmul %22, %45, %cst_21 {dimension_numbers = #tpu.dot_dimension_numbers<[1], [0], [0], [1], [0, 0, 1, 1], [], []>} : vector<8x2048xbf16>, vector<2048x256xbf16>, vector<8x256xf32> -> vector<8x256xf32>
    %c0_i32_22 = arith.constant 0 : i32
    %47 = arith.cmpi eq, %arg0, %c0_i32_22 : i32
    %48 = arith.extui %47 : i1 to i32
    %c0_i32_23 = arith.constant 0 : i32
    %49 = arith.cmpi ne, %48, %c0_i32_23 : i32
    scf.if %49 {
      %c3_i32 = arith.constant 3 : i32
      %c3_i32_71 = arith.constant 3 : i32
      %c3_i32_72 = arith.constant 3 : i32
      %c0_i32_73 = arith.constant 0 : i32
      %c0_i32_74 = arith.constant 0 : i32
      %126 = tpu.memref_slice %arg4[%c3_i32, %c0_i32_73, %c0_i32_74] : memref<4x2048x256xi8, #tpu.memory_space<any>> -> memref<1x2048x256xi8, #tpu.memory_space<any>>
      %127 = tpu.memref_squeeze %126 : memref<1x2048x256xi8, #tpu.memory_space<any>> -> memref<2048x256xi8, #tpu.memory_space<any>>
      %c0_i32_75 = arith.constant 0 : i32
      %c0_i32_76 = arith.constant 0 : i32
      %128 = tpu.memref_slice %arg20[%c3_i32_71, %c0_i32_75, %c0_i32_76] : memref<4x2048x256xi8, #tpu.memory_space<vmem>> -> memref<1x2048x256xi8, #tpu.memory_space<vmem>>
      %129 = tpu.memref_squeeze %128 : memref<1x2048x256xi8, #tpu.memory_space<vmem>> -> memref<2048x256xi8, #tpu.memory_space<vmem>>
      %130 = tpu.memref_slice %arg24[%c3_i32_72] : memref<7x!tpu.dma_semaphore, #tpu.memory_space<semaphore_mem>> -> memref<1x!tpu.dma_semaphore, #tpu.memory_space<semaphore_mem>>
      %131 = tpu.memref_squeeze %130 : memref<1x!tpu.dma_semaphore, #tpu.memory_space<semaphore_mem>> -> memref<!tpu.dma_semaphore, #tpu.memory_space<semaphore_mem>>
      tpu.wait_dma2 semaphore(%131 : memref<!tpu.dma_semaphore, #tpu.memory_space<semaphore_mem>>) src(%127 : memref<2048x256xi8, #tpu.memory_space<any>>) dst(%129 : memref<2048x256xi8, #tpu.memory_space<vmem>>)
    } else {
    }
    %c3 = arith.constant 3 : index
    %c0_24 = arith.constant 0 : index
    %c0_25 = arith.constant 0 : index
    %50 = vector.load %arg20[%c3, %c0_24, %c0_25] : memref<4x2048x256xi8, #tpu.memory_space<vmem>>, vector<1x2048x256xi8>
    %51 = vector.shape_cast %50 : vector<1x2048x256xi8> to vector<2048x256xi8>
    %52 = arith.sitofp %51 : vector<2048x256xi8> to vector<2048x256xf32>
    %53 = arith.truncf %52 : vector<2048x256xf32> to vector<2048x256xbf16>
    %cst_26 = arith.constant dense<0.000000e+00> : vector<8x256xf32>
    %54 = tpu.matmul %22, %53, %cst_26 {dimension_numbers = #tpu.dot_dimension_numbers<[1], [0], [0], [1], [0, 0, 1, 1], [], []>} : vector<8x2048xbf16>, vector<2048x256xbf16>, vector<8x256xf32> -> vector<8x256xf32>
    %55 = tpu.concatenate %30, %38, %46, %54 in 1 : vector<8x256xf32>, vector<8x256xf32>, vector<8x256xf32>, vector<8x256xf32> -> vector<8x1024xf32>
    %c0_27 = arith.constant 0 : index
    %c0_28 = arith.constant 0 : index
    %56 = vector.load %arg5[%c0_27, %c0_28] : memref<1x1024xf32, #tpu.memory_space<vmem>>, vector<1x1024xf32>
    %57 = vector.broadcast %56 : vector<1x1024xf32> to vector<8x1024xf32>
    %58 = arith.mulf %55, %57 : vector<8x1024xf32>
    %c0_29 = arith.constant 0 : index
    %c0_30 = arith.constant 0 : index
    %59 = vector.load %arg6[%c0_29, %c0_30] : memref<1x1024xf32, #tpu.memory_space<vmem>>, vector<1x1024xf32>
    %60 = vector.broadcast %59 : vector<1x1024xf32> to vector<8x1024xf32>
    %61 = arith.addf %58, %60 : vector<8x1024xf32>
    %cst_31 = arith.constant 0.000000e+00 : f32
    %62 = vector.broadcast %cst_31 : f32 to vector<8x1024xf32>
    %63 = arith.maximumf %61, %62 : vector<8x1024xf32>
    %c0_i32_32 = arith.constant 0 : i32
    %64 = arith.cmpi eq, %arg0, %c0_i32_32 : i32
    %65 = arith.extui %64 : i1 to i32
    %c0_i32_33 = arith.constant 0 : i32
    %66 = arith.cmpi ne, %65, %c0_i32_33 : i32
    scf.if %66 {
      %c4_i32 = arith.constant 4 : i32
      %126 = tpu.memref_slice %arg24[%c4_i32] : memref<7x!tpu.dma_semaphore, #tpu.memory_space<semaphore_mem>> -> memref<1x!tpu.dma_semaphore, #tpu.memory_space<semaphore_mem>>
      %127 = tpu.memref_squeeze %126 : memref<1x!tpu.dma_semaphore, #tpu.memory_space<semaphore_mem>> -> memref<!tpu.dma_semaphore, #tpu.memory_space<semaphore_mem>>
      tpu.wait_dma2 semaphore(%127 : memref<!tpu.dma_semaphore, #tpu.memory_space<semaphore_mem>>) src(%arg7 : memref<1024x512xi8, #tpu.memory_space<any>>) dst(%arg21 : memref<1024x512xi8, #tpu.memory_space<vmem>>)
    } else {
    }
    %c0_34 = arith.constant 0 : index
    %c0_35 = arith.constant 0 : index
    %67 = vector.load %arg21[%c0_34, %c0_35] : memref<1024x512xi8, #tpu.memory_space<vmem>>, vector<1024x512xi8>
    %68 = arith.sitofp %67 : vector<1024x512xi8> to vector<1024x512xf32>
    %69 = arith.truncf %68 : vector<1024x512xf32> to vector<1024x512xbf16>
    %70 = arith.truncf %63 : vector<8x1024xf32> to vector<8x1024xbf16>
    %cst_36 = arith.constant dense<0.000000e+00> : vector<8x512xf32>
    %71 = tpu.matmul %70, %69, %cst_36 {dimension_numbers = #tpu.dot_dimension_numbers<[1], [0], [0], [1], [0, 0, 1, 1], [], []>} : vector<8x1024xbf16>, vector<1024x512xbf16>, vector<8x512xf32> -> vector<8x512xf32>
    %c0_37 = arith.constant 0 : index
    %c0_38 = arith.constant 0 : index
    %72 = vector.load %arg8[%c0_37, %c0_38] : memref<1x512xf32, #tpu.memory_space<vmem>>, vector<1x512xf32>
    %73 = vector.broadcast %72 : vector<1x512xf32> to vector<8x512xf32>
    %74 = arith.mulf %71, %73 : vector<8x512xf32>
    %c0_39 = arith.constant 0 : index
    %c0_40 = arith.constant 0 : index
    %75 = vector.load %arg9[%c0_39, %c0_40] : memref<1x512xf32, #tpu.memory_space<vmem>>, vector<1x512xf32>
    %76 = vector.broadcast %75 : vector<1x512xf32> to vector<8x512xf32>
    %77 = arith.addf %74, %76 : vector<8x512xf32>
    %cst_41 = arith.constant 0.000000e+00 : f32
    %78 = vector.broadcast %cst_41 : f32 to vector<8x512xf32>
    %79 = arith.maximumf %77, %78 : vector<8x512xf32>
    %c0_i32_42 = arith.constant 0 : i32
    %80 = arith.cmpi eq, %arg0, %c0_i32_42 : i32
    %81 = arith.extui %80 : i1 to i32
    %c0_i32_43 = arith.constant 0 : i32
    %82 = arith.cmpi ne, %81, %c0_i32_43 : i32
    scf.if %82 {
      %c5_i32 = arith.constant 5 : i32
      %126 = tpu.memref_slice %arg24[%c5_i32] : memref<7x!tpu.dma_semaphore, #tpu.memory_space<semaphore_mem>> -> memref<1x!tpu.dma_semaphore, #tpu.memory_space<semaphore_mem>>
      %127 = tpu.memref_squeeze %126 : memref<1x!tpu.dma_semaphore, #tpu.memory_space<semaphore_mem>> -> memref<!tpu.dma_semaphore, #tpu.memory_space<semaphore_mem>>
      tpu.wait_dma2 semaphore(%127 : memref<!tpu.dma_semaphore, #tpu.memory_space<semaphore_mem>>) src(%arg10 : memref<512x256xbf16, #tpu.memory_space<any>>) dst(%arg22 : memref<512x256xbf16, #tpu.memory_space<vmem>>)
    } else {
    }
    %83 = arith.truncf %79 : vector<8x512xf32> to vector<8x512xbf16>
    %c0_44 = arith.constant 0 : index
    %c0_45 = arith.constant 0 : index
    %84 = vector.load %arg22[%c0_44, %c0_45] : memref<512x256xbf16, #tpu.memory_space<vmem>>, vector<512x256xbf16>
    %cst_46 = arith.constant dense<0.000000e+00> : vector<8x256xf32>
    %85 = tpu.matmul %83, %84, %cst_46 {dimension_numbers = #tpu.dot_dimension_numbers<[1], [0], [0], [1], [0, 0, 1, 1], [], []>} : vector<8x512xbf16>, vector<512x256xbf16>, vector<8x256xf32> -> vector<8x256xf32>
    %c0_47 = arith.constant 0 : index
    %c0_48 = arith.constant 0 : index
    %86 = vector.load %arg11[%c0_47, %c0_48] : memref<1x256xf32, #tpu.memory_space<vmem>>, vector<1x256xf32>
    %87 = vector.broadcast %86 : vector<1x256xf32> to vector<8x256xf32>
    %88 = arith.addf %85, %87 : vector<8x256xf32>
    %cst_49 = arith.constant 0.000000e+00 : f32
    %89 = vector.broadcast %cst_49 : f32 to vector<8x256xf32>
    %90 = arith.maximumf %88, %89 : vector<8x256xf32>
    %c0_i32_50 = arith.constant 0 : i32
    %91 = arith.cmpi eq, %arg0, %c0_i32_50 : i32
    %92 = arith.extui %91 : i1 to i32
    %c0_i32_51 = arith.constant 0 : i32
    %93 = arith.cmpi ne, %92, %c0_i32_51 : i32
    scf.if %93 {
      %c6_i32 = arith.constant 6 : i32
      %126 = tpu.memref_slice %arg24[%c6_i32] : memref<7x!tpu.dma_semaphore, #tpu.memory_space<semaphore_mem>> -> memref<1x!tpu.dma_semaphore, #tpu.memory_space<semaphore_mem>>
      %127 = tpu.memref_squeeze %126 : memref<1x!tpu.dma_semaphore, #tpu.memory_space<semaphore_mem>> -> memref<!tpu.dma_semaphore, #tpu.memory_space<semaphore_mem>>
      tpu.wait_dma2 semaphore(%127 : memref<!tpu.dma_semaphore, #tpu.memory_space<semaphore_mem>>) src(%arg12 : memref<256x128xbf16, #tpu.memory_space<any>>) dst(%arg23 : memref<256x128xbf16, #tpu.memory_space<vmem>>)
    } else {
    }
    %94 = arith.truncf %90 : vector<8x256xf32> to vector<8x256xbf16>
    %c0_52 = arith.constant 0 : index
    %c0_53 = arith.constant 0 : index
    %95 = vector.load %arg23[%c0_52, %c0_53] : memref<256x128xbf16, #tpu.memory_space<vmem>>, vector<256x128xbf16>
    %cst_54 = arith.constant dense<0.000000e+00> : vector<8x128xf32>
    %96 = tpu.matmul %94, %95, %cst_54 {dimension_numbers = #tpu.dot_dimension_numbers<[1], [0], [0], [1], [0, 0, 1, 1], [], []>} : vector<8x256xbf16>, vector<256x128xbf16>, vector<8x128xf32> -> vector<8x128xf32>
    %c0_55 = arith.constant 0 : index
    %c0_56 = arith.constant 0 : index
    %97 = vector.load %arg13[%c0_55, %c0_56] : memref<1x128xf32, #tpu.memory_space<vmem>>, vector<1x128xf32>
    %98 = vector.broadcast %97 : vector<1x128xf32> to vector<8x128xf32>
    %99 = arith.addf %96, %98 : vector<8x128xf32>
    %cst_57 = arith.constant 0.000000e+00 : f32
    %100 = vector.broadcast %cst_57 : f32 to vector<8x128xf32>
    %101 = arith.maximumf %99, %100 : vector<8x128xf32>
    %102 = arith.truncf %101 : vector<8x128xf32> to vector<8x128xbf16>
    %c0_58 = arith.constant 0 : index
    %c0_59 = arith.constant 0 : index
    %103 = vector.load %arg14[%c0_58, %c0_59] : memref<128x2xbf16, #tpu.memory_space<vmem>>, vector<128x2xbf16>
    %cst_60 = arith.constant dense<0.000000e+00> : vector<8x2xf32>
    %104 = tpu.matmul %102, %103, %cst_60 {dimension_numbers = #tpu.dot_dimension_numbers<[1], [0], [0], [1], [0, 0, 1, 1], [], []>} : vector<8x128xbf16>, vector<128x2xbf16>, vector<8x2xf32> -> vector<8x2xf32>
    %c0_61 = arith.constant 0 : index
    %c0_62 = arith.constant 0 : index
    %105 = vector.load %arg15[%c0_61, %c0_62] : memref<1x2xf32, #tpu.memory_space<vmem>>, vector<1x2xf32>
    %106 = vector.broadcast %105 : vector<1x2xf32> to vector<8x2xf32>
    %107 = arith.addf %104, %106 : vector<8x2xf32>
    %c0_63 = arith.constant 0 : index
    %c0_64 = arith.constant 0 : index
    %108 = vector.load %arg19[%c0_63, %c0_64] : memref<8x2xf32, #tpu.memory_space<vmem>>, vector<8x2xf32>
    tpu.vector_store %arg19[%c0_63, %c0_64], %107 {strides = array<i32>} : memref<8x2xf32, #tpu.memory_space<vmem>>, vector<8x2xf32>,
    %c0_65 = arith.constant 0 : index
    %c0_66 = arith.constant 0 : index
    %109 = vector.load %arg16[%c0_65, %c0_66] : memref<2x25xbf16, #tpu.memory_space<vmem>>, vector<2x25xbf16>
    %110 = arith.extf %109 : vector<2x25xbf16> to vector<2x25xf32>
    %111 = vector.extract_strided_slice %107 {offsets = [0, 0], sizes = [8, 1], strides = [1, 1]} : vector<8x2xf32> to vector<8x1xf32>
    %112 = vector.extract_strided_slice %110 {offsets = [0, 0], sizes = [1, 25], strides = [1, 1]} : vector<2x25xf32> to vector<1x25xf32>
    %113 = vector.broadcast %111 : vector<8x1xf32> to vector<8x25xf32>
    %114 = vector.broadcast %112 : vector<1x25xf32> to vector<8x25xf32>
    %115 = arith.mulf %113, %114 : vector<8x25xf32>
    %116 = vector.extract_strided_slice %107 {offsets = [0, 1], sizes = [8, 1], strides = [1, 1]} : vector<8x2xf32> to vector<8x1xf32>
    %117 = vector.extract_strided_slice %110 {offsets = [1, 0], sizes = [1, 25], strides = [1, 1]} : vector<2x25xf32> to vector<1x25xf32>
    %118 = vector.broadcast %116 : vector<8x1xf32> to vector<8x25xf32>
    %119 = vector.broadcast %117 : vector<1x25xf32> to vector<8x25xf32>
    %120 = arith.mulf %118, %119 : vector<8x25xf32>
    %121 = arith.addf %115, %120 : vector<8x25xf32>
    %c0_67 = arith.constant 0 : index
    %c0_68 = arith.constant 0 : index
    %122 = vector.load %arg17[%c0_67, %c0_68] : memref<1x25xf32, #tpu.memory_space<vmem>>, vector<1x25xf32>
    %123 = vector.broadcast %122 : vector<1x25xf32> to vector<8x25xf32>
    %124 = arith.addf %121, %123 : vector<8x25xf32>
    %c0_69 = arith.constant 0 : index
    %c0_70 = arith.constant 0 : index
    %125 = vector.load %arg18[%c0_69, %c0_70] : memref<8x25xf32, #tpu.memory_space<vmem>>, vector<8x25xf32>
    tpu.vector_store %arg18[%c0_69, %c0_70], %124 {strides = array<i32>} : memref<8x25xf32, #tpu.memory_space<vmem>>, vector<8x25xf32>,
    return
  }
  func.func @transform_0(%arg0: i32) -> (i32, i32) {
    %c0_i32 = arith.constant 0 : i32
    %c0_i32_0 = arith.constant 0 : i32
    return %arg0, %c0_i32 : i32, i32
  }
  func.func @transform_1(%arg0: i32) -> (i32, i32) {
    %c0_i32 = arith.constant 0 : i32
    %c0_i32_0 = arith.constant 0 : i32
    %c0_i32_1 = arith.constant 0 : i32
    return %c0_i32, %c0_i32_0 : i32, i32
  }
  func.func @transform_2(%arg0: i32) -> (i32, i32) {
    %c0_i32 = arith.constant 0 : i32
    %c0_i32_0 = arith.constant 0 : i32
    %c0_i32_1 = arith.constant 0 : i32
    return %c0_i32, %c0_i32_0 : i32, i32
  }
  func.func @transform_4(%arg0: i32) -> (i32, i32) {
    %c0_i32 = arith.constant 0 : i32
    %c0_i32_0 = arith.constant 0 : i32
    %c0_i32_1 = arith.constant 0 : i32
    return %c0_i32, %c0_i32_0 : i32, i32
  }
  func.func @transform_5(%arg0: i32) -> (i32, i32) {
    %c0_i32 = arith.constant 0 : i32
    %c0_i32_0 = arith.constant 0 : i32
    %c0_i32_1 = arith.constant 0 : i32
    return %c0_i32, %c0_i32_0 : i32, i32
  }
  func.func @transform_7(%arg0: i32) -> (i32, i32) {
    %c0_i32 = arith.constant 0 : i32
    %c0_i32_0 = arith.constant 0 : i32
    %c0_i32_1 = arith.constant 0 : i32
    return %c0_i32, %c0_i32_0 : i32, i32
  }
  func.func @transform_8(%arg0: i32) -> (i32, i32) {
    %c0_i32 = arith.constant 0 : i32
    %c0_i32_0 = arith.constant 0 : i32
    %c0_i32_1 = arith.constant 0 : i32
    return %c0_i32, %c0_i32_0 : i32, i32
  }
  func.func @transform_10(%arg0: i32) -> (i32, i32) {
    %c0_i32 = arith.constant 0 : i32
    %c0_i32_0 = arith.constant 0 : i32
    %c0_i32_1 = arith.constant 0 : i32
    return %c0_i32, %c0_i32_0 : i32, i32
  }
  func.func @transform_12(%arg0: i32) -> (i32, i32) {
    %c0_i32 = arith.constant 0 : i32
    %c0_i32_0 = arith.constant 0 : i32
    %c0_i32_1 = arith.constant 0 : i32
    return %c0_i32, %c0_i32_0 : i32, i32
  }
  func.func @transform_13(%arg0: i32) -> (i32, i32) {
    %c0_i32 = arith.constant 0 : i32
    %c0_i32_0 = arith.constant 0 : i32
    %c0_i32_1 = arith.constant 0 : i32
    return %c0_i32, %c0_i32_0 : i32, i32
  }
  func.func @transform_14(%arg0: i32) -> (i32, i32) {
    %c0_i32 = arith.constant 0 : i32
    %c0_i32_0 = arith.constant 0 : i32
    %c0_i32_1 = arith.constant 0 : i32
    return %c0_i32, %c0_i32_0 : i32, i32
  }
  func.func @transform_15(%arg0: i32) -> (i32, i32) {
    %c0_i32 = arith.constant 0 : i32
    %c0_i32_0 = arith.constant 0 : i32
    %c0_i32_1 = arith.constant 0 : i32
    return %c0_i32, %c0_i32_0 : i32, i32
  }
  func.func @transform_16(%arg0: i32) -> (i32, i32) {
    %c0_i32 = arith.constant 0 : i32
    %c0_i32_0 = arith.constant 0 : i32
    %c0_i32_1 = arith.constant 0 : i32
    return %c0_i32, %c0_i32_0 : i32, i32
  }
  func.func @transform_17(%arg0: i32) -> (i32, i32) {
    %c0_i32 = arith.constant 0 : i32
    %c0_i32_0 = arith.constant 0 : i32
    return %arg0, %c0_i32 : i32, i32
  }
  func.func @transform_18(%arg0: i32) -> (i32, i32) {
    %c0_i32 = arith.constant 0 : i32
    %c0_i32_0 = arith.constant 0 : i32
    return %arg0, %c0_i32 : i32, i32
  }
}

</mosaic_0001>

<llo_original>
// kernel: tpu_custom_call.1
$region0: #{tpu_custom_call.1}
  #allocation0 [shape = 'u32[]', space=smem, size = 0x4, offset = 0x4, fixed_abs, tag = 'smem constant byte address 0x4 - core index']
  #allocation1 [shape = 'u32[144,128]{1,0:T(1,128)}', space=vmem, size = 0x12000, scoped, tag = 'internal scratch']
  #allocation2 [shape = 's8[4,2048,256]{2,1,0:T(32,128)(4,1)}', space=vmem, size = 0x200000, scoped, tag = 'scratch operand']
  #allocation3 [shape = 's8[1024,512]{1,0:T(32,128)(4,1)}', space=vmem, size = 0x80000, scoped, tag = 'scratch operand']
  #allocation4 [shape = 'bf16[512,256]{1,0:T(16,128)(2,1)}', space=vmem, size = 0x40000, scoped, tag = 'scratch operand']
  #allocation5 [shape = 'bf16[256,128]{1,0:T(16,128)(2,1)}', space=vmem, size = 0x10000, scoped, tag = 'scratch operand']
  #allocation6 [shape = 's32[7]{0}', space=sflag, size = 0x1c, scoped, tag = 'scratch operand']
  #allocation26 [shape = 's32[]', space=sflag, size = 0x4, offset = 0, fixed_abs, tag = 'sflag constant byte address 0x0 - dummy sync flag']
  #allocation27 [shape = 's32[]', space=sflag, size = 0x4, offset = 0, fixed_abs, tag = 'sflag constant byte address 0x0 - dummy sync flag']
  #allocation28 [shape = 'u32[]', space=smem, size = 0x4, offset = 0x44, fixed_abs, tag = 'smem constant byte address 0x44 - assertion arg 0']
  #allocation29 [shape = 'u32[]', space=smem, size = 0x4, offset = 0x48, fixed_abs, tag = 'smem constant byte address 0x48 - assertion arg 1']
  #allocation30 [shape = 's32[]', space=sflag, size = 0x4, offset = 0, fixed_abs, tag = 'sflag constant byte address 0x0 - dummy sync flag']
  #allocation31 [shape = 's32[]', space=sflag, size = 0x4, offset = 0, fixed_abs, tag = 'sflag constant byte address 0x0 - dummy sync flag']
  #allocation32 [shape = 's32[]', space=sflag, size = 0x4, offset = 0, fixed_abs, tag = 'sflag constant byte address 0x0 - dummy sync flag']
  #allocation33 [shape = 's32[]', space=sflag, size = 0x4, offset = 0, fixed_abs, tag = 'sflag constant byte address 0x0 - dummy sync flag']
  #allocation34 [shape = 's32[]', space=sflag, size = 0x4, offset = 0, fixed_abs, tag = 'sflag constant byte address 0x0 - dummy sync flag']
  #allocation35 [shape = 's32[]', space=sflag, size = 0x4, offset = 0, fixed_abs, tag = 'sflag constant byte address 0x0 - dummy sync flag']
  #allocation36 [shape = 's32[]', space=sflag, size = 0x4, offset = 0, fixed_abs, tag = 'sflag constant byte address 0x0 - dummy sync flag']
  #allocation37 [shape = 's32[]', space=sflag, size = 0x4, offset = 0, fixed_abs, tag = 'sflag constant byte address 0x0 - dummy sync flag']
  #allocation38 [shape = 's32[]', space=sflag, size = 0x4, offset = 0, fixed_abs, tag = 'sflag constant byte address 0x0 - dummy sync flag']
  #allocation40 [shape = 's32[]', space=sflag, size = 0x4, offset = 0, fixed_abs, tag = 'sflag constant byte address 0x0 - dummy sync flag']
  #allocation41 [shape = 's32[]', space=sflag, size = 0x4, offset = 0, fixed_abs, tag = 'sflag constant byte address 0x0 - dummy sync flag']
  %s0 = inlined_call_operand.vmem [shape: f32[16,2], index: 0, kind: input, shape index: {}]
  %s1 = inlined_call_operand.hbm [shape: bf16[2,2048], index: 1, kind: input, shape index: {}]
  %s2 = inlined_call_operand.hbm [shape: f32[1,2048], index: 2, kind: input, shape index: {}]
  %s3 = inlined_call_operand.hbm [shape: s8[4,2048,256], index: 3, kind: input, shape index: {}]
  %s4 = inlined_call_operand.hbm [shape: f32[1,1024], index: 4, kind: input, shape index: {}]
  %s5 = inlined_call_operand.hbm [shape: f32[1,1024], index: 5, kind: input, shape index: {}]
  %s6 = inlined_call_operand.hbm [shape: s8[1024,512], index: 6, kind: input, shape index: {}]
  %s7 = inlined_call_operand.hbm [shape: f32[1,512], index: 7, kind: input, shape index: {}]
  %s8 = inlined_call_operand.hbm [shape: f32[1,512], index: 8, kind: input, shape index: {}]
  %s9 = inlined_call_operand.hbm [shape: bf16[512,256], index: 9, kind: input, shape index: {}]
  %s10 = inlined_call_operand.hbm [shape: f32[1,256], index: 10, kind: input, shape index: {}]
  %s11 = inlined_call_operand.hbm [shape: bf16[256,128], index: 11, kind: input, shape index: {}]
  %s12 = inlined_call_operand.hbm [shape: f32[1,128], index: 12, kind: input, shape index: {}]
  %s13 = inlined_call_operand.vmem [shape: bf16[128,2], index: 13, kind: input, shape index: {}]
  %s14 = inlined_call_operand.hbm [shape: f32[1,2], index: 14, kind: input, shape index: {}]
  %s15 = inlined_call_operand.hbm [shape: bf16[2,25], index: 15, kind: input, shape index: {}]
  %s16 = inlined_call_operand.hbm [shape: f32[1,25], index: 16, kind: input, shape index: {}]
  %s17 = inlined_call_operand.hbm [shape: f32[16,25], index: 17, kind: output, shape index: {0}]
  %s18 = inlined_call_operand.vmem [shape: f32[16,2], index: 18, kind: output, shape index: {1}]
  %19 = xla_tuple %s17, %s18
  %s20 = sld [smem:[#allocation0]]
  $region193: #{tpu_custom_call.1} parent=0
    _
  %s22 = ssub.s32 1, %s20
  %s23 = scalar_select 0, %s22, %s20
  $region1: #{tpu_custom_call.1} parent=0
    #allocation7 [shape = 'u8[8192]{0}', space=vmem, size = 0x2000, scoped, tag = 'input window, operand 1, single buffered']
    #allocation8 [shape = 's32[2]{0}', space=sflag, size = 0x8, scoped, tag = 'scoped memory for tpu_custom_call.1']
    #allocation9 [shape = 's32[2]{0}', space=sflag, size = 0x8, scoped, tag = 'scoped memory for tpu_custom_call.1']
    #allocation10 [shape = 'u8[8192]{0}', space=vmem, size = 0x2000, scoped, tag = 'input window, operand 2, single buffered']
    #allocation11 [shape = 's32[1]{0}', space=sflag, size = 0x4, scoped, tag = 'scoped memory for tpu_custom_call.1']
    #allocation12 [shape = 'u8[4096]{0}', space=vmem, size = 0x1000, scoped, tag = 'input window, operand 4, single buffered']
    #allocation13 [shape = 'u8[4096]{0}', space=vmem, size = 0x1000, scoped, tag = 'input window, operand 5, single buffered']
    #allocation14 [shape = 's32[1]{0}', space=sflag, size = 0x4, scoped, tag = 'scoped memory for tpu_custom_call.1']
    #allocation15 [shape = 'u8[2048]{0}', space=vmem, size = 0x800, scoped, tag = 'input window, operand 7, single buffered']
    #allocation16 [shape = 'u8[2048]{0}', space=vmem, size = 0x800, scoped, tag = 'input window, operand 8, single buffered']
    #allocation17 [shape = 's32[1]{0}', space=sflag, size = 0x4, scoped, tag = 'scoped memory for tpu_custom_call.1']
    #allocation18 [shape = 'u8[1024]{0}', space=vmem, size = 0x400, scoped, tag = 'input window, operand 10, single buffered']
    #allocation19 [shape = 'u8[512]{0}', space=vmem, size = 0x400, scoped, tag = 'input window, operand 12, single buffered']
    #allocation20 [shape = 's32[1]{0}', space=sflag, size = 0x4, scoped, tag = 'scoped memory for tpu_custom_call.1']
    #allocation21 [shape = 'u8[512]{0}', space=vmem, size = 0x400, scoped, tag = 'input window, operand 14, single buffered']
    #allocation22 [shape = 'u8[512]{0}', space=vmem, size = 0x400, scoped, tag = 'input window, operand 15, single buffered']
    #allocation23 [shape = 's32[1]{0}', space=sflag, size = 0x4, scoped, tag = 'scoped memory for tpu_custom_call.1']
    #allocation24 [shape = 'u8[512]{0}', space=vmem, size = 0x400, scoped, tag = 'input window, operand 16, single buffered']
    #allocation25 [shape = 'u8[8192]{0}', space=vmem, size = 0x2000, scoped, tag = 'output window, operand 0']
    %24 = vsyncpa [#allocation8], 0
    %25 = vsyncpa [#allocation11], 0
    %26 = vsyncpa [#allocation14], 0
    %27 = vsyncpa [#allocation17], 0
    %28 = vsyncpa [#allocation20], 0
    %29 = vsyncpa [#allocation23], 0
    %30 = vsyncpa [#allocation9], 0
    %s31 = scalar_lea.sflag [#allocation9], 1
    %32 = vsyncpa %s31, 0
    loop: start=0, step=1, limit=4
    $region2: #{tpu_custom_call.1} parent=1 // loop_pre_header
      _
    $region3: #{tpu_custom_call.1} parent=1 // loop_header
      %s34 = sphi 0, %s38
      %p35 = scmp.ge.s32.totalorder %s34, 4
      %s44 = sphi 0, %s46
      %s47 = sphi 0, %s44
      %s48 = sphi 0, %s47
      %s64 = sphi 0, %s48
      %s68 = sphi 0, %s68
      %s70 = sphi 0, %s68
      %s71 = sphi 0, %s70
      %s85 = sphi 0, %s71
      %s89 = sphi 0, %s89
      %s91 = sphi 0, %s89
      %s92 = sphi 0, %s91
      %s106 = sphi 0, %s92
      %s110 = sphi 0, %s110
      %s112 = sphi 0, %s110
      %s113 = sphi 0, %s112
      %s127 = sphi 0, %s113
      %s131 = sphi 0, %s131
      %s133 = sphi 0, %s131
      %s134 = sphi 0, %s133
      %s148 = sphi 0, %s134
      %s152 = sphi 0, %s152
      %s154 = sphi 0, %s152
      %s155 = sphi 0, %s154
      %s169 = sphi 0, %s155
      %s173 = sphi 0, %s173
      %s175 = sphi 0, %s173
      %s176 = sphi 0, %s175
      %s190 = sphi 0, %s176
      %s194 = sphi 0, %s194
      %s196 = sphi 0, %s194
      %s197 = sphi 0, %s196
      %s211 = sphi 0, %s197
      %s215 = sphi 0, %s215
      %s217 = sphi 0, %s215
      %s218 = sphi 0, %s217
      %s232 = sphi 0, %s218
      %s236 = sphi 0, %s236
      %s238 = sphi 0, %s236
      %s239 = sphi 0, %s238
      %s253 = sphi 0, %s239
      %s257 = sphi 0, %s257
      %s259 = sphi 0, %s257
      %s260 = sphi 0, %s259
      %s274 = sphi 0, %s260
      %s278 = sphi 0, %s278
      %s280 = sphi 0, %s278
      %s281 = sphi 0, %s280
      %s295 = sphi 0, %s281
      %s299 = sphi 0, %s299
      %s301 = sphi 0, %s299
      %s302 = sphi 0, %s301
      %s316 = sphi 0, %s302
      %s322 = sphi 0, %s324
      %s325 = sphi 0, %s322
      %s326 = sphi 0, %s325
      %s342 = sphi 0, %s326
      %s348 = sphi 0, %s350
      %s351 = sphi 0, %s348
      %s352 = sphi 0, %s351
      %s368 = sphi 0, %s352
    $region4: #{tpu_custom_call.1} parent=1 // loop_header_branch
      %37 = sbr.rel (%p35) target = $region8
    $region5: #{tpu_custom_call.1} parent=1 // loop_body
      %s39 = ssub.s32 %s34, 1
      %s40 = ssub.s32 %s34, 2
      %s41 = sadd.s32 %s34, 1
      %s42 = ssub.s32 %s34, %s41
      %p43 = scmp.eq.s32.totalorder %s42, 0
      %s45 = sadd.s32 %s44, 1
      %s46 = scalar_select %p43, %s44, %s45
      %p49 = pneg %p43
      %p50 = scmp.eq.s32.totalorder %s34, 1
      %p51 = por %p49, %p50
      %p52 = scmp.ne.s32.totalorder %s44, %s47
      %p53 = scmp.eq.s32.totalorder %s34, 0
      %p54 = por %p52, %p53
      %p55 = scmp.ne.s32.totalorder %s44, %s47
      %p56 = scmp.eq.s32.totalorder %s39, 1
      %p57 = por %p55, %p56
      %p58 = scmp.ne.s32.totalorder %s47, %s48
      %p59 = scmp.eq.s32.totalorder %s39, 0
      %p60 = por %p58, %p59
      %p61 = scmp.ne.s32.totalorder %s47, %s48
      %p62 = scmp.eq.s32.totalorder %s40, 1
      %p63 = por %p61, %p62
      %p65 = scmp.ne.s32.totalorder %s48, %s64
      %p66 = scmp.eq.s32.totalorder %s40, 0
      %p67 = por %p65, %p66
      %s69 = sadd.s32 %s68, 1
      %p72 = scmp.eq.s32.totalorder %s34, 1
      %p73 = scmp.ne.s32.totalorder %s68, %s70
      %p74 = scmp.eq.s32.totalorder %s34, 0
      %p75 = por %p73, %p74
      %p76 = scmp.ne.s32.totalorder %s68, %s70
      %p77 = scmp.eq.s32.totalorder %s39, 1
      %p78 = por %p76, %p77
      %p79 = scmp.ne.s32.totalorder %s70, %s71
      %p80 = scmp.eq.s32.totalorder %s39, 0
      %p81 = por %p79, %p80
      %p82 = scmp.ne.s32.totalorder %s70, %s71
      %p83 = scmp.eq.s32.totalorder %s40, 1
      %p84 = por %p82, %p83
      %p86 = scmp.ne.s32.totalorder %s71, %s85
      %p87 = scmp.eq.s32.totalorder %s40, 0
      %p88 = por %p86, %p87
      %s90 = sadd.s32 %s89, 1
      %p93 = scmp.eq.s32.totalorder %s34, 1
      %p94 = scmp.ne.s32.totalorder %s89, %s91
      %p95 = scmp.eq.s32.totalorder %s34, 0
      %p96 = por %p94, %p95
      %p97 = scmp.ne.s32.totalorder %s89, %s91
      %p98 = scmp.eq.s32.totalorder %s39, 1
      %p99 = por %p97, %p98
      %p100 = scmp.ne.s32.totalorder %s91, %s92
      %p101 = scmp.eq.s32.totalorder %s39, 0
      %p102 = por %p100, %p101
      %p103 = scmp.ne.s32.totalorder %s91, %s92
      %p104 = scmp.eq.s32.totalorder %s40, 1
      %p105 = por %p103, %p104
      %p107 = scmp.ne.s32.totalorder %s92, %s106
      %p108 = scmp.eq.s32.totalorder %s40, 0
      %p109 = por %p107, %p108
      %s111 = sadd.s32 %s110, 1
      %p114 = scmp.eq.s32.totalorder %s34, 1
      %p115 = scmp.ne.s32.totalorder %s110, %s112
      %p116 = scmp.eq.s32.totalorder %s34, 0
      %p117 = por %p115, %p116
      %p118 = scmp.ne.s32.totalorder %s110, %s112
      %p119 = scmp.eq.s32.totalorder %s39, 1
      %p120 = por %p118, %p119
      %p121 = scmp.ne.s32.totalorder %s112, %s113
      %p122 = scmp.eq.s32.totalorder %s39, 0
      %p123 = por %p121, %p122
      %p124 = scmp.ne.s32.totalorder %s112, %s113
      %p125 = scmp.eq.s32.totalorder %s40, 1
      %p126 = por %p124, %p125
      %p128 = scmp.ne.s32.totalorder %s113, %s127
      %p129 = scmp.eq.s32.totalorder %s40, 0
      %p130 = por %p128, %p129
      %s132 = sadd.s32 %s131, 1
      %p135 = scmp.eq.s32.totalorder %s34, 1
      %p136 = scmp.ne.s32.totalorder %s131, %s133
      %p137 = scmp.eq.s32.totalorder %s34, 0
      %p138 = por %p136, %p137
      %p139 = scmp.ne.s32.totalorder %s131, %s133
      %p140 = scmp.eq.s32.totalorder %s39, 1
      %p141 = por %p139, %p140
      %p142 = scmp.ne.s32.totalorder %s133, %s134
      %p143 = scmp.eq.s32.totalorder %s39, 0
      %p144 = por %p142, %p143
      %p145 = scmp.ne.s32.totalorder %s133, %s134
      %p146 = scmp.eq.s32.totalorder %s40, 1
      %p147 = por %p145, %p146
      %p149 = scmp.ne.s32.totalorder %s134, %s148
      %p150 = scmp.eq.s32.totalorder %s40, 0
      %p151 = por %p149, %p150
      %s153 = sadd.s32 %s152, 1
      %p156 = scmp.eq.s32.totalorder %s34, 1
      %p157 = scmp.ne.s32.totalorder %s152, %s154
      %p158 = scmp.eq.s32.totalorder %s34, 0
      %p159 = por %p157, %p158
      %p160 = scmp.ne.s32.totalorder %s152, %s154
      %p161 = scmp.eq.s32.totalorder %s39, 1
      %p162 = por %p160, %p161
      %p163 = scmp.ne.s32.totalorder %s154, %s155
      %p164 = scmp.eq.s32.totalorder %s39, 0
      %p165 = por %p163, %p164
      %p166 = scmp.ne.s32.totalorder %s154, %s155
      %p167 = scmp.eq.s32.totalorder %s40, 1
      %p168 = por %p166, %p167
      %p170 = scmp.ne.s32.totalorder %s155, %s169
      %p171 = scmp.eq.s32.totalorder %s40, 0
      %p172 = por %p170, %p171
      %s174 = sadd.s32 %s173, 1
      %p177 = scmp.eq.s32.totalorder %s34, 1
      %p178 = scmp.ne.s32.totalorder %s173, %s175
      %p179 = scmp.eq.s32.totalorder %s34, 0
      %p180 = por %p178, %p179
      %p181 = scmp.ne.s32.totalorder %s173, %s175
      %p182 = scmp.eq.s32.totalorder %s39, 1
      %p183 = por %p181, %p182
      %p184 = scmp.ne.s32.totalorder %s175, %s176
      %p185 = scmp.eq.s32.totalorder %s39, 0
      %p186 = por %p184, %p185
      %p187 = scmp.ne.s32.totalorder %s175, %s176
      %p188 = scmp.eq.s32.totalorder %s40, 1
      %p189 = por %p187, %p188
      %p191 = scmp.ne.s32.totalorder %s176, %s190
      %p192 = scmp.eq.s32.totalorder %s40, 0
      %p193 = por %p191, %p192
      %s195 = sadd.s32 %s194, 1
      %p198 = scmp.eq.s32.totalorder %s34, 1
      %p199 = scmp.ne.s32.totalorder %s194, %s196
      %p200 = scmp.eq.s32.totalorder %s34, 0
      %p201 = por %p199, %p200
      %p202 = scmp.ne.s32.totalorder %s194, %s196
      %p203 = scmp.eq.s32.totalorder %s39, 1
      %p204 = por %p202, %p203
      %p205 = scmp.ne.s32.totalorder %s196, %s197
      %p206 = scmp.eq.s32.totalorder %s39, 0
      %p207 = por %p205, %p206
      %p208 = scmp.ne.s32.totalorder %s196, %s197
      %p209 = scmp.eq.s32.totalorder %s40, 1
      %p210 = por %p208, %p209
      %p212 = scmp.ne.s32.totalorder %s197, %s211
      %p213 = scmp.eq.s32.totalorder %s40, 0
      %p214 = por %p212, %p213
      %s216 = sadd.s32 %s215, 1
      %p219 = scmp.eq.s32.totalorder %s34, 1
      %p220 = scmp.ne.s32.totalorder %s215, %s217
      %p221 = scmp.eq.s32.totalorder %s34, 0
      %p222 = por %p220, %p221
      %p223 = scmp.ne.s32.totalorder %s215, %s217
      %p224 = scmp.eq.s32.totalorder %s39, 1
      %p225 = por %p223, %p224
      %p226 = scmp.ne.s32.totalorder %s217, %s218
      %p227 = scmp.eq.s32.totalorder %s39, 0
      %p228 = por %p226, %p227
      %p229 = scmp.ne.s32.totalorder %s217, %s218
      %p230 = scmp.eq.s32.totalorder %s40, 1
      %p231 = por %p229, %p230
      %p233 = scmp.ne.s32.totalorder %s218, %s232
      %p234 = scmp.eq.s32.totalorder %s40, 0
      %p235 = por %p233, %p234
      %s237 = sadd.s32 %s236, 1
      %p240 = scmp.eq.s32.totalorder %s34, 1
      %p241 = scmp.ne.s32.totalorder %s236, %s238
      %p242 = scmp.eq.s32.totalorder %s34, 0
      %p243 = por %p241, %p242
      %p244 = scmp.ne.s32.totalorder %s236, %s238
      %p245 = scmp.eq.s32.totalorder %s39, 1
      %p246 = por %p244, %p245
      %p247 = scmp.ne.s32.totalorder %s238, %s239
      %p248 = scmp.eq.s32.totalorder %s39, 0
      %p249 = por %p247, %p248
      %p250 = scmp.ne.s32.totalorder %s238, %s239
      %p251 = scmp.eq.s32.totalorder %s40, 1
      %p252 = por %p250, %p251
      %p254 = scmp.ne.s32.totalorder %s239, %s253
      %p255 = scmp.eq.s32.totalorder %s40, 0
      %p256 = por %p254, %p255
      %s258 = sadd.s32 %s257, 1
      %p261 = scmp.eq.s32.totalorder %s34, 1
      %p262 = scmp.ne.s32.totalorder %s257, %s259
      %p263 = scmp.eq.s32.totalorder %s34, 0
      %p264 = por %p262, %p263
      %p265 = scmp.ne.s32.totalorder %s257, %s259
      %p266 = scmp.eq.s32.totalorder %s39, 1
      %p267 = por %p265, %p266
      %p268 = scmp.ne.s32.totalorder %s259, %s260
      %p269 = scmp.eq.s32.totalorder %s39, 0
      %p270 = por %p268, %p269
      %p271 = scmp.ne.s32.totalorder %s259, %s260
      %p272 = scmp.eq.s32.totalorder %s40, 1
      %p273 = por %p271, %p272
      %p275 = scmp.ne.s32.totalorder %s260, %s274
      %p276 = scmp.eq.s32.totalorder %s40, 0
      %p277 = por %p275, %p276
      %s279 = sadd.s32 %s278, 1
      %p282 = scmp.eq.s32.totalorder %s34, 1
      %p283 = scmp.ne.s32.totalorder %s278, %s280
      %p284 = scmp.eq.s32.totalorder %s34, 0
      %p285 = por %p283, %p284
      %p286 = scmp.ne.s32.totalorder %s278, %s280
      %p287 = scmp.eq.s32.totalorder %s39, 1
      %p288 = por %p286, %p287
      %p289 = scmp.ne.s32.totalorder %s280, %s281
      %p290 = scmp.eq.s32.totalorder %s39, 0
      %p291 = por %p289, %p290
      %p292 = scmp.ne.s32.totalorder %s280, %s281
      %p293 = scmp.eq.s32.totalorder %s40, 1
      %p294 = por %p292, %p293
      %p296 = scmp.ne.s32.totalorder %s281, %s295
      %p297 = scmp.eq.s32.totalorder %s40, 0
      %p298 = por %p296, %p297
      %s300 = sadd.s32 %s299, 1
      %p303 = scmp.eq.s32.totalorder %s34, 1
      %p304 = scmp.ne.s32.totalorder %s299, %s301
      %p305 = scmp.eq.s32.totalorder %s34, 0
      %p306 = por %p304, %p305
      %p307 = scmp.ne.s32.totalorder %s299, %s301
      %p308 = scmp.eq.s32.totalorder %s39, 1
      %p309 = por %p307, %p308
      %p310 = scmp.ne.s32.totalorder %s301, %s302
      %p311 = scmp.eq.s32.totalorder %s39, 0
      %p312 = por %p310, %p311
      %p313 = scmp.ne.s32.totalorder %s301, %s302
      %p314 = scmp.eq.s32.totalorder %s40, 1
      %p315 = por %p313, %p314
      %p317 = scmp.ne.s32.totalorder %s302, %s316
      %p318 = scmp.eq.s32.totalorder %s40, 0
      %p319 = por %p317, %p318
      %s320 = ssub.s32 %s34, %s41
      %p321 = scmp.eq.s32.totalorder %s320, 0
      %s323 = sadd.s32 %s322, 1
      %s324 = scalar_select %p321, %s322, %s323
      %p327 = pneg %p321
      %p328 = scmp.eq.s32.totalorder %s34, 1
      %p329 = por %p327, %p328
      %p330 = scmp.ne.s32.totalorder %s322, %s325
      %p331 = scmp.eq.s32.totalorder %s34, 0
      %p332 = por %p330, %p331
      %p333 = scmp.ne.s32.totalorder %s322, %s325
      %p334 = scmp.eq.s32.totalorder %s39, 1
      %p335 = por %p333, %p334
      %p336 = scmp.ne.s32.totalorder %s325, %s326
      %p337 = scmp.eq.s32.totalorder %s39, 0
      %p338 = por %p336, %p337
      %p339 = scmp.ne.s32.totalorder %s325, %s326
      %p340 = scmp.eq.s32.totalorder %s40, 1
      %p341 = por %p339, %p340
      %p343 = scmp.ne.s32.totalorder %s326, %s342
      %p344 = scmp.eq.s32.totalorder %s40, 0
      %p345 = por %p343, %p344
      %s346 = ssub.s32 %s34, %s41
      %p347 = scmp.eq.s32.totalorder %s346, 0
      %s349 = sadd.s32 %s348, 1
      %s350 = scalar_select %p347, %s348, %s349
      %p353 = pneg %p347
      %p354 = scmp.eq.s32.totalorder %s34, 1
      %p355 = por %p353, %p354
      %p356 = scmp.ne.s32.totalorder %s348, %s351
      %p357 = scmp.eq.s32.totalorder %s34, 0
      %p358 = por %p356, %p357
      %p359 = scmp.ne.s32.totalorder %s348, %s351
      %p360 = scmp.eq.s32.totalorder %s39, 1
      %p361 = por %p359, %p360
      %p362 = scmp.ne.s32.totalorder %s351, %s352
      %p363 = scmp.eq.s32.totalorder %s39, 0
      %p364 = por %p362, %p363
      %p365 = scmp.ne.s32.totalorder %s351, %s352
      %p366 = scmp.eq.s32.totalorder %s40, 1
      %p367 = por %p365, %p366
      %p369 = scmp.ne.s32.totalorder %s352, %s368
      %p370 = scmp.eq.s32.totalorder %s40, 0
      %p371 = por %p369, %p370
      %p372 = scmp.le.s32.totalorder 1, %s34
      %p373 = scmp.lt.s32.totalorder %s34, 3
      %p374 = pnand %p372, %p373
      %p375 = pneg %p374
      // Predicated region
      $region9: #{tpu_custom_call.1} parent=5 // pred_check
        _
      $region10: #{tpu_custom_call.1} parent=5 // pred_check_branch
        %377 = sbr.rel (%p374) target = $region12
      $region11: #{tpu_custom_call.1} parent=5 // pred_region
        %s378 = ssub.s32 %s34, 1
        // Predicated region
        $region13: #{tpu_custom_call.1} parent=11 // pred_check
          %p379 = pneg %p81
        $region14: #{tpu_custom_call.1} parent=11 // pred_check_branch
          %381 = sbr.rel (%p379) target = $region16
        $region15: #{tpu_custom_call.1} parent=11 // pred_region
          %s383 = ssub.s32 256, 256
          %384 = vsyncadd [#allocation8], %s383
          %s386 = sshll.u32 [#allocation7], 4
          %s387 = int_to_ptr.vmem [resolvable:$true] %s386
          %389 = dma.hbm_to_vmem [thread:$0]  %s1, 256, %s387, [#allocation8]
        $region16: #{tpu_custom_call.1} parent=11 // pred_fallthru
          _
        // Predicated region
        $region17: #{tpu_custom_call.1} parent=11 // pred_check
          %p390 = pneg %p102
        $region18: #{tpu_custom_call.1} parent=11 // pred_check_branch
          %392 = sbr.rel (%p390) target = $region20
        $region19: #{tpu_custom_call.1} parent=11 // pred_region
          %s394 = ssub.s32 256, 256
          %395 = vsyncadd [#allocation11], %s394
          %s397 = sshll.u32 [#allocation10], 4
          %s398 = int_to_ptr.vmem [resolvable:$true] %s397
          %400 = dma.hbm_to_vmem [thread:$0]  %s2, 256, %s398, [#allocation11]
        $region20: #{tpu_custom_call.1} parent=11 // pred_fallthru
          _
        // Predicated region
        $region21: #{tpu_custom_call.1} parent=11 // pred_check
          %p401 = pneg %p123
        $region22: #{tpu_custom_call.1} parent=11 // pred_check_branch
          %403 = sbr.rel (%p401) target = $region24
        $region23: #{tpu_custom_call.1} parent=11 // pred_region
          %s405 = ssub.s32 128, 128
          %406 = vsyncadd [#allocation11], %s405
          %s408 = sshll.u32 [#allocation12], 4
          %s409 = int_to_ptr.vmem [resolvable:$true] %s408
          %411 = dma.hbm_to_vmem [thread:$0]  %s4, 128, %s409, [#allocation11]
        $region24: #{tpu_custom_call.1} parent=11 // pred_fallthru
          _
        // Predicated region
        $region25: #{tpu_custom_call.1} parent=11 // pred_check
          %p412 = pneg %p144
        $region26: #{tpu_custom_call.1} parent=11 // pred_check_branch
          %414 = sbr.rel (%p412) target = $region28
        $region27: #{tpu_custom_call.1} parent=11 // pred_region
          %s416 = ssub.s32 128, 128
          %417 = vsyncadd [#allocation14], %s416
          %s419 = sshll.u32 [#allocation13], 4
          %s420 = int_to_ptr.vmem [resolvable:$true] %s419
          %422 = dma.hbm_to_vmem [thread:$0]  %s5, 128, %s420, [#allocation14]
        $region28: #{tpu_custom_call.1} parent=11 // pred_fallthru
          _
        // Predicated region
        $region29: #{tpu_custom_call.1} parent=11 // pred_check
          %p423 = pneg %p165
        $region30: #{tpu_custom_call.1} parent=11 // pred_check_branch
          %425 = sbr.rel (%p423) target = $region32
        $region31: #{tpu_custom_call.1} parent=11 // pred_region
          %s427 = ssub.s32 64, 64
          %428 = vsyncadd [#allocation14], %s427
          %s430 = sshll.u32 [#allocation15], 4
          %s431 = int_to_ptr.vmem [resolvable:$true] %s430
          %433 = dma.hbm_to_vmem [thread:$0]  %s7, 64, %s431, [#allocation14]
        $region32: #{tpu_custom_call.1} parent=11 // pred_fallthru
          _
        // Predicated region
        $region33: #{tpu_custom_call.1} parent=11 // pred_check
          %p434 = pneg %p186
        $region34: #{tpu_custom_call.1} parent=11 // pred_check_branch
          %436 = sbr.rel (%p434) target = $region36
        $region35: #{tpu_custom_call.1} parent=11 // pred_region
          %s438 = ssub.s32 64, 64
          %439 = vsyncadd [#allocation17], %s438
          %s441 = sshll.u32 [#allocation16], 4
          %s442 = int_to_ptr.vmem [resolvable:$true] %s441
          %444 = dma.hbm_to_vmem [thread:$0]  %s8, 64, %s442, [#allocation17]
        $region36: #{tpu_custom_call.1} parent=11 // pred_fallthru
          _
        // Predicated region
        $region37: #{tpu_custom_call.1} parent=11 // pred_check
          %p445 = pneg %p207
        $region38: #{tpu_custom_call.1} parent=11 // pred_check_branch
          %447 = sbr.rel (%p445) target = $region40
        $region39: #{tpu_custom_call.1} parent=11 // pred_region
          %s449 = ssub.s32 32, 32
          %450 = vsyncadd [#allocation17], %s449
          %s452 = sshll.u32 [#allocation18], 4
          %s453 = int_to_ptr.vmem [resolvable:$true] %s452
          %455 = dma.hbm_to_vmem [thread:$0]  %s10, 32, %s453, [#allocation17]
        $region40: #{tpu_custom_call.1} parent=11 // pred_fallthru
          _
        // Predicated region
        $region41: #{tpu_custom_call.1} parent=11 // pred_check
          %p456 = pneg %p228
        $region42: #{tpu_custom_call.1} parent=11 // pred_check_branch
          %458 = sbr.rel (%p456) target = $region44
        $region43: #{tpu_custom_call.1} parent=11 // pred_region
          %s460 = ssub.s32 16, 16
          %461 = vsyncadd [#allocation20], %s460
          %s463 = sshll.u32 [#allocation19], 4
          %s464 = int_to_ptr.vmem [resolvable:$true] %s463
          %466 = dma.hbm_to_vmem [thread:$0]  %s12, 16, %s464, [#allocation20]
        $region44: #{tpu_custom_call.1} parent=11 // pred_fallthru
          _
        // Predicated region
        $region45: #{tpu_custom_call.1} parent=11 // pred_check
          %p467 = pneg %p249
        $region46: #{tpu_custom_call.1} parent=11 // pred_check_branch
          %469 = sbr.rel (%p467) target = $region48
        $region47: #{tpu_custom_call.1} parent=11 // pred_region
          _
        $region48: #{tpu_custom_call.1} parent=11 // pred_fallthru
          _
        // Predicated region
        $region49: #{tpu_custom_call.1} parent=11 // pred_check
          %p470 = pneg %p270
        $region50: #{tpu_custom_call.1} parent=11 // pred_check_branch
          %472 = sbr.rel (%p470) target = $region52
        $region51: #{tpu_custom_call.1} parent=11 // pred_region
          %s474 = ssub.s32 16, 16
          %475 = vsyncadd [#allocation20], %s474
          %s477 = sshll.u32 [#allocation21], 4
          %s478 = int_to_ptr.vmem [resolvable:$true] %s477
          %480 = dma.hbm_to_vmem [thread:$0]  %s14, 16, %s478, [#allocation20]
        $region52: #{tpu_custom_call.1} parent=11 // pred_fallthru
          _
        // Predicated region
        $region53: #{tpu_custom_call.1} parent=11 // pred_check
          %p481 = pneg %p291
        $region54: #{tpu_custom_call.1} parent=11 // pred_check_branch
          %483 = sbr.rel (%p481) target = $region56
        $region55: #{tpu_custom_call.1} parent=11 // pred_region
          %s485 = ssub.s32 16, 16
          %486 = vsyncadd [#allocation23], %s485
          %s488 = sshll.u32 [#allocation22], 4
          %s489 = int_to_ptr.vmem [resolvable:$true] %s488
          %491 = dma.hbm_to_vmem [thread:$0]  %s15, 16, %s489, [#allocation23]
        $region56: #{tpu_custom_call.1} parent=11 // pred_fallthru
          _
        // Predicated region
        $region57: #{tpu_custom_call.1} parent=11 // pred_check
          %p492 = pneg %p312
        $region58: #{tpu_custom_call.1} parent=11 // pred_check_branch
          %494 = sbr.rel (%p492) target = $region60
        $region59: #{tpu_custom_call.1} parent=11 // pred_region
          %s496 = ssub.s32 16, 16
          %497 = vsyncadd [#allocation23], %s496
          %s499 = sshll.u32 [#allocation24], 4
          %s500 = int_to_ptr.vmem [resolvable:$true] %s499
          %502 = dma.hbm_to_vmem [thread:$0]  %s16, 16, %s500, [#allocation23]
        $region60: #{tpu_custom_call.1} parent=11 // pred_fallthru
          _
      $region12: #{tpu_custom_call.1} parent=5 // pred_fallthru
        _
      %p503 = scmp.lt.s32.totalorder %s34, 2
      // Predicated region
      $region61: #{tpu_custom_call.1} parent=5 // pred_check
        %p504 = pneg %p503
      $region62: #{tpu_custom_call.1} parent=5 // pred_check_branch
        %506 = sbr.rel (%p504) target = $region64
      $region63: #{tpu_custom_call.1} parent=5 // pred_region
        // Predicated region
        $region65: #{tpu_custom_call.1} parent=63 // pred_check
          %p507 = pneg %p54
        $region66: #{tpu_custom_call.1} parent=63 // pred_check_branch
          %509 = sbr.rel (%p507) target = $region68
        $region67: #{tpu_custom_call.1} parent=63 // pred_region
          %p510 = scmp.lt.s32.totalorder %s34, 1
          %s511 = scalar_select %p510, %s34, 1
          %s512 = smul.addr %s511, 8
          %s513 = scalar_lea.vmem %s0, %s512
        $region68: #{tpu_custom_call.1} parent=63 // pred_fallthru
          _
      $region64: #{tpu_custom_call.1} parent=5 // pred_fallthru
        _
      %p514 = scmp.le.s32.totalorder 1, %s34
      %p515 = scmp.lt.s32.totalorder %s34, 3
      %p516 = pnand %p514, %p515
      %p517 = pneg %p516
      // Predicated region
      $region69: #{tpu_custom_call.1} parent=5 // pred_check
        _
      $region70: #{tpu_custom_call.1} parent=5 // pred_check_branch
        %519 = sbr.rel (%p516) target = $region72
      $region71: #{tpu_custom_call.1} parent=5 // pred_region
        %s520 = ssub.s32 %s34, 1
        // Predicated region
        $region73: #{tpu_custom_call.1} parent=71 // pred_check
          %p521 = pneg %p81
        $region74: #{tpu_custom_call.1} parent=71 // pred_check_branch
          %523 = sbr.rel (%p521) target = $region76
        $region75: #{tpu_custom_call.1} parent=71 // pred_region
          %524 = dma.done [#allocation8], 256
        $region76: #{tpu_custom_call.1} parent=71 // pred_fallthru
          _
        // Predicated region
        $region77: #{tpu_custom_call.1} parent=71 // pred_check
          %p525 = pneg %p102
        $region78: #{tpu_custom_call.1} parent=71 // pred_check_branch
          %527 = sbr.rel (%p525) target = $region80
        $region79: #{tpu_custom_call.1} parent=71 // pred_region
          %528 = dma.done [#allocation11], 256
        $region80: #{tpu_custom_call.1} parent=71 // pred_fallthru
          _
        // Predicated region
        $region81: #{tpu_custom_call.1} parent=71 // pred_check
          %p529 = pneg %p123
        $region82: #{tpu_custom_call.1} parent=71 // pred_check_branch
          %531 = sbr.rel (%p529) target = $region84
        $region83: #{tpu_custom_call.1} parent=71 // pred_region
          %532 = dma.done [#allocation11], 128
        $region84: #{tpu_custom_call.1} parent=71 // pred_fallthru
          _
        // Predicated region
        $region85: #{tpu_custom_call.1} parent=71 // pred_check
          %p533 = pneg %p144
        $region86: #{tpu_custom_call.1} parent=71 // pred_check_branch
          %535 = sbr.rel (%p533) target = $region88
        $region87: #{tpu_custom_call.1} parent=71 // pred_region
          %536 = dma.done [#allocation14], 128
        $region88: #{tpu_custom_call.1} parent=71 // pred_fallthru
          _
        // Predicated region
        $region89: #{tpu_custom_call.1} parent=71 // pred_check
          %p537 = pneg %p165
        $region90: #{tpu_custom_call.1} parent=71 // pred_check_branch
          %539 = sbr.rel (%p537) target = $region92
        $region91: #{tpu_custom_call.1} parent=71 // pred_region
          %540 = dma.done [#allocation14], 64
        $region92: #{tpu_custom_call.1} parent=71 // pred_fallthru
          _
        // Predicated region
        $region93: #{tpu_custom_call.1} parent=71 // pred_check
          %p541 = pneg %p186
        $region94: #{tpu_custom_call.1} parent=71 // pred_check_branch
          %543 = sbr.rel (%p541) target = $region96
        $region95: #{tpu_custom_call.1} parent=71 // pred_region
          %544 = dma.done [#allocation17], 64
        $region96: #{tpu_custom_call.1} parent=71 // pred_fallthru
          _
        // Predicated region
        $region97: #{tpu_custom_call.1} parent=71 // pred_check
          %p545 = pneg %p207
        $region98: #{tpu_custom_call.1} parent=71 // pred_check_branch
          %547 = sbr.rel (%p545) target = $region100
        $region99: #{tpu_custom_call.1} parent=71 // pred_region
          %548 = dma.done [#allocation17], 32
        $region100: #{tpu_custom_call.1} parent=71 // pred_fallthru
          _
        // Predicated region
        $region101: #{tpu_custom_call.1} parent=71 // pred_check
          %p549 = pneg %p228
        $region102: #{tpu_custom_call.1} parent=71 // pred_check_branch
          %551 = sbr.rel (%p549) target = $region104
        $region103: #{tpu_custom_call.1} parent=71 // pred_region
          %552 = dma.done [#allocation20], 16
        $region104: #{tpu_custom_call.1} parent=71 // pred_fallthru
          _
        // Predicated region
        $region105: #{tpu_custom_call.1} parent=71 // pred_check
          %p553 = pneg %p270
        $region106: #{tpu_custom_call.1} parent=71 // pred_check_branch
          %555 = sbr.rel (%p553) target = $region108
        $region107: #{tpu_custom_call.1} parent=71 // pred_region
          %556 = dma.done [#allocation20], 16
        $region108: #{tpu_custom_call.1} parent=71 // pred_fallthru
          _
        // Predicated region
        $region109: #{tpu_custom_call.1} parent=71 // pred_check
          %p557 = pneg %p291
        $region110: #{tpu_custom_call.1} parent=71 // pred_check_branch
          %559 = sbr.rel (%p557) target = $region112
        $region111: #{tpu_custom_call.1} parent=71 // pred_region
          %560 = dma.done [#allocation23], 16
        $region112: #{tpu_custom_call.1} parent=71 // pred_fallthru
          _
        // Predicated region
        $region113: #{tpu_custom_call.1} parent=71 // pred_check
          %p561 = pneg %p312
        $region114: #{tpu_custom_call.1} parent=71 // pred_check_branch
          %563 = sbr.rel (%p561) target = $region116
        $region115: #{tpu_custom_call.1} parent=71 // pred_region
          %564 = dma.done [#allocation23], 16
        $region116: #{tpu_custom_call.1} parent=71 // pred_fallthru
          _
        %p565 = scmp.lt.s32.totalorder %s39, 1
        %s566 = scalar_select %p565, %s39, 1
        %s567 = smul.addr %s566, 8
        %s568 = scalar_lea.vmem %s0, %s567
        %p569 = pneg %p60
        %p570 = pneg %p57
        %p571 = pneg %p81
        %p572 = pneg %p78
        %p573 = pneg %p102
        %p574 = pneg %p99
        %p575 = pneg %p123
        %p576 = pneg %p120
        %p577 = pneg %p144
        %p578 = pneg %p141
        %p579 = pneg %p165
        %p580 = pneg %p162
        %p581 = pneg %p186
        %p582 = pneg %p183
        %p583 = pneg %p207
        %p584 = pneg %p204
        %p585 = pneg %p228
        %p586 = pneg %p225
        %p587 = pneg %p249
        %p588 = pneg %p246
        %p589 = pneg %p270
        %p590 = pneg %p267
        %p591 = pneg %p291
        %p592 = pneg %p288
        %p593 = pneg %p312
        %p594 = pneg %p309
        %p595 = pneg %p338
        %p596 = pneg %p335
        %s597 = sand.u32 %s325, 1
        %s598 = scalar_lea.sflag [#allocation9], %s597
        %s599 = sand.u32 %s325, 1
        %s600 = smul.addr %s599, 8
        %s601 = scalar_lea.vmem [#allocation25], %s600
        %p602 = pneg %p364
        %p603 = pneg %p361
        %p604 = scmp.lt.s32.totalorder %s39, 1
        %s605 = scalar_select %p604, %s39, 1
        %s606 = smul.addr %s605, 8
        %s607 = scalar_lea.vmem %s18, %s606
        %p608 = scmp.lt.s32.totalorder %s39, 1
        %s609 = scalar_select %p608, %s39, 1
        %s610 = smul.addr %s609, 8
        %s611 = scalar_lea.vmem %s0, %s610
        %p612 = scmp.lt.s32.totalorder %s39, 1
        %s613 = scalar_select %p612, %s39, 1
        %s614 = smul.addr %s613, 8
        %s615 = scalar_lea.vmem %s18, %s614
        %p617 = scmp.eq.s32.totalorder %s39, 0
        // Predicated region
        $region117: #{tpu_custom_call.1} parent=71 // pred_check
          %p618 = pneg %p617
        $region118: #{tpu_custom_call.1} parent=71 // pred_check_branch
          %620 = sbr.rel (%p618) target = $region120
        $region119: #{tpu_custom_call.1} parent=71 // pred_region
          // Predicated region
          $region121: #{tpu_custom_call.1} parent=119 // pred_check
            _
          $region122: #{tpu_custom_call.1} parent=119 // pred_check_branch
            %622 = sbr.rel target = $region124
          $region123: #{tpu_custom_call.1} parent=119 // pred_region
            %623 = sst [smem:[#allocation28]] [#allocation27]
            %624 = sst [smem:[#allocation29]] [#allocation26]
          $region124: #{tpu_custom_call.1} parent=119 // pred_fallthru
            _
          %626 = shalt.err (0)
          %s628 = sshll.u32 [#allocation2], 4
          %s629 = int_to_ptr.vmem [resolvable:$true] %s628
          %631 = dma.hbm_to_vmem [thread:$0]  %s3, 16384, %s629, [#allocation6]
          %s632 = scalar_lea.hbm %s3, 16384
          %s633 = scalar_lea.vmem [#allocation2], 1024
          %s634 = scalar_lea.sflag [#allocation6], 1
          // Predicated region
          $region125: #{tpu_custom_call.1} parent=119 // pred_check
            _
          $region126: #{tpu_custom_call.1} parent=119 // pred_check_branch
            %636 = sbr.rel target = $region128
          $region127: #{tpu_custom_call.1} parent=119 // pred_region
            %637 = sst [smem:[#allocation28]] [#allocation31]
            %638 = sst [smem:[#allocation29]] [#allocation30]
          $region128: #{tpu_custom_call.1} parent=119 // pred_fallthru
            _
          %640 = shalt.err (0)
          %s642 = sshll.u32 %s633, 4
          %s643 = int_to_ptr.vmem [resolvable:$true] %s642
          %645 = dma.hbm_to_vmem [thread:$0]  %s632, 16384, %s643, %s634
          %s646 = scalar_lea.hbm %s3, 32768
          %s647 = scalar_lea.vmem [#allocation2], 2048
          %s648 = scalar_lea.sflag [#allocation6], 2
          // Predicated region
          $region129: #{tpu_custom_call.1} parent=119 // pred_check
            _
          $region130: #{tpu_custom_call.1} parent=119 // pred_check_branch
            %650 = sbr.rel target = $region132
          $region131: #{tpu_custom_call.1} parent=119 // pred_region
            %651 = sst [smem:[#allocation28]] [#allocation33]
            %652 = sst [smem:[#allocation29]] [#allocation32]
          $region132: #{tpu_custom_call.1} parent=119 // pred_fallthru
            _
          %654 = shalt.err (0)
          %s656 = sshll.u32 %s647, 4
          %s657 = int_to_ptr.vmem [resolvable:$true] %s656
          %659 = dma.hbm_to_vmem [thread:$0]  %s646, 16384, %s657, %s648
          %s660 = scalar_lea.hbm %s3, 49152
          %s661 = scalar_lea.vmem [#allocation2], 3072
          %s662 = scalar_lea.sflag [#allocation6], 3
          // Predicated region
          $region133: #{tpu_custom_call.1} parent=119 // pred_check
            _
          $region134: #{tpu_custom_call.1} parent=119 // pred_check_branch
            %664 = sbr.rel target = $region136
          $region135: #{tpu_custom_call.1} parent=119 // pred_region
            %665 = sst [smem:[#allocation28]] [#allocation35]
            %666 = sst [smem:[#allocation29]] [#allocation34]
          $region136: #{tpu_custom_call.1} parent=119 // pred_fallthru
            _
          %668 = shalt.err (0)
          %s670 = sshll.u32 %s661, 4
          %s671 = int_to_ptr.vmem [resolvable:$true] %s670
          %673 = dma.hbm_to_vmem [thread:$0]  %s660, 16384, %s671, %s662
        $region120: #{tpu_custom_call.1} parent=71 // pred_fallthru
          _
        %v674 = vld [vmem:[%s611] sm:$0xff]
        %v675 = vld [vmem:[#allocation7] sm:$0xff]
        %v676 = vld [vmem:[#allocation7 + $0x8] sm:$0xff]
        %v677 = vunpack.c.l.bf16 %v675
        %v678 = vunpack.c.h.bf16 %v675
        %v679 = vunpack.c.l.bf16 %v676
        %v680 = vunpack.c.h.bf16 %v676
        %682 = vset.pattern.permute.xlu0 0
        %683 = vperm.xlu0 %682, %v674
        %v684 = vpop.permute.xlu0 %683
        %v690 = vlaneseq
        %v691 = vshrl.u32 %v690, 7
        %v692 = vsub.s32 0, %v691
        %v693 = vrot.slane %v677, %v692
        %v694 = vlaneseq
        %v695 = vshrl.u32 %v694, 7
        %v696 = vsub.s32 2, %v695
        %v697 = vrot.slane %v677, %v696
        %v698 = vlaneseq
        %v699 = vshrl.u32 %v698, 7
        %v700 = vsub.s32 4, %v699
        %v701 = vrot.slane %v677, %v700
        %v702 = vlaneseq
        %v703 = vshrl.u32 %v702, 7
        %v704 = vsub.s32 6, %v703
        %v705 = vrot.slane %v677, %v704
        %v706 = vlaneseq
        %v707 = vshrl.u32 %v706, 7
        %v708 = vsub.s32 0, %v707
        %v709 = vrot.slane %v678, %v708
        %v710 = vlaneseq
        %v711 = vshrl.u32 %v710, 7
        %v712 = vsub.s32 2, %v711
        %v713 = vrot.slane %v678, %v712
        %v714 = vlaneseq
        %v715 = vshrl.u32 %v714, 7
        %v716 = vsub.s32 4, %v715
        %v717 = vrot.slane %v678, %v716
        %v718 = vlaneseq
        %v719 = vshrl.u32 %v718, 7
        %v720 = vsub.s32 6, %v719
        %v721 = vrot.slane %v678, %v720
        %v722 = vlaneseq
        %v723 = vshrl.u32 %v722, 7
        %v724 = vsub.s32 0, %v723
        %v725 = vrot.slane %v679, %v724
        %v726 = vlaneseq
        %v727 = vshrl.u32 %v726, 7
        %v728 = vsub.s32 2, %v727
        %v729 = vrot.slane %v679, %v728
        %v730 = vlaneseq
        %v731 = vshrl.u32 %v730, 7
        %v732 = vsub.s32 4, %v731
        %v733 = vrot.slane %v679, %v732
        %v734 = vlaneseq
        %v735 = vshrl.u32 %v734, 7
        %v736 = vsub.s32 6, %v735
        %v737 = vrot.slane %v679, %v736
        %v738 = vlaneseq
        %v739 = vshrl.u32 %v738, 7
        %v740 = vsub.s32 0, %v739
        %v741 = vrot.slane %v680, %v740
        %v742 = vlaneseq
        %v743 = vshrl.u32 %v742, 7
        %v744 = vsub.s32 2, %v743
        %v745 = vrot.slane %v680, %v744
        %v746 = vlaneseq
        %v747 = vshrl.u32 %v746, 7
        %v748 = vsub.s32 4, %v747
        %v749 = vrot.slane %v680, %v748
        %v750 = vlaneseq
        %v751 = vshrl.u32 %v750, 7
        %v752 = vsub.s32 6, %v751
        %v753 = vrot.slane %v680, %v752
        %v770 = vlaneseq
        %v771 = vshrl.u32 %v770, 7
        %v772 = vsub.s32 0, %v771
        %v773 = vrot.slane %v693, %v772
        %v774 = vlaneseq
        %v775 = vshrl.u32 %v774, 7
        %v776 = vsub.s32 0, %v775
        %v777 = vrot.slane %v697, %v776
        %v778 = vlaneseq
        %v779 = vshrl.u32 %v778, 7
        %v780 = vsub.s32 0, %v779
        %v781 = vrot.slane %v701, %v780
        %v782 = vlaneseq
        %v783 = vshrl.u32 %v782, 7
        %v784 = vsub.s32 0, %v783
        %v785 = vrot.slane %v705, %v784
        %v786 = vlaneseq
        %v787 = vshrl.u32 %v786, 7
        %v788 = vsub.s32 0, %v787
        %v789 = vrot.slane %v709, %v788
        %v790 = vlaneseq
        %v791 = vshrl.u32 %v790, 7
        %v792 = vsub.s32 0, %v791
        %v793 = vrot.slane %v713, %v792
        %v794 = vlaneseq
        %v795 = vshrl.u32 %v794, 7
        %v796 = vsub.s32 0, %v795
        %v797 = vrot.slane %v717, %v796
        %v798 = vlaneseq
        %v799 = vshrl.u32 %v798, 7
        %v800 = vsub.s32 0, %v799
        %v801 = vrot.slane %v721, %v800
        %v802 = vlaneseq
        %v803 = vshrl.u32 %v802, 7
        %v804 = vsub.s32 0, %v803
        %v805 = vrot.slane %v725, %v804
        %v806 = vlaneseq
        %v807 = vshrl.u32 %v806, 7
        %v808 = vsub.s32 0, %v807
        %v809 = vrot.slane %v729, %v808
        %v810 = vlaneseq
        %v811 = vshrl.u32 %v810, 7
        %v812 = vsub.s32 0, %v811
        %v813 = vrot.slane %v733, %v812
        %v814 = vlaneseq
        %v815 = vshrl.u32 %v814, 7
        %v816 = vsub.s32 0, %v815
        %v817 = vrot.slane %v737, %v816
        %v818 = vlaneseq
        %v819 = vshrl.u32 %v818, 7
        %v820 = vsub.s32 0, %v819
        %v821 = vrot.slane %v741, %v820
        %v822 = vlaneseq
        %v823 = vshrl.u32 %v822, 7
        %v824 = vsub.s32 0, %v823
        %v825 = vrot.slane %v745, %v824
        %v826 = vlaneseq
        %v827 = vshrl.u32 %v826, 7
        %v828 = vsub.s32 0, %v827
        %v829 = vrot.slane %v749, %v828
        %v830 = vlaneseq
        %v831 = vshrl.u32 %v830, 7
        %v832 = vsub.s32 0, %v831
        %v833 = vrot.slane %v753, %v832
        %v834 = vmul.f32 %v684, %v773
        %v835 = vmul.f32 %v684, %v777
        %v836 = vmul.f32 %v684, %v781
        %v837 = vmul.f32 %v684, %v785
        %v838 = vmul.f32 %v684, %v789
        %v839 = vmul.f32 %v684, %v793
        %v840 = vmul.f32 %v684, %v797
        %v841 = vmul.f32 %v684, %v801
        %v842 = vmul.f32 %v684, %v805
        %v843 = vmul.f32 %v684, %v809
        %v844 = vmul.f32 %v684, %v813
        %v845 = vmul.f32 %v684, %v817
        %v846 = vmul.f32 %v684, %v821
        %v847 = vmul.f32 %v684, %v825
        %v848 = vmul.f32 %v684, %v829
        %v849 = vmul.f32 %v684, %v833
        %850 = vset.pattern.permute.xlu0 1
        %851 = vperm.xlu0 %850, %v674
        %v852 = vpop.permute.xlu0 %851
        %v854 = vlaneseq
        %v855 = vshrl.u32 %v854, 7
        %v856 = vsub.s32 1, %v855
        %v857 = vrot.slane %v677, %v856
        %v858 = vlaneseq
        %v859 = vshrl.u32 %v858, 7
        %v860 = vsub.s32 3, %v859
        %v861 = vrot.slane %v677, %v860
        %v862 = vlaneseq
        %v863 = vshrl.u32 %v862, 7
        %v864 = vsub.s32 5, %v863
        %v865 = vrot.slane %v677, %v864
        %v866 = vlaneseq
        %v867 = vshrl.u32 %v866, 7
        %v868 = vsub.s32 7, %v867
        %v869 = vrot.slane %v677, %v868
        %v870 = vlaneseq
        %v871 = vshrl.u32 %v870, 7
        %v872 = vsub.s32 1, %v871
        %v873 = vrot.slane %v678, %v872
        %v874 = vlaneseq
        %v875 = vshrl.u32 %v874, 7
        %v876 = vsub.s32 3, %v875
        %v877 = vrot.slane %v678, %v876
        %v878 = vlaneseq
        %v879 = vshrl.u32 %v878, 7
        %v880 = vsub.s32 5, %v879
        %v881 = vrot.slane %v678, %v880
        %v882 = vlaneseq
        %v883 = vshrl.u32 %v882, 7
        %v884 = vsub.s32 7, %v883
        %v885 = vrot.slane %v678, %v884
        %v886 = vlaneseq
        %v887 = vshrl.u32 %v886, 7
        %v888 = vsub.s32 1, %v887
        %v889 = vrot.slane %v679, %v888
        %v890 = vlaneseq
        %v891 = vshrl.u32 %v890, 7
        %v892 = vsub.s32 3, %v891
        %v893 = vrot.slane %v679, %v892
        %v894 = vlaneseq
        %v895 = vshrl.u32 %v894, 7
        %v896 = vsub.s32 5, %v895
        %v897 = vrot.slane %v679, %v896
        %v898 = vlaneseq
        %v899 = vshrl.u32 %v898, 7
        %v900 = vsub.s32 7, %v899
        %v901 = vrot.slane %v679, %v900
        %v902 = vlaneseq
        %v903 = vshrl.u32 %v902, 7
        %v904 = vsub.s32 1, %v903
        %v905 = vrot.slane %v680, %v904
        %v906 = vlaneseq
        %v907 = vshrl.u32 %v906, 7
        %v908 = vsub.s32 3, %v907
        %v909 = vrot.slane %v680, %v908
        %v910 = vlaneseq
        %v911 = vshrl.u32 %v910, 7
        %v912 = vsub.s32 5, %v911
        %v913 = vrot.slane %v680, %v912
        %v914 = vlaneseq
        %v915 = vshrl.u32 %v914, 7
        %v916 = vsub.s32 7, %v915
        %v917 = vrot.slane %v680, %v916
        %v934 = vlaneseq
        %v935 = vshrl.u32 %v934, 7
        %v936 = vsub.s32 1, %v935
        %v937 = vrot.slane %v857, %v936
        %v938 = vlaneseq
        %v939 = vshrl.u32 %v938, 7
        %v940 = vsub.s32 1, %v939
        %v941 = vrot.slane %v861, %v940
        %v942 = vlaneseq
        %v943 = vshrl.u32 %v942, 7
        %v944 = vsub.s32 1, %v943
        %v945 = vrot.slane %v865, %v944
        %v946 = vlaneseq
        %v947 = vshrl.u32 %v946, 7
        %v948 = vsub.s32 1, %v947
        %v949 = vrot.slane %v869, %v948
        %v950 = vlaneseq
        %v951 = vshrl.u32 %v950, 7
        %v952 = vsub.s32 1, %v951
        %v953 = vrot.slane %v873, %v952
        %v954 = vlaneseq
        %v955 = vshrl.u32 %v954, 7
        %v956 = vsub.s32 1, %v955
        %v957 = vrot.slane %v877, %v956
        %v958 = vlaneseq
        %v959 = vshrl.u32 %v958, 7
        %v960 = vsub.s32 1, %v959
        %v961 = vrot.slane %v881, %v960
        %v962 = vlaneseq
        %v963 = vshrl.u32 %v962, 7
        %v964 = vsub.s32 1, %v963
        %v965 = vrot.slane %v885, %v964
        %v966 = vlaneseq
        %v967 = vshrl.u32 %v966, 7
        %v968 = vsub.s32 1, %v967
        %v969 = vrot.slane %v889, %v968
        %v970 = vlaneseq
        %v971 = vshrl.u32 %v970, 7
        %v972 = vsub.s32 1, %v971
        %v973 = vrot.slane %v893, %v972
        %v974 = vlaneseq
        %v975 = vshrl.u32 %v974, 7
        %v976 = vsub.s32 1, %v975
        %v977 = vrot.slane %v897, %v976
        %v978 = vlaneseq
        %v979 = vshrl.u32 %v978, 7
        %v980 = vsub.s32 1, %v979
        %v981 = vrot.slane %v901, %v980
        %v982 = vlaneseq
        %v983 = vshrl.u32 %v982, 7
        %v984 = vsub.s32 1, %v983
        %v985 = vrot.slane %v905, %v984
        %v986 = vlaneseq
        %v987 = vshrl.u32 %v986, 7
        %v988 = vsub.s32 1, %v987
        %v989 = vrot.slane %v909, %v988
        %v990 = vlaneseq
        %v991 = vshrl.u32 %v990, 7
        %v992 = vsub.s32 1, %v991
        %v993 = vrot.slane %v913, %v992
        %v994 = vlaneseq
        %v995 = vshrl.u32 %v994, 7
        %v996 = vsub.s32 1, %v995
        %v997 = vrot.slane %v917, %v996
        %v998 = vmul.f32 %v852, %v937
        %v999 = vmul.f32 %v852, %v941
        %v1000 = vmul.f32 %v852, %v945
        %v1001 = vmul.f32 %v852, %v949
        %v1002 = vmul.f32 %v852, %v953
        %v1003 = vmul.f32 %v852, %v957
        %v1004 = vmul.f32 %v852, %v961
        %v1005 = vmul.f32 %v852, %v965
        %v1006 = vmul.f32 %v852, %v969
        %v1007 = vmul.f32 %v852, %v973
        %v1008 = vmul.f32 %v852, %v977
        %v1009 = vmul.f32 %v852, %v981
        %v1010 = vmul.f32 %v852, %v985
        %v1011 = vmul.f32 %v852, %v989
        %v1012 = vmul.f32 %v852, %v993
        %v1013 = vmul.f32 %v852, %v997
        %v1014 = vadd.f32 %v834, %v998
        %v1015 = vadd.f32 %v835, %v999
        %v1016 = vadd.f32 %v836, %v1000
        %v1017 = vadd.f32 %v837, %v1001
        %v1018 = vadd.f32 %v838, %v1002
        %v1019 = vadd.f32 %v839, %v1003
        %v1020 = vadd.f32 %v840, %v1004
        %v1021 = vadd.f32 %v841, %v1005
        %v1022 = vadd.f32 %v842, %v1006
        %v1023 = vadd.f32 %v843, %v1007
        %v1024 = vadd.f32 %v844, %v1008
        %v1025 = vadd.f32 %v845, %v1009
        %v1026 = vadd.f32 %v846, %v1010
        %v1027 = vadd.f32 %v847, %v1011
        %v1028 = vadd.f32 %v848, %v1012
        %v1029 = vadd.f32 %v849, %v1013
        %v1030 = vld [vmem:[#allocation10] sm:$0xff]
        %v1031 = vld [vmem:[#allocation10 + $0x8] sm:$0xff]
        %v1034 = vlaneseq
        %v1035 = vshrl.u32 %v1034, 7
        %v1036 = vsub.s32 0, %v1035
        %v1037 = vrot.slane %v1030, %v1036
        %v1038 = vlaneseq
        %v1039 = vshrl.u32 %v1038, 7
        %v1040 = vsub.s32 1, %v1039
        %v1041 = vrot.slane %v1030, %v1040
        %v1042 = vlaneseq
        %v1043 = vshrl.u32 %v1042, 7
        %v1044 = vsub.s32 2, %v1043
        %v1045 = vrot.slane %v1030, %v1044
        %v1046 = vlaneseq
        %v1047 = vshrl.u32 %v1046, 7
        %v1048 = vsub.s32 3, %v1047
        %v1049 = vrot.slane %v1030, %v1048
        %v1050 = vlaneseq
        %v1051 = vshrl.u32 %v1050, 7
        %v1052 = vsub.s32 4, %v1051
        %v1053 = vrot.slane %v1030, %v1052
        %v1054 = vlaneseq
        %v1055 = vshrl.u32 %v1054, 7
        %v1056 = vsub.s32 5, %v1055
        %v1057 = vrot.slane %v1030, %v1056
        %v1058 = vlaneseq
        %v1059 = vshrl.u32 %v1058, 7
        %v1060 = vsub.s32 6, %v1059
        %v1061 = vrot.slane %v1030, %v1060
        %v1062 = vlaneseq
        %v1063 = vshrl.u32 %v1062, 7
        %v1064 = vsub.s32 7, %v1063
        %v1065 = vrot.slane %v1030, %v1064
        %v1066 = vlaneseq
        %v1067 = vshrl.u32 %v1066, 7
        %v1068 = vsub.s32 0, %v1067
        %v1069 = vrot.slane %v1031, %v1068
        %v1070 = vlaneseq
        %v1071 = vshrl.u32 %v1070, 7
        %v1072 = vsub.s32 1, %v1071
        %v1073 = vrot.slane %v1031, %v1072
        %v1074 = vlaneseq
        %v1075 = vshrl.u32 %v1074, 7
        %v1076 = vsub.s32 2, %v1075
        %v1077 = vrot.slane %v1031, %v1076
        %v1078 = vlaneseq
        %v1079 = vshrl.u32 %v1078, 7
        %v1080 = vsub.s32 3, %v1079
        %v1081 = vrot.slane %v1031, %v1080
        %v1082 = vlaneseq
        %v1083 = vshrl.u32 %v1082, 7
        %v1084 = vsub.s32 4, %v1083
        %v1085 = vrot.slane %v1031, %v1084
        %v1086 = vlaneseq
        %v1087 = vshrl.u32 %v1086, 7
        %v1088 = vsub.s32 5, %v1087
        %v1089 = vrot.slane %v1031, %v1088
        %v1090 = vlaneseq
        %v1091 = vshrl.u32 %v1090, 7
        %v1092 = vsub.s32 6, %v1091
        %v1093 = vrot.slane %v1031, %v1092
        %v1094 = vlaneseq
        %v1095 = vshrl.u32 %v1094, 7
        %v1096 = vsub.s32 7, %v1095
        %v1097 = vrot.slane %v1031, %v1096
        %v1114 = vadd.f32 %v1014, %v1037
        %v1115 = vadd.f32 %v1015, %v1041
        %v1116 = vadd.f32 %v1016, %v1045
        %v1117 = vadd.f32 %v1017, %v1049
        %v1118 = vadd.f32 %v1018, %v1053
        %v1119 = vadd.f32 %v1019, %v1057
        %v1120 = vadd.f32 %v1020, %v1061
        %v1121 = vadd.f32 %v1021, %v1065
        %v1122 = vadd.f32 %v1022, %v1069
        %v1123 = vadd.f32 %v1023, %v1073
        %v1124 = vadd.f32 %v1024, %v1077
        %v1125 = vadd.f32 %v1025, %v1081
        %v1126 = vadd.f32 %v1026, %v1085
        %v1127 = vadd.f32 %v1027, %v1089
        %v1128 = vadd.f32 %v1028, %v1093
        %v1129 = vadd.f32 %v1029, %v1097
        %v1130 = vmax.f32 %v1114, 0.0
        %v1131 = vmax.f32 %v1115, 0.0
        %v1132 = vmax.f32 %v1116, 0.0
        %v1133 = vmax.f32 %v1117, 0.0
        %v1134 = vmax.f32 %v1118, 0.0
        %v1135 = vmax.f32 %v1119, 0.0
        %v1136 = vmax.f32 %v1120, 0.0
        %v1137 = vmax.f32 %v1121, 0.0
        %v1138 = vmax.f32 %v1122, 0.0
        %v1139 = vmax.f32 %v1123, 0.0
        %v1140 = vmax.f32 %v1124, 0.0
        %v1141 = vmax.f32 %v1125, 0.0
        %v1142 = vmax.f32 %v1126, 0.0
        %v1143 = vmax.f32 %v1127, 0.0
        %v1144 = vmax.f32 %v1128, 0.0
        %v1145 = vmax.f32 %v1129, 0.0
        %v1146 = vpack.c.bf16 %v1130, %v1130
        %v1147 = vpack.c.bf16 %v1131, %v1131
        %v1148 = vpack.c.bf16 %v1132, %v1132
        %v1149 = vpack.c.bf16 %v1133, %v1133
        %v1150 = vpack.c.bf16 %v1134, %v1134
        %v1151 = vpack.c.bf16 %v1135, %v1135
        %v1152 = vpack.c.bf16 %v1136, %v1136
        %v1153 = vpack.c.bf16 %v1137, %v1137
        %v1154 = vpack.c.bf16 %v1138, %v1138
        %v1155 = vpack.c.bf16 %v1139, %v1139
        %v1156 = vpack.c.bf16 %v1140, %v1140
        %v1157 = vpack.c.bf16 %v1141, %v1141
        %v1158 = vpack.c.bf16 %v1142, %v1142
        %v1159 = vpack.c.bf16 %v1143, %v1143
        %v1160 = vpack.c.bf16 %v1144, %v1144
        %v1161 = vpack.c.bf16 %v1145, %v1145
        // Predicated region
        $region137: #{tpu_custom_call.1} parent=71 // pred_check
          %p1162 = pneg %p617
        $region138: #{tpu_custom_call.1} parent=71 // pred_check_branch
          %1164 = sbr.rel (%p1162) target = $region140
        $region139: #{tpu_custom_call.1} parent=71 // pred_region
          #allocation39 [shape = 'u32[9]{0}', space=smem, size = 0x24, scoped, tag = 'DMA stride descriptor']
          %s1165 = smul.u32 2, 256
          %s1166 = smul.u32 %s1165, 2
          %s1167 = sshll.u32 %s1166, 4
          %1168 = dma.done [#allocation6], %s1167
          %s1169 = scalar_lea.sflag [#allocation6], 4
          // Predicated region
          $region141: #{tpu_custom_call.1} parent=139 // pred_check
            _
          $region142: #{tpu_custom_call.1} parent=139 // pred_check_branch
            %1171 = sbr.rel target = $region144
          $region143: #{tpu_custom_call.1} parent=139 // pred_region
            %1172 = sst [smem:[#allocation28]] [#allocation37]
            %1173 = sst [smem:[#allocation29]] [#allocation36]
          $region144: #{tpu_custom_call.1} parent=139 // pred_fallthru
            _
          %1175 = shalt.err (0)
          %s1177 = sshll.u32 [#allocation3], 4
          %s1178 = int_to_ptr.vmem [resolvable:$true] %s1177
          %1180 = dma.hbm_to_vmem [thread:$0]  %s6, 16384, %s1178, %s1169
          %s1181 = scalar_lea.sflag [#allocation6], 5
          %s1183 = sshll.u32 1, 14
          %s1184 = sxor.u32 4294967295, %s1183
          %s1186 = sld [smem:[#allocation0]]
          %s1187 = sadd.s32 2, %s1186
          %s1189 = sshll.u32 7, 26
          %s1190 = sxor.u32 4294967295, %s1189
          %s1191 = sand.u32 0, %s1190
          %s1192 = sshll.u32 %s1187, 26
          %s1193 = sor.u32 %s1191, %s1192
          %s1194 = sshll.u32 [#allocation4], 4
          %s1195 = int_to_ptr.vmem [resolvable:$true] %s1194
          %1198 = sst [smem:[#allocation39]] 256
          %s1199 = scalar_lea.smem [#allocation39], 1
          %1200 = sst [smem:[%s1199]] 256
          %s1201 = scalar_lea.smem [#allocation39], 2
          %1202 = sst [smem:[%s1201]] 2
          %s1203 = scalar_lea.smem [#allocation39], 3
          %1204 = sst [smem:[%s1203]] 64
          %s1205 = scalar_lea.smem [#allocation39], 4
          %1206 = sst [smem:[%s1205]] 128
          %s1207 = scalar_lea.smem [#allocation39], 5
          %1208 = sst [smem:[%s1207]] 2
          %s1209 = scalar_lea.smem [#allocation39], 6
          %1210 = sst [smem:[%s1209]] 128
          %s1211 = scalar_lea.smem [#allocation39], 7
          %1212 = sst [smem:[%s1211]] 64
          %s1213 = scalar_lea.smem [#allocation39], 8
          %1214 = sst [smem:[%s1213]] 4
          %1216 = dma.general %s9, 8192, %s1195, %s1181, [#allocation38], [#allocation39], %s1193, 0
          %s1217 = scalar_lea.sflag [#allocation6], 6
          // Predicated region
          $region145: #{tpu_custom_call.1} parent=139 // pred_check
            _
          $region146: #{tpu_custom_call.1} parent=139 // pred_check_branch
            %1219 = sbr.rel target = $region148
          $region147: #{tpu_custom_call.1} parent=139 // pred_region
            %1220 = sst [smem:[#allocation28]] [#allocation41]
            %1221 = sst [smem:[#allocation29]] [#allocation40]
          $region148: #{tpu_custom_call.1} parent=139 // pred_fallthru
            _
          %1223 = shalt.err (0)
          %s1225 = sshll.u32 [#allocation5], 4
          %s1226 = int_to_ptr.vmem [resolvable:$true] %s1225
          %1228 = dma.hbm_to_vmem [thread:$0]  %s11, 2048, %s1226, %s1217
        $region140: #{tpu_custom_call.1} parent=71 // pred_fallthru
          _
        %v1229 = vld [vmem:[#allocation2] sm:$0xff]
        %v1230 = vld [vmem:[#allocation2 + $0x8] sm:$0xff]
        %v1231 = vld [vmem:[#allocation2 + $0x10] sm:$0xff]
        %v1232 = vld [vmem:[#allocation2 + $0x18] sm:$0xff]
        %v1233 = vld [vmem:[#allocation2 + $0x20] sm:$0xff]
        %v1234 = vld [vmem:[#allocation2 + $0x28] sm:$0xff]
        %v1235 = vld [vmem:[#allocation2 + $0x30] sm:$0xff]
        %v1236 = vld [vmem:[#allocation2 + $0x38] sm:$0xff]
        %v1237 = vld [vmem:[#allocation2 + $0x40] sm:$0xff]
        %v1238 = vld [vmem:[#allocation2 + $0x48] sm:$0xff]
        %v1239 = vld [vmem:[#allocation2 + $0x50] sm:$0xff]
        %v1240 = vld [vmem:[#allocation2 + $0x58] sm:$0xff]
        %v1241 = vld [vmem:[#allocation2 + $0x60] sm:$0xff]
        %v1242 = vld [vmem:[#allocation2 + $0x68] sm:$0xff]
        %v1243 = vld [vmem:[#allocation2 + $0x70] sm:$0xff]
        %v1244 = vld [vmem:[#allocation2 + $0x78] sm:$0xff]
        %v1245 = vld [vmem:[#allocation2 + $0x80] sm:$0xff]
        %v1246 = vld [vmem:[#allocation2 + $0x88] sm:$0xff]
        %v1247 = vld [vmem:[#allocation2 + $0x90] sm:$0xff]
        %v1248 = vld [vmem:[#allocation2 + $0x98] sm:$0xff]
        %v1249 = vld [vmem:[#allocation2 + $0xa0] sm:$0xff]
        %v1250 = vld [vmem:[#allocation2 + $0xa8] sm:$0xff]
        %v1251 = vld [vmem:[#allocation2 + $0xb0] sm:$0xff]
        %v1252 = vld [vmem:[#allocation2 + $0xb8] sm:$0xff]
        %v1253 = vld [vmem:[#allocation2 + $0xc0] sm:$0xff]
        %v1254 = vld [vmem:[#allocation2 + $0xc8] sm:$0xff]
        %v1255 = vld [vmem:[#allocation2 + $0xd0] sm:$0xff]
        %v1256 = vld [vmem:[#allocation2 + $0xd8] sm:$0xff]
        %v1257 = vld [vmem:[#allocation2 + $0xe0] sm:$0xff]
        %v1258 = vld [vmem:[#allocation2 + $0xe8] sm:$0xff]
        %v1259 = vld [vmem:[#allocation2 + $0xf0] sm:$0xff]
        %v1260 = vld [vmem:[#allocation2 + $0xf8] sm:$0xff]
        %v1261 = vld [vmem:[#allocation2 + $0x100] sm:$0xff]
        %v1262 = vld [vmem:[#allocation2 + $0x108] sm:$0xff]
        %v1263 = vld [vmem:[#allocation2 + $0x110] sm:$0xff]
        %v1264 = vld [vmem:[#allocation2 + $0x118] sm:$0xff]
        %v1265 = vld [vmem:[#allocation2 + $0x120] sm:$0xff]
        %v1266 = vld [vmem:[#allocation2 + $0x128] sm:$0xff]
        %v1267 = vld [vmem:[#allocation2 + $0x130] sm:$0xff]
        %v1268 = vld [vmem:[#allocation2 + $0x138] sm:$0xff]
        %v1269 = vld [vmem:[#allocation2 + $0x140] sm:$0xff]
        %v1270 = vld [vmem:[#allocation2 + $0x148] sm:$0xff]
        %v1271 = vld [vmem:[#allocation2 + $0x150] sm:$0xff]
        %v1272 = vld [vmem:[#allocation2 + $0x158] sm:$0xff]
        %v1273 = vld [vmem:[#allocation2 + $0x160] sm:$0xff]
        %v1274 = vld [vmem:[#allocation2 + $0x168] sm:$0xff]
        %v1275 = vld [vmem:[#allocation2 + $0x170] sm:$0xff]
        %v1276 = vld [vmem:[#allocation2 + $0x178] sm:$0xff]
        %v1277 = vld [vmem:[#allocation2 + $0x180] sm:$0xff]
        %v1278 = vld [vmem:[#allocation2 + $0x188] sm:$0xff]
        %v1279 = vld [vmem:[#allocation2 + $0x190] sm:$0xff]
        %v1280 = vld [vmem:[#allocation2 + $0x198] sm:$0xff]
        %v1281 = vld [vmem:[#allocation2 + $0x1a0] sm:$0xff]
        %v1282 = vld [vmem:[#allocation2 + $0x1a8] sm:$0xff]
        %v1283 = vld [vmem:[#allocation2 + $0x1b0] sm:$0xff]
        %v1284 = vld [vmem:[#allocation2 + $0x1b8] sm:$0xff]
        %v1285 = vld [vmem:[#allocation2 + $0x1c0] sm:$0xff]
        %v1286 = vld [vmem:[#allocation2 + $0x1c8] sm:$0xff]
        %v1287 = vld [vmem:[#allocation2 + $0x1d0] sm:$0xff]
        %v1288 = vld [vmem:[#allocation2 + $0x1d8] sm:$0xff]
        %v1289 = vld [vmem:[#allocation2 + $0x1e0] sm:$0xff]
        %v1290 = vld [vmem:[#allocation2 + $0x1e8] sm:$0xff]
        %v1291 = vld [vmem:[#allocation2 + $0x1f0] sm:$0xff]
        %v1292 = vld [vmem:[#allocation2 + $0x1f8] sm:$0xff]
        %v1293 = vld [vmem:[#allocation2 + $0x200] sm:$0xff]
        %v1294 = vld [vmem:[#allocation2 + $0x208] sm:$0xff]
        %v1295 = vld [vmem:[#allocation2 + $0x210] sm:$0xff]
        %v1296 = vld [vmem:[#allocation2 + $0x218] sm:$0xff]
        %v1297 = vld [vmem:[#allocation2 + $0x220] sm:$0xff]
        %v1298 = vld [vmem:[#allocation2 + $0x228] sm:$0xff]
        %v1299 = vld [vmem:[#allocation2 + $0x230] sm:$0xff]
        %v1300 = vld [vmem:[#allocation2 + $0x238] sm:$0xff]
        %v1301 = vld [vmem:[#allocation2 + $0x240] sm:$0xff]
        %v1302 = vld [vmem:[#allocation2 + $0x248] sm:$0xff]
        %v1303 = vld [vmem:[#allocation2 + $0x250] sm:$0xff]
        %v1304 = vld [vmem:[#allocation2 + $0x258] sm:$0xff]
        %v1305 = vld [vmem:[#allocation2 + $0x260] sm:$0xff]
        %v1306 = vld [vmem:[#allocation2 + $0x268] sm:$0xff]
        %v1307 = vld [vmem:[#allocation2 + $0x270] sm:$0xff]
        %v1308 = vld [vmem:[#allocation2 + $0x278] sm:$0xff]
        %v1309 = vld [vmem:[#allocation2 + $0x280] sm:$0xff]
        %v1310 = vld [vmem:[#allocation2 + $0x288] sm:$0xff]
        %v1311 = vld [vmem:[#allocation2 + $0x290] sm:$0xff]
        %v1312 = vld [vmem:[#allocation2 + $0x298] sm:$0xff]
        %v1313 = vld [vmem:[#allocation2 + $0x2a0] sm:$0xff]
        %v1314 = vld [vmem:[#allocation2 + $0x2a8] sm:$0xff]
        %v1315 = vld [vmem:[#allocation2 + $0x2b0] sm:$0xff]
        %v1316 = vld [vmem:[#allocation2 + $0x2b8] sm:$0xff]
        %v1317 = vld [vmem:[#allocation2 + $0x2c0] sm:$0xff]
        %v1318 = vld [vmem:[#allocation2 + $0x2c8] sm:$0xff]
        %v1319 = vld [vmem:[#allocation2 + $0x2d0] sm:$0xff]
        %v1320 = vld [vmem:[#allocation2 + $0x2d8] sm:$0xff]
        %v1321 = vld [vmem:[#allocation2 + $0x2e0] sm:$0xff]
        %v1322 = vld [vmem:[#allocation2 + $0x2e8] sm:$0xff]
        %v1323 = vld [vmem:[#allocation2 + $0x2f0] sm:$0xff]
        %v1324 = vld [vmem:[#allocation2 + $0x2f8] sm:$0xff]
        %v1325 = vld [vmem:[#allocation2 + $0x300] sm:$0xff]
        %v1326 = vld [vmem:[#allocation2 + $0x308] sm:$0xff]
        %v1327 = vld [vmem:[#allocation2 + $0x310] sm:$0xff]
        %v1328 = vld [vmem:[#allocation2 + $0x318] sm:$0xff]
        %v1329 = vld [vmem:[#allocation2 + $0x320] sm:$0xff]
        %v1330 = vld [vmem:[#allocation2 + $0x328] sm:$0xff]
        %v1331 = vld [vmem:[#allocation2 + $0x330] sm:$0xff]
        %v1332 = vld [vmem:[#allocation2 + $0x338] sm:$0xff]
        %v1333 = vld [vmem:[#allocation2 + $0x340] sm:$0xff]
        %v1334 = vld [vmem:[#allocation2 + $0x348] sm:$0xff]
        %v1335 = vld [vmem:[#allocation2 + $0x350] sm:$0xff]
        %v1336 = vld [vmem:[#allocation2 + $0x358] sm:$0xff]
        %v1337 = vld [vmem:[#allocation2 + $0x360] sm:$0xff]
        %v1338 = vld [vmem:[#allocation2 + $0x368] sm:$0xff]
        %v1339 = vld [vmem:[#allocation2 + $0x370] sm:$0xff]
        %v1340 = vld [vmem:[#allocation2 + $0x378] sm:$0xff]
        %v1341 = vld [vmem:[#allocation2 + $0x380] sm:$0xff]
        %v1342 = vld [vmem:[#allocation2 + $0x388] sm:$0xff]
        %v1343 = vld [vmem:[#allocation2 + $0x390] sm:$0xff]
        %v1344 = vld [vmem:[#allocation2 + $0x398] sm:$0xff]
        %v1345 = vld [vmem:[#allocation2 + $0x3a0] sm:$0xff]
        %v1346 = vld [vmem:[#allocation2 + $0x3a8] sm:$0xff]
        %v1347 = vld [vmem:[#allocation2 + $0x3b0] sm:$0xff]
        %v1348 = vld [vmem:[#allocation2 + $0x3b8] sm:$0xff]
        %v1349 = vld [vmem:[#allocation2 + $0x3c0] sm:$0xff]
        %v1350 = vld [vmem:[#allocation2 + $0x3c8] sm:$0xff]
        %v1351 = vld [vmem:[#allocation2 + $0x3d0] sm:$0xff]
        %v1352 = vld [vmem:[#allocation2 + $0x3d8] sm:$0xff]
        %v1353 = vld [vmem:[#allocation2 + $0x3e0] sm:$0xff]
        %v1354 = vld [vmem:[#allocation2 + $0x3e8] sm:$0xff]
        %v1355 = vld [vmem:[#allocation2 + $0x3f0] sm:$0xff]
        %v1356 = vld [vmem:[#allocation2 + $0x3f8] sm:$0xff]
        %v1357 = vunpack.c.l.s8.bf16 %v1229
        %v1358 = vunpack.c.l.s8.bf16 %v1230
        %v1359 = vunpack.c.h.s8.bf16 %v1229
        %v1360 = vunpack.c.h.s8.bf16 %v1230
        %v1361 = vunpack.c.l.s8.bf16 %v1231
        %v1362 = vunpack.c.l.s8.bf16 %v1232
        %v1363 = vunpack.c.h.s8.bf16 %v1231
        %v1364 = vunpack.c.h.s8.bf16 %v1232
        %v1365 = vunpack.c.l.s8.bf16 %v1233
        %v1366 = vunpack.c.l.s8.bf16 %v1234
        %v1367 = vunpack.c.h.s8.bf16 %v1233
        %v1368 = vunpack.c.h.s8.bf16 %v1234
        %v1369 = vunpack.c.l.s8.bf16 %v1235
        %v1370 = vunpack.c.l.s8.bf16 %v1236
        %v1371 = vunpack.c.h.s8.bf16 %v1235
        %v1372 = vunpack.c.h.s8.bf16 %v1236
        %v1373 = vunpack.c.l.s8.bf16 %v1237
        %v1374 = vunpack.c.l.s8.bf16 %v1238
        %v1375 = vunpack.c.h.s8.bf16 %v1237
        %v1376 = vunpack.c.h.s8.bf16 %v1238
        %v1377 = vunpack.c.l.s8.bf16 %v1239
        %v1378 = vunpack.c.l.s8.bf16 %v1240
        %v1379 = vunpack.c.h.s8.bf16 %v1239
        %v1380 = vunpack.c.h.s8.bf16 %v1240
        %v1381 = vunpack.c.l.s8.bf16 %v1241
        %v1382 = vunpack.c.l.s8.bf16 %v1242
        %v1383 = vunpack.c.h.s8.bf16 %v1241
        %v1384 = vunpack.c.h.s8.bf16 %v1242
        %v1385 = vunpack.c.l.s8.bf16 %v1243
        %v1386 = vunpack.c.l.s8.bf16 %v1244
        %v1387 = vunpack.c.h.s8.bf16 %v1243
        %v1388 = vunpack.c.h.s8.bf16 %v1244
        %v1389 = vunpack.c.l.s8.bf16 %v1245
        %v1390 = vunpack.c.l.s8.bf16 %v1246
        %v1391 = vunpack.c.h.s8.bf16 %v1245
        %v1392 = vunpack.c.h.s8.bf16 %v1246
        %v1393 = vunpack.c.l.s8.bf16 %v1247
        %v1394 = vunpack.c.l.s8.bf16 %v1248
        %v1395 = vunpack.c.h.s8.bf16 %v1247
        %v1396 = vunpack.c.h.s8.bf16 %v1248
        %v1397 = vunpack.c.l.s8.bf16 %v1249
        %v1398 = vunpack.c.l.s8.bf16 %v1250
        %v1399 = vunpack.c.h.s8.bf16 %v1249
        %v1400 = vunpack.c.h.s8.bf16 %v1250
        %v1401 = vunpack.c.l.s8.bf16 %v1251
        %v1402 = vunpack.c.l.s8.bf16 %v1252
        %v1403 = vunpack.c.h.s8.bf16 %v1251
        %v1404 = vunpack.c.h.s8.bf16 %v1252
        %v1405 = vunpack.c.l.s8.bf16 %v1253
        %v1406 = vunpack.c.l.s8.bf16 %v1254
        %v1407 = vunpack.c.h.s8.bf16 %v1253
        %v1408 = vunpack.c.h.s8.bf16 %v1254
        %v1409 = vunpack.c.l.s8.bf16 %v1255
        %v1410 = vunpack.c.l.s8.bf16 %v1256
        %v1411 = vunpack.c.h.s8.bf16 %v1255
        %v1412 = vunpack.c.h.s8.bf16 %v1256
        %v1413 = vunpack.c.l.s8.bf16 %v1257
        %v1414 = vunpack.c.l.s8.bf16 %v1258
        %v1415 = vunpack.c.h.s8.bf16 %v1257
        %v1416 = vunpack.c.h.s8.bf16 %v1258
        %v1417 = vunpack.c.l.s8.bf16 %v1259
        %v1418 = vunpack.c.l.s8.bf16 %v1260
        %v1419 = vunpack.c.h.s8.bf16 %v1259
        %v1420 = vunpack.c.h.s8.bf16 %v1260
        %v1421 = vunpack.c.l.s8.bf16 %v1261
        %v1422 = vunpack.c.l.s8.bf16 %v1262
        %v1423 = vunpack.c.h.s8.bf16 %v1261
        %v1424 = vunpack.c.h.s8.bf16 %v1262
        %v1425 = vunpack.c.l.s8.bf16 %v1263
        %v1426 = vunpack.c.l.s8.bf16 %v1264
        %v1427 = vunpack.c.h.s8.bf16 %v1263
        %v1428 = vunpack.c.h.s8.bf16 %v1264
        %v1429 = vunpack.c.l.s8.bf16 %v1265
        %v1430 = vunpack.c.l.s8.bf16 %v1266
        %v1431 = vunpack.c.h.s8.bf16 %v1265
        %v1432 = vunpack.c.h.s8.bf16 %v1266
        %v1433 = vunpack.c.l.s8.bf16 %v1267
        %v1434 = vunpack.c.l.s8.bf16 %v1268
        %v1435 = vunpack.c.h.s8.bf16 %v1267
        %v1436 = vunpack.c.h.s8.bf16 %v1268
        %v1437 = vunpack.c.l.s8.bf16 %v1269
        %v1438 = vunpack.c.l.s8.bf16 %v1270
        %v1439 = vunpack.c.h.s8.bf16 %v1269
        %v1440 = vunpack.c.h.s8.bf16 %v1270
        %v1441 = vunpack.c.l.s8.bf16 %v1271
        %v1442 = vunpack.c.l.s8.bf16 %v1272
        %v1443 = vunpack.c.h.s8.bf16 %v1271
        %v1444 = vunpack.c.h.s8.bf16 %v1272
        %v1445 = vunpack.c.l.s8.bf16 %v1273
        %v1446 = vunpack.c.l.s8.bf16 %v1274
        %v1447 = vunpack.c.h.s8.bf16 %v1273
        %v1448 = vunpack.c.h.s8.bf16 %v1274
        %v1449 = vunpack.c.l.s8.bf16 %v1275
        %v1450 = vunpack.c.l.s8.bf16 %v1276
        %v1451 = vunpack.c.h.s8.bf16 %v1275
        %v1452 = vunpack.c.h.s8.bf16 %v1276
        %v1453 = vunpack.c.l.s8.bf16 %v1277
        %v1454 = vunpack.c.l.s8.bf16 %v1278
        %v1455 = vunpack.c.h.s8.bf16 %v1277
        %v1456 = vunpack.c.h.s8.bf16 %v1278
        %v1457 = vunpack.c.l.s8.bf16 %v1279
        %v1458 = vunpack.c.l.s8.bf16 %v1280
        %v1459 = vunpack.c.h.s8.bf16 %v1279
        %v1460 = vunpack.c.h.s8.bf16 %v1280
        %v1461 = vunpack.c.l.s8.bf16 %v1281
        %v1462 = vunpack.c.l.s8.bf16 %v1282
        %v1463 = vunpack.c.h.s8.bf16 %v1281
        %v1464 = vunpack.c.h.s8.bf16 %v1282
        %v1465 = vunpack.c.l.s8.bf16 %v1283
        %v1466 = vunpack.c.l.s8.bf16 %v1284
        %v1467 = vunpack.c.h.s8.bf16 %v1283
        %v1468 = vunpack.c.h.s8.bf16 %v1284
        %v1469 = vunpack.c.l.s8.bf16 %v1285
        %v1470 = vunpack.c.l.s8.bf16 %v1286
        %v1471 = vunpack.c.h.s8.bf16 %v1285
        %v1472 = vunpack.c.h.s8.bf16 %v1286
        %v1473 = vunpack.c.l.s8.bf16 %v1287
        %v1474 = vunpack.c.l.s8.bf16 %v1288
        %v1475 = vunpack.c.h.s8.bf16 %v1287
        %v1476 = vunpack.c.h.s8.bf16 %v1288
        %v1477 = vunpack.c.l.s8.bf16 %v1289
        %v1478 = vunpack.c.l.s8.bf16 %v1290
        %v1479 = vunpack.c.h.s8.bf16 %v1289
        %v1480 = vunpack.c.h.s8.bf16 %v1290
        %v1481 = vunpack.c.l.s8.bf16 %v1291
        %v1482 = vunpack.c.l.s8.bf16 %v1292
        %v1483 = vunpack.c.h.s8.bf16 %v1291
        %v1484 = vunpack.c.h.s8.bf16 %v1292
        %v1485 = vunpack.c.l.s8.bf16 %v1293
        %v1486 = vunpack.c.l.s8.bf16 %v1294
        %v1487 = vunpack.c.h.s8.bf16 %v1293
        %v1488 = vunpack.c.h.s8.bf16 %v1294
        %v1489 = vunpack.c.l.s8.bf16 %v1295
        %v1490 = vunpack.c.l.s8.bf16 %v1296
        %v1491 = vunpack.c.h.s8.bf16 %v1295
        %v1492 = vunpack.c.h.s8.bf16 %v1296
        %v1493 = vunpack.c.l.s8.bf16 %v1297
        %v1494 = vunpack.c.l.s8.bf16 %v1298
        %v1495 = vunpack.c.h.s8.bf16 %v1297
        %v1496 = vunpack.c.h.s8.bf16 %v1298
        %v1497 = vunpack.c.l.s8.bf16 %v1299
        %v1498 = vunpack.c.l.s8.bf16 %v1300
        %v1499 = vunpack.c.h.s8.bf16 %v1299
        %v1500 = vunpack.c.h.s8.bf16 %v1300
        %v1501 = vunpack.c.l.s8.bf16 %v1301
        %v1502 = vunpack.c.l.s8.bf16 %v1302
        %v1503 = vunpack.c.h.s8.bf16 %v1301
        %v1504 = vunpack.c.h.s8.bf16 %v1302
        %v1505 = vunpack.c.l.s8.bf16 %v1303
        %v1506 = vunpack.c.l.s8.bf16 %v1304
        %v1507 = vunpack.c.h.s8.bf16 %v1303
        %v1508 = vunpack.c.h.s8.bf16 %v1304
        %v1509 = vunpack.c.l.s8.bf16 %v1305
        %v1510 = vunpack.c.l.s8.bf16 %v1306
        %v1511 = vunpack.c.h.s8.bf16 %v1305
        %v1512 = vunpack.c.h.s8.bf16 %v1306
        %v1513 = vunpack.c.l.s8.bf16 %v1307
        %v1514 = vunpack.c.l.s8.bf16 %v1308
        %v1515 = vunpack.c.h.s8.bf16 %v1307
        %v1516 = vunpack.c.h.s8.bf16 %v1308
        %v1517 = vunpack.c.l.s8.bf16 %v1309
        %v1518 = vunpack.c.l.s8.bf16 %v1310
        %v1519 = vunpack.c.h.s8.bf16 %v1309
        %v1520 = vunpack.c.h.s8.bf16 %v1310
        %v1521 = vunpack.c.l.s8.bf16 %v1311
        %v1522 = vunpack.c.l.s8.bf16 %v1312
        %v1523 = vunpack.c.h.s8.bf16 %v1311
        %v1524 = vunpack.c.h.s8.bf16 %v1312
        %v1525 = vunpack.c.l.s8.bf16 %v1313
        %v1526 = vunpack.c.l.s8.bf16 %v1314
        %v1527 = vunpack.c.h.s8.bf16 %v1313
        %v1528 = vunpack.c.h.s8.bf16 %v1314
        %v1529 = vunpack.c.l.s8.bf16 %v1315
        %v1530 = vunpack.c.l.s8.bf16 %v1316
        %v1531 = vunpack.c.h.s8.bf16 %v1315
        %v1532 = vunpack.c.h.s8.bf16 %v1316
        %v1533 = vunpack.c.l.s8.bf16 %v1317
        %v1534 = vunpack.c.l.s8.bf16 %v1318
        %v1535 = vunpack.c.h.s8.bf16 %v1317
        %v1536 = vunpack.c.h.s8.bf16 %v1318
        %v1537 = vunpack.c.l.s8.bf16 %v1319
        %v1538 = vunpack.c.l.s8.bf16 %v1320
        %v1539 = vunpack.c.h.s8.bf16 %v1319
        %v1540 = vunpack.c.h.s8.bf16 %v1320
        %v1541 = vunpack.c.l.s8.bf16 %v1321
        %v1542 = vunpack.c.l.s8.bf16 %v1322
        %v1543 = vunpack.c.h.s8.bf16 %v1321
        %v1544 = vunpack.c.h.s8.bf16 %v1322
        %v1545 = vunpack.c.l.s8.bf16 %v1323
        %v1546 = vunpack.c.l.s8.bf16 %v1324
        %v1547 = vunpack.c.h.s8.bf16 %v1323
        %v1548 = vunpack.c.h.s8.bf16 %v1324
        %v1549 = vunpack.c.l.s8.bf16 %v1325
        %v1550 = vunpack.c.l.s8.bf16 %v1326
        %v1551 = vunpack.c.h.s8.bf16 %v1325
        %v1552 = vunpack.c.h.s8.bf16 %v1326
        %v1553 = vunpack.c.l.s8.bf16 %v1327
        %v1554 = vunpack.c.l.s8.bf16 %v1328
        %v1555 = vunpack.c.h.s8.bf16 %v1327
        %v1556 = vunpack.c.h.s8.bf16 %v1328
        %v1557 = vunpack.c.l.s8.bf16 %v1329
        %v1558 = vunpack.c.l.s8.bf16 %v1330
        %v1559 = vunpack.c.h.s8.bf16 %v1329
        %v1560 = vunpack.c.h.s8.bf16 %v1330
        %v1561 = vunpack.c.l.s8.bf16 %v1331
        %v1562 = vunpack.c.l.s8.bf16 %v1332
        %v1563 = vunpack.c.h.s8.bf16 %v1331
        %v1564 = vunpack.c.h.s8.bf16 %v1332
        %v1565 = vunpack.c.l.s8.bf16 %v1333
        %v1566 = vunpack.c.l.s8.bf16 %v1334
        %v1567 = vunpack.c.h.s8.bf16 %v1333
        %v1568 = vunpack.c.h.s8.bf16 %v1334
        %v1569 = vunpack.c.l.s8.bf16 %v1335
        %v1570 = vunpack.c.l.s8.bf16 %v1336
        %v1571 = vunpack.c.h.s8.bf16 %v1335
        %v1572 = vunpack.c.h.s8.bf16 %v1336
        %v1573 = vunpack.c.l.s8.bf16 %v1337
        %v1574 = vunpack.c.l.s8.bf16 %v1338
        %v1575 = vunpack.c.h.s8.bf16 %v1337
        %v1576 = vunpack.c.h.s8.bf16 %v1338
        %v1577 = vunpack.c.l.s8.bf16 %v1339
        %v1578 = vunpack.c.l.s8.bf16 %v1340
        %v1579 = vunpack.c.h.s8.bf16 %v1339
        %v1580 = vunpack.c.h.s8.bf16 %v1340
        %v1581 = vunpack.c.l.s8.bf16 %v1341
        %v1582 = vunpack.c.l.s8.bf16 %v1342
        %v1583 = vunpack.c.h.s8.bf16 %v1341
        %v1584 = vunpack.c.h.s8.bf16 %v1342
        %v1585 = vunpack.c.l.s8.bf16 %v1343
        %v1586 = vunpack.c.l.s8.bf16 %v1344
        %v1587 = vunpack.c.h.s8.bf16 %v1343
        %v1588 = vunpack.c.h.s8.bf16 %v1344
        %v1589 = vunpack.c.l.s8.bf16 %v1345
        %v1590 = vunpack.c.l.s8.bf16 %v1346
        %v1591 = vunpack.c.h.s8.bf16 %v1345
        %v1592 = vunpack.c.h.s8.bf16 %v1346
        %v1593 = vunpack.c.l.s8.bf16 %v1347
        %v1594 = vunpack.c.l.s8.bf16 %v1348
        %v1595 = vunpack.c.h.s8.bf16 %v1347
        %v1596 = vunpack.c.h.s8.bf16 %v1348
        %v1597 = vunpack.c.l.s8.bf16 %v1349
        %v1598 = vunpack.c.l.s8.bf16 %v1350
        %v1599 = vunpack.c.h.s8.bf16 %v1349
        %v1600 = vunpack.c.h.s8.bf16 %v1350
        %v1601 = vunpack.c.l.s8.bf16 %v1351
        %v1602 = vunpack.c.l.s8.bf16 %v1352
        %v1603 = vunpack.c.h.s8.bf16 %v1351
        %v1604 = vunpack.c.h.s8.bf16 %v1352
        %v1605 = vunpack.c.l.s8.bf16 %v1353
        %v1606 = vunpack.c.l.s8.bf16 %v1354
        %v1607 = vunpack.c.h.s8.bf16 %v1353
        %v1608 = vunpack.c.h.s8.bf16 %v1354
        %v1609 = vunpack.c.l.s8.bf16 %v1355
        %v1610 = vunpack.c.l.s8.bf16 %v1356
        %v1611 = vunpack.c.h.s8.bf16 %v1355
        %v1612 = vunpack.c.h.s8.bf16 %v1356
        %1613 = vmatprep.subr.bf16.mxu0 %v1358
        %1614 = vmatpush1.bf16.msra.mxu0 %v1357
        %1615 = vmatprep.subr.bf16.mxu0 %v1360
        %1616 = vmatpush1.bf16.msra.mxu0 %v1359
        %1617 = vmatprep.subr.bf16.mxu0 %v1362
        %1618 = vmatpush1.bf16.msra.mxu0 %v1361
        %1619 = vmatprep.subr.bf16.mxu0 %v1364
        %1620 = vmatpush1.bf16.msra.mxu0 %v1363
        %1621 = vmatprep.subr.bf16.mxu0 %v1366
        %1622 = vmatpush1.bf16.msra.mxu0 %v1365
        %1623 = vmatprep.subr.bf16.mxu0 %v1368
        %1624 = vmatpush1.bf16.msra.mxu0 %v1367
        %1625 = vmatprep.subr.bf16.mxu0 %v1370
        %1626 = vmatpush1.bf16.msra.mxu0 %v1369
        %1627 = vmatprep.subr.bf16.mxu0 %v1372
        %1628 = vmatpush1.bf16.msra.mxu0 %v1371
        %1629 = vmatprep.subr.bf16.mxu0 %v1374
        %1630 = vmatpush1.bf16.msra.mxu0 %v1373
        %1631 = vmatprep.subr.bf16.mxu0 %v1376
        %1632 = vmatpush1.bf16.msra.mxu0 %v1375
        %1633 = vmatprep.subr.bf16.mxu0 %v1378
        %1634 = vmatpush1.bf16.msra.mxu0 %v1377
        %1635 = vmatprep.subr.bf16.mxu0 %v1380
        %1636 = vmatpush1.bf16.msra.mxu0 %v1379
        %1637 = vmatprep.subr.bf16.mxu0 %v1382
        %1638 = vmatpush1.bf16.msra.mxu0 %v1381
        %1639 = vmatprep.subr.bf16.mxu0 %v1384
        %1640 = vmatpush1.bf16.msra.mxu0 %v1383
        %1641 = vmatprep.subr.bf16.mxu0 %v1386
        %1642 = vmatpush1.bf16.msra.mxu0 %v1385
        %1643 = vmatprep.subr.bf16.mxu0 %v1388
        %1644 = vmatpush1.bf16.msra.mxu0 %v1387
        %1645 = vmatprep.mubr.bf16.mxu0 %v1147
        %1646 = vmatmul.mubr.bf16.gmra.mrb[0].mxu0 %v1146
        %v1647 = vpop.f32.mrb[0].mxu0
        %v1648 = vadd.f32 0.0, %v1647
        %v1649 = vpop.f32.mrb[0].mxu0
        %v1650 = vadd.f32 0.0, %v1649
        %v1651 = vpop.f32.mrb[0].mxu0
        %v1652 = vpop.f32.mrb[0].mxu0
        %1653 = vdwg.mxu0
        %1654 = vmatprep.subr.bf16.mxu0 %v1390
        %1655 = vmatpush1.bf16.msra.mxu0 %v1389
        %1656 = vmatprep.subr.bf16.mxu0 %v1392
        %1657 = vmatpush1.bf16.msra.mxu0 %v1391
        %1658 = vmatprep.subr.bf16.mxu0 %v1394
        %1659 = vmatpush1.bf16.msra.mxu0 %v1393
        %1660 = vmatprep.subr.bf16.mxu0 %v1396
        %1661 = vmatpush1.bf16.msra.mxu0 %v1395
        %1662 = vmatprep.subr.bf16.mxu0 %v1398
        %1663 = vmatpush1.bf16.msra.mxu0 %v1397
        %1664 = vmatprep.subr.bf16.mxu0 %v1400
        %1665 = vmatpush1.bf16.msra.mxu0 %v1399
        %1666 = vmatprep.subr.bf16.mxu0 %v1402
        %1667 = vmatpush1.bf16.msra.mxu0 %v1401
        %1668 = vmatprep.subr.bf16.mxu0 %v1404
        %1669 = vmatpush1.bf16.msra.mxu0 %v1403
        %1670 = vmatprep.subr.bf16.mxu0 %v1406
        %1671 = vmatpush1.bf16.msra.mxu0 %v1405
        %1672 = vmatprep.subr.bf16.mxu0 %v1408
        %1673 = vmatpush1.bf16.msra.mxu0 %v1407
        %1674 = vmatprep.subr.bf16.mxu0 %v1410
        %1675 = vmatpush1.bf16.msra.mxu0 %v1409
        %1676 = vmatprep.subr.bf16.mxu0 %v1412
        %1677 = vmatpush1.bf16.msra.mxu0 %v1411
        %1678 = vmatprep.subr.bf16.mxu0 %v1414
        %1679 = vmatpush1.bf16.msra.mxu0 %v1413
        %1680 = vmatprep.subr.bf16.mxu0 %v1416
        %1681 = vmatpush1.bf16.msra.mxu0 %v1415
        %1682 = vmatprep.subr.bf16.mxu0 %v1418
        %1683 = vmatpush1.bf16.msra.mxu0 %v1417
        %1684 = vmatprep.subr.bf16.mxu0 %v1420
        %1685 = vmatpush1.bf16.msra.mxu0 %v1419
        %1686 = vmatprep.mubr.bf16.mxu0 %v1149
        %1687 = vmatmul.mubr.bf16.gmra.mrb[0].mxu0 %v1148
        %v1688 = vpop.f32.mrb[0].mxu0
        %v1689 = vadd.f32 %v1648, %v1688
        %v1690 = vpop.f32.mrb[0].mxu0
        %v1691 = vadd.f32 %v1650, %v1690
        %v1692 = vpop.f32.mrb[0].mxu0
        %v1693 = vpop.f32.mrb[0].mxu0
        %1694 = vdwg.mxu0
        %1695 = vmatprep.subr.bf16.mxu0 %v1422
        %1696 = vmatpush1.bf16.msra.mxu0 %v1421
        %1697 = vmatprep.subr.bf16.mxu0 %v1424
        %1698 = vmatpush1.bf16.msra.mxu0 %v1423
        %1699 = vmatprep.subr.bf16.mxu0 %v1426
        %1700 = vmatpush1.bf16.msra.mxu0 %v1425
        %1701 = vmatprep.subr.bf16.mxu0 %v1428
        %1702 = vmatpush1.bf16.msra.mxu0 %v1427
        %1703 = vmatprep.subr.bf16.mxu0 %v1430
        %1704 = vmatpush1.bf16.msra.mxu0 %v1429
        %1705 = vmatprep.subr.bf16.mxu0 %v1432
        %1706 = vmatpush1.bf16.msra.mxu0 %v1431
        %1707 = vmatprep.subr.bf16.mxu0 %v1434
        %1708 = vmatpush1.bf16.msra.mxu0 %v1433
        %1709 = vmatprep.subr.bf16.mxu0 %v1436
        %1710 = vmatpush1.bf16.msra.mxu0 %v1435
        %1711 = vmatprep.subr.bf16.mxu0 %v1438
        %1712 = vmatpush1.bf16.msra.mxu0 %v1437
        %1713 = vmatprep.subr.bf16.mxu0 %v1440
        %1714 = vmatpush1.bf16.msra.mxu0 %v1439
        %1715 = vmatprep.subr.bf16.mxu0 %v1442
        %1716 = vmatpush1.bf16.msra.mxu0 %v1441
        %1717 = vmatprep.subr.bf16.mxu0 %v1444
        %1718 = vmatpush1.bf16.msra.mxu0 %v1443
        %1719 = vmatprep.subr.bf16.mxu0 %v1446
        %1720 = vmatpush1.bf16.msra.mxu0 %v1445
        %1721 = vmatprep.subr.bf16.mxu0 %v1448
        %1722 = vmatpush1.bf16.msra.mxu0 %v1447
        %1723 = vmatprep.subr.bf16.mxu0 %v1450
        %1724 = vmatpush1.bf16.msra.mxu0 %v1449
        %1725 = vmatprep.subr.bf16.mxu0 %v1452
        %1726 = vmatpush1.bf16.msra.mxu0 %v1451
        %1727 = vmatprep.mubr.bf16.mxu0 %v1151
        %1728 = vmatmul.mubr.bf16.gmra.mrb[0].mxu0 %v1150
        %v1729 = vpop.f32.mrb[0].mxu0
        %v1730 = vadd.f32 %v1689, %v1729
        %v1731 = vpop.f32.mrb[0].mxu0
        %v1732 = vadd.f32 %v1691, %v1731
        %v1733 = vpop.f32.mrb[0].mxu0
        %v1734 = vpop.f32.mrb[0].mxu0
        %1735 = vdwg.mxu0
        %1736 = vmatprep.subr.bf16.mxu0 %v1454
        %1737 = vmatpush1.bf16.msra.mxu0 %v1453
        %1738 = vmatprep.subr.bf16.mxu0 %v1456
        %1739 = vmatpush1.bf16.msra.mxu0 %v1455
        %1740 = vmatprep.subr.bf16.mxu0 %v1458
        %1741 = vmatpush1.bf16.msra.mxu0 %v1457
        %1742 = vmatprep.subr.bf16.mxu0 %v1460
        %1743 = vmatpush1.bf16.msra.mxu0 %v1459
        %1744 = vmatprep.subr.bf16.mxu0 %v1462
        %1745 = vmatpush1.bf16.msra.mxu0 %v1461
        %1746 = vmatprep.subr.bf16.mxu0 %v1464
        %1747 = vmatpush1.bf16.msra.mxu0 %v1463
        %1748 = vmatprep.subr.bf16.mxu0 %v1466
        %1749 = vmatpush1.bf16.msra.mxu0 %v1465
        %1750 = vmatprep.subr.bf16.mxu0 %v1468
        %1751 = vmatpush1.bf16.msra.mxu0 %v1467
        %1752 = vmatprep.subr.bf16.mxu0 %v1470
        %1753 = vmatpush1.bf16.msra.mxu0 %v1469
        %1754 = vmatprep.subr.bf16.mxu0 %v1472
        %1755 = vmatpush1.bf16.msra.mxu0 %v1471
        %1756 = vmatprep.subr.bf16.mxu0 %v1474
        %1757 = vmatpush1.bf16.msra.mxu0 %v1473
        %1758 = vmatprep.subr.bf16.mxu0 %v1476
        %1759 = vmatpush1.bf16.msra.mxu0 %v1475
        %1760 = vmatprep.subr.bf16.mxu0 %v1478
        %1761 = vmatpush1.bf16.msra.mxu0 %v1477
        %1762 = vmatprep.subr.bf16.mxu0 %v1480
        %1763 = vmatpush1.bf16.msra.mxu0 %v1479
        %1764 = vmatprep.subr.bf16.mxu0 %v1482
        %1765 = vmatpush1.bf16.msra.mxu0 %v1481
        %1766 = vmatprep.subr.bf16.mxu0 %v1484
        %1767 = vmatpush1.bf16.msra.mxu0 %v1483
        %1768 = vmatprep.mubr.bf16.mxu0 %v1153
        %1769 = vmatmul.mubr.bf16.gmra.mrb[0].mxu0 %v1152
        %v1770 = vpop.f32.mrb[0].mxu0
        %v1771 = vadd.f32 %v1730, %v1770
        %v1772 = vpop.f32.mrb[0].mxu0
        %v1773 = vadd.f32 %v1732, %v1772
        %v1774 = vpop.f32.mrb[0].mxu0
        %v1775 = vpop.f32.mrb[0].mxu0
        %1776 = vdwg.mxu0
        %1777 = vmatprep.subr.bf16.mxu0 %v1486
        %1778 = vmatpush1.bf16.msra.mxu0 %v1485
        %1779 = vmatprep.subr.bf16.mxu0 %v1488
        %1780 = vmatpush1.bf16.msra.mxu0 %v1487
        %1781 = vmatprep.subr.bf16.mxu0 %v1490
        %1782 = vmatpush1.bf16.msra.mxu0 %v1489
        %1783 = vmatprep.subr.bf16.mxu0 %v1492
        %1784 = vmatpush1.bf16.msra.mxu0 %v1491
        %1785 = vmatprep.subr.bf16.mxu0 %v1494
        %1786 = vmatpush1.bf16.msra.mxu0 %v1493
        %1787 = vmatprep.subr.bf16.mxu0 %v1496
        %1788 = vmatpush1.bf16.msra.mxu0 %v1495
        %1789 = vmatprep.subr.bf16.mxu0 %v1498
        %1790 = vmatpush1.bf16.msra.mxu0 %v1497
        %1791 = vmatprep.subr.bf16.mxu0 %v1500
        %1792 = vmatpush1.bf16.msra.mxu0 %v1499
        %1793 = vmatprep.subr.bf16.mxu0 %v1502
        %1794 = vmatpush1.bf16.msra.mxu0 %v1501
        %1795 = vmatprep.subr.bf16.mxu0 %v1504
        %1796 = vmatpush1.bf16.msra.mxu0 %v1503
        %1797 = vmatprep.subr.bf16.mxu0 %v1506
        %1798 = vmatpush1.bf16.msra.mxu0 %v1505
        %1799 = vmatprep.subr.bf16.mxu0 %v1508
        %1800 = vmatpush1.bf16.msra.mxu0 %v1507
        %1801 = vmatprep.subr.bf16.mxu0 %v1510
        %1802 = vmatpush1.bf16.msra.mxu0 %v1509
        %1803 = vmatprep.subr.bf16.mxu0 %v1512
        %1804 = vmatpush1.bf16.msra.mxu0 %v1511
        %1805 = vmatprep.subr.bf16.mxu0 %v1514
        %1806 = vmatpush1.bf16.msra.mxu0 %v1513
        %1807 = vmatprep.subr.bf16.mxu0 %v1516
        %1808 = vmatpush1.bf16.msra.mxu0 %v1515
        %1809 = vmatprep.mubr.bf16.mxu0 %v1155
        %1810 = vmatmul.mubr.bf16.gmra.mrb[0].mxu0 %v1154
        %v1811 = vpop.f32.mrb[0].mxu0
        %v1812 = vadd.f32 %v1771, %v1811
        %v1813 = vpop.f32.mrb[0].mxu0
        %v1814 = vadd.f32 %v1773, %v1813
        %v1815 = vpop.f32.mrb[0].mxu0
        %v1816 = vpop.f32.mrb[0].mxu0
        %1817 = vdwg.mxu0
        %1818 = vmatprep.subr.bf16.mxu0 %v1518
        %1819 = vmatpush1.bf16.msra.mxu0 %v1517
        %1820 = vmatprep.subr.bf16.mxu0 %v1520
        %1821 = vmatpush1.bf16.msra.mxu0 %v1519
        %1822 = vmatprep.subr.bf16.mxu0 %v1522
        %1823 = vmatpush1.bf16.msra.mxu0 %v1521
        %1824 = vmatprep.subr.bf16.mxu0 %v1524
        %1825 = vmatpush1.bf16.msra.mxu0 %v1523
        %1826 = vmatprep.subr.bf16.mxu0 %v1526
        %1827 = vmatpush1.bf16.msra.mxu0 %v1525
        %1828 = vmatprep.subr.bf16.mxu0 %v1528
        %1829 = vmatpush1.bf16.msra.mxu0 %v1527
        %1830 = vmatprep.subr.bf16.mxu0 %v1530
        %1831 = vmatpush1.bf16.msra.mxu0 %v1529
        %1832 = vmatprep.subr.bf16.mxu0 %v1532
        %1833 = vmatpush1.bf16.msra.mxu0 %v1531
        %1834 = vmatprep.subr.bf16.mxu0 %v1534
        %1835 = vmatpush1.bf16.msra.mxu0 %v1533
        %1836 = vmatprep.subr.bf16.mxu0 %v1536
        %1837 = vmatpush1.bf16.msra.mxu0 %v1535
        %1838 = vmatprep.subr.bf16.mxu0 %v1538
        %1839 = vmatpush1.bf16.msra.mxu0 %v1537
        %1840 = vmatprep.subr.bf16.mxu0 %v1540
        %1841 = vmatpush1.bf16.msra.mxu0 %v1539
        %1842 = vmatprep.subr.bf16.mxu0 %v1542
        %1843 = vmatpush1.bf16.msra.mxu0 %v1541
        %1844 = vmatprep.subr.bf16.mxu0 %v1544
        %1845 = vmatpush1.bf16.msra.mxu0 %v1543
        %1846 = vmatprep.subr.bf16.mxu0 %v1546
        %1847 = vmatpush1.bf16.msra.mxu0 %v1545
        %1848 = vmatprep.subr.bf16.mxu0 %v1548
        %1849 = vmatpush1.bf16.msra.mxu0 %v1547
        %1850 = vmatprep.mubr.bf16.mxu0 %v1157
        %1851 = vmatmul.mubr.bf16.gmra.mrb[0].mxu0 %v1156
        %v1852 = vpop.f32.mrb[0].mxu0
        %v1853 = vadd.f32 %v1812, %v1852
        %v1854 = vpop.f32.mrb[0].mxu0
        %v1855 = vadd.f32 %v1814, %v1854
        %v1856 = vpop.f32.mrb[0].mxu0
        %v1857 = vpop.f32.mrb[0].mxu0
        %1858 = vdwg.mxu0
        %1859 = vmatprep.subr.bf16.mxu0 %v1550
        %1860 = vmatpush1.bf16.msra.mxu0 %v1549
        %1861 = vmatprep.subr.bf16.mxu0 %v1552
        %1862 = vmatpush1.bf16.msra.mxu0 %v1551
        %1863 = vmatprep.subr.bf16.mxu0 %v1554
        %1864 = vmatpush1.bf16.msra.mxu0 %v1553
        %1865 = vmatprep.subr.bf16.mxu0 %v1556
        %1866 = vmatpush1.bf16.msra.mxu0 %v1555
        %1867 = vmatprep.subr.bf16.mxu0 %v1558
        %1868 = vmatpush1.bf16.msra.mxu0 %v1557
        %1869 = vmatprep.subr.bf16.mxu0 %v1560
        %1870 = vmatpush1.bf16.msra.mxu0 %v1559
        %1871 = vmatprep.subr.bf16.mxu0 %v1562
        %1872 = vmatpush1.bf16.msra.mxu0 %v1561
        %1873 = vmatprep.subr.bf16.mxu0 %v1564
        %1874 = vmatpush1.bf16.msra.mxu0 %v1563
        %1875 = vmatprep.subr.bf16.mxu0 %v1566
        %1876 = vmatpush1.bf16.msra.mxu0 %v1565
        %1877 = vmatprep.subr.bf16.mxu0 %v1568
        %1878 = vmatpush1.bf16.msra.mxu0 %v1567
        %1879 = vmatprep.subr.bf16.mxu0 %v1570
        %1880 = vmatpush1.bf16.msra.mxu0 %v1569
        %1881 = vmatprep.subr.bf16.mxu0 %v1572
        %1882 = vmatpush1.bf16.msra.mxu0 %v1571
        %1883 = vmatprep.subr.bf16.mxu0 %v1574
        %1884 = vmatpush1.bf16.msra.mxu0 %v1573
        %1885 = vmatprep.subr.bf16.mxu0 %v1576
        %1886 = vmatpush1.bf16.msra.mxu0 %v1575
        %1887 = vmatprep.subr.bf16.mxu0 %v1578
        %1888 = vmatpush1.bf16.msra.mxu0 %v1577
        %1889 = vmatprep.subr.bf16.mxu0 %v1580
        %1890 = vmatpush1.bf16.msra.mxu0 %v1579
        %1891 = vmatprep.mubr.bf16.mxu0 %v1159
        %1892 = vmatmul.mubr.bf16.gmra.mrb[0].mxu0 %v1158
        %v1893 = vpop.f32.mrb[0].mxu0
        %v1894 = vadd.f32 %v1853, %v1893
        %v1895 = vpop.f32.mrb[0].mxu0
        %v1896 = vadd.f32 %v1855, %v1895
        %v1897 = vpop.f32.mrb[0].mxu0
        %v1898 = vpop.f32.mrb[0].mxu0
        %1899 = vdwg.mxu0
        %1900 = vmatprep.subr.bf16.mxu0 %v1582
        %1901 = vmatpush1.bf16.msra.mxu0 %v1581
        %1902 = vmatprep.subr.bf16.mxu0 %v1584
        %1903 = vmatpush1.bf16.msra.mxu0 %v1583
        %1904 = vmatprep.subr.bf16.mxu0 %v1586
        %1905 = vmatpush1.bf16.msra.mxu0 %v1585
        %1906 = vmatprep.subr.bf16.mxu0 %v1588
        %1907 = vmatpush1.bf16.msra.mxu0 %v1587
        %1908 = vmatprep.subr.bf16.mxu0 %v1590
        %1909 = vmatpush1.bf16.msra.mxu0 %v1589
        %1910 = vmatprep.subr.bf16.mxu0 %v1592
        %1911 = vmatpush1.bf16.msra.mxu0 %v1591
        %1912 = vmatprep.subr.bf16.mxu0 %v1594
        %1913 = vmatpush1.bf16.msra.mxu0 %v1593
        %1914 = vmatprep.subr.bf16.mxu0 %v1596
        %1915 = vmatpush1.bf16.msra.mxu0 %v1595
        %1916 = vmatprep.subr.bf16.mxu0 %v1598
        %1917 = vmatpush1.bf16.msra.mxu0 %v1597
        %1918 = vmatprep.subr.bf16.mxu0 %v1600
        %1919 = vmatpush1.bf16.msra.mxu0 %v1599
        %1920 = vmatprep.subr.bf16.mxu0 %v1602
        %1921 = vmatpush1.bf16.msra.mxu0 %v1601
        %1922 = vmatprep.subr.bf16.mxu0 %v1604
        %1923 = vmatpush1.bf16.msra.mxu0 %v1603
        %1924 = vmatprep.subr.bf16.mxu0 %v1606
        %1925 = vmatpush1.bf16.msra.mxu0 %v1605
        %1926 = vmatprep.subr.bf16.mxu0 %v1608
        %1927 = vmatpush1.bf16.msra.mxu0 %v1607
        %1928 = vmatprep.subr.bf16.mxu0 %v1610
        %1929 = vmatpush1.bf16.msra.mxu0 %v1609
        %1930 = vmatprep.subr.bf16.mxu0 %v1612
        %1931 = vmatpush1.bf16.msra.mxu0 %v1611
        %1932 = vmatprep.mubr.bf16.mxu0 %v1161
        %1933 = vmatmul.mubr.bf16.gmra.mrb[0].mxu0 %v1160
        %v1934 = vpop.f32.mrb[0].mxu0
        %v1935 = vadd.f32 %v1894, %v1934
        %v1936 = vpop.f32.mrb[0].mxu0
        %v1937 = vadd.f32 %v1896, %v1936
        %v1938 = vpop.f32.mrb[0].mxu0
        %v1939 = vpop.f32.mrb[0].mxu0
        %1940 = vdwg.mxu0
        // Predicated region
        $region149: #{tpu_custom_call.1} parent=71 // pred_check
          %p1941 = pneg %p617
        $region150: #{tpu_custom_call.1} parent=71 // pred_check_branch
          %1943 = sbr.rel (%p1941) target = $region152
        $region151: #{tpu_custom_call.1} parent=71 // pred_region
          %s1944 = scalar_lea.sflag [#allocation6], 1
          %s1945 = smul.u32 2, 256
          %s1946 = smul.u32 %s1945, 2
          %s1947 = sshll.u32 %s1946, 4
          %1948 = dma.done %s1944, %s1947
        $region152: #{tpu_custom_call.1} parent=71 // pred_fallthru
          _
        %s1949 = scalar_lea.vmem [#allocation2], 1024
        %v1950 = vld [vmem:[%s1949] sm:$0xff]
        %v1951 = vld [vmem:[%s1949 + $0x8] sm:$0xff]
        %v1952 = vld [vmem:[%s1949 + $0x10] sm:$0xff]
        %v1953 = vld [vmem:[%s1949 + $0x18] sm:$0xff]
        %v1954 = vld [vmem:[%s1949 + $0x20] sm:$0xff]
        %v1955 = vld [vmem:[%s1949 + $0x28] sm:$0xff]
        %v1956 = vld [vmem:[%s1949 + $0x30] sm:$0xff]
        %v1957 = vld [vmem:[%s1949 + $0x38] sm:$0xff]
        %v1958 = vld [vmem:[%s1949 + $0x40] sm:$0xff]
        %v1959 = vld [vmem:[%s1949 + $0x48] sm:$0xff]
        %v1960 = vld [vmem:[%s1949 + $0x50] sm:$0xff]
        %v1961 = vld [vmem:[%s1949 + $0x58] sm:$0xff]
        %v1962 = vld [vmem:[%s1949 + $0x60] sm:$0xff]
        %v1963 = vld [vmem:[%s1949 + $0x68] sm:$0xff]
        %v1964 = vld [vmem:[%s1949 + $0x70] sm:$0xff]
        %v1965 = vld [vmem:[%s1949 + $0x78] sm:$0xff]
        %v1966 = vld [vmem:[%s1949 + $0x80] sm:$0xff]
        %v1967 = vld [vmem:[%s1949 + $0x88] sm:$0xff]
        %v1968 = vld [vmem:[%s1949 + $0x90] sm:$0xff]
        %v1969 = vld [vmem:[%s1949 + $0x98] sm:$0xff]
        %v1970 = vld [vmem:[%s1949 + $0xa0] sm:$0xff]
        %v1971 = vld [vmem:[%s1949 + $0xa8] sm:$0xff]
        %v1972 = vld [vmem:[%s1949 + $0xb0] sm:$0xff]
        %v1973 = vld [vmem:[%s1949 + $0xb8] sm:$0xff]
        %v1974 = vld [vmem:[%s1949 + $0xc0] sm:$0xff]
        %v1975 = vld [vmem:[%s1949 + $0xc8] sm:$0xff]
        %v1976 = vld [vmem:[%s1949 + $0xd0] sm:$0xff]
        %v1977 = vld [vmem:[%s1949 + $0xd8] sm:$0xff]
        %v1978 = vld [vmem:[%s1949 + $0xe0] sm:$0xff]
        %v1979 = vld [vmem:[%s1949 + $0xe8] sm:$0xff]
        %v1980 = vld [vmem:[%s1949 + $0xf0] sm:$0xff]
        %v1981 = vld [vmem:[%s1949 + $0xf8] sm:$0xff]
        %v1982 = vld [vmem:[%s1949 + $0x100] sm:$0xff]
        %v1983 = vld [vmem:[%s1949 + $0x108] sm:$0xff]
        %v1984 = vld [vmem:[%s1949 + $0x110] sm:$0xff]
        %v1985 = vld [vmem:[%s1949 + $0x118] sm:$0xff]
        %v1986 = vld [vmem:[%s1949 + $0x120] sm:$0xff]
        %v1987 = vld [vmem:[%s1949 + $0x128] sm:$0xff]
        %v1988 = vld [vmem:[%s1949 + $0x130] sm:$0xff]
        %v1989 = vld [vmem:[%s1949 + $0x138] sm:$0xff]
        %v1990 = vld [vmem:[%s1949 + $0x140] sm:$0xff]
        %v1991 = vld [vmem:[%s1949 + $0x148] sm:$0xff]
        %v1992 = vld [vmem:[%s1949 + $0x150] sm:$0xff]
        %v1993 = vld [vmem:[%s1949 + $0x158] sm:$0xff]
        %v1994 = vld [vmem:[%s1949 + $0x160] sm:$0xff]
        %v1995 = vld [vmem:[%s1949 + $0x168] sm:$0xff]
        %v1996 = vld [vmem:[%s1949 + $0x170] sm:$0xff]
        %v1997 = vld [vmem:[%s1949 + $0x178] sm:$0xff]
        %v1998 = vld [vmem:[%s1949 + $0x180] sm:$0xff]
        %v1999 = vld [vmem:[%s1949 + $0x188] sm:$0xff]
        %v2000 = vld [vmem:[%s1949 + $0x190] sm:$0xff]
        %v2001 = vld [vmem:[%s1949 + $0x198] sm:$0xff]
        %v2002 = vld [vmem:[%s1949 + $0x1a0] sm:$0xff]
        %v2003 = vld [vmem:[%s1949 + $0x1a8] sm:$0xff]
        %v2004 = vld [vmem:[%s1949 + $0x1b0] sm:$0xff]
        %v2005 = vld [vmem:[%s1949 + $0x1b8] sm:$0xff]
        %v2006 = vld [vmem:[%s1949 + $0x1c0] sm:$0xff]
        %v2007 = vld [vmem:[%s1949 + $0x1c8] sm:$0xff]
        %v2008 = vld [vmem:[%s1949 + $0x1d0] sm:$0xff]
        %v2009 = vld [vmem:[%s1949 + $0x1d8] sm:$0xff]
        %v2010 = vld [vmem:[%s1949 + $0x1e0] sm:$0xff]
        %v2011 = vld [vmem:[%s1949 + $0x1e8] sm:$0xff]
        %v2012 = vld [vmem:[%s1949 + $0x1f0] sm:$0xff]
        %v2013 = vld [vmem:[%s1949 + $0x1f8] sm:$0xff]
        %v2014 = vld [vmem:[%s1949 + $0x200] sm:$0xff]
        %v2015 = vld [vmem:[%s1949 + $0x208] sm:$0xff]
        %v2016 = vld [vmem:[%s1949 + $0x210] sm:$0xff]
        %v2017 = vld [vmem:[%s1949 + $0x218] sm:$0xff]
        %v2018 = vld [vmem:[%s1949 + $0x220] sm:$0xff]
        %v2019 = vld [vmem:[%s1949 + $0x228] sm:$0xff]
        %v2020 = vld [vmem:[%s1949 + $0x230] sm:$0xff]
        %v2021 = vld [vmem:[%s1949 + $0x238] sm:$0xff]
        %v2022 = vld [vmem:[%s1949 + $0x240] sm:$0xff]
        %v2023 = vld [vmem:[%s1949 + $0x248] sm:$0xff]
        %v2024 = vld [vmem:[%s1949 + $0x250] sm:$0xff]
        %v2025 = vld [vmem:[%s1949 + $0x258] sm:$0xff]
        %v2026 = vld [vmem:[%s1949 + $0x260] sm:$0xff]
        %v2027 = vld [vmem:[%s1949 + $0x268] sm:$0xff]
        %v2028 = vld [vmem:[%s1949 + $0x270] sm:$0xff]
        %v2029 = vld [vmem:[%s1949 + $0x278] sm:$0xff]
        %v2030 = vld [vmem:[%s1949 + $0x280] sm:$0xff]
        %v2031 = vld [vmem:[%s1949 + $0x288] sm:$0xff]
        %v2032 = vld [vmem:[%s1949 + $0x290] sm:$0xff]
        %v2033 = vld [vmem:[%s1949 + $0x298] sm:$0xff]
        %v2034 = vld [vmem:[%s1949 + $0x2a0] sm:$0xff]
        %v2035 = vld [vmem:[%s1949 + $0x2a8] sm:$0xff]
        %v2036 = vld [vmem:[%s1949 + $0x2b0] sm:$0xff]
        %v2037 = vld [vmem:[%s1949 + $0x2b8] sm:$0xff]
        %v2038 = vld [vmem:[%s1949 + $0x2c0] sm:$0xff]
        %v2039 = vld [vmem:[%s1949 + $0x2c8] sm:$0xff]
        %v2040 = vld [vmem:[%s1949 + $0x2d0] sm:$0xff]
        %v2041 = vld [vmem:[%s1949 + $0x2d8] sm:$0xff]
        %v2042 = vld [vmem:[%s1949 + $0x2e0] sm:$0xff]
        %v2043 = vld [vmem:[%s1949 + $0x2e8] sm:$0xff]
        %v2044 = vld [vmem:[%s1949 + $0x2f0] sm:$0xff]
        %v2045 = vld [vmem:[%s1949 + $0x2f8] sm:$0xff]
        %v2046 = vld [vmem:[%s1949 + $0x300] sm:$0xff]
        %v2047 = vld [vmem:[%s1949 + $0x308] sm:$0xff]
        %v2048 = vld [vmem:[%s1949 + $0x310] sm:$0xff]
        %v2049 = vld [vmem:[%s1949 + $0x318] sm:$0xff]
        %v2050 = vld [vmem:[%s1949 + $0x320] sm:$0xff]
        %v2051 = vld [vmem:[%s1949 + $0x328] sm:$0xff]
        %v2052 = vld [vmem:[%s1949 + $0x330] sm:$0xff]
        %v2053 = vld [vmem:[%s1949 + $0x338] sm:$0xff]
        %v2054 = vld [vmem:[%s1949 + $0x340] sm:$0xff]
        %v2055 = vld [vmem:[%s1949 + $0x348] sm:$0xff]
        %v2056 = vld [vmem:[%s1949 + $0x350] sm:$0xff]
        %v2057 = vld [vmem:[%s1949 + $0x358] sm:$0xff]
        %v2058 = vld [vmem:[%s1949 + $0x360] sm:$0xff]
        %v2059 = vld [vmem:[%s1949 + $0x368] sm:$0xff]
        %v2060 = vld [vmem:[%s1949 + $0x370] sm:$0xff]
        %v2061 = vld [vmem:[%s1949 + $0x378] sm:$0xff]
        %v2062 = vld [vmem:[%s1949 + $0x380] sm:$0xff]
        %v2063 = vld [vmem:[%s1949 + $0x388] sm:$0xff]
        %v2064 = vld [vmem:[%s1949 + $0x390] sm:$0xff]
        %v2065 = vld [vmem:[%s1949 + $0x398] sm:$0xff]
        %v2066 = vld [vmem:[%s1949 + $0x3a0] sm:$0xff]
        %v2067 = vld [vmem:[%s1949 + $0x3a8] sm:$0xff]
        %v2068 = vld [vmem:[%s1949 + $0x3b0] sm:$0xff]
        %v2069 = vld [vmem:[%s1949 + $0x3b8] sm:$0xff]
        %v2070 = vld [vmem:[%s1949 + $0x3c0] sm:$0xff]
        %v2071 = vld [vmem:[%s1949 + $0x3c8] sm:$0xff]
        %v2072 = vld [vmem:[%s1949 + $0x3d0] sm:$0xff]
        %v2073 = vld [vmem:[%s1949 + $0x3d8] sm:$0xff]
        %v2074 = vld [vmem:[%s1949 + $0x3e0] sm:$0xff]
        %v2075 = vld [vmem:[%s1949 + $0x3e8] sm:$0xff]
        %v2076 = vld [vmem:[%s1949 + $0x3f0] sm:$0xff]
        %v2077 = vld [vmem:[%s1949 + $0x3f8] sm:$0xff]
        %v2078 = vunpack.c.l.s8.bf16 %v1950
        %v2079 = vunpack.c.l.s8.bf16 %v1951
        %v2080 = vunpack.c.h.s8.bf16 %v1950
        %v2081 = vunpack.c.h.s8.bf16 %v1951
        %v2082 = vunpack.c.l.s8.bf16 %v1952
        %v2083 = vunpack.c.l.s8.bf16 %v1953
        %v2084 = vunpack.c.h.s8.bf16 %v1952
        %v2085 = vunpack.c.h.s8.bf16 %v1953
        %v2086 = vunpack.c.l.s8.bf16 %v1954
        %v2087 = vunpack.c.l.s8.bf16 %v1955
        %v2088 = vunpack.c.h.s8.bf16 %v1954
        %v2089 = vunpack.c.h.s8.bf16 %v1955
        %v2090 = vunpack.c.l.s8.bf16 %v1956
        %v2091 = vunpack.c.l.s8.bf16 %v1957
        %v2092 = vunpack.c.h.s8.bf16 %v1956
        %v2093 = vunpack.c.h.s8.bf16 %v1957
        %v2094 = vunpack.c.l.s8.bf16 %v1958
        %v2095 = vunpack.c.l.s8.bf16 %v1959
        %v2096 = vunpack.c.h.s8.bf16 %v1958
        %v2097 = vunpack.c.h.s8.bf16 %v1959
        %v2098 = vunpack.c.l.s8.bf16 %v1960
        %v2099 = vunpack.c.l.s8.bf16 %v1961
        %v2100 = vunpack.c.h.s8.bf16 %v1960
        %v2101 = vunpack.c.h.s8.bf16 %v1961
        %v2102 = vunpack.c.l.s8.bf16 %v1962
        %v2103 = vunpack.c.l.s8.bf16 %v1963
        %v2104 = vunpack.c.h.s8.bf16 %v1962
        %v2105 = vunpack.c.h.s8.bf16 %v1963
        %v2106 = vunpack.c.l.s8.bf16 %v1964
        %v2107 = vunpack.c.l.s8.bf16 %v1965
        %v2108 = vunpack.c.h.s8.bf16 %v1964
        %v2109 = vunpack.c.h.s8.bf16 %v1965
        %v2110 = vunpack.c.l.s8.bf16 %v1966
        %v2111 = vunpack.c.l.s8.bf16 %v1967
        %v2112 = vunpack.c.h.s8.bf16 %v1966
        %v2113 = vunpack.c.h.s8.bf16 %v1967
        %v2114 = vunpack.c.l.s8.bf16 %v1968
        %v2115 = vunpack.c.l.s8.bf16 %v1969
        %v2116 = vunpack.c.h.s8.bf16 %v1968
        %v2117 = vunpack.c.h.s8.bf16 %v1969
        %v2118 = vunpack.c.l.s8.bf16 %v1970
        %v2119 = vunpack.c.l.s8.bf16 %v1971
        %v2120 = vunpack.c.h.s8.bf16 %v1970
        %v2121 = vunpack.c.h.s8.bf16 %v1971
        %v2122 = vunpack.c.l.s8.bf16 %v1972
        %v2123 = vunpack.c.l.s8.bf16 %v1973
        %v2124 = vunpack.c.h.s8.bf16 %v1972
        %v2125 = vunpack.c.h.s8.bf16 %v1973
        %v2126 = vunpack.c.l.s8.bf16 %v1974
        %v2127 = vunpack.c.l.s8.bf16 %v1975
        %v2128 = vunpack.c.h.s8.bf16 %v1974
        %v2129 = vunpack.c.h.s8.bf16 %v1975
        %v2130 = vunpack.c.l.s8.bf16 %v1976
        %v2131 = vunpack.c.l.s8.bf16 %v1977
        %v2132 = vunpack.c.h.s8.bf16 %v1976
        %v2133 = vunpack.c.h.s8.bf16 %v1977
        %v2134 = vunpack.c.l.s8.bf16 %v1978
        %v2135 = vunpack.c.l.s8.bf16 %v1979
        %v2136 = vunpack.c.h.s8.bf16 %v1978
        %v2137 = vunpack.c.h.s8.bf16 %v1979
        %v2138 = vunpack.c.l.s8.bf16 %v1980
        %v2139 = vunpack.c.l.s8.bf16 %v1981
        %v2140 = vunpack.c.h.s8.bf16 %v1980
        %v2141 = vunpack.c.h.s8.bf16 %v1981
        %v2142 = vunpack.c.l.s8.bf16 %v1982
        %v2143 = vunpack.c.l.s8.bf16 %v1983
        %v2144 = vunpack.c.h.s8.bf16 %v1982
        %v2145 = vunpack.c.h.s8.bf16 %v1983
        %v2146 = vunpack.c.l.s8.bf16 %v1984
        %v2147 = vunpack.c.l.s8.bf16 %v1985
        %v2148 = vunpack.c.h.s8.bf16 %v1984
        %v2149 = vunpack.c.h.s8.bf16 %v1985
        %v2150 = vunpack.c.l.s8.bf16 %v1986
        %v2151 = vunpack.c.l.s8.bf16 %v1987
        %v2152 = vunpack.c.h.s8.bf16 %v1986
        %v2153 = vunpack.c.h.s8.bf16 %v1987
        %v2154 = vunpack.c.l.s8.bf16 %v1988
        %v2155 = vunpack.c.l.s8.bf16 %v1989
        %v2156 = vunpack.c.h.s8.bf16 %v1988
        %v2157 = vunpack.c.h.s8.bf16 %v1989
        %v2158 = vunpack.c.l.s8.bf16 %v1990
        %v2159 = vunpack.c.l.s8.bf16 %v1991
        %v2160 = vunpack.c.h.s8.bf16 %v1990
        %v2161 = vunpack.c.h.s8.bf16 %v1991
        %v2162 = vunpack.c.l.s8.bf16 %v1992
        %v2163 = vunpack.c.l.s8.bf16 %v1993
        %v2164 = vunpack.c.h.s8.bf16 %v1992
        %v2165 = vunpack.c.h.s8.bf16 %v1993
        %v2166 = vunpack.c.l.s8.bf16 %v1994
        %v2167 = vunpack.c.l.s8.bf16 %v1995
        %v2168 = vunpack.c.h.s8.bf16 %v1994
        %v2169 = vunpack.c.h.s8.bf16 %v1995
        %v2170 = vunpack.c.l.s8.bf16 %v1996
        %v2171 = vunpack.c.l.s8.bf16 %v1997
        %v2172 = vunpack.c.h.s8.bf16 %v1996
        %v2173 = vunpack.c.h.s8.bf16 %v1997
        %v2174 = vunpack.c.l.s8.bf16 %v1998
        %v2175 = vunpack.c.l.s8.bf16 %v1999
        %v2176 = vunpack.c.h.s8.bf16 %v1998
        %v2177 = vunpack.c.h.s8.bf16 %v1999
        %v2178 = vunpack.c.l.s8.bf16 %v2000
        %v2179 = vunpack.c.l.s8.bf16 %v2001
        %v2180 = vunpack.c.h.s8.bf16 %v2000
        %v2181 = vunpack.c.h.s8.bf16 %v2001
        %v2182 = vunpack.c.l.s8.bf16 %v2002
        %v2183 = vunpack.c.l.s8.bf16 %v2003
        %v2184 = vunpack.c.h.s8.bf16 %v2002
        %v2185 = vunpack.c.h.s8.bf16 %v2003
        %v2186 = vunpack.c.l.s8.bf16 %v2004
        %v2187 = vunpack.c.l.s8.bf16 %v2005
        %v2188 = vunpack.c.h.s8.bf16 %v2004
        %v2189 = vunpack.c.h.s8.bf16 %v2005
        %v2190 = vunpack.c.l.s8.bf16 %v2006
        %v2191 = vunpack.c.l.s8.bf16 %v2007
        %v2192 = vunpack.c.h.s8.bf16 %v2006
        %v2193 = vunpack.c.h.s8.bf16 %v2007
        %v2194 = vunpack.c.l.s8.bf16 %v2008
        %v2195 = vunpack.c.l.s8.bf16 %v2009
        %v2196 = vunpack.c.h.s8.bf16 %v2008
        %v2197 = vunpack.c.h.s8.bf16 %v2009
        %v2198 = vunpack.c.l.s8.bf16 %v2010
        %v2199 = vunpack.c.l.s8.bf16 %v2011
        %v2200 = vunpack.c.h.s8.bf16 %v2010
        %v2201 = vunpack.c.h.s8.bf16 %v2011
        %v2202 = vunpack.c.l.s8.bf16 %v2012
        %v2203 = vunpack.c.l.s8.bf16 %v2013
        %v2204 = vunpack.c.h.s8.bf16 %v2012
        %v2205 = vunpack.c.h.s8.bf16 %v2013
        %v2206 = vunpack.c.l.s8.bf16 %v2014
        %v2207 = vunpack.c.l.s8.bf16 %v2015
        %v2208 = vunpack.c.h.s8.bf16 %v2014
        %v2209 = vunpack.c.h.s8.bf16 %v2015
        %v2210 = vunpack.c.l.s8.bf16 %v2016
        %v2211 = vunpack.c.l.s8.bf16 %v2017
        %v2212 = vunpack.c.h.s8.bf16 %v2016
        %v2213 = vunpack.c.h.s8.bf16 %v2017
        %v2214 = vunpack.c.l.s8.bf16 %v2018
        %v2215 = vunpack.c.l.s8.bf16 %v2019
        %v2216 = vunpack.c.h.s8.bf16 %v2018
        %v2217 = vunpack.c.h.s8.bf16 %v2019
        %v2218 = vunpack.c.l.s8.bf16 %v2020
        %v2219 = vunpack.c.l.s8.bf16 %v2021
        %v2220 = vunpack.c.h.s8.bf16 %v2020
        %v2221 = vunpack.c.h.s8.bf16 %v2021
        %v2222 = vunpack.c.l.s8.bf16 %v2022
        %v2223 = vunpack.c.l.s8.bf16 %v2023
        %v2224 = vunpack.c.h.s8.bf16 %v2022
        %v2225 = vunpack.c.h.s8.bf16 %v2023
        %v2226 = vunpack.c.l.s8.bf16 %v2024
        %v2227 = vunpack.c.l.s8.bf16 %v2025
        %v2228 = vunpack.c.h.s8.bf16 %v2024
        %v2229 = vunpack.c.h.s8.bf16 %v2025
        %v2230 = vunpack.c.l.s8.bf16 %v2026
        %v2231 = vunpack.c.l.s8.bf16 %v2027
        %v2232 = vunpack.c.h.s8.bf16 %v2026
        %v2233 = vunpack.c.h.s8.bf16 %v2027
        %v2234 = vunpack.c.l.s8.bf16 %v2028
        %v2235 = vunpack.c.l.s8.bf16 %v2029
        %v2236 = vunpack.c.h.s8.bf16 %v2028
        %v2237 = vunpack.c.h.s8.bf16 %v2029
        %v2238 = vunpack.c.l.s8.bf16 %v2030
        %v2239 = vunpack.c.l.s8.bf16 %v2031
        %v2240 = vunpack.c.h.s8.bf16 %v2030
        %v2241 = vunpack.c.h.s8.bf16 %v2031
        %v2242 = vunpack.c.l.s8.bf16 %v2032
        %v2243 = vunpack.c.l.s8.bf16 %v2033
        %v2244 = vunpack.c.h.s8.bf16 %v2032
        %v2245 = vunpack.c.h.s8.bf16 %v2033
        %v2246 = vunpack.c.l.s8.bf16 %v2034
        %v2247 = vunpack.c.l.s8.bf16 %v2035
        %v2248 = vunpack.c.h.s8.bf16 %v2034
        %v2249 = vunpack.c.h.s8.bf16 %v2035
        %v2250 = vunpack.c.l.s8.bf16 %v2036
        %v2251 = vunpack.c.l.s8.bf16 %v2037
        %v2252 = vunpack.c.h.s8.bf16 %v2036
        %v2253 = vunpack.c.h.s8.bf16 %v2037
        %v2254 = vunpack.c.l.s8.bf16 %v2038
        %v2255 = vunpack.c.l.s8.bf16 %v2039
        %v2256 = vunpack.c.h.s8.bf16 %v2038
        %v2257 = vunpack.c.h.s8.bf16 %v2039
        %v2258 = vunpack.c.l.s8.bf16 %v2040
        %v2259 = vunpack.c.l.s8.bf16 %v2041
        %v2260 = vunpack.c.h.s8.bf16 %v2040
        %v2261 = vunpack.c.h.s8.bf16 %v2041
        %v2262 = vunpack.c.l.s8.bf16 %v2042
        %v2263 = vunpack.c.l.s8.bf16 %v2043
        %v2264 = vunpack.c.h.s8.bf16 %v2042
        %v2265 = vunpack.c.h.s8.bf16 %v2043
        %v2266 = vunpack.c.l.s8.bf16 %v2044
        %v2267 = vunpack.c.l.s8.bf16 %v2045
        %v2268 = vunpack.c.h.s8.bf16 %v2044
        %v2269 = vunpack.c.h.s8.bf16 %v2045
        %v2270 = vunpack.c.l.s8.bf16 %v2046
        %v2271 = vunpack.c.l.s8.bf16 %v2047
        %v2272 = vunpack.c.h.s8.bf16 %v2046
        %v2273 = vunpack.c.h.s8.bf16 %v2047
        %v2274 = vunpack.c.l.s8.bf16 %v2048
        %v2275 = vunpack.c.l.s8.bf16 %v2049
        %v2276 = vunpack.c.h.s8.bf16 %v2048
        %v2277 = vunpack.c.h.s8.bf16 %v2049
        %v2278 = vunpack.c.l.s8.bf16 %v2050
        %v2279 = vunpack.c.l.s8.bf16 %v2051
        %v2280 = vunpack.c.h.s8.bf16 %v2050
        %v2281 = vunpack.c.h.s8.bf16 %v2051
        %v2282 = vunpack.c.l.s8.bf16 %v2052
        %v2283 = vunpack.c.l.s8.bf16 %v2053
        %v2284 = vunpack.c.h.s8.bf16 %v2052
        %v2285 = vunpack.c.h.s8.bf16 %v2053
        %v2286 = vunpack.c.l.s8.bf16 %v2054
        %v2287 = vunpack.c.l.s8.bf16 %v2055
        %v2288 = vunpack.c.h.s8.bf16 %v2054
        %v2289 = vunpack.c.h.s8.bf16 %v2055
        %v2290 = vunpack.c.l.s8.bf16 %v2056
        %v2291 = vunpack.c.l.s8.bf16 %v2057
        %v2292 = vunpack.c.h.s8.bf16 %v2056
        %v2293 = vunpack.c.h.s8.bf16 %v2057
        %v2294 = vunpack.c.l.s8.bf16 %v2058
        %v2295 = vunpack.c.l.s8.bf16 %v2059
        %v2296 = vunpack.c.h.s8.bf16 %v2058
        %v2297 = vunpack.c.h.s8.bf16 %v2059
        %v2298 = vunpack.c.l.s8.bf16 %v2060
        %v2299 = vunpack.c.l.s8.bf16 %v2061
        %v2300 = vunpack.c.h.s8.bf16 %v2060
        %v2301 = vunpack.c.h.s8.bf16 %v2061
        %v2302 = vunpack.c.l.s8.bf16 %v2062
        %v2303 = vunpack.c.l.s8.bf16 %v2063
        %v2304 = vunpack.c.h.s8.bf16 %v2062
        %v2305 = vunpack.c.h.s8.bf16 %v2063
        %v2306 = vunpack.c.l.s8.bf16 %v2064
        %v2307 = vunpack.c.l.s8.bf16 %v2065
        %v2308 = vunpack.c.h.s8.bf16 %v2064
        %v2309 = vunpack.c.h.s8.bf16 %v2065
        %v2310 = vunpack.c.l.s8.bf16 %v2066
        %v2311 = vunpack.c.l.s8.bf16 %v2067
        %v2312 = vunpack.c.h.s8.bf16 %v2066
        %v2313 = vunpack.c.h.s8.bf16 %v2067
        %v2314 = vunpack.c.l.s8.bf16 %v2068
        %v2315 = vunpack.c.l.s8.bf16 %v2069
        %v2316 = vunpack.c.h.s8.bf16 %v2068
        %v2317 = vunpack.c.h.s8.bf16 %v2069
        %v2318 = vunpack.c.l.s8.bf16 %v2070
        %v2319 = vunpack.c.l.s8.bf16 %v2071
        %v2320 = vunpack.c.h.s8.bf16 %v2070
        %v2321 = vunpack.c.h.s8.bf16 %v2071
        %v2322 = vunpack.c.l.s8.bf16 %v2072
        %v2323 = vunpack.c.l.s8.bf16 %v2073
        %v2324 = vunpack.c.h.s8.bf16 %v2072
        %v2325 = vunpack.c.h.s8.bf16 %v2073
        %v2326 = vunpack.c.l.s8.bf16 %v2074
        %v2327 = vunpack.c.l.s8.bf16 %v2075
        %v2328 = vunpack.c.h.s8.bf16 %v2074
        %v2329 = vunpack.c.h.s8.bf16 %v2075
        %v2330 = vunpack.c.l.s8.bf16 %v2076
        %v2331 = vunpack.c.l.s8.bf16 %v2077
        %v2332 = vunpack.c.h.s8.bf16 %v2076
        %v2333 = vunpack.c.h.s8.bf16 %v2077
        %2334 = vmatprep.subr.bf16.mxu0 %v2079
        %2335 = vmatpush1.bf16.msra.mxu0 %v2078
        %2336 = vmatprep.subr.bf16.mxu0 %v2081
        %2337 = vmatpush1.bf16.msra.mxu0 %v2080
        %2338 = vmatprep.subr.bf16.mxu0 %v2083
        %2339 = vmatpush1.bf16.msra.mxu0 %v2082
        %2340 = vmatprep.subr.bf16.mxu0 %v2085
        %2341 = vmatpush1.bf16.msra.mxu0 %v2084
        %2342 = vmatprep.subr.bf16.mxu0 %v2087
        %2343 = vmatpush1.bf16.msra.mxu0 %v2086
        %2344 = vmatprep.subr.bf16.mxu0 %v2089
        %2345 = vmatpush1.bf16.msra.mxu0 %v2088
        %2346 = vmatprep.subr.bf16.mxu0 %v2091
        %2347 = vmatpush1.bf16.msra.mxu0 %v2090
        %2348 = vmatprep.subr.bf16.mxu0 %v2093
        %2349 = vmatpush1.bf16.msra.mxu0 %v2092
        %2350 = vmatprep.subr.bf16.mxu0 %v2095
        %2351 = vmatpush1.bf16.msra.mxu0 %v2094
        %2352 = vmatprep.subr.bf16.mxu0 %v2097
        %2353 = vmatpush1.bf16.msra.mxu0 %v2096
        %2354 = vmatprep.subr.bf16.mxu0 %v2099
        %2355 = vmatpush1.bf16.msra.mxu0 %v2098
        %2356 = vmatprep.subr.bf16.mxu0 %v2101
        %2357 = vmatpush1.bf16.msra.mxu0 %v2100
        %2358 = vmatprep.subr.bf16.mxu0 %v2103
        %2359 = vmatpush1.bf16.msra.mxu0 %v2102
        %2360 = vmatprep.subr.bf16.mxu0 %v2105
        %2361 = vmatpush1.bf16.msra.mxu0 %v2104
        %2362 = vmatprep.subr.bf16.mxu0 %v2107
        %2363 = vmatpush1.bf16.msra.mxu0 %v2106
        %2364 = vmatprep.subr.bf16.mxu0 %v2109
        %2365 = vmatpush1.bf16.msra.mxu0 %v2108
        %2366 = vmatprep.mubr.bf16.mxu0 %v1147
        %2367 = vmatmul.mubr.bf16.gmra.mrb[0].mxu0 %v1146
        %v2368 = vpop.f32.mrb[0].mxu0
        %v2369 = vadd.f32 0.0, %v2368
        %v2370 = vpop.f32.mrb[0].mxu0
        %v2371 = vadd.f32 0.0, %v2370
        %v2372 = vpop.f32.mrb[0].mxu0
        %v2373 = vpop.f32.mrb[0].mxu0
        %2374 = vdwg.mxu0
        %2375 = vmatprep.subr.bf16.mxu0 %v2111
        %2376 = vmatpush1.bf16.msra.mxu0 %v2110
        %2377 = vmatprep.subr.bf16.mxu0 %v2113
        %2378 = vmatpush1.bf16.msra.mxu0 %v2112
        %2379 = vmatprep.subr.bf16.mxu0 %v2115
        %2380 = vmatpush1.bf16.msra.mxu0 %v2114
        %2381 = vmatprep.subr.bf16.mxu0 %v2117
        %2382 = vmatpush1.bf16.msra.mxu0 %v2116
        %2383 = vmatprep.subr.bf16.mxu0 %v2119
        %2384 = vmatpush1.bf16.msra.mxu0 %v2118
        %2385 = vmatprep.subr.bf16.mxu0 %v2121
        %2386 = vmatpush1.bf16.msra.mxu0 %v2120
        %2387 = vmatprep.subr.bf16.mxu0 %v2123
        %2388 = vmatpush1.bf16.msra.mxu0 %v2122
        %2389 = vmatprep.subr.bf16.mxu0 %v2125
        %2390 = vmatpush1.bf16.msra.mxu0 %v2124
        %2391 = vmatprep.subr.bf16.mxu0 %v2127
        %2392 = vmatpush1.bf16.msra.mxu0 %v2126
        %2393 = vmatprep.subr.bf16.mxu0 %v2129
        %2394 = vmatpush1.bf16.msra.mxu0 %v2128
        %2395 = vmatprep.subr.bf16.mxu0 %v2131
        %2396 = vmatpush1.bf16.msra.mxu0 %v2130
        %2397 = vmatprep.subr.bf16.mxu0 %v2133
        %2398 = vmatpush1.bf16.msra.mxu0 %v2132
        %2399 = vmatprep.subr.bf16.mxu0 %v2135
        %2400 = vmatpush1.bf16.msra.mxu0 %v2134
        %2401 = vmatprep.subr.bf16.mxu0 %v2137
        %2402 = vmatpush1.bf16.msra.mxu0 %v2136
        %2403 = vmatprep.subr.bf16.mxu0 %v2139
        %2404 = vmatpush1.bf16.msra.mxu0 %v2138
        %2405 = vmatprep.subr.bf16.mxu0 %v2141
        %2406 = vmatpush1.bf16.msra.mxu0 %v2140
        %2407 = vmatprep.mubr.bf16.mxu0 %v1149
        %2408 = vmatmul.mubr.bf16.gmra.mrb[0].mxu0 %v1148
        %v2409 = vpop.f32.mrb[0].mxu0
        %v2410 = vadd.f32 %v2369, %v2409
        %v2411 = vpop.f32.mrb[0].mxu0
        %v2412 = vadd.f32 %v2371, %v2411
        %v2413 = vpop.f32.mrb[0].mxu0
        %v2414 = vpop.f32.mrb[0].mxu0
        %2415 = vdwg.mxu0
        %2416 = vmatprep.subr.bf16.mxu0 %v2143
        %2417 = vmatpush1.bf16.msra.mxu0 %v2142
        %2418 = vmatprep.subr.bf16.mxu0 %v2145
        %2419 = vmatpush1.bf16.msra.mxu0 %v2144
        %2420 = vmatprep.subr.bf16.mxu0 %v2147
        %2421 = vmatpush1.bf16.msra.mxu0 %v2146
        %2422 = vmatprep.subr.bf16.mxu0 %v2149
        %2423 = vmatpush1.bf16.msra.mxu0 %v2148
        %2424 = vmatprep.subr.bf16.mxu0 %v2151
        %2425 = vmatpush1.bf16.msra.mxu0 %v2150
        %2426 = vmatprep.subr.bf16.mxu0 %v2153
        %2427 = vmatpush1.bf16.msra.mxu0 %v2152
        %2428 = vmatprep.subr.bf16.mxu0 %v2155
        %2429 = vmatpush1.bf16.msra.mxu0 %v2154
        %2430 = vmatprep.subr.bf16.mxu0 %v2157
        %2431 = vmatpush1.bf16.msra.mxu0 %v2156
        %2432 = vmatprep.subr.bf16.mxu0 %v2159
        %2433 = vmatpush1.bf16.msra.mxu0 %v2158
        %2434 = vmatprep.subr.bf16.mxu0 %v2161
        %2435 = vmatpush1.bf16.msra.mxu0 %v2160
        %2436 = vmatprep.subr.bf16.mxu0 %v2163
        %2437 = vmatpush1.bf16.msra.mxu0 %v2162
        %2438 = vmatprep.subr.bf16.mxu0 %v2165
        %2439 = vmatpush1.bf16.msra.mxu0 %v2164
        %2440 = vmatprep.subr.bf16.mxu0 %v2167
        %2441 = vmatpush1.bf16.msra.mxu0 %v2166
        %2442 = vmatprep.subr.bf16.mxu0 %v2169
        %2443 = vmatpush1.bf16.msra.mxu0 %v2168
        %2444 = vmatprep.subr.bf16.mxu0 %v2171
        %2445 = vmatpush1.bf16.msra.mxu0 %v2170
        %2446 = vmatprep.subr.bf16.mxu0 %v2173
        %2447 = vmatpush1.bf16.msra.mxu0 %v2172
        %2448 = vmatprep.mubr.bf16.mxu0 %v1151
        %2449 = vmatmul.mubr.bf16.gmra.mrb[0].mxu0 %v1150
        %v2450 = vpop.f32.mrb[0].mxu0
        %v2451 = vadd.f32 %v2410, %v2450
        %v2452 = vpop.f32.mrb[0].mxu0
        %v2453 = vadd.f32 %v2412, %v2452
        %v2454 = vpop.f32.mrb[0].mxu0
        %v2455 = vpop.f32.mrb[0].mxu0
        %2456 = vdwg.mxu0
        %2457 = vmatprep.subr.bf16.mxu0 %v2175
        %2458 = vmatpush1.bf16.msra.mxu0 %v2174
        %2459 = vmatprep.subr.bf16.mxu0 %v2177
        %2460 = vmatpush1.bf16.msra.mxu0 %v2176
        %2461 = vmatprep.subr.bf16.mxu0 %v2179
        %2462 = vmatpush1.bf16.msra.mxu0 %v2178
        %2463 = vmatprep.subr.bf16.mxu0 %v2181
        %2464 = vmatpush1.bf16.msra.mxu0 %v2180
        %2465 = vmatprep.subr.bf16.mxu0 %v2183
        %2466 = vmatpush1.bf16.msra.mxu0 %v2182
        %2467 = vmatprep.subr.bf16.mxu0 %v2185
        %2468 = vmatpush1.bf16.msra.mxu0 %v2184
        %2469 = vmatprep.subr.bf16.mxu0 %v2187
        %2470 = vmatpush1.bf16.msra.mxu0 %v2186
        %2471 = vmatprep.subr.bf16.mxu0 %v2189
        %2472 = vmatpush1.bf16.msra.mxu0 %v2188
        %2473 = vmatprep.subr.bf16.mxu0 %v2191
        %2474 = vmatpush1.bf16.msra.mxu0 %v2190
        %2475 = vmatprep.subr.bf16.mxu0 %v2193
        %2476 = vmatpush1.bf16.msra.mxu0 %v2192
        %2477 = vmatprep.subr.bf16.mxu0 %v2195
        %2478 = vmatpush1.bf16.msra.mxu0 %v2194
        %2479 = vmatprep.subr.bf16.mxu0 %v2197
        %2480 = vmatpush1.bf16.msra.mxu0 %v2196
        %2481 = vmatprep.subr.bf16.mxu0 %v2199
        %2482 = vmatpush1.bf16.msra.mxu0 %v2198
        %2483 = vmatprep.subr.bf16.mxu0 %v2201
        %2484 = vmatpush1.bf16.msra.mxu0 %v2200
        %2485 = vmatprep.subr.bf16.mxu0 %v2203
        %2486 = vmatpush1.bf16.msra.mxu0 %v2202
        %2487 = vmatprep.subr.bf16.mxu0 %v2205
        %2488 = vmatpush1.bf16.msra.mxu0 %v2204
        %2489 = vmatprep.mubr.bf16.mxu0 %v1153
        %2490 = vmatmul.mubr.bf16.gmra.mrb[0].mxu0 %v1152
        %v2491 = vpop.f32.mrb[0].mxu0
        %v2492 = vadd.f32 %v2451, %v2491
        %v2493 = vpop.f32.mrb[0].mxu0
        %v2494 = vadd.f32 %v2453, %v2493
        %v2495 = vpop.f32.mrb[0].mxu0
        %v2496 = vpop.f32.mrb[0].mxu0
        %2497 = vdwg.mxu0
        %2498 = vmatprep.subr.bf16.mxu0 %v2207
        %2499 = vmatpush1.bf16.msra.mxu0 %v2206
        %2500 = vmatprep.subr.bf16.mxu0 %v2209
        %2501 = vmatpush1.bf16.msra.mxu0 %v2208
        %2502 = vmatprep.subr.bf16.mxu0 %v2211
        %2503 = vmatpush1.bf16.msra.mxu0 %v2210
        %2504 = vmatprep.subr.bf16.mxu0 %v2213
        %2505 = vmatpush1.bf16.msra.mxu0 %v2212
        %2506 = vmatprep.subr.bf16.mxu0 %v2215
        %2507 = vmatpush1.bf16.msra.mxu0 %v2214
        %2508 = vmatprep.subr.bf16.mxu0 %v2217
        %2509 = vmatpush1.bf16.msra.mxu0 %v2216
        %2510 = vmatprep.subr.bf16.mxu0 %v2219
        %2511 = vmatpush1.bf16.msra.mxu0 %v2218
        %2512 = vmatprep.subr.bf16.mxu0 %v2221
        %2513 = vmatpush1.bf16.msra.mxu0 %v2220
        %2514 = vmatprep.subr.bf16.mxu0 %v2223
        %2515 = vmatpush1.bf16.msra.mxu0 %v2222
        %2516 = vmatprep.subr.bf16.mxu0 %v2225
        %2517 = vmatpush1.bf16.msra.mxu0 %v2224
        %2518 = vmatprep.subr.bf16.mxu0 %v2227
        %2519 = vmatpush1.bf16.msra.mxu0 %v2226
        %2520 = vmatprep.subr.bf16.mxu0 %v2229
        %2521 = vmatpush1.bf16.msra.mxu0 %v2228
        %2522 = vmatprep.subr.bf16.mxu0 %v2231
        %2523 = vmatpush1.bf16.msra.mxu0 %v2230
        %2524 = vmatprep.subr.bf16.mxu0 %v2233
        %2525 = vmatpush1.bf16.msra.mxu0 %v2232
        %2526 = vmatprep.subr.bf16.mxu0 %v2235
        %2527 = vmatpush1.bf16.msra.mxu0 %v2234
        %2528 = vmatprep.subr.bf16.mxu0 %v2237
        %2529 = vmatpush1.bf16.msra.mxu0 %v2236
        %2530 = vmatprep.mubr.bf16.mxu0 %v1155
        %2531 = vmatmul.mubr.bf16.gmra.mrb[0].mxu0 %v1154
        %v2532 = vpop.f32.mrb[0].mxu0
        %v2533 = vadd.f32 %v2492, %v2532
        %v2534 = vpop.f32.mrb[0].mxu0
        %v2535 = vadd.f32 %v2494, %v2534
        %v2536 = vpop.f32.mrb[0].mxu0
        %v2537 = vpop.f32.mrb[0].mxu0
        %2538 = vdwg.mxu0
        %2539 = vmatprep.subr.bf16.mxu0 %v2239
        %2540 = vmatpush1.bf16.msra.mxu0 %v2238
        %2541 = vmatprep.subr.bf16.mxu0 %v2241
        %2542 = vmatpush1.bf16.msra.mxu0 %v2240
        %2543 = vmatprep.subr.bf16.mxu0 %v2243
        %2544 = vmatpush1.bf16.msra.mxu0 %v2242
        %2545 = vmatprep.subr.bf16.mxu0 %v2245
        %2546 = vmatpush1.bf16.msra.mxu0 %v2244
        %2547 = vmatprep.subr.bf16.mxu0 %v2247
        %2548 = vmatpush1.bf16.msra.mxu0 %v2246
        %2549 = vmatprep.subr.bf16.mxu0 %v2249
        %2550 = vmatpush1.bf16.msra.mxu0 %v2248
        %2551 = vmatprep.subr.bf16.mxu0 %v2251
        %2552 = vmatpush1.bf16.msra.mxu0 %v2250
        %2553 = vmatprep.subr.bf16.mxu0 %v2253
        %2554 = vmatpush1.bf16.msra.mxu0 %v2252
        %2555 = vmatprep.subr.bf16.mxu0 %v2255
        %2556 = vmatpush1.bf16.msra.mxu0 %v2254
        %2557 = vmatprep.subr.bf16.mxu0 %v2257
        %2558 = vmatpush1.bf16.msra.mxu0 %v2256
        %2559 = vmatprep.subr.bf16.mxu0 %v2259
        %2560 = vmatpush1.bf16.msra.mxu0 %v2258
        %2561 = vmatprep.subr.bf16.mxu0 %v2261
        %2562 = vmatpush1.bf16.msra.mxu0 %v2260
        %2563 = vmatprep.subr.bf16.mxu0 %v2263
        %2564 = vmatpush1.bf16.msra.mxu0 %v2262
        %2565 = vmatprep.subr.bf16.mxu0 %v2265
        %2566 = vmatpush1.bf16.msra.mxu0 %v2264
        %2567 = vmatprep.subr.bf16.mxu0 %v2267
        %2568 = vmatpush1.bf16.msra.mxu0 %v2266
        %2569 = vmatprep.subr.bf16.mxu0 %v2269
        %2570 = vmatpush1.bf16.msra.mxu0 %v2268
        %2571 = vmatprep.mubr.bf16.mxu0 %v1157
        %2572 = vmatmul.mubr.bf16.gmra.mrb[0].mxu0 %v1156
        %v2573 = vpop.f32.mrb[0].mxu0
        %v2574 = vadd.f32 %v2533, %v2573
        %v2575 = vpop.f32.mrb[0].mxu0
        %v2576 = vadd.f32 %v2535, %v2575
        %v2577 = vpop.f32.mrb[0].mxu0
        %v2578 = vpop.f32.mrb[0].mxu0
        %2579 = vdwg.mxu0
        %2580 = vmatprep.subr.bf16.mxu0 %v2271
        %2581 = vmatpush1.bf16.msra.mxu0 %v2270
        %2582 = vmatprep.subr.bf16.mxu0 %v2273
        %2583 = vmatpush1.bf16.msra.mxu0 %v2272
        %2584 = vmatprep.subr.bf16.mxu0 %v2275
        %2585 = vmatpush1.bf16.msra.mxu0 %v2274
        %2586 = vmatprep.subr.bf16.mxu0 %v2277
        %2587 = vmatpush1.bf16.msra.mxu0 %v2276
        %2588 = vmatprep.subr.bf16.mxu0 %v2279
        %2589 = vmatpush1.bf16.msra.mxu0 %v2278
        %2590 = vmatprep.subr.bf16.mxu0 %v2281
        %2591 = vmatpush1.bf16.msra.mxu0 %v2280
        %2592 = vmatprep.subr.bf16.mxu0 %v2283
        %2593 = vmatpush1.bf16.msra.mxu0 %v2282
        %2594 = vmatprep.subr.bf16.mxu0 %v2285
        %2595 = vmatpush1.bf16.msra.mxu0 %v2284
        %2596 = vmatprep.subr.bf16.mxu0 %v2287
        %2597 = vmatpush1.bf16.msra.mxu0 %v2286
        %2598 = vmatprep.subr.bf16.mxu0 %v2289
        %2599 = vmatpush1.bf16.msra.mxu0 %v2288
        %2600 = vmatprep.subr.bf16.mxu0 %v2291
        %2601 = vmatpush1.bf16.msra.mxu0 %v2290
        %2602 = vmatprep.subr.bf16.mxu0 %v2293
        %2603 = vmatpush1.bf16.msra.mxu0 %v2292
        %2604 = vmatprep.subr.bf16.mxu0 %v2295
        %2605 = vmatpush1.bf16.msra.mxu0 %v2294
        %2606 = vmatprep.subr.bf16.mxu0 %v2297
        %2607 = vmatpush1.bf16.msra.mxu0 %v2296
        %2608 = vmatprep.subr.bf16.mxu0 %v2299
        %2609 = vmatpush1.bf16.msra.mxu0 %v2298
        %2610 = vmatprep.subr.bf16.mxu0 %v2301
        %2611 = vmatpush1.bf16.msra.mxu0 %v2300
        %2612 = vmatprep.mubr.bf16.mxu0 %v1159
        %2613 = vmatmul.mubr.bf16.gmra.mrb[0].mxu0 %v1158
        %v2614 = vpop.f32.mrb[0].mxu0
        %v2615 = vadd.f32 %v2574, %v2614
        %v2616 = vpop.f32.mrb[0].mxu0
        %v2617 = vadd.f32 %v2576, %v2616
        %v2618 = vpop.f32.mrb[0].mxu0
        %v2619 = vpop.f32.mrb[0].mxu0
        %2620 = vdwg.mxu0
        %2621 = vmatprep.subr.bf16.mxu0 %v2303
        %2622 = vmatpush1.bf16.msra.mxu0 %v2302
        %2623 = vmatprep.subr.bf16.mxu0 %v2305
        %2624 = vmatpush1.bf16.msra.mxu0 %v2304
        %2625 = vmatprep.subr.bf16.mxu0 %v2307
        %2626 = vmatpush1.bf16.msra.mxu0 %v2306
        %2627 = vmatprep.subr.bf16.mxu0 %v2309
        %2628 = vmatpush1.bf16.msra.mxu0 %v2308
        %2629 = vmatprep.subr.bf16.mxu0 %v2311
        %2630 = vmatpush1.bf16.msra.mxu0 %v2310
        %2631 = vmatprep.subr.bf16.mxu0 %v2313
        %2632 = vmatpush1.bf16.msra.mxu0 %v2312
        %2633 = vmatprep.subr.bf16.mxu0 %v2315
        %2634 = vmatpush1.bf16.msra.mxu0 %v2314
        %2635 = vmatprep.subr.bf16.mxu0 %v2317
        %2636 = vmatpush1.bf16.msra.mxu0 %v2316
        %2637 = vmatprep.subr.bf16.mxu0 %v2319
        %2638 = vmatpush1.bf16.msra.mxu0 %v2318
        %2639 = vmatprep.subr.bf16.mxu0 %v2321
        %2640 = vmatpush1.bf16.msra.mxu0 %v2320
        %2641 = vmatprep.subr.bf16.mxu0 %v2323
        %2642 = vmatpush1.bf16.msra.mxu0 %v2322
        %2643 = vmatprep.subr.bf16.mxu0 %v2325
        %2644 = vmatpush1.bf16.msra.mxu0 %v2324
        %2645 = vmatprep.subr.bf16.mxu0 %v2327
        %2646 = vmatpush1.bf16.msra.mxu0 %v2326
        %2647 = vmatprep.subr.bf16.mxu0 %v2329
        %2648 = vmatpush1.bf16.msra.mxu0 %v2328
        %2649 = vmatprep.subr.bf16.mxu0 %v2331
        %2650 = vmatpush1.bf16.msra.mxu0 %v2330
        %2651 = vmatprep.subr.bf16.mxu0 %v2333
        %2652 = vmatpush1.bf16.msra.mxu0 %v2332
        %2653 = vmatprep.mubr.bf16.mxu0 %v1161
        %2654 = vmatmul.mubr.bf16.gmra.mrb[0].mxu0 %v1160
        %v2655 = vpop.f32.mrb[0].mxu0
        %v2656 = vadd.f32 %v2615, %v2655
        %v2657 = vpop.f32.mrb[0].mxu0
        %v2658 = vadd.f32 %v2617, %v2657
        %v2659 = vpop.f32.mrb[0].mxu0
        %v2660 = vpop.f32.mrb[0].mxu0
        %2661 = vdwg.mxu0
        // Predicated region
        $region153: #{tpu_custom_call.1} parent=71 // pred_check
          %p2662 = pneg %p617
        $region154: #{tpu_custom_call.1} parent=71 // pred_check_branch
          %2664 = sbr.rel (%p2662) target = $region156
        $region155: #{tpu_custom_call.1} parent=71 // pred_region
          %s2665 = scalar_lea.sflag [#allocation6], 2
          %s2666 = smul.u32 2, 256
          %s2667 = smul.u32 %s2666, 2
          %s2668 = sshll.u32 %s2667, 4
          %2669 = dma.done %s2665, %s2668
        $region156: #{tpu_custom_call.1} parent=71 // pred_fallthru
          _
        %s2670 = scalar_lea.vmem [#allocation2], 2048
        %v2671 = vld [vmem:[%s2670] sm:$0xff]
        %v2672 = vld [vmem:[%s2670 + $0x8] sm:$0xff]
        %v2673 = vld [vmem:[%s2670 + $0x10] sm:$0xff]
        %v2674 = vld [vmem:[%s2670 + $0x18] sm:$0xff]
        %v2675 = vld [vmem:[%s2670 + $0x20] sm:$0xff]
        %v2676 = vld [vmem:[%s2670 + $0x28] sm:$0xff]
        %v2677 = vld [vmem:[%s2670 + $0x30] sm:$0xff]
        %v2678 = vld [vmem:[%s2670 + $0x38] sm:$0xff]
        %v2679 = vld [vmem:[%s2670 + $0x40] sm:$0xff]
        %v2680 = vld [vmem:[%s2670 + $0x48] sm:$0xff]
        %v2681 = vld [vmem:[%s2670 + $0x50] sm:$0xff]
        %v2682 = vld [vmem:[%s2670 + $0x58] sm:$0xff]
        %v2683 = vld [vmem:[%s2670 + $0x60] sm:$0xff]
        %v2684 = vld [vmem:[%s2670 + $0x68] sm:$0xff]
        %v2685 = vld [vmem:[%s2670 + $0x70] sm:$0xff]
        %v2686 = vld [vmem:[%s2670 + $0x78] sm:$0xff]
        %v2687 = vld [vmem:[%s2670 + $0x80] sm:$0xff]
        %v2688 = vld [vmem:[%s2670 + $0x88] sm:$0xff]
        %v2689 = vld [vmem:[%s2670 + $0x90] sm:$0xff]
        %v2690 = vld [vmem:[%s2670 + $0x98] sm:$0xff]
        %v2691 = vld [vmem:[%s2670 + $0xa0] sm:$0xff]
        %v2692 = vld [vmem:[%s2670 + $0xa8] sm:$0xff]
        %v2693 = vld [vmem:[%s2670 + $0xb0] sm:$0xff]
        %v2694 = vld [vmem:[%s2670 + $0xb8] sm:$0xff]
        %v2695 = vld [vmem:[%s2670 + $0xc0] sm:$0xff]
        %v2696 = vld [vmem:[%s2670 + $0xc8] sm:$0xff]
        %v2697 = vld [vmem:[%s2670 + $0xd0] sm:$0xff]
        %v2698 = vld [vmem:[%s2670 + $0xd8] sm:$0xff]
        %v2699 = vld [vmem:[%s2670 + $0xe0] sm:$0xff]
        %v2700 = vld [vmem:[%s2670 + $0xe8] sm:$0xff]
        %v2701 = vld [vmem:[%s2670 + $0xf0] sm:$0xff]
        %v2702 = vld [vmem:[%s2670 + $0xf8] sm:$0xff]
        %v2703 = vld [vmem:[%s2670 + $0x100] sm:$0xff]
        %v2704 = vld [vmem:[%s2670 + $0x108] sm:$0xff]
        %v2705 = vld [vmem:[%s2670 + $0x110] sm:$0xff]
        %v2706 = vld [vmem:[%s2670 + $0x118] sm:$0xff]
        %v2707 = vld [vmem:[%s2670 + $0x120] sm:$0xff]
        %v2708 = vld [vmem:[%s2670 + $0x128] sm:$0xff]
        %v2709 = vld [vmem:[%s2670 + $0x130] sm:$0xff]
        %v2710 = vld [vmem:[%s2670 + $0x138] sm:$0xff]
        %v2711 = vld [vmem:[%s2670 + $0x140] sm:$0xff]
        %v2712 = vld [vmem:[%s2670 + $0x148] sm:$0xff]
        %v2713 = vld [vmem:[%s2670 + $0x150] sm:$0xff]
        %v2714 = vld [vmem:[%s2670 + $0x158] sm:$0xff]
        %v2715 = vld [vmem:[%s2670 + $0x160] sm:$0xff]
        %v2716 = vld [vmem:[%s2670 + $0x168] sm:$0xff]
        %v2717 = vld [vmem:[%s2670 + $0x170] sm:$0xff]
        %v2718 = vld [vmem:[%s2670 + $0x178] sm:$0xff]
        %v2719 = vld [vmem:[%s2670 + $0x180] sm:$0xff]
        %v2720 = vld [vmem:[%s2670 + $0x188] sm:$0xff]
        %v2721 = vld [vmem:[%s2670 + $0x190] sm:$0xff]
        %v2722 = vld [vmem:[%s2670 + $0x198] sm:$0xff]
        %v2723 = vld [vmem:[%s2670 + $0x1a0] sm:$0xff]
        %v2724 = vld [vmem:[%s2670 + $0x1a8] sm:$0xff]
        %v2725 = vld [vmem:[%s2670 + $0x1b0] sm:$0xff]
        %v2726 = vld [vmem:[%s2670 + $0x1b8] sm:$0xff]
        %v2727 = vld [vmem:[%s2670 + $0x1c0] sm:$0xff]
        %v2728 = vld [vmem:[%s2670 + $0x1c8] sm:$0xff]
        %v2729 = vld [vmem:[%s2670 + $0x1d0] sm:$0xff]
        %v2730 = vld [vmem:[%s2670 + $0x1d8] sm:$0xff]
        %v2731 = vld [vmem:[%s2670 + $0x1e0] sm:$0xff]
        %v2732 = vld [vmem:[%s2670 + $0x1e8] sm:$0xff]
        %v2733 = vld [vmem:[%s2670 + $0x1f0] sm:$0xff]
        %v2734 = vld [vmem:[%s2670 + $0x1f8] sm:$0xff]
        %v2735 = vld [vmem:[%s2670 + $0x200] sm:$0xff]
        %v2736 = vld [vmem:[%s2670 + $0x208] sm:$0xff]
        %v2737 = vld [vmem:[%s2670 + $0x210] sm:$0xff]
        %v2738 = vld [vmem:[%s2670 + $0x218] sm:$0xff]
        %v2739 = vld [vmem:[%s2670 + $0x220] sm:$0xff]
        %v2740 = vld [vmem:[%s2670 + $0x228] sm:$0xff]
        %v2741 = vld [vmem:[%s2670 + $0x230] sm:$0xff]
        %v2742 = vld [vmem:[%s2670 + $0x238] sm:$0xff]
        %v2743 = vld [vmem:[%s2670 + $0x240] sm:$0xff]
        %v2744 = vld [vmem:[%s2670 + $0x248] sm:$0xff]
        %v2745 = vld [vmem:[%s2670 + $0x250] sm:$0xff]
        %v2746 = vld [vmem:[%s2670 + $0x258] sm:$0xff]
        %v2747 = vld [vmem:[%s2670 + $0x260] sm:$0xff]
        %v2748 = vld [vmem:[%s2670 + $0x268] sm:$0xff]
        %v2749 = vld [vmem:[%s2670 + $0x270] sm:$0xff]
        %v2750 = vld [vmem:[%s2670 + $0x278] sm:$0xff]
        %v2751 = vld [vmem:[%s2670 + $0x280] sm:$0xff]
        %v2752 = vld [vmem:[%s2670 + $0x288] sm:$0xff]
        %v2753 = vld [vmem:[%s2670 + $0x290] sm:$0xff]
        %v2754 = vld [vmem:[%s2670 + $0x298] sm:$0xff]
        %v2755 = vld [vmem:[%s2670 + $0x2a0] sm:$0xff]
        %v2756 = vld [vmem:[%s2670 + $0x2a8] sm:$0xff]
        %v2757 = vld [vmem:[%s2670 + $0x2b0] sm:$0xff]
        %v2758 = vld [vmem:[%s2670 + $0x2b8] sm:$0xff]
        %v2759 = vld [vmem:[%s2670 + $0x2c0] sm:$0xff]
        %v2760 = vld [vmem:[%s2670 + $0x2c8] sm:$0xff]
        %v2761 = vld [vmem:[%s2670 + $0x2d0] sm:$0xff]
        %v2762 = vld [vmem:[%s2670 + $0x2d8] sm:$0xff]
        %v2763 = vld [vmem:[%s2670 + $0x2e0] sm:$0xff]
        %v2764 = vld [vmem:[%s2670 + $0x2e8] sm:$0xff]
        %v2765 = vld [vmem:[%s2670 + $0x2f0] sm:$0xff]
        %v2766 = vld [vmem:[%s2670 + $0x2f8] sm:$0xff]
        %v2767 = vld [vmem:[%s2670 + $0x300] sm:$0xff]
        %v2768 = vld [vmem:[%s2670 + $0x308] sm:$0xff]
        %v2769 = vld [vmem:[%s2670 + $0x310] sm:$0xff]
        %v2770 = vld [vmem:[%s2670 + $0x318] sm:$0xff]
        %v2771 = vld [vmem:[%s2670 + $0x320] sm:$0xff]
        %v2772 = vld [vmem:[%s2670 + $0x328] sm:$0xff]
        %v2773 = vld [vmem:[%s2670 + $0x330] sm:$0xff]
        %v2774 = vld [vmem:[%s2670 + $0x338] sm:$0xff]
        %v2775 = vld [vmem:[%s2670 + $0x340] sm:$0xff]
        %v2776 = vld [vmem:[%s2670 + $0x348] sm:$0xff]
        %v2777 = vld [vmem:[%s2670 + $0x350] sm:$0xff]
        %v2778 = vld [vmem:[%s2670 + $0x358] sm:$0xff]
        %v2779 = vld [vmem:[%s2670 + $0x360] sm:$0xff]
        %v2780 = vld [vmem:[%s2670 + $0x368] sm:$0xff]
        %v2781 = vld [vmem:[%s2670 + $0x370] sm:$0xff]
        %v2782 = vld [vmem:[%s2670 + $0x378] sm:$0xff]
        %v2783 = vld [vmem:[%s2670 + $0x380] sm:$0xff]
        %v2784 = vld [vmem:[%s2670 + $0x388] sm:$0xff]
        %v2785 = vld [vmem:[%s2670 + $0x390] sm:$0xff]
        %v2786 = vld [vmem:[%s2670 + $0x398] sm:$0xff]
        %v2787 = vld [vmem:[%s2670 + $0x3a0] sm:$0xff]
        %v2788 = vld [vmem:[%s2670 + $0x3a8] sm:$0xff]
        %v2789 = vld [vmem:[%s2670 + $0x3b0] sm:$0xff]
        %v2790 = vld [vmem:[%s2670 + $0x3b8] sm:$0xff]
        %v2791 = vld [vmem:[%s2670 + $0x3c0] sm:$0xff]
        %v2792 = vld [vmem:[%s2670 + $0x3c8] sm:$0xff]
        %v2793 = vld [vmem:[%s2670 + $0x3d0] sm:$0xff]
        %v2794 = vld [vmem:[%s2670 + $0x3d8] sm:$0xff]
        %v2795 = vld [vmem:[%s2670 + $0x3e0] sm:$0xff]
        %v2796 = vld [vmem:[%s2670 + $0x3e8] sm:$0xff]
        %v2797 = vld [vmem:[%s2670 + $0x3f0] sm:$0xff]
        %v2798 = vld [vmem:[%s2670 + $0x3f8] sm:$0xff]
        %v2799 = vunpack.c.l.s8.bf16 %v2671
        %v2800 = vunpack.c.l.s8.bf16 %v2672
        %v2801 = vunpack.c.h.s8.bf16 %v2671
        %v2802 = vunpack.c.h.s8.bf16 %v2672
        %v2803 = vunpack.c.l.s8.bf16 %v2673
        %v2804 = vunpack.c.l.s8.bf16 %v2674
        %v2805 = vunpack.c.h.s8.bf16 %v2673
        %v2806 = vunpack.c.h.s8.bf16 %v2674
        %v2807 = vunpack.c.l.s8.bf16 %v2675
        %v2808 = vunpack.c.l.s8.bf16 %v2676
        %v2809 = vunpack.c.h.s8.bf16 %v2675
        %v2810 = vunpack.c.h.s8.bf16 %v2676
        %v2811 = vunpack.c.l.s8.bf16 %v2677
        %v2812 = vunpack.c.l.s8.bf16 %v2678
        %v2813 = vunpack.c.h.s8.bf16 %v2677
        %v2814 = vunpack.c.h.s8.bf16 %v2678
        %v2815 = vunpack.c.l.s8.bf16 %v2679
        %v2816 = vunpack.c.l.s8.bf16 %v2680
        %v2817 = vunpack.c.h.s8.bf16 %v2679
        %v2818 = vunpack.c.h.s8.bf16 %v2680
        %v2819 = vunpack.c.l.s8.bf16 %v2681
        %v2820 = vunpack.c.l.s8.bf16 %v2682
        %v2821 = vunpack.c.h.s8.bf16 %v2681
        %v2822 = vunpack.c.h.s8.bf16 %v2682
        %v2823 = vunpack.c.l.s8.bf16 %v2683
        %v2824 = vunpack.c.l.s8.bf16 %v2684
        %v2825 = vunpack.c.h.s8.bf16 %v2683
        %v2826 = vunpack.c.h.s8.bf16 %v2684
        %v2827 = vunpack.c.l.s8.bf16 %v2685
        %v2828 = vunpack.c.l.s8.bf16 %v2686
        %v2829 = vunpack.c.h.s8.bf16 %v2685
        %v2830 = vunpack.c.h.s8.bf16 %v2686
        %v2831 = vunpack.c.l.s8.bf16 %v2687
        %v2832 = vunpack.c.l.s8.bf16 %v2688
        %v2833 = vunpack.c.h.s8.bf16 %v2687
        %v2834 = vunpack.c.h.s8.bf16 %v2688
        %v2835 = vunpack.c.l.s8.bf16 %v2689
        %v2836 = vunpack.c.l.s8.bf16 %v2690
        %v2837 = vunpack.c.h.s8.bf16 %v2689
        %v2838 = vunpack.c.h.s8.bf16 %v2690
        %v2839 = vunpack.c.l.s8.bf16 %v2691
        %v2840 = vunpack.c.l.s8.bf16 %v2692
        %v2841 = vunpack.c.h.s8.bf16 %v2691
        %v2842 = vunpack.c.h.s8.bf16 %v2692
        %v2843 = vunpack.c.l.s8.bf16 %v2693
        %v2844 = vunpack.c.l.s8.bf16 %v2694
        %v2845 = vunpack.c.h.s8.bf16 %v2693
        %v2846 = vunpack.c.h.s8.bf16 %v2694
        %v2847 = vunpack.c.l.s8.bf16 %v2695
        %v2848 = vunpack.c.l.s8.bf16 %v2696
        %v2849 = vunpack.c.h.s8.bf16 %v2695
        %v2850 = vunpack.c.h.s8.bf16 %v2696
        %v2851 = vunpack.c.l.s8.bf16 %v2697
        %v2852 = vunpack.c.l.s8.bf16 %v2698
        %v2853 = vunpack.c.h.s8.bf16 %v2697
        %v2854 = vunpack.c.h.s8.bf16 %v2698
        %v2855 = vunpack.c.l.s8.bf16 %v2699
        %v2856 = vunpack.c.l.s8.bf16 %v2700
        %v2857 = vunpack.c.h.s8.bf16 %v2699
        %v2858 = vunpack.c.h.s8.bf16 %v2700
        %v2859 = vunpack.c.l.s8.bf16 %v2701
        %v2860 = vunpack.c.l.s8.bf16 %v2702
        %v2861 = vunpack.c.h.s8.bf16 %v2701
        %v2862 = vunpack.c.h.s8.bf16 %v2702
        %v2863 = vunpack.c.l.s8.bf16 %v2703
        %v2864 = vunpack.c.l.s8.bf16 %v2704
        %v2865 = vunpack.c.h.s8.bf16 %v2703
        %v2866 = vunpack.c.h.s8.bf16 %v2704
        %v2867 = vunpack.c.l.s8.bf16 %v2705
        %v2868 = vunpack.c.l.s8.bf16 %v2706
        %v2869 = vunpack.c.h.s8.bf16 %v2705
        %v2870 = vunpack.c.h.s8.bf16 %v2706
        %v2871 = vunpack.c.l.s8.bf16 %v2707
        %v2872 = vunpack.c.l.s8.bf16 %v2708
        %v2873 = vunpack.c.h.s8.bf16 %v2707
        %v2874 = vunpack.c.h.s8.bf16 %v2708
        %v2875 = vunpack.c.l.s8.bf16 %v2709
        %v2876 = vunpack.c.l.s8.bf16 %v2710
        %v2877 = vunpack.c.h.s8.bf16 %v2709
        %v2878 = vunpack.c.h.s8.bf16 %v2710
        %v2879 = vunpack.c.l.s8.bf16 %v2711
        %v2880 = vunpack.c.l.s8.bf16 %v2712
        %v2881 = vunpack.c.h.s8.bf16 %v2711
        %v2882 = vunpack.c.h.s8.bf16 %v2712
        %v2883 = vunpack.c.l.s8.bf16 %v2713
        %v2884 = vunpack.c.l.s8.bf16 %v2714
        %v2885 = vunpack.c.h.s8.bf16 %v2713
        %v2886 = vunpack.c.h.s8.bf16 %v2714
        %v2887 = vunpack.c.l.s8.bf16 %v2715
        %v2888 = vunpack.c.l.s8.bf16 %v2716
        %v2889 = vunpack.c.h.s8.bf16 %v2715
        %v2890 = vunpack.c.h.s8.bf16 %v2716
        %v2891 = vunpack.c.l.s8.bf16 %v2717
        %v2892 = vunpack.c.l.s8.bf16 %v2718
        %v2893 = vunpack.c.h.s8.bf16 %v2717
        %v2894 = vunpack.c.h.s8.bf16 %v2718
        %v2895 = vunpack.c.l.s8.bf16 %v2719
        %v2896 = vunpack.c.l.s8.bf16 %v2720
        %v2897 = vunpack.c.h.s8.bf16 %v2719
        %v2898 = vunpack.c.h.s8.bf16 %v2720
        %v2899 = vunpack.c.l.s8.bf16 %v2721
        %v2900 = vunpack.c.l.s8.bf16 %v2722
        %v2901 = vunpack.c.h.s8.bf16 %v2721
        %v2902 = vunpack.c.h.s8.bf16 %v2722
        %v2903 = vunpack.c.l.s8.bf16 %v2723
        %v2904 = vunpack.c.l.s8.bf16 %v2724
        %v2905 = vunpack.c.h.s8.bf16 %v2723
        %v2906 = vunpack.c.h.s8.bf16 %v2724
        %v2907 = vunpack.c.l.s8.bf16 %v2725
        %v2908 = vunpack.c.l.s8.bf16 %v2726
        %v2909 = vunpack.c.h.s8.bf16 %v2725
        %v2910 = vunpack.c.h.s8.bf16 %v2726
        %v2911 = vunpack.c.l.s8.bf16 %v2727
        %v2912 = vunpack.c.l.s8.bf16 %v2728
        %v2913 = vunpack.c.h.s8.bf16 %v2727
        %v2914 = vunpack.c.h.s8.bf16 %v2728
        %v2915 = vunpack.c.l.s8.bf16 %v2729
        %v2916 = vunpack.c.l.s8.bf16 %v2730
        %v2917 = vunpack.c.h.s8.bf16 %v2729
        %v2918 = vunpack.c.h.s8.bf16 %v2730
        %v2919 = vunpack.c.l.s8.bf16 %v2731
        %v2920 = vunpack.c.l.s8.bf16 %v2732
        %v2921 = vunpack.c.h.s8.bf16 %v2731
        %v2922 = vunpack.c.h.s8.bf16 %v2732
        %v2923 = vunpack.c.l.s8.bf16 %v2733
        %v2924 = vunpack.c.l.s8.bf16 %v2734
        %v2925 = vunpack.c.h.s8.bf16 %v2733
        %v2926 = vunpack.c.h.s8.bf16 %v2734
        %v2927 = vunpack.c.l.s8.bf16 %v2735
        %v2928 = vunpack.c.l.s8.bf16 %v2736
        %v2929 = vunpack.c.h.s8.bf16 %v2735
        %v2930 = vunpack.c.h.s8.bf16 %v2736
        %v2931 = vunpack.c.l.s8.bf16 %v2737
        %v2932 = vunpack.c.l.s8.bf16 %v2738
        %v2933 = vunpack.c.h.s8.bf16 %v2737
        %v2934 = vunpack.c.h.s8.bf16 %v2738
        %v2935 = vunpack.c.l.s8.bf16 %v2739
        %v2936 = vunpack.c.l.s8.bf16 %v2740
        %v2937 = vunpack.c.h.s8.bf16 %v2739
        %v2938 = vunpack.c.h.s8.bf16 %v2740
        %v2939 = vunpack.c.l.s8.bf16 %v2741
        %v2940 = vunpack.c.l.s8.bf16 %v2742
        %v2941 = vunpack.c.h.s8.bf16 %v2741
        %v2942 = vunpack.c.h.s8.bf16 %v2742
        %v2943 = vunpack.c.l.s8.bf16 %v2743
        %v2944 = vunpack.c.l.s8.bf16 %v2744
        %v2945 = vunpack.c.h.s8.bf16 %v2743
        %v2946 = vunpack.c.h.s8.bf16 %v2744
        %v2947 = vunpack.c.l.s8.bf16 %v2745
        %v2948 = vunpack.c.l.s8.bf16 %v2746
        %v2949 = vunpack.c.h.s8.bf16 %v2745
        %v2950 = vunpack.c.h.s8.bf16 %v2746
        %v2951 = vunpack.c.l.s8.bf16 %v2747
        %v2952 = vunpack.c.l.s8.bf16 %v2748
        %v2953 = vunpack.c.h.s8.bf16 %v2747
        %v2954 = vunpack.c.h.s8.bf16 %v2748
        %v2955 = vunpack.c.l.s8.bf16 %v2749
        %v2956 = vunpack.c.l.s8.bf16 %v2750
        %v2957 = vunpack.c.h.s8.bf16 %v2749
        %v2958 = vunpack.c.h.s8.bf16 %v2750
        %v2959 = vunpack.c.l.s8.bf16 %v2751
        %v2960 = vunpack.c.l.s8.bf16 %v2752
        %v2961 = vunpack.c.h.s8.bf16 %v2751
        %v2962 = vunpack.c.h.s8.bf16 %v2752
        %v2963 = vunpack.c.l.s8.bf16 %v2753
        %v2964 = vunpack.c.l.s8.bf16 %v2754
        %v2965 = vunpack.c.h.s8.bf16 %v2753
        %v2966 = vunpack.c.h.s8.bf16 %v2754
        %v2967 = vunpack.c.l.s8.bf16 %v2755
        %v2968 = vunpack.c.l.s8.bf16 %v2756
        %v2969 = vunpack.c.h.s8.bf16 %v2755
        %v2970 = vunpack.c.h.s8.bf16 %v2756
        %v2971 = vunpack.c.l.s8.bf16 %v2757
        %v2972 = vunpack.c.l.s8.bf16 %v2758
        %v2973 = vunpack.c.h.s8.bf16 %v2757
        %v2974 = vunpack.c.h.s8.bf16 %v2758
        %v2975 = vunpack.c.l.s8.bf16 %v2759
        %v2976 = vunpack.c.l.s8.bf16 %v2760
        %v2977 = vunpack.c.h.s8.bf16 %v2759
        %v2978 = vunpack.c.h.s8.bf16 %v2760
        %v2979 = vunpack.c.l.s8.bf16 %v2761
        %v2980 = vunpack.c.l.s8.bf16 %v2762
        %v2981 = vunpack.c.h.s8.bf16 %v2761
        %v2982 = vunpack.c.h.s8.bf16 %v2762
        %v2983 = vunpack.c.l.s8.bf16 %v2763
        %v2984 = vunpack.c.l.s8.bf16 %v2764
        %v2985 = vunpack.c.h.s8.bf16 %v2763
        %v2986 = vunpack.c.h.s8.bf16 %v2764
        %v2987 = vunpack.c.l.s8.bf16 %v2765
        %v2988 = vunpack.c.l.s8.bf16 %v2766
        %v2989 = vunpack.c.h.s8.bf16 %v2765
        %v2990 = vunpack.c.h.s8.bf16 %v2766
        %v2991 = vunpack.c.l.s8.bf16 %v2767
        %v2992 = vunpack.c.l.s8.bf16 %v2768
        %v2993 = vunpack.c.h.s8.bf16 %v2767
        %v2994 = vunpack.c.h.s8.bf16 %v2768
        %v2995 = vunpack.c.l.s8.bf16 %v2769
        %v2996 = vunpack.c.l.s8.bf16 %v2770
        %v2997 = vunpack.c.h.s8.bf16 %v2769
        %v2998 = vunpack.c.h.s8.bf16 %v2770
        %v2999 = vunpack.c.l.s8.bf16 %v2771
        %v3000 = vunpack.c.l.s8.bf16 %v2772
        %v3001 = vunpack.c.h.s8.bf16 %v2771
        %v3002 = vunpack.c.h.s8.bf16 %v2772
        %v3003 = vunpack.c.l.s8.bf16 %v2773
        %v3004 = vunpack.c.l.s8.bf16 %v2774
        %v3005 = vunpack.c.h.s8.bf16 %v2773
        %v3006 = vunpack.c.h.s8.bf16 %v2774
        %v3007 = vunpack.c.l.s8.bf16 %v2775
        %v3008 = vunpack.c.l.s8.bf16 %v2776
        %v3009 = vunpack.c.h.s8.bf16 %v2775
        %v3010 = vunpack.c.h.s8.bf16 %v2776
        %v3011 = vunpack.c.l.s8.bf16 %v2777
        %v3012 = vunpack.c.l.s8.bf16 %v2778
        %v3013 = vunpack.c.h.s8.bf16 %v2777
        %v3014 = vunpack.c.h.s8.bf16 %v2778
        %v3015 = vunpack.c.l.s8.bf16 %v2779
        %v3016 = vunpack.c.l.s8.bf16 %v2780
        %v3017 = vunpack.c.h.s8.bf16 %v2779
        %v3018 = vunpack.c.h.s8.bf16 %v2780
        %v3019 = vunpack.c.l.s8.bf16 %v2781
        %v3020 = vunpack.c.l.s8.bf16 %v2782
        %v3021 = vunpack.c.h.s8.bf16 %v2781
        %v3022 = vunpack.c.h.s8.bf16 %v2782
        %v3023 = vunpack.c.l.s8.bf16 %v2783
        %v3024 = vunpack.c.l.s8.bf16 %v2784
        %v3025 = vunpack.c.h.s8.bf16 %v2783
        %v3026 = vunpack.c.h.s8.bf16 %v2784
        %v3027 = vunpack.c.l.s8.bf16 %v2785
        %v3028 = vunpack.c.l.s8.bf16 %v2786
        %v3029 = vunpack.c.h.s8.bf16 %v2785
        %v3030 = vunpack.c.h.s8.bf16 %v2786
        %v3031 = vunpack.c.l.s8.bf16 %v2787
        %v3032 = vunpack.c.l.s8.bf16 %v2788
        %v3033 = vunpack.c.h.s8.bf16 %v2787
        %v3034 = vunpack.c.h.s8.bf16 %v2788
        %v3035 = vunpack.c.l.s8.bf16 %v2789
        %v3036 = vunpack.c.l.s8.bf16 %v2790
        %v3037 = vunpack.c.h.s8.bf16 %v2789
        %v3038 = vunpack.c.h.s8.bf16 %v2790
        %v3039 = vunpack.c.l.s8.bf16 %v2791
        %v3040 = vunpack.c.l.s8.bf16 %v2792
        %v3041 = vunpack.c.h.s8.bf16 %v2791
        %v3042 = vunpack.c.h.s8.bf16 %v2792
        %v3043 = vunpack.c.l.s8.bf16 %v2793
        %v3044 = vunpack.c.l.s8.bf16 %v2794
        %v3045 = vunpack.c.h.s8.bf16 %v2793
        %v3046 = vunpack.c.h.s8.bf16 %v2794
        %v3047 = vunpack.c.l.s8.bf16 %v2795
        %v3048 = vunpack.c.l.s8.bf16 %v2796
        %v3049 = vunpack.c.h.s8.bf16 %v2795
        %v3050 = vunpack.c.h.s8.bf16 %v2796
        %v3051 = vunpack.c.l.s8.bf16 %v2797
        %v3052 = vunpack.c.l.s8.bf16 %v2798
        %v3053 = vunpack.c.h.s8.bf16 %v2797
        %v3054 = vunpack.c.h.s8.bf16 %v2798
        %3055 = vmatprep.subr.bf16.mxu0 %v2800
        %3056 = vmatpush1.bf16.msra.mxu0 %v2799
        %3057 = vmatprep.subr.bf16.mxu0 %v2802
        %3058 = vmatpush1.bf16.msra.mxu0 %v2801
        %3059 = vmatprep.subr.bf16.mxu0 %v2804
        %3060 = vmatpush1.bf16.msra.mxu0 %v2803
        %3061 = vmatprep.subr.bf16.mxu0 %v2806
        %3062 = vmatpush1.bf16.msra.mxu0 %v2805
        %3063 = vmatprep.subr.bf16.mxu0 %v2808
        %3064 = vmatpush1.bf16.msra.mxu0 %v2807
        %3065 = vmatprep.subr.bf16.mxu0 %v2810
        %3066 = vmatpush1.bf16.msra.mxu0 %v2809
        %3067 = vmatprep.subr.bf16.mxu0 %v2812
        %3068 = vmatpush1.bf16.msra.mxu0 %v2811
        %3069 = vmatprep.subr.bf16.mxu0 %v2814
        %3070 = vmatpush1.bf16.msra.mxu0 %v2813
        %3071 = vmatprep.subr.bf16.mxu0 %v2816
        %3072 = vmatpush1.bf16.msra.mxu0 %v2815
        %3073 = vmatprep.subr.bf16.mxu0 %v2818
        %3074 = vmatpush1.bf16.msra.mxu0 %v2817
        %3075 = vmatprep.subr.bf16.mxu0 %v2820
        %3076 = vmatpush1.bf16.msra.mxu0 %v2819
        %3077 = vmatprep.subr.bf16.mxu0 %v2822
        %3078 = vmatpush1.bf16.msra.mxu0 %v2821
        %3079 = vmatprep.subr.bf16.mxu0 %v2824
        %3080 = vmatpush1.bf16.msra.mxu0 %v2823
        %3081 = vmatprep.subr.bf16.mxu0 %v2826
        %3082 = vmatpush1.bf16.msra.mxu0 %v2825
        %3083 = vmatprep.subr.bf16.mxu0 %v2828
        %3084 = vmatpush1.bf16.msra.mxu0 %v2827
        %3085 = vmatprep.subr.bf16.mxu0 %v2830
        %3086 = vmatpush1.bf16.msra.mxu0 %v2829
        %3087 = vmatprep.mubr.bf16.mxu0 %v1147
        %3088 = vmatmul.mubr.bf16.gmra.mrb[0].mxu0 %v1146
        %v3089 = vpop.f32.mrb[0].mxu0
        %v3090 = vadd.f32 0.0, %v3089
        %v3091 = vpop.f32.mrb[0].mxu0
        %v3092 = vadd.f32 0.0, %v3091
        %v3093 = vpop.f32.mrb[0].mxu0
        %v3094 = vpop.f32.mrb[0].mxu0
        %3095 = vdwg.mxu0
        %3096 = vmatprep.subr.bf16.mxu0 %v2832
        %3097 = vmatpush1.bf16.msra.mxu0 %v2831
        %3098 = vmatprep.subr.bf16.mxu0 %v2834
        %3099 = vmatpush1.bf16.msra.mxu0 %v2833
        %3100 = vmatprep.subr.bf16.mxu0 %v2836
        %3101 = vmatpush1.bf16.msra.mxu0 %v2835
        %3102 = vmatprep.subr.bf16.mxu0 %v2838
        %3103 = vmatpush1.bf16.msra.mxu0 %v2837
        %3104 = vmatprep.subr.bf16.mxu0 %v2840
        %3105 = vmatpush1.bf16.msra.mxu0 %v2839
        %3106 = vmatprep.subr.bf16.mxu0 %v2842
        %3107 = vmatpush1.bf16.msra.mxu0 %v2841
        %3108 = vmatprep.subr.bf16.mxu0 %v2844
        %3109 = vmatpush1.bf16.msra.mxu0 %v2843
        %3110 = vmatprep.subr.bf16.mxu0 %v2846
        %3111 = vmatpush1.bf16.msra.mxu0 %v2845
        %3112 = vmatprep.subr.bf16.mxu0 %v2848
        %3113 = vmatpush1.bf16.msra.mxu0 %v2847
        %3114 = vmatprep.subr.bf16.mxu0 %v2850
        %3115 = vmatpush1.bf16.msra.mxu0 %v2849
        %3116 = vmatprep.subr.bf16.mxu0 %v2852
        %3117 = vmatpush1.bf16.msra.mxu0 %v2851
        %3118 = vmatprep.subr.bf16.mxu0 %v2854
        %3119 = vmatpush1.bf16.msra.mxu0 %v2853
        %3120 = vmatprep.subr.bf16.mxu0 %v2856
        %3121 = vmatpush1.bf16.msra.mxu0 %v2855
        %3122 = vmatprep.subr.bf16.mxu0 %v2858
        %3123 = vmatpush1.bf16.msra.mxu0 %v2857
        %3124 = vmatprep.subr.bf16.mxu0 %v2860
        %3125 = vmatpush1.bf16.msra.mxu0 %v2859
        %3126 = vmatprep.subr.bf16.mxu0 %v2862
        %3127 = vmatpush1.bf16.msra.mxu0 %v2861
        %3128 = vmatprep.mubr.bf16.mxu0 %v1149
        %3129 = vmatmul.mubr.bf16.gmra.mrb[0].mxu0 %v1148
        %v3130 = vpop.f32.mrb[0].mxu0
        %v3131 = vadd.f32 %v3090, %v3130
        %v3132 = vpop.f32.mrb[0].mxu0
        %v3133 = vadd.f32 %v3092, %v3132
        %v3134 = vpop.f32.mrb[0].mxu0
        %v3135 = vpop.f32.mrb[0].mxu0
        %3136 = vdwg.mxu0
        %3137 = vmatprep.subr.bf16.mxu0 %v2864
        %3138 = vmatpush1.bf16.msra.mxu0 %v2863
        %3139 = vmatprep.subr.bf16.mxu0 %v2866
        %3140 = vmatpush1.bf16.msra.mxu0 %v2865
        %3141 = vmatprep.subr.bf16.mxu0 %v2868
        %3142 = vmatpush1.bf16.msra.mxu0 %v2867
        %3143 = vmatprep.subr.bf16.mxu0 %v2870
        %3144 = vmatpush1.bf16.msra.mxu0 %v2869
        %3145 = vmatprep.subr.bf16.mxu0 %v2872
        %3146 = vmatpush1.bf16.msra.mxu0 %v2871
        %3147 = vmatprep.subr.bf16.mxu0 %v2874
        %3148 = vmatpush1.bf16.msra.mxu0 %v2873
        %3149 = vmatprep.subr.bf16.mxu0 %v2876
        %3150 = vmatpush1.bf16.msra.mxu0 %v2875
        %3151 = vmatprep.subr.bf16.mxu0 %v2878
        %3152 = vmatpush1.bf16.msra.mxu0 %v2877
        %3153 = vmatprep.subr.bf16.mxu0 %v2880
        %3154 = vmatpush1.bf16.msra.mxu0 %v2879
        %3155 = vmatprep.subr.bf16.mxu0 %v2882
        %3156 = vmatpush1.bf16.msra.mxu0 %v2881
        %3157 = vmatprep.subr.bf16.mxu0 %v2884
        %3158 = vmatpush1.bf16.msra.mxu0 %v2883
        %3159 = vmatprep.subr.bf16.mxu0 %v2886
        %3160 = vmatpush1.bf16.msra.mxu0 %v2885
        %3161 = vmatprep.subr.bf16.mxu0 %v2888
        %3162 = vmatpush1.bf16.msra.mxu0 %v2887
        %3163 = vmatprep.subr.bf16.mxu0 %v2890
        %3164 = vmatpush1.bf16.msra.mxu0 %v2889
        %3165 = vmatprep.subr.bf16.mxu0 %v2892
        %3166 = vmatpush1.bf16.msra.mxu0 %v2891
        %3167 = vmatprep.subr.bf16.mxu0 %v2894
        %3168 = vmatpush1.bf16.msra.mxu0 %v2893
        %3169 = vmatprep.mubr.bf16.mxu0 %v1151
        %3170 = vmatmul.mubr.bf16.gmra.mrb[0].mxu0 %v1150
        %v3171 = vpop.f32.mrb[0].mxu0
        %v3172 = vadd.f32 %v3131, %v3171
        %v3173 = vpop.f32.mrb[0].mxu0
        %v3174 = vadd.f32 %v3133, %v3173
        %v3175 = vpop.f32.mrb[0].mxu0
        %v3176 = vpop.f32.mrb[0].mxu0
        %3177 = vdwg.mxu0
        %3178 = vmatprep.subr.bf16.mxu0 %v2896
        %3179 = vmatpush1.bf16.msra.mxu0 %v2895
        %3180 = vmatprep.subr.bf16.mxu0 %v2898
        %3181 = vmatpush1.bf16.msra.mxu0 %v2897
        %3182 = vmatprep.subr.bf16.mxu0 %v2900
        %3183 = vmatpush1.bf16.msra.mxu0 %v2899
        %3184 = vmatprep.subr.bf16.mxu0 %v2902
        %3185 = vmatpush1.bf16.msra.mxu0 %v2901
        %3186 = vmatprep.subr.bf16.mxu0 %v2904
        %3187 = vmatpush1.bf16.msra.mxu0 %v2903
        %3188 = vmatprep.subr.bf16.mxu0 %v2906
        %3189 = vmatpush1.bf16.msra.mxu0 %v2905
        %3190 = vmatprep.subr.bf16.mxu0 %v2908
        %3191 = vmatpush1.bf16.msra.mxu0 %v2907
        %3192 = vmatprep.subr.bf16.mxu0 %v2910
        %3193 = vmatpush1.bf16.msra.mxu0 %v2909
        %3194 = vmatprep.subr.bf16.mxu0 %v2912
        %3195 = vmatpush1.bf16.msra.mxu0 %v2911
        %3196 = vmatprep.subr.bf16.mxu0 %v2914
        %3197 = vmatpush1.bf16.msra.mxu0 %v2913
        %3198 = vmatprep.subr.bf16.mxu0 %v2916
        %3199 = vmatpush1.bf16.msra.mxu0 %v2915
        %3200 = vmatprep.subr.bf16.mxu0 %v2918
        %3201 = vmatpush1.bf16.msra.mxu0 %v2917
        %3202 = vmatprep.subr.bf16.mxu0 %v2920
        %3203 = vmatpush1.bf16.msra.mxu0 %v2919
        %3204 = vmatprep.subr.bf16.mxu0 %v2922
        %3205 = vmatpush1.bf16.msra.mxu0 %v2921
        %3206 = vmatprep.subr.bf16.mxu0 %v2924
        %3207 = vmatpush1.bf16.msra.mxu0 %v2923
        %3208 = vmatprep.subr.bf16.mxu0 %v2926
        %3209 = vmatpush1.bf16.msra.mxu0 %v2925
        %3210 = vmatprep.mubr.bf16.mxu0 %v1153
        %3211 = vmatmul.mubr.bf16.gmra.mrb[0].mxu0 %v1152
        %v3212 = vpop.f32.mrb[0].mxu0
        %v3213 = vadd.f32 %v3172, %v3212
        %v3214 = vpop.f32.mrb[0].mxu0
        %v3215 = vadd.f32 %v3174, %v3214
        %v3216 = vpop.f32.mrb[0].mxu0
        %v3217 = vpop.f32.mrb[0].mxu0
        %3218 = vdwg.mxu0
        %3219 = vmatprep.subr.bf16.mxu0 %v2928
        %3220 = vmatpush1.bf16.msra.mxu0 %v2927
        %3221 = vmatprep.subr.bf16.mxu0 %v2930
        %3222 = vmatpush1.bf16.msra.mxu0 %v2929
        %3223 = vmatprep.subr.bf16.mxu0 %v2932
        %3224 = vmatpush1.bf16.msra.mxu0 %v2931
        %3225 = vmatprep.subr.bf16.mxu0 %v2934
        %3226 = vmatpush1.bf16.msra.mxu0 %v2933
        %3227 = vmatprep.subr.bf16.mxu0 %v2936
        %3228 = vmatpush1.bf16.msra.mxu0 %v2935
        %3229 = vmatprep.subr.bf16.mxu0 %v2938
        %3230 = vmatpush1.bf16.msra.mxu0 %v2937
        %3231 = vmatprep.subr.bf16.mxu0 %v2940
        %3232 = vmatpush1.bf16.msra.mxu0 %v2939
        %3233 = vmatprep.subr.bf16.mxu0 %v2942
        %3234 = vmatpush1.bf16.msra.mxu0 %v2941
        %3235 = vmatprep.subr.bf16.mxu0 %v2944
        %3236 = vmatpush1.bf16.msra.mxu0 %v2943
        %3237 = vmatprep.subr.bf16.mxu0 %v2946
        %3238 = vmatpush1.bf16.msra.mxu0 %v2945
        %3239 = vmatprep.subr.bf16.mxu0 %v2948
        %3240 = vmatpush1.bf16.msra.mxu0 %v2947
        %3241 = vmatprep.subr.bf16.mxu0 %v2950
        %3242 = vmatpush1.bf16.msra.mxu0 %v2949
        %3243 = vmatprep.subr.bf16.mxu0 %v2952
        %3244 = vmatpush1.bf16.msra.mxu0 %v2951
        %3245 = vmatprep.subr.bf16.mxu0 %v2954
        %3246 = vmatpush1.bf16.msra.mxu0 %v2953
        %3247 = vmatprep.subr.bf16.mxu0 %v2956
        %3248 = vmatpush1.bf16.msra.mxu0 %v2955
        %3249 = vmatprep.subr.bf16.mxu0 %v2958
        %3250 = vmatpush1.bf16.msra.mxu0 %v2957
        %3251 = vmatprep.mubr.bf16.mxu0 %v1155
        %3252 = vmatmul.mubr.bf16.gmra.mrb[0].mxu0 %v1154
        %v3253 = vpop.f32.mrb[0].mxu0
        %v3254 = vadd.f32 %v3213, %v3253
        %v3255 = vpop.f32.mrb[0].mxu0
        %v3256 = vadd.f32 %v3215, %v3255
        %v3257 = vpop.f32.mrb[0].mxu0
        %v3258 = vpop.f32.mrb[0].mxu0
        %3259 = vdwg.mxu0
        %3260 = vmatprep.subr.bf16.mxu0 %v2960
        %3261 = vmatpush1.bf16.msra.mxu0 %v2959
        %3262 = vmatprep.subr.bf16.mxu0 %v2962
        %3263 = vmatpush1.bf16.msra.mxu0 %v2961
        %3264 = vmatprep.subr.bf16.mxu0 %v2964
        %3265 = vmatpush1.bf16.msra.mxu0 %v2963
        %3266 = vmatprep.subr.bf16.mxu0 %v2966
        %3267 = vmatpush1.bf16.msra.mxu0 %v2965
        %3268 = vmatprep.subr.bf16.mxu0 %v2968
        %3269 = vmatpush1.bf16.msra.mxu0 %v2967
        %3270 = vmatprep.subr.bf16.mxu0 %v2970
        %3271 = vmatpush1.bf16.msra.mxu0 %v2969
        %3272 = vmatprep.subr.bf16.mxu0 %v2972
        %3273 = vmatpush1.bf16.msra.mxu0 %v2971
        %3274 = vmatprep.subr.bf16.mxu0 %v2974
        %3275 = vmatpush1.bf16.msra.mxu0 %v2973
        %3276 = vmatprep.subr.bf16.mxu0 %v2976
        %3277 = vmatpush1.bf16.msra.mxu0 %v2975
        %3278 = vmatprep.subr.bf16.mxu0 %v2978
        %3279 = vmatpush1.bf16.msra.mxu0 %v2977
        %3280 = vmatprep.subr.bf16.mxu0 %v2980
        %3281 = vmatpush1.bf16.msra.mxu0 %v2979
        %3282 = vmatprep.subr.bf16.mxu0 %v2982
        %3283 = vmatpush1.bf16.msra.mxu0 %v2981
        %3284 = vmatprep.subr.bf16.mxu0 %v2984
        %3285 = vmatpush1.bf16.msra.mxu0 %v2983
        %3286 = vmatprep.subr.bf16.mxu0 %v2986
        %3287 = vmatpush1.bf16.msra.mxu0 %v2985
        %3288 = vmatprep.subr.bf16.mxu0 %v2988
        %3289 = vmatpush1.bf16.msra.mxu0 %v2987
        %3290 = vmatprep.subr.bf16.mxu0 %v2990
        %3291 = vmatpush1.bf16.msra.mxu0 %v2989
        %3292 = vmatprep.mubr.bf16.mxu0 %v1157
        %3293 = vmatmul.mubr.bf16.gmra.mrb[0].mxu0 %v1156
        %v3294 = vpop.f32.mrb[0].mxu0
        %v3295 = vadd.f32 %v3254, %v3294
        %v3296 = vpop.f32.mrb[0].mxu0
        %v3297 = vadd.f32 %v3256, %v3296
        %v3298 = vpop.f32.mrb[0].mxu0
        %v3299 = vpop.f32.mrb[0].mxu0
        %3300 = vdwg.mxu0
        %3301 = vmatprep.subr.bf16.mxu0 %v2992
        %3302 = vmatpush1.bf16.msra.mxu0 %v2991
        %3303 = vmatprep.subr.bf16.mxu0 %v2994
        %3304 = vmatpush1.bf16.msra.mxu0 %v2993
        %3305 = vmatprep.subr.bf16.mxu0 %v2996
        %3306 = vmatpush1.bf16.msra.mxu0 %v2995
        %3307 = vmatprep.subr.bf16.mxu0 %v2998
        %3308 = vmatpush1.bf16.msra.mxu0 %v2997
        %3309 = vmatprep.subr.bf16.mxu0 %v3000
        %3310 = vmatpush1.bf16.msra.mxu0 %v2999
        %3311 = vmatprep.subr.bf16.mxu0 %v3002
        %3312 = vmatpush1.bf16.msra.mxu0 %v3001
        %3313 = vmatprep.subr.bf16.mxu0 %v3004
        %3314 = vmatpush1.bf16.msra.mxu0 %v3003
        %3315 = vmatprep.subr.bf16.mxu0 %v3006
        %3316 = vmatpush1.bf16.msra.mxu0 %v3005
        %3317 = vmatprep.subr.bf16.mxu0 %v3008
        %3318 = vmatpush1.bf16.msra.mxu0 %v3007
        %3319 = vmatprep.subr.bf16.mxu0 %v3010
        %3320 = vmatpush1.bf16.msra.mxu0 %v3009
        %3321 = vmatprep.subr.bf16.mxu0 %v3012
        %3322 = vmatpush1.bf16.msra.mxu0 %v3011
        %3323 = vmatprep.subr.bf16.mxu0 %v3014
        %3324 = vmatpush1.bf16.msra.mxu0 %v3013
        %3325 = vmatprep.subr.bf16.mxu0 %v3016
        %3326 = vmatpush1.bf16.msra.mxu0 %v3015
        %3327 = vmatprep.subr.bf16.mxu0 %v3018
        %3328 = vmatpush1.bf16.msra.mxu0 %v3017
        %3329 = vmatprep.subr.bf16.mxu0 %v3020
        %3330 = vmatpush1.bf16.msra.mxu0 %v3019
        %3331 = vmatprep.subr.bf16.mxu0 %v3022
        %3332 = vmatpush1.bf16.msra.mxu0 %v3021
        %3333 = vmatprep.mubr.bf16.mxu0 %v1159
        %3334 = vmatmul.mubr.bf16.gmra.mrb[0].mxu0 %v1158
        %v3335 = vpop.f32.mrb[0].mxu0
        %v3336 = vadd.f32 %v3295, %v3335
        %v3337 = vpop.f32.mrb[0].mxu0
        %v3338 = vadd.f32 %v3297, %v3337
        %v3339 = vpop.f32.mrb[0].mxu0
        %v3340 = vpop.f32.mrb[0].mxu0
        %3341 = vdwg.mxu0
        %3342 = vmatprep.subr.bf16.mxu0 %v3024
        %3343 = vmatpush1.bf16.msra.mxu0 %v3023
        %3344 = vmatprep.subr.bf16.mxu0 %v3026
        %3345 = vmatpush1.bf16.msra.mxu0 %v3025
        %3346 = vmatprep.subr.bf16.mxu0 %v3028
        %3347 = vmatpush1.bf16.msra.mxu0 %v3027
        %3348 = vmatprep.subr.bf16.mxu0 %v3030
        %3349 = vmatpush1.bf16.msra.mxu0 %v3029
        %3350 = vmatprep.subr.bf16.mxu0 %v3032
        %3351 = vmatpush1.bf16.msra.mxu0 %v3031
        %3352 = vmatprep.subr.bf16.mxu0 %v3034
        %3353 = vmatpush1.bf16.msra.mxu0 %v3033
        %3354 = vmatprep.subr.bf16.mxu0 %v3036
        %3355 = vmatpush1.bf16.msra.mxu0 %v3035
        %3356 = vmatprep.subr.bf16.mxu0 %v3038
        %3357 = vmatpush1.bf16.msra.mxu0 %v3037
        %3358 = vmatprep.subr.bf16.mxu0 %v3040
        %3359 = vmatpush1.bf16.msra.mxu0 %v3039
        %3360 = vmatprep.subr.bf16.mxu0 %v3042
        %3361 = vmatpush1.bf16.msra.mxu0 %v3041
        %3362 = vmatprep.subr.bf16.mxu0 %v3044
        %3363 = vmatpush1.bf16.msra.mxu0 %v3043
        %3364 = vmatprep.subr.bf16.mxu0 %v3046
        %3365 = vmatpush1.bf16.msra.mxu0 %v3045
        %3366 = vmatprep.subr.bf16.mxu0 %v3048
        %3367 = vmatpush1.bf16.msra.mxu0 %v3047
        %3368 = vmatprep.subr.bf16.mxu0 %v3050
        %3369 = vmatpush1.bf16.msra.mxu0 %v3049
        %3370 = vmatprep.subr.bf16.mxu0 %v3052
        %3371 = vmatpush1.bf16.msra.mxu0 %v3051
        %3372 = vmatprep.subr.bf16.mxu0 %v3054
        %3373 = vmatpush1.bf16.msra.mxu0 %v3053
        %3374 = vmatprep.mubr.bf16.mxu0 %v1161
        %3375 = vmatmul.mubr.bf16.gmra.mrb[0].mxu0 %v1160
        %v3376 = vpop.f32.mrb[0].mxu0
        %v3377 = vadd.f32 %v3336, %v3376
        %v3378 = vpop.f32.mrb[0].mxu0
        %v3379 = vadd.f32 %v3338, %v3378
        %v3380 = vpop.f32.mrb[0].mxu0
        %v3381 = vpop.f32.mrb[0].mxu0
        %3382 = vdwg.mxu0
        // Predicated region
        $region157: #{tpu_custom_call.1} parent=71 // pred_check
          %p3383 = pneg %p617
        $region158: #{tpu_custom_call.1} parent=71 // pred_check_branch
          %3385 = sbr.rel (%p3383) target = $region160
        $region159: #{tpu_custom_call.1} parent=71 // pred_region
          %s3386 = scalar_lea.sflag [#allocation6], 3
          %s3387 = smul.u32 2, 256
          %s3388 = smul.u32 %s3387, 2
          %s3389 = sshll.u32 %s3388, 4
          %3390 = dma.done %s3386, %s3389
        $region160: #{tpu_custom_call.1} parent=71 // pred_fallthru
          _
        %s3391 = scalar_lea.vmem [#allocation2], 3072
        %v3392 = vld [vmem:[%s3391] sm:$0xff]
        %v3393 = vld [vmem:[%s3391 + $0x8] sm:$0xff]
        %v3394 = vld [vmem:[%s3391 + $0x10] sm:$0xff]
        %v3395 = vld [vmem:[%s3391 + $0x18] sm:$0xff]
        %v3396 = vld [vmem:[%s3391 + $0x20] sm:$0xff]
        %v3397 = vld [vmem:[%s3391 + $0x28] sm:$0xff]
        %v3398 = vld [vmem:[%s3391 + $0x30] sm:$0xff]
        %v3399 = vld [vmem:[%s3391 + $0x38] sm:$0xff]
        %v3400 = vld [vmem:[%s3391 + $0x40] sm:$0xff]
        %v3401 = vld [vmem:[%s3391 + $0x48] sm:$0xff]
        %v3402 = vld [vmem:[%s3391 + $0x50] sm:$0xff]
        %v3403 = vld [vmem:[%s3391 + $0x58] sm:$0xff]
        %v3404 = vld [vmem:[%s3391 + $0x60] sm:$0xff]
        %v3405 = vld [vmem:[%s3391 + $0x68] sm:$0xff]
        %v3406 = vld [vmem:[%s3391 + $0x70] sm:$0xff]
        %v3407 = vld [vmem:[%s3391 + $0x78] sm:$0xff]
        %v3408 = vld [vmem:[%s3391 + $0x80] sm:$0xff]
        %v3409 = vld [vmem:[%s3391 + $0x88] sm:$0xff]
        %v3410 = vld [vmem:[%s3391 + $0x90] sm:$0xff]
        %v3411 = vld [vmem:[%s3391 + $0x98] sm:$0xff]
        %v3412 = vld [vmem:[%s3391 + $0xa0] sm:$0xff]
        %v3413 = vld [vmem:[%s3391 + $0xa8] sm:$0xff]
        %v3414 = vld [vmem:[%s3391 + $0xb0] sm:$0xff]
        %v3415 = vld [vmem:[%s3391 + $0xb8] sm:$0xff]
        %v3416 = vld [vmem:[%s3391 + $0xc0] sm:$0xff]
        %v3417 = vld [vmem:[%s3391 + $0xc8] sm:$0xff]
        %v3418 = vld [vmem:[%s3391 + $0xd0] sm:$0xff]
        %v3419 = vld [vmem:[%s3391 + $0xd8] sm:$0xff]
        %v3420 = vld [vmem:[%s3391 + $0xe0] sm:$0xff]
        %v3421 = vld [vmem:[%s3391 + $0xe8] sm:$0xff]
        %v3422 = vld [vmem:[%s3391 + $0xf0] sm:$0xff]
        %v3423 = vld [vmem:[%s3391 + $0xf8] sm:$0xff]
        %v3424 = vld [vmem:[%s3391 + $0x100] sm:$0xff]
        %v3425 = vld [vmem:[%s3391 + $0x108] sm:$0xff]
        %v3426 = vld [vmem:[%s3391 + $0x110] sm:$0xff]
        %v3427 = vld [vmem:[%s3391 + $0x118] sm:$0xff]
        %v3428 = vld [vmem:[%s3391 + $0x120] sm:$0xff]
        %v3429 = vld [vmem:[%s3391 + $0x128] sm:$0xff]
        %v3430 = vld [vmem:[%s3391 + $0x130] sm:$0xff]
        %v3431 = vld [vmem:[%s3391 + $0x138] sm:$0xff]
        %v3432 = vld [vmem:[%s3391 + $0x140] sm:$0xff]
        %v3433 = vld [vmem:[%s3391 + $0x148] sm:$0xff]
        %v3434 = vld [vmem:[%s3391 + $0x150] sm:$0xff]
        %v3435 = vld [vmem:[%s3391 + $0x158] sm:$0xff]
        %v3436 = vld [vmem:[%s3391 + $0x160] sm:$0xff]
        %v3437 = vld [vmem:[%s3391 + $0x168] sm:$0xff]
        %v3438 = vld [vmem:[%s3391 + $0x170] sm:$0xff]
        %v3439 = vld [vmem:[%s3391 + $0x178] sm:$0xff]
        %v3440 = vld [vmem:[%s3391 + $0x180] sm:$0xff]
        %v3441 = vld [vmem:[%s3391 + $0x188] sm:$0xff]
        %v3442 = vld [vmem:[%s3391 + $0x190] sm:$0xff]
        %v3443 = vld [vmem:[%s3391 + $0x198] sm:$0xff]
        %v3444 = vld [vmem:[%s3391 + $0x1a0] sm:$0xff]
        %v3445 = vld [vmem:[%s3391 + $0x1a8] sm:$0xff]
        %v3446 = vld [vmem:[%s3391 + $0x1b0] sm:$0xff]
        %v3447 = vld [vmem:[%s3391 + $0x1b8] sm:$0xff]
        %v3448 = vld [vmem:[%s3391 + $0x1c0] sm:$0xff]
        %v3449 = vld [vmem:[%s3391 + $0x1c8] sm:$0xff]
        %v3450 = vld [vmem:[%s3391 + $0x1d0] sm:$0xff]
        %v3451 = vld [vmem:[%s3391 + $0x1d8] sm:$0xff]
        %v3452 = vld [vmem:[%s3391 + $0x1e0] sm:$0xff]
        %v3453 = vld [vmem:[%s3391 + $0x1e8] sm:$0xff]
        %v3454 = vld [vmem:[%s3391 + $0x1f0] sm:$0xff]
        %v3455 = vld [vmem:[%s3391 + $0x1f8] sm:$0xff]
        %v3456 = vld [vmem:[%s3391 + $0x200] sm:$0xff]
        %v3457 = vld [vmem:[%s3391 + $0x208] sm:$0xff]
        %v3458 = vld [vmem:[%s3391 + $0x210] sm:$0xff]
        %v3459 = vld [vmem:[%s3391 + $0x218] sm:$0xff]
        %v3460 = vld [vmem:[%s3391 + $0x220] sm:$0xff]
        %v3461 = vld [vmem:[%s3391 + $0x228] sm:$0xff]
        %v3462 = vld [vmem:[%s3391 + $0x230] sm:$0xff]
        %v3463 = vld [vmem:[%s3391 + $0x238] sm:$0xff]
        %v3464 = vld [vmem:[%s3391 + $0x240] sm:$0xff]
        %v3465 = vld [vmem:[%s3391 + $0x248] sm:$0xff]
        %v3466 = vld [vmem:[%s3391 + $0x250] sm:$0xff]
        %v3467 = vld [vmem:[%s3391 + $0x258] sm:$0xff]
        %v3468 = vld [vmem:[%s3391 + $0x260] sm:$0xff]
        %v3469 = vld [vmem:[%s3391 + $0x268] sm:$0xff]
        %v3470 = vld [vmem:[%s3391 + $0x270] sm:$0xff]
        %v3471 = vld [vmem:[%s3391 + $0x278] sm:$0xff]
        %v3472 = vld [vmem:[%s3391 + $0x280] sm:$0xff]
        %v3473 = vld [vmem:[%s3391 + $0x288] sm:$0xff]
        %v3474 = vld [vmem:[%s3391 + $0x290] sm:$0xff]
        %v3475 = vld [vmem:[%s3391 + $0x298] sm:$0xff]
        %v3476 = vld [vmem:[%s3391 + $0x2a0] sm:$0xff]
        %v3477 = vld [vmem:[%s3391 + $0x2a8] sm:$0xff]
        %v3478 = vld [vmem:[%s3391 + $0x2b0] sm:$0xff]
        %v3479 = vld [vmem:[%s3391 + $0x2b8] sm:$0xff]
        %v3480 = vld [vmem:[%s3391 + $0x2c0] sm:$0xff]
        %v3481 = vld [vmem:[%s3391 + $0x2c8] sm:$0xff]
        %v3482 = vld [vmem:[%s3391 + $0x2d0] sm:$0xff]
        %v3483 = vld [vmem:[%s3391 + $0x2d8] sm:$0xff]
        %v3484 = vld [vmem:[%s3391 + $0x2e0] sm:$0xff]
        %v3485 = vld [vmem:[%s3391 + $0x2e8] sm:$0xff]
        %v3486 = vld [vmem:[%s3391 + $0x2f0] sm:$0xff]
        %v3487 = vld [vmem:[%s3391 + $0x2f8] sm:$0xff]
        %v3488 = vld [vmem:[%s3391 + $0x300] sm:$0xff]
        %v3489 = vld [vmem:[%s3391 + $0x308] sm:$0xff]
        %v3490 = vld [vmem:[%s3391 + $0x310] sm:$0xff]
        %v3491 = vld [vmem:[%s3391 + $0x318] sm:$0xff]
        %v3492 = vld [vmem:[%s3391 + $0x320] sm:$0xff]
        %v3493 = vld [vmem:[%s3391 + $0x328] sm:$0xff]
        %v3494 = vld [vmem:[%s3391 + $0x330] sm:$0xff]
        %v3495 = vld [vmem:[%s3391 + $0x338] sm:$0xff]
        %v3496 = vld [vmem:[%s3391 + $0x340] sm:$0xff]
        %v3497 = vld [vmem:[%s3391 + $0x348] sm:$0xff]
        %v3498 = vld [vmem:[%s3391 + $0x350] sm:$0xff]
        %v3499 = vld [vmem:[%s3391 + $0x358] sm:$0xff]
        %v3500 = vld [vmem:[%s3391 + $0x360] sm:$0xff]
        %v3501 = vld [vmem:[%s3391 + $0x368] sm:$0xff]
        %v3502 = vld [vmem:[%s3391 + $0x370] sm:$0xff]
        %v3503 = vld [vmem:[%s3391 + $0x378] sm:$0xff]
        %v3504 = vld [vmem:[%s3391 + $0x380] sm:$0xff]
        %v3505 = vld [vmem:[%s3391 + $0x388] sm:$0xff]
        %v3506 = vld [vmem:[%s3391 + $0x390] sm:$0xff]
        %v3507 = vld [vmem:[%s3391 + $0x398] sm:$0xff]
        %v3508 = vld [vmem:[%s3391 + $0x3a0] sm:$0xff]
        %v3509 = vld [vmem:[%s3391 + $0x3a8] sm:$0xff]
        %v3510 = vld [vmem:[%s3391 + $0x3b0] sm:$0xff]
        %v3511 = vld [vmem:[%s3391 + $0x3b8] sm:$0xff]
        %v3512 = vld [vmem:[%s3391 + $0x3c0] sm:$0xff]
        %v3513 = vld [vmem:[%s3391 + $0x3c8] sm:$0xff]
        %v3514 = vld [vmem:[%s3391 + $0x3d0] sm:$0xff]
        %v3515 = vld [vmem:[%s3391 + $0x3d8] sm:$0xff]
        %v3516 = vld [vmem:[%s3391 + $0x3e0] sm:$0xff]
        %v3517 = vld [vmem:[%s3391 + $0x3e8] sm:$0xff]
        %v3518 = vld [vmem:[%s3391 + $0x3f0] sm:$0xff]
        %v3519 = vld [vmem:[%s3391 + $0x3f8] sm:$0xff]
        %v3520 = vunpack.c.l.s8.bf16 %v3392
        %v3521 = vunpack.c.l.s8.bf16 %v3393
        %v3522 = vunpack.c.h.s8.bf16 %v3392
        %v3523 = vunpack.c.h.s8.bf16 %v3393
        %v3524 = vunpack.c.l.s8.bf16 %v3394
        %v3525 = vunpack.c.l.s8.bf16 %v3395
        %v3526 = vunpack.c.h.s8.bf16 %v3394
        %v3527 = vunpack.c.h.s8.bf16 %v3395
        %v3528 = vunpack.c.l.s8.bf16 %v3396
        %v3529 = vunpack.c.l.s8.bf16 %v3397
        %v3530 = vunpack.c.h.s8.bf16 %v3396
        %v3531 = vunpack.c.h.s8.bf16 %v3397
        %v3532 = vunpack.c.l.s8.bf16 %v3398
        %v3533 = vunpack.c.l.s8.bf16 %v3399
        %v3534 = vunpack.c.h.s8.bf16 %v3398
        %v3535 = vunpack.c.h.s8.bf16 %v3399
        %v3536 = vunpack.c.l.s8.bf16 %v3400
        %v3537 = vunpack.c.l.s8.bf16 %v3401
        %v3538 = vunpack.c.h.s8.bf16 %v3400
        %v3539 = vunpack.c.h.s8.bf16 %v3401
        %v3540 = vunpack.c.l.s8.bf16 %v3402
        %v3541 = vunpack.c.l.s8.bf16 %v3403
        %v3542 = vunpack.c.h.s8.bf16 %v3402
        %v3543 = vunpack.c.h.s8.bf16 %v3403
        %v3544 = vunpack.c.l.s8.bf16 %v3404
        %v3545 = vunpack.c.l.s8.bf16 %v3405
        %v3546 = vunpack.c.h.s8.bf16 %v3404
        %v3547 = vunpack.c.h.s8.bf16 %v3405
        %v3548 = vunpack.c.l.s8.bf16 %v3406
        %v3549 = vunpack.c.l.s8.bf16 %v3407
        %v3550 = vunpack.c.h.s8.bf16 %v3406
        %v3551 = vunpack.c.h.s8.bf16 %v3407
        %v3552 = vunpack.c.l.s8.bf16 %v3408
        %v3553 = vunpack.c.l.s8.bf16 %v3409
        %v3554 = vunpack.c.h.s8.bf16 %v3408
        %v3555 = vunpack.c.h.s8.bf16 %v3409
        %v3556 = vunpack.c.l.s8.bf16 %v3410
        %v3557 = vunpack.c.l.s8.bf16 %v3411
        %v3558 = vunpack.c.h.s8.bf16 %v3410
        %v3559 = vunpack.c.h.s8.bf16 %v3411
        %v3560 = vunpack.c.l.s8.bf16 %v3412
        %v3561 = vunpack.c.l.s8.bf16 %v3413
        %v3562 = vunpack.c.h.s8.bf16 %v3412
        %v3563 = vunpack.c.h.s8.bf16 %v3413
        %v3564 = vunpack.c.l.s8.bf16 %v3414
        %v3565 = vunpack.c.l.s8.bf16 %v3415
        %v3566 = vunpack.c.h.s8.bf16 %v3414
        %v3567 = vunpack.c.h.s8.bf16 %v3415
        %v3568 = vunpack.c.l.s8.bf16 %v3416
        %v3569 = vunpack.c.l.s8.bf16 %v3417
        %v3570 = vunpack.c.h.s8.bf16 %v3416
        %v3571 = vunpack.c.h.s8.bf16 %v3417
        %v3572 = vunpack.c.l.s8.bf16 %v3418
        %v3573 = vunpack.c.l.s8.bf16 %v3419
        %v3574 = vunpack.c.h.s8.bf16 %v3418
        %v3575 = vunpack.c.h.s8.bf16 %v3419
        %v3576 = vunpack.c.l.s8.bf16 %v3420
        %v3577 = vunpack.c.l.s8.bf16 %v3421
        %v3578 = vunpack.c.h.s8.bf16 %v3420
        %v3579 = vunpack.c.h.s8.bf16 %v3421
        %v3580 = vunpack.c.l.s8.bf16 %v3422
        %v3581 = vunpack.c.l.s8.bf16 %v3423
        %v3582 = vunpack.c.h.s8.bf16 %v3422
        %v3583 = vunpack.c.h.s8.bf16 %v3423
        %v3584 = vunpack.c.l.s8.bf16 %v3424
        %v3585 = vunpack.c.l.s8.bf16 %v3425
        %v3586 = vunpack.c.h.s8.bf16 %v3424
        %v3587 = vunpack.c.h.s8.bf16 %v3425
        %v3588 = vunpack.c.l.s8.bf16 %v3426
        %v3589 = vunpack.c.l.s8.bf16 %v3427
        %v3590 = vunpack.c.h.s8.bf16 %v3426
        %v3591 = vunpack.c.h.s8.bf16 %v3427
        %v3592 = vunpack.c.l.s8.bf16 %v3428
        %v3593 = vunpack.c.l.s8.bf16 %v3429
        %v3594 = vunpack.c.h.s8.bf16 %v3428
        %v3595 = vunpack.c.h.s8.bf16 %v3429
        %v3596 = vunpack.c.l.s8.bf16 %v3430
        %v3597 = vunpack.c.l.s8.bf16 %v3431
        %v3598 = vunpack.c.h.s8.bf16 %v3430
        %v3599 = vunpack.c.h.s8.bf16 %v3431
        %v3600 = vunpack.c.l.s8.bf16 %v3432
        %v3601 = vunpack.c.l.s8.bf16 %v3433
        %v3602 = vunpack.c.h.s8.bf16 %v3432
        %v3603 = vunpack.c.h.s8.bf16 %v3433
        %v3604 = vunpack.c.l.s8.bf16 %v3434
        %v3605 = vunpack.c.l.s8.bf16 %v3435
        %v3606 = vunpack.c.h.s8.bf16 %v3434
        %v3607 = vunpack.c.h.s8.bf16 %v3435
        %v3608 = vunpack.c.l.s8.bf16 %v3436
        %v3609 = vunpack.c.l.s8.bf16 %v3437
        %v3610 = vunpack.c.h.s8.bf16 %v3436
        %v3611 = vunpack.c.h.s8.bf16 %v3437
        %v3612 = vunpack.c.l.s8.bf16 %v3438
        %v3613 = vunpack.c.l.s8.bf16 %v3439
        %v3614 = vunpack.c.h.s8.bf16 %v3438
        %v3615 = vunpack.c.h.s8.bf16 %v3439
        %v3616 = vunpack.c.l.s8.bf16 %v3440
        %v3617 = vunpack.c.l.s8.bf16 %v3441
        %v3618 = vunpack.c.h.s8.bf16 %v3440
        %v3619 = vunpack.c.h.s8.bf16 %v3441
        %v3620 = vunpack.c.l.s8.bf16 %v3442
        %v3621 = vunpack.c.l.s8.bf16 %v3443
        %v3622 = vunpack.c.h.s8.bf16 %v3442
        %v3623 = vunpack.c.h.s8.bf16 %v3443
        %v3624 = vunpack.c.l.s8.bf16 %v3444
        %v3625 = vunpack.c.l.s8.bf16 %v3445
        %v3626 = vunpack.c.h.s8.bf16 %v3444
        %v3627 = vunpack.c.h.s8.bf16 %v3445
        %v3628 = vunpack.c.l.s8.bf16 %v3446
        %v3629 = vunpack.c.l.s8.bf16 %v3447
        %v3630 = vunpack.c.h.s8.bf16 %v3446
        %v3631 = vunpack.c.h.s8.bf16 %v3447
        %v3632 = vunpack.c.l.s8.bf16 %v3448
        %v3633 = vunpack.c.l.s8.bf16 %v3449
        %v3634 = vunpack.c.h.s8.bf16 %v3448
        %v3635 = vunpack.c.h.s8.bf16 %v3449
        %v3636 = vunpack.c.l.s8.bf16 %v3450
        %v3637 = vunpack.c.l.s8.bf16 %v3451
        %v3638 = vunpack.c.h.s8.bf16 %v3450
        %v3639 = vunpack.c.h.s8.bf16 %v3451
        %v3640 = vunpack.c.l.s8.bf16 %v3452
        %v3641 = vunpack.c.l.s8.bf16 %v3453
        %v3642 = vunpack.c.h.s8.bf16 %v3452
        %v3643 = vunpack.c.h.s8.bf16 %v3453
        %v3644 = vunpack.c.l.s8.bf16 %v3454
        %v3645 = vunpack.c.l.s8.bf16 %v3455
        %v3646 = vunpack.c.h.s8.bf16 %v3454
        %v3647 = vunpack.c.h.s8.bf16 %v3455
        %v3648 = vunpack.c.l.s8.bf16 %v3456
        %v3649 = vunpack.c.l.s8.bf16 %v3457
        %v3650 = vunpack.c.h.s8.bf16 %v3456
        %v3651 = vunpack.c.h.s8.bf16 %v3457
        %v3652 = vunpack.c.l.s8.bf16 %v3458
        %v3653 = vunpack.c.l.s8.bf16 %v3459
        %v3654 = vunpack.c.h.s8.bf16 %v3458
        %v3655 = vunpack.c.h.s8.bf16 %v3459
        %v3656 = vunpack.c.l.s8.bf16 %v3460
        %v3657 = vunpack.c.l.s8.bf16 %v3461
        %v3658 = vunpack.c.h.s8.bf16 %v3460
        %v3659 = vunpack.c.h.s8.bf16 %v3461
        %v3660 = vunpack.c.l.s8.bf16 %v3462
        %v3661 = vunpack.c.l.s8.bf16 %v3463
        %v3662 = vunpack.c.h.s8.bf16 %v3462
        %v3663 = vunpack.c.h.s8.bf16 %v3463
        %v3664 = vunpack.c.l.s8.bf16 %v3464
        %v3665 = vunpack.c.l.s8.bf16 %v3465
        %v3666 = vunpack.c.h.s8.bf16 %v3464
        %v3667 = vunpack.c.h.s8.bf16 %v3465
        %v3668 = vunpack.c.l.s8.bf16 %v3466
        %v3669 = vunpack.c.l.s8.bf16 %v3467
        %v3670 = vunpack.c.h.s8.bf16 %v3466
        %v3671 = vunpack.c.h.s8.bf16 %v3467
        %v3672 = vunpack.c.l.s8.bf16 %v3468
        %v3673 = vunpack.c.l.s8.bf16 %v3469
        %v3674 = vunpack.c.h.s8.bf16 %v3468
        %v3675 = vunpack.c.h.s8.bf16 %v3469
        %v3676 = vunpack.c.l.s8.bf16 %v3470
        %v3677 = vunpack.c.l.s8.bf16 %v3471
        %v3678 = vunpack.c.h.s8.bf16 %v3470
        %v3679 = vunpack.c.h.s8.bf16 %v3471
        %v3680 = vunpack.c.l.s8.bf16 %v3472
        %v3681 = vunpack.c.l.s8.bf16 %v3473
        %v3682 = vunpack.c.h.s8.bf16 %v3472
        %v3683 = vunpack.c.h.s8.bf16 %v3473
        %v3684 = vunpack.c.l.s8.bf16 %v3474
        %v3685 = vunpack.c.l.s8.bf16 %v3475
        %v3686 = vunpack.c.h.s8.bf16 %v3474
        %v3687 = vunpack.c.h.s8.bf16 %v3475
        %v3688 = vunpack.c.l.s8.bf16 %v3476
        %v3689 = vunpack.c.l.s8.bf16 %v3477
        %v3690 = vunpack.c.h.s8.bf16 %v3476
        %v3691 = vunpack.c.h.s8.bf16 %v3477
        %v3692 = vunpack.c.l.s8.bf16 %v3478
        %v3693 = vunpack.c.l.s8.bf16 %v3479
        %v3694 = vunpack.c.h.s8.bf16 %v3478
        %v3695 = vunpack.c.h.s8.bf16 %v3479
        %v3696 = vunpack.c.l.s8.bf16 %v3480
        %v3697 = vunpack.c.l.s8.bf16 %v3481
        %v3698 = vunpack.c.h.s8.bf16 %v3480
        %v3699 = vunpack.c.h.s8.bf16 %v3481
        %v3700 = vunpack.c.l.s8.bf16 %v3482
        %v3701 = vunpack.c.l.s8.bf16 %v3483
        %v3702 = vunpack.c.h.s8.bf16 %v3482
        %v3703 = vunpack.c.h.s8.bf16 %v3483
        %v3704 = vunpack.c.l.s8.bf16 %v3484
        %v3705 = vunpack.c.l.s8.bf16 %v3485
        %v3706 = vunpack.c.h.s8.bf16 %v3484
        %v3707 = vunpack.c.h.s8.bf16 %v3485
        %v3708 = vunpack.c.l.s8.bf16 %v3486
        %v3709 = vunpack.c.l.s8.bf16 %v3487
        %v3710 = vunpack.c.h.s8.bf16 %v3486
        %v3711 = vunpack.c.h.s8.bf16 %v3487
        %v3712 = vunpack.c.l.s8.bf16 %v3488
        %v3713 = vunpack.c.l.s8.bf16 %v3489
        %v3714 = vunpack.c.h.s8.bf16 %v3488
        %v3715 = vunpack.c.h.s8.bf16 %v3489
        %v3716 = vunpack.c.l.s8.bf16 %v3490
        %v3717 = vunpack.c.l.s8.bf16 %v3491
        %v3718 = vunpack.c.h.s8.bf16 %v3490
        %v3719 = vunpack.c.h.s8.bf16 %v3491
        %v3720 = vunpack.c.l.s8.bf16 %v3492
        %v3721 = vunpack.c.l.s8.bf16 %v3493
        %v3722 = vunpack.c.h.s8.bf16 %v3492
        %v3723 = vunpack.c.h.s8.bf16 %v3493
        %v3724 = vunpack.c.l.s8.bf16 %v3494
        %v3725 = vunpack.c.l.s8.bf16 %v3495
        %v3726 = vunpack.c.h.s8.bf16 %v3494
        %v3727 = vunpack.c.h.s8.bf16 %v3495
        %v3728 = vunpack.c.l.s8.bf16 %v3496
        %v3729 = vunpack.c.l.s8.bf16 %v3497
        %v3730 = vunpack.c.h.s8.bf16 %v3496
        %v3731 = vunpack.c.h.s8.bf16 %v3497
        %v3732 = vunpack.c.l.s8.bf16 %v3498
        %v3733 = vunpack.c.l.s8.bf16 %v3499
        %v3734 = vunpack.c.h.s8.bf16 %v3498
        %v3735 = vunpack.c.h.s8.bf16 %v3499
        %v3736 = vunpack.c.l.s8.bf16 %v3500
        %v3737 = vunpack.c.l.s8.bf16 %v3501
        %v3738 = vunpack.c.h.s8.bf16 %v3500
        %v3739 = vunpack.c.h.s8.bf16 %v3501
        %v3740 = vunpack.c.l.s8.bf16 %v3502
        %v3741 = vunpack.c.l.s8.bf16 %v3503
        %v3742 = vunpack.c.h.s8.bf16 %v3502
        %v3743 = vunpack.c.h.s8.bf16 %v3503
        %v3744 = vunpack.c.l.s8.bf16 %v3504
        %v3745 = vunpack.c.l.s8.bf16 %v3505
        %v3746 = vunpack.c.h.s8.bf16 %v3504
        %v3747 = vunpack.c.h.s8.bf16 %v3505
        %v3748 = vunpack.c.l.s8.bf16 %v3506
        %v3749 = vunpack.c.l.s8.bf16 %v3507
        %v3750 = vunpack.c.h.s8.bf16 %v3506
        %v3751 = vunpack.c.h.s8.bf16 %v3507
        %v3752 = vunpack.c.l.s8.bf16 %v3508
        %v3753 = vunpack.c.l.s8.bf16 %v3509
        %v3754 = vunpack.c.h.s8.bf16 %v3508
        %v3755 = vunpack.c.h.s8.bf16 %v3509
        %v3756 = vunpack.c.l.s8.bf16 %v3510
        %v3757 = vunpack.c.l.s8.bf16 %v3511
        %v3758 = vunpack.c.h.s8.bf16 %v3510
        %v3759 = vunpack.c.h.s8.bf16 %v3511
        %v3760 = vunpack.c.l.s8.bf16 %v3512
        %v3761 = vunpack.c.l.s8.bf16 %v3513
        %v3762 = vunpack.c.h.s8.bf16 %v3512
        %v3763 = vunpack.c.h.s8.bf16 %v3513
        %v3764 = vunpack.c.l.s8.bf16 %v3514
        %v3765 = vunpack.c.l.s8.bf16 %v3515
        %v3766 = vunpack.c.h.s8.bf16 %v3514
        %v3767 = vunpack.c.h.s8.bf16 %v3515
        %v3768 = vunpack.c.l.s8.bf16 %v3516
        %v3769 = vunpack.c.l.s8.bf16 %v3517
        %v3770 = vunpack.c.h.s8.bf16 %v3516
        %v3771 = vunpack.c.h.s8.bf16 %v3517
        %v3772 = vunpack.c.l.s8.bf16 %v3518
        %v3773 = vunpack.c.l.s8.bf16 %v3519
        %v3774 = vunpack.c.h.s8.bf16 %v3518
        %v3775 = vunpack.c.h.s8.bf16 %v3519
        %3776 = vmatprep.subr.bf16.mxu0 %v3521
        %3777 = vmatpush1.bf16.msra.mxu0 %v3520
        %3778 = vmatprep.subr.bf16.mxu0 %v3523
        %3779 = vmatpush1.bf16.msra.mxu0 %v3522
        %3780 = vmatprep.subr.bf16.mxu0 %v3525
        %3781 = vmatpush1.bf16.msra.mxu0 %v3524
        %3782 = vmatprep.subr.bf16.mxu0 %v3527
        %3783 = vmatpush1.bf16.msra.mxu0 %v3526
        %3784 = vmatprep.subr.bf16.mxu0 %v3529
        %3785 = vmatpush1.bf16.msra.mxu0 %v3528
        %3786 = vmatprep.subr.bf16.mxu0 %v3531
        %3787 = vmatpush1.bf16.msra.mxu0 %v3530
        %3788 = vmatprep.subr.bf16.mxu0 %v3533
        %3789 = vmatpush1.bf16.msra.mxu0 %v3532
        %3790 = vmatprep.subr.bf16.mxu0 %v3535
        %3791 = vmatpush1.bf16.msra.mxu0 %v3534
        %3792 = vmatprep.subr.bf16.mxu0 %v3537
        %3793 = vmatpush1.bf16.msra.mxu0 %v3536
        %3794 = vmatprep.subr.bf16.mxu0 %v3539
        %3795 = vmatpush1.bf16.msra.mxu0 %v3538
        %3796 = vmatprep.subr.bf16.mxu0 %v3541
        %3797 = vmatpush1.bf16.msra.mxu0 %v3540
        %3798 = vmatprep.subr.bf16.mxu0 %v3543
        %3799 = vmatpush1.bf16.msra.mxu0 %v3542
        %3800 = vmatprep.subr.bf16.mxu0 %v3545
        %3801 = vmatpush1.bf16.msra.mxu0 %v3544
        %3802 = vmatprep.subr.bf16.mxu0 %v3547
        %3803 = vmatpush1.bf16.msra.mxu0 %v3546
        %3804 = vmatprep.subr.bf16.mxu0 %v3549
        %3805 = vmatpush1.bf16.msra.mxu0 %v3548
        %3806 = vmatprep.subr.bf16.mxu0 %v3551
        %3807 = vmatpush1.bf16.msra.mxu0 %v3550
        %3808 = vmatprep.mubr.bf16.mxu0 %v1147
        %3809 = vmatmul.mubr.bf16.gmra.mrb[0].mxu0 %v1146
        %v3810 = vpop.f32.mrb[0].mxu0
        %v3811 = vadd.f32 0.0, %v3810
        %v3812 = vpop.f32.mrb[0].mxu0
        %v3813 = vadd.f32 0.0, %v3812
        %v3814 = vpop.f32.mrb[0].mxu0
        %v3815 = vpop.f32.mrb[0].mxu0
        %3816 = vdwg.mxu0
        %3817 = vmatprep.subr.bf16.mxu0 %v3553
        %3818 = vmatpush1.bf16.msra.mxu0 %v3552
        %3819 = vmatprep.subr.bf16.mxu0 %v3555
        %3820 = vmatpush1.bf16.msra.mxu0 %v3554
        %3821 = vmatprep.subr.bf16.mxu0 %v3557
        %3822 = vmatpush1.bf16.msra.mxu0 %v3556
        %3823 = vmatprep.subr.bf16.mxu0 %v3559
        %3824 = vmatpush1.bf16.msra.mxu0 %v3558
        %3825 = vmatprep.subr.bf16.mxu0 %v3561
        %3826 = vmatpush1.bf16.msra.mxu0 %v3560
        %3827 = vmatprep.subr.bf16.mxu0 %v3563
        %3828 = vmatpush1.bf16.msra.mxu0 %v3562
        %3829 = vmatprep.subr.bf16.mxu0 %v3565
        %3830 = vmatpush1.bf16.msra.mxu0 %v3564
        %3831 = vmatprep.subr.bf16.mxu0 %v3567
        %3832 = vmatpush1.bf16.msra.mxu0 %v3566
        %3833 = vmatprep.subr.bf16.mxu0 %v3569
        %3834 = vmatpush1.bf16.msra.mxu0 %v3568
        %3835 = vmatprep.subr.bf16.mxu0 %v3571
        %3836 = vmatpush1.bf16.msra.mxu0 %v3570
        %3837 = vmatprep.subr.bf16.mxu0 %v3573
        %3838 = vmatpush1.bf16.msra.mxu0 %v3572
        %3839 = vmatprep.subr.bf16.mxu0 %v3575
        %3840 = vmatpush1.bf16.msra.mxu0 %v3574
        %3841 = vmatprep.subr.bf16.mxu0 %v3577
        %3842 = vmatpush1.bf16.msra.mxu0 %v3576
        %3843 = vmatprep.subr.bf16.mxu0 %v3579
        %3844 = vmatpush1.bf16.msra.mxu0 %v3578
        %3845 = vmatprep.subr.bf16.mxu0 %v3581
        %3846 = vmatpush1.bf16.msra.mxu0 %v3580
        %3847 = vmatprep.subr.bf16.mxu0 %v3583
        %3848 = vmatpush1.bf16.msra.mxu0 %v3582
        %3849 = vmatprep.mubr.bf16.mxu0 %v1149
        %3850 = vmatmul.mubr.bf16.gmra.mrb[0].mxu0 %v1148
        %v3851 = vpop.f32.mrb[0].mxu0
        %v3852 = vadd.f32 %v3811, %v3851
        %v3853 = vpop.f32.mrb[0].mxu0
        %v3854 = vadd.f32 %v3813, %v3853
        %v3855 = vpop.f32.mrb[0].mxu0
        %v3856 = vpop.f32.mrb[0].mxu0
        %3857 = vdwg.mxu0
        %3858 = vmatprep.subr.bf16.mxu0 %v3585
        %3859 = vmatpush1.bf16.msra.mxu0 %v3584
        %3860 = vmatprep.subr.bf16.mxu0 %v3587
        %3861 = vmatpush1.bf16.msra.mxu0 %v3586
        %3862 = vmatprep.subr.bf16.mxu0 %v3589
        %3863 = vmatpush1.bf16.msra.mxu0 %v3588
        %3864 = vmatprep.subr.bf16.mxu0 %v3591
        %3865 = vmatpush1.bf16.msra.mxu0 %v3590
        %3866 = vmatprep.subr.bf16.mxu0 %v3593
        %3867 = vmatpush1.bf16.msra.mxu0 %v3592
        %3868 = vmatprep.subr.bf16.mxu0 %v3595
        %3869 = vmatpush1.bf16.msra.mxu0 %v3594
        %3870 = vmatprep.subr.bf16.mxu0 %v3597
        %3871 = vmatpush1.bf16.msra.mxu0 %v3596
        %3872 = vmatprep.subr.bf16.mxu0 %v3599
        %3873 = vmatpush1.bf16.msra.mxu0 %v3598
        %3874 = vmatprep.subr.bf16.mxu0 %v3601
        %3875 = vmatpush1.bf16.msra.mxu0 %v3600
        %3876 = vmatprep.subr.bf16.mxu0 %v3603
        %3877 = vmatpush1.bf16.msra.mxu0 %v3602
        %3878 = vmatprep.subr.bf16.mxu0 %v3605
        %3879 = vmatpush1.bf16.msra.mxu0 %v3604
        %3880 = vmatprep.subr.bf16.mxu0 %v3607
        %3881 = vmatpush1.bf16.msra.mxu0 %v3606
        %3882 = vmatprep.subr.bf16.mxu0 %v3609
        %3883 = vmatpush1.bf16.msra.mxu0 %v3608
        %3884 = vmatprep.subr.bf16.mxu0 %v3611
        %3885 = vmatpush1.bf16.msra.mxu0 %v3610
        %3886 = vmatprep.subr.bf16.mxu0 %v3613
        %3887 = vmatpush1.bf16.msra.mxu0 %v3612
        %3888 = vmatprep.subr.bf16.mxu0 %v3615
        %3889 = vmatpush1.bf16.msra.mxu0 %v3614
        %3890 = vmatprep.mubr.bf16.mxu0 %v1151
        %3891 = vmatmul.mubr.bf16.gmra.mrb[0].mxu0 %v1150
        %v3892 = vpop.f32.mrb[0].mxu0
        %v3893 = vadd.f32 %v3852, %v3892
        %v3894 = vpop.f32.mrb[0].mxu0
        %v3895 = vadd.f32 %v3854, %v3894
        %v3896 = vpop.f32.mrb[0].mxu0
        %v3897 = vpop.f32.mrb[0].mxu0
        %3898 = vdwg.mxu0
        %3899 = vmatprep.subr.bf16.mxu0 %v3617
        %3900 = vmatpush1.bf16.msra.mxu0 %v3616
        %3901 = vmatprep.subr.bf16.mxu0 %v3619
        %3902 = vmatpush1.bf16.msra.mxu0 %v3618
        %3903 = vmatprep.subr.bf16.mxu0 %v3621
        %3904 = vmatpush1.bf16.msra.mxu0 %v3620
        %3905 = vmatprep.subr.bf16.mxu0 %v3623
        %3906 = vmatpush1.bf16.msra.mxu0 %v3622
        %3907 = vmatprep.subr.bf16.mxu0 %v3625
        %3908 = vmatpush1.bf16.msra.mxu0 %v3624
        %3909 = vmatprep.subr.bf16.mxu0 %v3627
        %3910 = vmatpush1.bf16.msra.mxu0 %v3626
        %3911 = vmatprep.subr.bf16.mxu0 %v3629
        %3912 = vmatpush1.bf16.msra.mxu0 %v3628
        %3913 = vmatprep.subr.bf16.mxu0 %v3631
        %3914 = vmatpush1.bf16.msra.mxu0 %v3630
        %3915 = vmatprep.subr.bf16.mxu0 %v3633
        %3916 = vmatpush1.bf16.msra.mxu0 %v3632
        %3917 = vmatprep.subr.bf16.mxu0 %v3635
        %3918 = vmatpush1.bf16.msra.mxu0 %v3634
        %3919 = vmatprep.subr.bf16.mxu0 %v3637
        %3920 = vmatpush1.bf16.msra.mxu0 %v3636
        %3921 = vmatprep.subr.bf16.mxu0 %v3639
        %3922 = vmatpush1.bf16.msra.mxu0 %v3638
        %3923 = vmatprep.subr.bf16.mxu0 %v3641
        %3924 = vmatpush1.bf16.msra.mxu0 %v3640
        %3925 = vmatprep.subr.bf16.mxu0 %v3643
        %3926 = vmatpush1.bf16.msra.mxu0 %v3642
        %3927 = vmatprep.subr.bf16.mxu0 %v3645
        %3928 = vmatpush1.bf16.msra.mxu0 %v3644
        %3929 = vmatprep.subr.bf16.mxu0 %v3647
        %3930 = vmatpush1.bf16.msra.mxu0 %v3646
        %3931 = vmatprep.mubr.bf16.mxu0 %v1153
        %3932 = vmatmul.mubr.bf16.gmra.mrb[0].mxu0 %v1152
        %v3933 = vpop.f32.mrb[0].mxu0
        %v3934 = vadd.f32 %v3893, %v3933
        %v3935 = vpop.f32.mrb[0].mxu0
        %v3936 = vadd.f32 %v3895, %v3935
        %v3937 = vpop.f32.mrb[0].mxu0
        %v3938 = vpop.f32.mrb[0].mxu0
        %3939 = vdwg.mxu0
        %3940 = vmatprep.subr.bf16.mxu0 %v3649
        %3941 = vmatpush1.bf16.msra.mxu0 %v3648
        %3942 = vmatprep.subr.bf16.mxu0 %v3651
        %3943 = vmatpush1.bf16.msra.mxu0 %v3650
        %3944 = vmatprep.subr.bf16.mxu0 %v3653
        %3945 = vmatpush1.bf16.msra.mxu0 %v3652
        %3946 = vmatprep.subr.bf16.mxu0 %v3655
        %3947 = vmatpush1.bf16.msra.mxu0 %v3654
        %3948 = vmatprep.subr.bf16.mxu0 %v3657
        %3949 = vmatpush1.bf16.msra.mxu0 %v3656
        %3950 = vmatprep.subr.bf16.mxu0 %v3659
        %3951 = vmatpush1.bf16.msra.mxu0 %v3658
        %3952 = vmatprep.subr.bf16.mxu0 %v3661
        %3953 = vmatpush1.bf16.msra.mxu0 %v3660
        %3954 = vmatprep.subr.bf16.mxu0 %v3663
        %3955 = vmatpush1.bf16.msra.mxu0 %v3662
        %3956 = vmatprep.subr.bf16.mxu0 %v3665
        %3957 = vmatpush1.bf16.msra.mxu0 %v3664
        %3958 = vmatprep.subr.bf16.mxu0 %v3667
        %3959 = vmatpush1.bf16.msra.mxu0 %v3666
        %3960 = vmatprep.subr.bf16.mxu0 %v3669
        %3961 = vmatpush1.bf16.msra.mxu0 %v3668
        %3962 = vmatprep.subr.bf16.mxu0 %v3671
        %3963 = vmatpush1.bf16.msra.mxu0 %v3670
        %3964 = vmatprep.subr.bf16.mxu0 %v3673
        %3965 = vmatpush1.bf16.msra.mxu0 %v3672
        %3966 = vmatprep.subr.bf16.mxu0 %v3675
        %3967 = vmatpush1.bf16.msra.mxu0 %v3674
        %3968 = vmatprep.subr.bf16.mxu0 %v3677
        %3969 = vmatpush1.bf16.msra.mxu0 %v3676
        %3970 = vmatprep.subr.bf16.mxu0 %v3679
        %3971 = vmatpush1.bf16.msra.mxu0 %v3678
        %3972 = vmatprep.mubr.bf16.mxu0 %v1155
        %3973 = vmatmul.mubr.bf16.gmra.mrb[0].mxu0 %v1154
        %v3974 = vpop.f32.mrb[0].mxu0
        %v3975 = vadd.f32 %v3934, %v3974
        %v3976 = vpop.f32.mrb[0].mxu0
        %v3977 = vadd.f32 %v3936, %v3976
        %v3978 = vpop.f32.mrb[0].mxu0
        %v3979 = vpop.f32.mrb[0].mxu0
        %3980 = vdwg.mxu0
        %3981 = vmatprep.subr.bf16.mxu0 %v3681
        %3982 = vmatpush1.bf16.msra.mxu0 %v3680
        %3983 = vmatprep.subr.bf16.mxu0 %v3683
        %3984 = vmatpush1.bf16.msra.mxu0 %v3682
        %3985 = vmatprep.subr.bf16.mxu0 %v3685
        %3986 = vmatpush1.bf16.msra.mxu0 %v3684
        %3987 = vmatprep.subr.bf16.mxu0 %v3687
        %3988 = vmatpush1.bf16.msra.mxu0 %v3686
        %3989 = vmatprep.subr.bf16.mxu0 %v3689
        %3990 = vmatpush1.bf16.msra.mxu0 %v3688
        %3991 = vmatprep.subr.bf16.mxu0 %v3691
        %3992 = vmatpush1.bf16.msra.mxu0 %v3690
        %3993 = vmatprep.subr.bf16.mxu0 %v3693
        %3994 = vmatpush1.bf16.msra.mxu0 %v3692
        %3995 = vmatprep.subr.bf16.mxu0 %v3695
        %3996 = vmatpush1.bf16.msra.mxu0 %v3694
        %3997 = vmatprep.subr.bf16.mxu0 %v3697
        %3998 = vmatpush1.bf16.msra.mxu0 %v3696
        %3999 = vmatprep.subr.bf16.mxu0 %v3699
        %4000 = vmatpush1.bf16.msra.mxu0 %v3698
        %4001 = vmatprep.subr.bf16.mxu0 %v3701
        %4002 = vmatpush1.bf16.msra.mxu0 %v3700
        %4003 = vmatprep.subr.bf16.mxu0 %v3703
        %4004 = vmatpush1.bf16.msra.mxu0 %v3702
        %4005 = vmatprep.subr.bf16.mxu0 %v3705
        %4006 = vmatpush1.bf16.msra.mxu0 %v3704
        %4007 = vmatprep.subr.bf16.mxu0 %v3707
        %4008 = vmatpush1.bf16.msra.mxu0 %v3706
        %4009 = vmatprep.subr.bf16.mxu0 %v3709
        %4010 = vmatpush1.bf16.msra.mxu0 %v3708
        %4011 = vmatprep.subr.bf16.mxu0 %v3711
        %4012 = vmatpush1.bf16.msra.mxu0 %v3710
        %4013 = vmatprep.mubr.bf16.mxu0 %v1157
        %4014 = vmatmul.mubr.bf16.gmra.mrb[0].mxu0 %v1156
        %v4015 = vpop.f32.mrb[0].mxu0
        %v4016 = vadd.f32 %v3975, %v4015
        %v4017 = vpop.f32.mrb[0].mxu0
        %v4018 = vadd.f32 %v3977, %v4017
        %v4019 = vpop.f32.mrb[0].mxu0
        %v4020 = vpop.f32.mrb[0].mxu0
        %4021 = vdwg.mxu0
        %4022 = vmatprep.subr.bf16.mxu0 %v3713
        %4023 = vmatpush1.bf16.msra.mxu0 %v3712
        %4024 = vmatprep.subr.bf16.mxu0 %v3715
        %4025 = vmatpush1.bf16.msra.mxu0 %v3714
        %4026 = vmatprep.subr.bf16.mxu0 %v3717
        %4027 = vmatpush1.bf16.msra.mxu0 %v3716
        %4028 = vmatprep.subr.bf16.mxu0 %v3719
        %4029 = vmatpush1.bf16.msra.mxu0 %v3718
        %4030 = vmatprep.subr.bf16.mxu0 %v3721
        %4031 = vmatpush1.bf16.msra.mxu0 %v3720
        %4032 = vmatprep.subr.bf16.mxu0 %v3723
        %4033 = vmatpush1.bf16.msra.mxu0 %v3722
        %4034 = vmatprep.subr.bf16.mxu0 %v3725
        %4035 = vmatpush1.bf16.msra.mxu0 %v3724
        %4036 = vmatprep.subr.bf16.mxu0 %v3727
        %4037 = vmatpush1.bf16.msra.mxu0 %v3726
        %4038 = vmatprep.subr.bf16.mxu0 %v3729
        %4039 = vmatpush1.bf16.msra.mxu0 %v3728
        %4040 = vmatprep.subr.bf16.mxu0 %v3731
        %4041 = vmatpush1.bf16.msra.mxu0 %v3730
        %4042 = vmatprep.subr.bf16.mxu0 %v3733
        %4043 = vmatpush1.bf16.msra.mxu0 %v3732
        %4044 = vmatprep.subr.bf16.mxu0 %v3735
        %4045 = vmatpush1.bf16.msra.mxu0 %v3734
        %4046 = vmatprep.subr.bf16.mxu0 %v3737
        %4047 = vmatpush1.bf16.msra.mxu0 %v3736
        %4048 = vmatprep.subr.bf16.mxu0 %v3739
        %4049 = vmatpush1.bf16.msra.mxu0 %v3738
        %4050 = vmatprep.subr.bf16.mxu0 %v3741
        %4051 = vmatpush1.bf16.msra.mxu0 %v3740
        %4052 = vmatprep.subr.bf16.mxu0 %v3743
        %4053 = vmatpush1.bf16.msra.mxu0 %v3742
        %4054 = vmatprep.mubr.bf16.mxu0 %v1159
        %4055 = vmatmul.mubr.bf16.gmra.mrb[0].mxu0 %v1158
        %v4056 = vpop.f32.mrb[0].mxu0
        %v4057 = vadd.f32 %v4016, %v4056
        %v4058 = vpop.f32.mrb[0].mxu0
        %v4059 = vadd.f32 %v4018, %v4058
        %v4060 = vpop.f32.mrb[0].mxu0
        %v4061 = vpop.f32.mrb[0].mxu0
        %4062 = vdwg.mxu0
        %4063 = vmatprep.subr.bf16.mxu0 %v3745
        %4064 = vmatpush1.bf16.msra.mxu0 %v3744
        %4065 = vmatprep.subr.bf16.mxu0 %v3747
        %4066 = vmatpush1.bf16.msra.mxu0 %v3746
        %4067 = vmatprep.subr.bf16.mxu0 %v3749
        %4068 = vmatpush1.bf16.msra.mxu0 %v3748
        %4069 = vmatprep.subr.bf16.mxu0 %v3751
        %4070 = vmatpush1.bf16.msra.mxu0 %v3750
        %4071 = vmatprep.subr.bf16.mxu0 %v3753
        %4072 = vmatpush1.bf16.msra.mxu0 %v3752
        %4073 = vmatprep.subr.bf16.mxu0 %v3755
        %4074 = vmatpush1.bf16.msra.mxu0 %v3754
        %4075 = vmatprep.subr.bf16.mxu0 %v3757
        %4076 = vmatpush1.bf16.msra.mxu0 %v3756
        %4077 = vmatprep.subr.bf16.mxu0 %v3759
        %4078 = vmatpush1.bf16.msra.mxu0 %v3758
        %4079 = vmatprep.subr.bf16.mxu0 %v3761
        %4080 = vmatpush1.bf16.msra.mxu0 %v3760
        %4081 = vmatprep.subr.bf16.mxu0 %v3763
        %4082 = vmatpush1.bf16.msra.mxu0 %v3762
        %4083 = vmatprep.subr.bf16.mxu0 %v3765
        %4084 = vmatpush1.bf16.msra.mxu0 %v3764
        %4085 = vmatprep.subr.bf16.mxu0 %v3767
        %4086 = vmatpush1.bf16.msra.mxu0 %v3766
        %4087 = vmatprep.subr.bf16.mxu0 %v3769
        %4088 = vmatpush1.bf16.msra.mxu0 %v3768
        %4089 = vmatprep.subr.bf16.mxu0 %v3771
        %4090 = vmatpush1.bf16.msra.mxu0 %v3770
        %4091 = vmatprep.subr.bf16.mxu0 %v3773
        %4092 = vmatpush1.bf16.msra.mxu0 %v3772
        %4093 = vmatprep.subr.bf16.mxu0 %v3775
        %4094 = vmatpush1.bf16.msra.mxu0 %v3774
        %4095 = vmatprep.mubr.bf16.mxu0 %v1161
        %4096 = vmatmul.mubr.bf16.gmra.mrb[0].mxu0 %v1160
        %v4097 = vpop.f32.mrb[0].mxu0
        %v4098 = vadd.f32 %v4057, %v4097
        %v4099 = vpop.f32.mrb[0].mxu0
        %v4100 = vadd.f32 %v4059, %v4099
        %v4101 = vpop.f32.mrb[0].mxu0
        %v4102 = vpop.f32.mrb[0].mxu0
        %4103 = vdwg.mxu0
        %v4104 = vld [vmem:[#allocation12] sm:$0xff]
        %v4106 = vlaneseq
        %v4107 = vshrl.u32 %v4106, 7
        %v4108 = vsub.s32 0, %v4107
        %v4109 = vrot.slane %v4104, %v4108
        %v4110 = vlaneseq
        %v4111 = vshrl.u32 %v4110, 7
        %v4112 = vsub.s32 1, %v4111
        %v4113 = vrot.slane %v4104, %v4112
        %v4114 = vlaneseq
        %v4115 = vshrl.u32 %v4114, 7
        %v4116 = vsub.s32 2, %v4115
        %v4117 = vrot.slane %v4104, %v4116
        %v4118 = vlaneseq
        %v4119 = vshrl.u32 %v4118, 7
        %v4120 = vsub.s32 3, %v4119
        %v4121 = vrot.slane %v4104, %v4120
        %v4122 = vlaneseq
        %v4123 = vshrl.u32 %v4122, 7
        %v4124 = vsub.s32 4, %v4123
        %v4125 = vrot.slane %v4104, %v4124
        %v4126 = vlaneseq
        %v4127 = vshrl.u32 %v4126, 7
        %v4128 = vsub.s32 5, %v4127
        %v4129 = vrot.slane %v4104, %v4128
        %v4130 = vlaneseq
        %v4131 = vshrl.u32 %v4130, 7
        %v4132 = vsub.s32 6, %v4131
        %v4133 = vrot.slane %v4104, %v4132
        %v4134 = vlaneseq
        %v4135 = vshrl.u32 %v4134, 7
        %v4136 = vsub.s32 7, %v4135
        %v4137 = vrot.slane %v4104, %v4136
        %v4146 = vmul.f32 %v1935, %v4109
        %v4147 = vmul.f32 %v1937, %v4113
        %v4148 = vmul.f32 %v2656, %v4117
        %v4149 = vmul.f32 %v2658, %v4121
        %v4150 = vmul.f32 %v3377, %v4125
        %v4151 = vmul.f32 %v3379, %v4129
        %v4152 = vmul.f32 %v4098, %v4133
        %v4153 = vmul.f32 %v4100, %v4137
        %v4154 = vld [vmem:[#allocation13] sm:$0xff]
        %v4156 = vlaneseq
        %v4157 = vshrl.u32 %v4156, 7
        %v4158 = vsub.s32 0, %v4157
        %v4159 = vrot.slane %v4154, %v4158
        %v4160 = vlaneseq
        %v4161 = vshrl.u32 %v4160, 7
        %v4162 = vsub.s32 1, %v4161
        %v4163 = vrot.slane %v4154, %v4162
        %v4164 = vlaneseq
        %v4165 = vshrl.u32 %v4164, 7
        %v4166 = vsub.s32 2, %v4165
        %v4167 = vrot.slane %v4154, %v4166
        %v4168 = vlaneseq
        %v4169 = vshrl.u32 %v4168, 7
        %v4170 = vsub.s32 3, %v4169
        %v4171 = vrot.slane %v4154, %v4170
        %v4172 = vlaneseq
        %v4173 = vshrl.u32 %v4172, 7
        %v4174 = vsub.s32 4, %v4173
        %v4175 = vrot.slane %v4154, %v4174
        %v4176 = vlaneseq
        %v4177 = vshrl.u32 %v4176, 7
        %v4178 = vsub.s32 5, %v4177
        %v4179 = vrot.slane %v4154, %v4178
        %v4180 = vlaneseq
        %v4181 = vshrl.u32 %v4180, 7
        %v4182 = vsub.s32 6, %v4181
        %v4183 = vrot.slane %v4154, %v4182
        %v4184 = vlaneseq
        %v4185 = vshrl.u32 %v4184, 7
        %v4186 = vsub.s32 7, %v4185
        %v4187 = vrot.slane %v4154, %v4186
        %v4196 = vadd.f32 %v4146, %v4159
        %v4197 = vadd.f32 %v4147, %v4163
        %v4198 = vadd.f32 %v4148, %v4167
        %v4199 = vadd.f32 %v4149, %v4171
        %v4200 = vadd.f32 %v4150, %v4175
        %v4201 = vadd.f32 %v4151, %v4179
        %v4202 = vadd.f32 %v4152, %v4183
        %v4203 = vadd.f32 %v4153, %v4187
        %v4204 = vmax.f32 %v4196, 0.0
        %v4205 = vmax.f32 %v4197, 0.0
        %v4206 = vmax.f32 %v4198, 0.0
        %v4207 = vmax.f32 %v4199, 0.0
        %v4208 = vmax.f32 %v4200, 0.0
        %v4209 = vmax.f32 %v4201, 0.0
        %v4210 = vmax.f32 %v4202, 0.0
        %v4211 = vmax.f32 %v4203, 0.0
        // Predicated region
        $region161: #{tpu_custom_call.1} parent=71 // pred_check
          %p4212 = pneg %p617
        $region162: #{tpu_custom_call.1} parent=71 // pred_check_branch
          %4214 = sbr.rel (%p4212) target = $region164
        $region163: #{tpu_custom_call.1} parent=71 // pred_region
          %s4215 = scalar_lea.sflag [#allocation6], 4
          %s4216 = smul.u32 2, 128
          %s4217 = smul.u32 %s4216, 4
          %s4218 = sshll.u32 %s4217, 4
          %4219 = dma.done %s4215, %s4218
        $region164: #{tpu_custom_call.1} parent=71 // pred_fallthru
          _
        %v4220 = vld [vmem:[#allocation3] sm:$0xff]
        %v4221 = vld [vmem:[#allocation3 + $0x8] sm:$0xff]
        %v4222 = vld [vmem:[#allocation3 + $0x10] sm:$0xff]
        %v4223 = vld [vmem:[#allocation3 + $0x18] sm:$0xff]
        %v4224 = vld [vmem:[#allocation3 + $0x20] sm:$0xff]
        %v4225 = vld [vmem:[#allocation3 + $0x28] sm:$0xff]
        %v4226 = vld [vmem:[#allocation3 + $0x30] sm:$0xff]
        %v4227 = vld [vmem:[#allocation3 + $0x38] sm:$0xff]
        %v4228 = vld [vmem:[#allocation3 + $0x40] sm:$0xff]
        %v4229 = vld [vmem:[#allocation3 + $0x48] sm:$0xff]
        %v4230 = vld [vmem:[#allocation3 + $0x50] sm:$0xff]
        %v4231 = vld [vmem:[#allocation3 + $0x58] sm:$0xff]
        %v4232 = vld [vmem:[#allocation3 + $0x60] sm:$0xff]
        %v4233 = vld [vmem:[#allocation3 + $0x68] sm:$0xff]
        %v4234 = vld [vmem:[#allocation3 + $0x70] sm:$0xff]
        %v4235 = vld [vmem:[#allocation3 + $0x78] sm:$0xff]
        %v4236 = vld [vmem:[#allocation3 + $0x80] sm:$0xff]
        %v4237 = vld [vmem:[#allocation3 + $0x88] sm:$0xff]
        %v4238 = vld [vmem:[#allocation3 + $0x90] sm:$0xff]
        %v4239 = vld [vmem:[#allocation3 + $0x98] sm:$0xff]
        %v4240 = vld [vmem:[#allocation3 + $0xa0] sm:$0xff]
        %v4241 = vld [vmem:[#allocation3 + $0xa8] sm:$0xff]
        %v4242 = vld [vmem:[#allocation3 + $0xb0] sm:$0xff]
        %v4243 = vld [vmem:[#allocation3 + $0xb8] sm:$0xff]
        %v4244 = vld [vmem:[#allocation3 + $0xc0] sm:$0xff]
        %v4245 = vld [vmem:[#allocation3 + $0xc8] sm:$0xff]
        %v4246 = vld [vmem:[#allocation3 + $0xd0] sm:$0xff]
        %v4247 = vld [vmem:[#allocation3 + $0xd8] sm:$0xff]
        %v4248 = vld [vmem:[#allocation3 + $0xe0] sm:$0xff]
        %v4249 = vld [vmem:[#allocation3 + $0xe8] sm:$0xff]
        %v4250 = vld [vmem:[#allocation3 + $0xf0] sm:$0xff]
        %v4251 = vld [vmem:[#allocation3 + $0xf8] sm:$0xff]
        %v4252 = vld [vmem:[#allocation3 + $0x100] sm:$0xff]
        %v4253 = vld [vmem:[#allocation3 + $0x108] sm:$0xff]
        %v4254 = vld [vmem:[#allocation3 + $0x110] sm:$0xff]
        %v4255 = vld [vmem:[#allocation3 + $0x118] sm:$0xff]
        %v4256 = vld [vmem:[#allocation3 + $0x120] sm:$0xff]
        %v4257 = vld [vmem:[#allocation3 + $0x128] sm:$0xff]
        %v4258 = vld [vmem:[#allocation3 + $0x130] sm:$0xff]
        %v4259 = vld [vmem:[#allocation3 + $0x138] sm:$0xff]
        %v4260 = vld [vmem:[#allocation3 + $0x140] sm:$0xff]
        %v4261 = vld [vmem:[#allocation3 + $0x148] sm:$0xff]
        %v4262 = vld [vmem:[#allocation3 + $0x150] sm:$0xff]
        %v4263 = vld [vmem:[#allocation3 + $0x158] sm:$0xff]
        %v4264 = vld [vmem:[#allocation3 + $0x160] sm:$0xff]
        %v4265 = vld [vmem:[#allocation3 + $0x168] sm:$0xff]
        %v4266 = vld [vmem:[#allocation3 + $0x170] sm:$0xff]
        %v4267 = vld [vmem:[#allocation3 + $0x178] sm:$0xff]
        %v4268 = vld [vmem:[#allocation3 + $0x180] sm:$0xff]
        %v4269 = vld [vmem:[#allocation3 + $0x188] sm:$0xff]
        %v4270 = vld [vmem:[#allocation3 + $0x190] sm:$0xff]
        %v4271 = vld [vmem:[#allocation3 + $0x198] sm:$0xff]
        %v4272 = vld [vmem:[#allocation3 + $0x1a0] sm:$0xff]
        %v4273 = vld [vmem:[#allocation3 + $0x1a8] sm:$0xff]
        %v4274 = vld [vmem:[#allocation3 + $0x1b0] sm:$0xff]
        %v4275 = vld [vmem:[#allocation3 + $0x1b8] sm:$0xff]
        %v4276 = vld [vmem:[#allocation3 + $0x1c0] sm:$0xff]
        %v4277 = vld [vmem:[#allocation3 + $0x1c8] sm:$0xff]
        %v4278 = vld [vmem:[#allocation3 + $0x1d0] sm:$0xff]
        %v4279 = vld [vmem:[#allocation3 + $0x1d8] sm:$0xff]
        %v4280 = vld [vmem:[#allocation3 + $0x1e0] sm:$0xff]
        %v4281 = vld [vmem:[#allocation3 + $0x1e8] sm:$0xff]
        %v4282 = vld [vmem:[#allocation3 + $0x1f0] sm:$0xff]
        %v4283 = vld [vmem:[#allocation3 + $0x1f8] sm:$0xff]
        %v4284 = vld [vmem:[#allocation3 + $0x200] sm:$0xff]
        %v4285 = vld [vmem:[#allocation3 + $0x208] sm:$0xff]
        %v4286 = vld [vmem:[#allocation3 + $0x210] sm:$0xff]
        %v4287 = vld [vmem:[#allocation3 + $0x218] sm:$0xff]
        %v4288 = vld [vmem:[#allocation3 + $0x220] sm:$0xff]
        %v4289 = vld [vmem:[#allocation3 + $0x228] sm:$0xff]
        %v4290 = vld [vmem:[#allocation3 + $0x230] sm:$0xff]
        %v4291 = vld [vmem:[#allocation3 + $0x238] sm:$0xff]
        %v4292 = vld [vmem:[#allocation3 + $0x240] sm:$0xff]
        %v4293 = vld [vmem:[#allocation3 + $0x248] sm:$0xff]
        %v4294 = vld [vmem:[#allocation3 + $0x250] sm:$0xff]
        %v4295 = vld [vmem:[#allocation3 + $0x258] sm:$0xff]
        %v4296 = vld [vmem:[#allocation3 + $0x260] sm:$0xff]
        %v4297 = vld [vmem:[#allocation3 + $0x268] sm:$0xff]
        %v4298 = vld [vmem:[#allocation3 + $0x270] sm:$0xff]
        %v4299 = vld [vmem:[#allocation3 + $0x278] sm:$0xff]
        %v4300 = vld [vmem:[#allocation3 + $0x280] sm:$0xff]
        %v4301 = vld [vmem:[#allocation3 + $0x288] sm:$0xff]
        %v4302 = vld [vmem:[#allocation3 + $0x290] sm:$0xff]
        %v4303 = vld [vmem:[#allocation3 + $0x298] sm:$0xff]
        %v4304 = vld [vmem:[#allocation3 + $0x2a0] sm:$0xff]
        %v4305 = vld [vmem:[#allocation3 + $0x2a8] sm:$0xff]
        %v4306 = vld [vmem:[#allocation3 + $0x2b0] sm:$0xff]
        %v4307 = vld [vmem:[#allocation3 + $0x2b8] sm:$0xff]
        %v4308 = vld [vmem:[#allocation3 + $0x2c0] sm:$0xff]
        %v4309 = vld [vmem:[#allocation3 + $0x2c8] sm:$0xff]
        %v4310 = vld [vmem:[#allocation3 + $0x2d0] sm:$0xff]
        %v4311 = vld [vmem:[#allocation3 + $0x2d8] sm:$0xff]
        %v4312 = vld [vmem:[#allocation3 + $0x2e0] sm:$0xff]
        %v4313 = vld [vmem:[#allocation3 + $0x2e8] sm:$0xff]
        %v4314 = vld [vmem:[#allocation3 + $0x2f0] sm:$0xff]
        %v4315 = vld [vmem:[#allocation3 + $0x2f8] sm:$0xff]
        %v4316 = vld [vmem:[#allocation3 + $0x300] sm:$0xff]
        %v4317 = vld [vmem:[#allocation3 + $0x308] sm:$0xff]
        %v4318 = vld [vmem:[#allocation3 + $0x310] sm:$0xff]
        %v4319 = vld [vmem:[#allocation3 + $0x318] sm:$0xff]
        %v4320 = vld [vmem:[#allocation3 + $0x320] sm:$0xff]
        %v4321 = vld [vmem:[#allocation3 + $0x328] sm:$0xff]
        %v4322 = vld [vmem:[#allocation3 + $0x330] sm:$0xff]
        %v4323 = vld [vmem:[#allocation3 + $0x338] sm:$0xff]
        %v4324 = vld [vmem:[#allocation3 + $0x340] sm:$0xff]
        %v4325 = vld [vmem:[#allocation3 + $0x348] sm:$0xff]
        %v4326 = vld [vmem:[#allocation3 + $0x350] sm:$0xff]
        %v4327 = vld [vmem:[#allocation3 + $0x358] sm:$0xff]
        %v4328 = vld [vmem:[#allocation3 + $0x360] sm:$0xff]
        %v4329 = vld [vmem:[#allocation3 + $0x368] sm:$0xff]
        %v4330 = vld [vmem:[#allocation3 + $0x370] sm:$0xff]
        %v4331 = vld [vmem:[#allocation3 + $0x378] sm:$0xff]
        %v4332 = vld [vmem:[#allocation3 + $0x380] sm:$0xff]
        %v4333 = vld [vmem:[#allocation3 + $0x388] sm:$0xff]
        %v4334 = vld [vmem:[#allocation3 + $0x390] sm:$0xff]
        %v4335 = vld [vmem:[#allocation3 + $0x398] sm:$0xff]
        %v4336 = vld [vmem:[#allocation3 + $0x3a0] sm:$0xff]
        %v4337 = vld [vmem:[#allocation3 + $0x3a8] sm:$0xff]
        %v4338 = vld [vmem:[#allocation3 + $0x3b0] sm:$0xff]
        %v4339 = vld [vmem:[#allocation3 + $0x3b8] sm:$0xff]
        %v4340 = vld [vmem:[#allocation3 + $0x3c0] sm:$0xff]
        %v4341 = vld [vmem:[#allocation3 + $0x3c8] sm:$0xff]
        %v4342 = vld [vmem:[#allocation3 + $0x3d0] sm:$0xff]
        %v4343 = vld [vmem:[#allocation3 + $0x3d8] sm:$0xff]
        %v4344 = vld [vmem:[#allocation3 + $0x3e0] sm:$0xff]
        %v4345 = vld [vmem:[#allocation3 + $0x3e8] sm:$0xff]
        %v4346 = vld [vmem:[#allocation3 + $0x3f0] sm:$0xff]
        %v4347 = vld [vmem:[#allocation3 + $0x3f8] sm:$0xff]
        %v4348 = vunpack.c.l.s8.bf16 %v4220
        %v4349 = vunpack.c.l.s8.bf16 %v4221
        %v4350 = vunpack.c.l.s8.bf16 %v4222
        %v4351 = vunpack.c.l.s8.bf16 %v4223
        %v4352 = vunpack.c.h.s8.bf16 %v4220
        %v4353 = vunpack.c.h.s8.bf16 %v4221
        %v4354 = vunpack.c.h.s8.bf16 %v4222
        %v4355 = vunpack.c.h.s8.bf16 %v4223
        %v4356 = vunpack.c.l.s8.bf16 %v4224
        %v4357 = vunpack.c.l.s8.bf16 %v4225
        %v4358 = vunpack.c.l.s8.bf16 %v4226
        %v4359 = vunpack.c.l.s8.bf16 %v4227
        %v4360 = vunpack.c.h.s8.bf16 %v4224
        %v4361 = vunpack.c.h.s8.bf16 %v4225
        %v4362 = vunpack.c.h.s8.bf16 %v4226
        %v4363 = vunpack.c.h.s8.bf16 %v4227
        %v4364 = vunpack.c.l.s8.bf16 %v4228
        %v4365 = vunpack.c.l.s8.bf16 %v4229
        %v4366 = vunpack.c.l.s8.bf16 %v4230
        %v4367 = vunpack.c.l.s8.bf16 %v4231
        %v4368 = vunpack.c.h.s8.bf16 %v4228
        %v4369 = vunpack.c.h.s8.bf16 %v4229
        %v4370 = vunpack.c.h.s8.bf16 %v4230
        %v4371 = vunpack.c.h.s8.bf16 %v4231
        %v4372 = vunpack.c.l.s8.bf16 %v4232
        %v4373 = vunpack.c.l.s8.bf16 %v4233
        %v4374 = vunpack.c.l.s8.bf16 %v4234
        %v4375 = vunpack.c.l.s8.bf16 %v4235
        %v4376 = vunpack.c.h.s8.bf16 %v4232
        %v4377 = vunpack.c.h.s8.bf16 %v4233
        %v4378 = vunpack.c.h.s8.bf16 %v4234
        %v4379 = vunpack.c.h.s8.bf16 %v4235
        %v4380 = vunpack.c.l.s8.bf16 %v4236
        %v4381 = vunpack.c.l.s8.bf16 %v4237
        %v4382 = vunpack.c.l.s8.bf16 %v4238
        %v4383 = vunpack.c.l.s8.bf16 %v4239
        %v4384 = vunpack.c.h.s8.bf16 %v4236
        %v4385 = vunpack.c.h.s8.bf16 %v4237
        %v4386 = vunpack.c.h.s8.bf16 %v4238
        %v4387 = vunpack.c.h.s8.bf16 %v4239
        %v4388 = vunpack.c.l.s8.bf16 %v4240
        %v4389 = vunpack.c.l.s8.bf16 %v4241
        %v4390 = vunpack.c.l.s8.bf16 %v4242
        %v4391 = vunpack.c.l.s8.bf16 %v4243
        %v4392 = vunpack.c.h.s8.bf16 %v4240
        %v4393 = vunpack.c.h.s8.bf16 %v4241
        %v4394 = vunpack.c.h.s8.bf16 %v4242
        %v4395 = vunpack.c.h.s8.bf16 %v4243
        %v4396 = vunpack.c.l.s8.bf16 %v4244
        %v4397 = vunpack.c.l.s8.bf16 %v4245
        %v4398 = vunpack.c.l.s8.bf16 %v4246
        %v4399 = vunpack.c.l.s8.bf16 %v4247
        %v4400 = vunpack.c.h.s8.bf16 %v4244
        %v4401 = vunpack.c.h.s8.bf16 %v4245
        %v4402 = vunpack.c.h.s8.bf16 %v4246
        %v4403 = vunpack.c.h.s8.bf16 %v4247
        %v4404 = vunpack.c.l.s8.bf16 %v4248
        %v4405 = vunpack.c.l.s8.bf16 %v4249
        %v4406 = vunpack.c.l.s8.bf16 %v4250
        %v4407 = vunpack.c.l.s8.bf16 %v4251
        %v4408 = vunpack.c.h.s8.bf16 %v4248
        %v4409 = vunpack.c.h.s8.bf16 %v4249
        %v4410 = vunpack.c.h.s8.bf16 %v4250
        %v4411 = vunpack.c.h.s8.bf16 %v4251
        %v4412 = vunpack.c.l.s8.bf16 %v4252
        %v4413 = vunpack.c.l.s8.bf16 %v4253
        %v4414 = vunpack.c.l.s8.bf16 %v4254
        %v4415 = vunpack.c.l.s8.bf16 %v4255
        %v4416 = vunpack.c.h.s8.bf16 %v4252
        %v4417 = vunpack.c.h.s8.bf16 %v4253
        %v4418 = vunpack.c.h.s8.bf16 %v4254
        %v4419 = vunpack.c.h.s8.bf16 %v4255
        %v4420 = vunpack.c.l.s8.bf16 %v4256
        %v4421 = vunpack.c.l.s8.bf16 %v4257
        %v4422 = vunpack.c.l.s8.bf16 %v4258
        %v4423 = vunpack.c.l.s8.bf16 %v4259
        %v4424 = vunpack.c.h.s8.bf16 %v4256
        %v4425 = vunpack.c.h.s8.bf16 %v4257
        %v4426 = vunpack.c.h.s8.bf16 %v4258
        %v4427 = vunpack.c.h.s8.bf16 %v4259
        %v4428 = vunpack.c.l.s8.bf16 %v4260
        %v4429 = vunpack.c.l.s8.bf16 %v4261
        %v4430 = vunpack.c.l.s8.bf16 %v4262
        %v4431 = vunpack.c.l.s8.bf16 %v4263
        %v4432 = vunpack.c.h.s8.bf16 %v4260
        %v4433 = vunpack.c.h.s8.bf16 %v4261
        %v4434 = vunpack.c.h.s8.bf16 %v4262
        %v4435 = vunpack.c.h.s8.bf16 %v4263
        %v4436 = vunpack.c.l.s8.bf16 %v4264
        %v4437 = vunpack.c.l.s8.bf16 %v4265
        %v4438 = vunpack.c.l.s8.bf16 %v4266
        %v4439 = vunpack.c.l.s8.bf16 %v4267
        %v4440 = vunpack.c.h.s8.bf16 %v4264
        %v4441 = vunpack.c.h.s8.bf16 %v4265
        %v4442 = vunpack.c.h.s8.bf16 %v4266
        %v4443 = vunpack.c.h.s8.bf16 %v4267
        %v4444 = vunpack.c.l.s8.bf16 %v4268
        %v4445 = vunpack.c.l.s8.bf16 %v4269
        %v4446 = vunpack.c.l.s8.bf16 %v4270
        %v4447 = vunpack.c.l.s8.bf16 %v4271
        %v4448 = vunpack.c.h.s8.bf16 %v4268
        %v4449 = vunpack.c.h.s8.bf16 %v4269
        %v4450 = vunpack.c.h.s8.bf16 %v4270
        %v4451 = vunpack.c.h.s8.bf16 %v4271
        %v4452 = vunpack.c.l.s8.bf16 %v4272
        %v4453 = vunpack.c.l.s8.bf16 %v4273
        %v4454 = vunpack.c.l.s8.bf16 %v4274
        %v4455 = vunpack.c.l.s8.bf16 %v4275
        %v4456 = vunpack.c.h.s8.bf16 %v4272
        %v4457 = vunpack.c.h.s8.bf16 %v4273
        %v4458 = vunpack.c.h.s8.bf16 %v4274
        %v4459 = vunpack.c.h.s8.bf16 %v4275
        %v4460 = vunpack.c.l.s8.bf16 %v4276
        %v4461 = vunpack.c.l.s8.bf16 %v4277
        %v4462 = vunpack.c.l.s8.bf16 %v4278
        %v4463 = vunpack.c.l.s8.bf16 %v4279
        %v4464 = vunpack.c.h.s8.bf16 %v4276
        %v4465 = vunpack.c.h.s8.bf16 %v4277
        %v4466 = vunpack.c.h.s8.bf16 %v4278
        %v4467 = vunpack.c.h.s8.bf16 %v4279
        %v4468 = vunpack.c.l.s8.bf16 %v4280
        %v4469 = vunpack.c.l.s8.bf16 %v4281
        %v4470 = vunpack.c.l.s8.bf16 %v4282
        %v4471 = vunpack.c.l.s8.bf16 %v4283
        %v4472 = vunpack.c.h.s8.bf16 %v4280
        %v4473 = vunpack.c.h.s8.bf16 %v4281
        %v4474 = vunpack.c.h.s8.bf16 %v4282
        %v4475 = vunpack.c.h.s8.bf16 %v4283
        %v4476 = vunpack.c.l.s8.bf16 %v4284
        %v4477 = vunpack.c.l.s8.bf16 %v4285
        %v4478 = vunpack.c.l.s8.bf16 %v4286
        %v4479 = vunpack.c.l.s8.bf16 %v4287
        %v4480 = vunpack.c.h.s8.bf16 %v4284
        %v4481 = vunpack.c.h.s8.bf16 %v4285
        %v4482 = vunpack.c.h.s8.bf16 %v4286
        %v4483 = vunpack.c.h.s8.bf16 %v4287
        %v4484 = vunpack.c.l.s8.bf16 %v4288
        %v4485 = vunpack.c.l.s8.bf16 %v4289
        %v4486 = vunpack.c.l.s8.bf16 %v4290
        %v4487 = vunpack.c.l.s8.bf16 %v4291
        %v4488 = vunpack.c.h.s8.bf16 %v4288
        %v4489 = vunpack.c.h.s8.bf16 %v4289
        %v4490 = vunpack.c.h.s8.bf16 %v4290
        %v4491 = vunpack.c.h.s8.bf16 %v4291
        %v4492 = vunpack.c.l.s8.bf16 %v4292
        %v4493 = vunpack.c.l.s8.bf16 %v4293
        %v4494 = vunpack.c.l.s8.bf16 %v4294
        %v4495 = vunpack.c.l.s8.bf16 %v4295
        %v4496 = vunpack.c.h.s8.bf16 %v4292
        %v4497 = vunpack.c.h.s8.bf16 %v4293
        %v4498 = vunpack.c.h.s8.bf16 %v4294
        %v4499 = vunpack.c.h.s8.bf16 %v4295
        %v4500 = vunpack.c.l.s8.bf16 %v4296
        %v4501 = vunpack.c.l.s8.bf16 %v4297
        %v4502 = vunpack.c.l.s8.bf16 %v4298
        %v4503 = vunpack.c.l.s8.bf16 %v4299
        %v4504 = vunpack.c.h.s8.bf16 %v4296
        %v4505 = vunpack.c.h.s8.bf16 %v4297
        %v4506 = vunpack.c.h.s8.bf16 %v4298
        %v4507 = vunpack.c.h.s8.bf16 %v4299
        %v4508 = vunpack.c.l.s8.bf16 %v4300
        %v4509 = vunpack.c.l.s8.bf16 %v4301
        %v4510 = vunpack.c.l.s8.bf16 %v4302
        %v4511 = vunpack.c.l.s8.bf16 %v4303
        %v4512 = vunpack.c.h.s8.bf16 %v4300
        %v4513 = vunpack.c.h.s8.bf16 %v4301
        %v4514 = vunpack.c.h.s8.bf16 %v4302
        %v4515 = vunpack.c.h.s8.bf16 %v4303
        %v4516 = vunpack.c.l.s8.bf16 %v4304
        %v4517 = vunpack.c.l.s8.bf16 %v4305
        %v4518 = vunpack.c.l.s8.bf16 %v4306
        %v4519 = vunpack.c.l.s8.bf16 %v4307
        %v4520 = vunpack.c.h.s8.bf16 %v4304
        %v4521 = vunpack.c.h.s8.bf16 %v4305
        %v4522 = vunpack.c.h.s8.bf16 %v4306
        %v4523 = vunpack.c.h.s8.bf16 %v4307
        %v4524 = vunpack.c.l.s8.bf16 %v4308
        %v4525 = vunpack.c.l.s8.bf16 %v4309
        %v4526 = vunpack.c.l.s8.bf16 %v4310
        %v4527 = vunpack.c.l.s8.bf16 %v4311
        %v4528 = vunpack.c.h.s8.bf16 %v4308
        %v4529 = vunpack.c.h.s8.bf16 %v4309
        %v4530 = vunpack.c.h.s8.bf16 %v4310
        %v4531 = vunpack.c.h.s8.bf16 %v4311
        %v4532 = vunpack.c.l.s8.bf16 %v4312
        %v4533 = vunpack.c.l.s8.bf16 %v4313
        %v4534 = vunpack.c.l.s8.bf16 %v4314
        %v4535 = vunpack.c.l.s8.bf16 %v4315
        %v4536 = vunpack.c.h.s8.bf16 %v4312
        %v4537 = vunpack.c.h.s8.bf16 %v4313
        %v4538 = vunpack.c.h.s8.bf16 %v4314
        %v4539 = vunpack.c.h.s8.bf16 %v4315
        %v4540 = vunpack.c.l.s8.bf16 %v4316
        %v4541 = vunpack.c.l.s8.bf16 %v4317
        %v4542 = vunpack.c.l.s8.bf16 %v4318
        %v4543 = vunpack.c.l.s8.bf16 %v4319
        %v4544 = vunpack.c.h.s8.bf16 %v4316
        %v4545 = vunpack.c.h.s8.bf16 %v4317
        %v4546 = vunpack.c.h.s8.bf16 %v4318
        %v4547 = vunpack.c.h.s8.bf16 %v4319
        %v4548 = vunpack.c.l.s8.bf16 %v4320
        %v4549 = vunpack.c.l.s8.bf16 %v4321
        %v4550 = vunpack.c.l.s8.bf16 %v4322
        %v4551 = vunpack.c.l.s8.bf16 %v4323
        %v4552 = vunpack.c.h.s8.bf16 %v4320
        %v4553 = vunpack.c.h.s8.bf16 %v4321
        %v4554 = vunpack.c.h.s8.bf16 %v4322
        %v4555 = vunpack.c.h.s8.bf16 %v4323
        %v4556 = vunpack.c.l.s8.bf16 %v4324
        %v4557 = vunpack.c.l.s8.bf16 %v4325
        %v4558 = vunpack.c.l.s8.bf16 %v4326
        %v4559 = vunpack.c.l.s8.bf16 %v4327
        %v4560 = vunpack.c.h.s8.bf16 %v4324
        %v4561 = vunpack.c.h.s8.bf16 %v4325
        %v4562 = vunpack.c.h.s8.bf16 %v4326
        %v4563 = vunpack.c.h.s8.bf16 %v4327
        %v4564 = vunpack.c.l.s8.bf16 %v4328
        %v4565 = vunpack.c.l.s8.bf16 %v4329
        %v4566 = vunpack.c.l.s8.bf16 %v4330
        %v4567 = vunpack.c.l.s8.bf16 %v4331
        %v4568 = vunpack.c.h.s8.bf16 %v4328
        %v4569 = vunpack.c.h.s8.bf16 %v4329
        %v4570 = vunpack.c.h.s8.bf16 %v4330
        %v4571 = vunpack.c.h.s8.bf16 %v4331
        %v4572 = vunpack.c.l.s8.bf16 %v4332
        %v4573 = vunpack.c.l.s8.bf16 %v4333
        %v4574 = vunpack.c.l.s8.bf16 %v4334
        %v4575 = vunpack.c.l.s8.bf16 %v4335
        %v4576 = vunpack.c.h.s8.bf16 %v4332
        %v4577 = vunpack.c.h.s8.bf16 %v4333
        %v4578 = vunpack.c.h.s8.bf16 %v4334
        %v4579 = vunpack.c.h.s8.bf16 %v4335
        %v4580 = vunpack.c.l.s8.bf16 %v4336
        %v4581 = vunpack.c.l.s8.bf16 %v4337
        %v4582 = vunpack.c.l.s8.bf16 %v4338
        %v4583 = vunpack.c.l.s8.bf16 %v4339
        %v4584 = vunpack.c.h.s8.bf16 %v4336
        %v4585 = vunpack.c.h.s8.bf16 %v4337
        %v4586 = vunpack.c.h.s8.bf16 %v4338
        %v4587 = vunpack.c.h.s8.bf16 %v4339
        %v4588 = vunpack.c.l.s8.bf16 %v4340
        %v4589 = vunpack.c.l.s8.bf16 %v4341
        %v4590 = vunpack.c.l.s8.bf16 %v4342
        %v4591 = vunpack.c.l.s8.bf16 %v4343
        %v4592 = vunpack.c.h.s8.bf16 %v4340
        %v4593 = vunpack.c.h.s8.bf16 %v4341
        %v4594 = vunpack.c.h.s8.bf16 %v4342
        %v4595 = vunpack.c.h.s8.bf16 %v4343
        %v4596 = vunpack.c.l.s8.bf16 %v4344
        %v4597 = vunpack.c.l.s8.bf16 %v4345
        %v4598 = vunpack.c.l.s8.bf16 %v4346
        %v4599 = vunpack.c.l.s8.bf16 %v4347
        %v4600 = vunpack.c.h.s8.bf16 %v4344
        %v4601 = vunpack.c.h.s8.bf16 %v4345
        %v4602 = vunpack.c.h.s8.bf16 %v4346
        %v4603 = vunpack.c.h.s8.bf16 %v4347
        %v4604 = vpack.c.bf16 %v4204, %v4204
        %v4605 = vpack.c.bf16 %v4205, %v4205
        %v4606 = vpack.c.bf16 %v4206, %v4206
        %v4607 = vpack.c.bf16 %v4207, %v4207
        %v4608 = vpack.c.bf16 %v4208, %v4208
        %v4609 = vpack.c.bf16 %v4209, %v4209
        %v4610 = vpack.c.bf16 %v4210, %v4210
        %v4611 = vpack.c.bf16 %v4211, %v4211
        %4612 = vmatprep.subr.bf16.mxu0 %v4349
        %4613 = vmatpush1.bf16.msra.mxu0 %v4348
        %4614 = vmatprep.subr.bf16.mxu0 %v4353
        %4615 = vmatpush1.bf16.msra.mxu0 %v4352
        %4616 = vmatprep.subr.bf16.mxu0 %v4357
        %4617 = vmatpush1.bf16.msra.mxu0 %v4356
        %4618 = vmatprep.subr.bf16.mxu0 %v4361
        %4619 = vmatpush1.bf16.msra.mxu0 %v4360
        %4620 = vmatprep.subr.bf16.mxu0 %v4365
        %4621 = vmatpush1.bf16.msra.mxu0 %v4364
        %4622 = vmatprep.subr.bf16.mxu0 %v4369
        %4623 = vmatpush1.bf16.msra.mxu0 %v4368
        %4624 = vmatprep.subr.bf16.mxu0 %v4373
        %4625 = vmatpush1.bf16.msra.mxu0 %v4372
        %4626 = vmatprep.subr.bf16.mxu0 %v4377
        %4627 = vmatpush1.bf16.msra.mxu0 %v4376
        %4628 = vmatprep.subr.bf16.mxu0 %v4381
        %4629 = vmatpush1.bf16.msra.mxu0 %v4380
        %4630 = vmatprep.subr.bf16.mxu0 %v4385
        %4631 = vmatpush1.bf16.msra.mxu0 %v4384
        %4632 = vmatprep.subr.bf16.mxu0 %v4389
        %4633 = vmatpush1.bf16.msra.mxu0 %v4388
        %4634 = vmatprep.subr.bf16.mxu0 %v4393
        %4635 = vmatpush1.bf16.msra.mxu0 %v4392
        %4636 = vmatprep.subr.bf16.mxu0 %v4397
        %4637 = vmatpush1.bf16.msra.mxu0 %v4396
        %4638 = vmatprep.subr.bf16.mxu0 %v4401
        %4639 = vmatpush1.bf16.msra.mxu0 %v4400
        %4640 = vmatprep.subr.bf16.mxu0 %v4405
        %4641 = vmatpush1.bf16.msra.mxu0 %v4404
        %4642 = vmatprep.subr.bf16.mxu0 %v4409
        %4643 = vmatpush1.bf16.msra.mxu0 %v4408
        %4644 = vmatprep.mubr.bf16.mxu0 %v4605
        %4645 = vmatmul.mubr.bf16.gmra.mrb[0].mxu0 %v4604
        %v4646 = vpop.f32.mrb[0].mxu0
        %v4647 = vadd.f32 0.0, %v4646
        %v4648 = vpop.f32.mrb[0].mxu0
        %v4649 = vadd.f32 0.0, %v4648
        %v4650 = vpop.f32.mrb[0].mxu0
        %v4651 = vpop.f32.mrb[0].mxu0
        %4652 = vdwg.mxu0
        %4653 = vmatprep.subr.bf16.mxu0 %v4413
        %4654 = vmatpush1.bf16.msra.mxu0 %v4412
        %4655 = vmatprep.subr.bf16.mxu0 %v4417
        %4656 = vmatpush1.bf16.msra.mxu0 %v4416
        %4657 = vmatprep.subr.bf16.mxu0 %v4421
        %4658 = vmatpush1.bf16.msra.mxu0 %v4420
        %4659 = vmatprep.subr.bf16.mxu0 %v4425
        %4660 = vmatpush1.bf16.msra.mxu0 %v4424
        %4661 = vmatprep.subr.bf16.mxu0 %v4429
        %4662 = vmatpush1.bf16.msra.mxu0 %v4428
        %4663 = vmatprep.subr.bf16.mxu0 %v4433
        %4664 = vmatpush1.bf16.msra.mxu0 %v4432
        %4665 = vmatprep.subr.bf16.mxu0 %v4437
        %4666 = vmatpush1.bf16.msra.mxu0 %v4436
        %4667 = vmatprep.subr.bf16.mxu0 %v4441
        %4668 = vmatpush1.bf16.msra.mxu0 %v4440
        %4669 = vmatprep.subr.bf16.mxu0 %v4445
        %4670 = vmatpush1.bf16.msra.mxu0 %v4444
        %4671 = vmatprep.subr.bf16.mxu0 %v4449
        %4672 = vmatpush1.bf16.msra.mxu0 %v4448
        %4673 = vmatprep.subr.bf16.mxu0 %v4453
        %4674 = vmatpush1.bf16.msra.mxu0 %v4452
        %4675 = vmatprep.subr.bf16.mxu0 %v4457
        %4676 = vmatpush1.bf16.msra.mxu0 %v4456
        %4677 = vmatprep.subr.bf16.mxu0 %v4461
        %4678 = vmatpush1.bf16.msra.mxu0 %v4460
        %4679 = vmatprep.subr.bf16.mxu0 %v4465
        %4680 = vmatpush1.bf16.msra.mxu0 %v4464
        %4681 = vmatprep.subr.bf16.mxu0 %v4469
        %4682 = vmatpush1.bf16.msra.mxu0 %v4468
        %4683 = vmatprep.subr.bf16.mxu0 %v4473
        %4684 = vmatpush1.bf16.msra.mxu0 %v4472
        %4685 = vmatprep.mubr.bf16.mxu0 %v4607
        %4686 = vmatmul.mubr.bf16.gmra.mrb[0].mxu0 %v4606
        %v4687 = vpop.f32.mrb[0].mxu0
        %v4688 = vadd.f32 %v4647, %v4687
        %v4689 = vpop.f32.mrb[0].mxu0
        %v4690 = vadd.f32 %v4649, %v4689
        %v4691 = vpop.f32.mrb[0].mxu0
        %v4692 = vpop.f32.mrb[0].mxu0
        %4693 = vdwg.mxu0
        %4694 = vmatprep.subr.bf16.mxu0 %v4477
        %4695 = vmatpush1.bf16.msra.mxu0 %v4476
        %4696 = vmatprep.subr.bf16.mxu0 %v4481
        %4697 = vmatpush1.bf16.msra.mxu0 %v4480
        %4698 = vmatprep.subr.bf16.mxu0 %v4485
        %4699 = vmatpush1.bf16.msra.mxu0 %v4484
        %4700 = vmatprep.subr.bf16.mxu0 %v4489
        %4701 = vmatpush1.bf16.msra.mxu0 %v4488
        %4702 = vmatprep.subr.bf16.mxu0 %v4493
        %4703 = vmatpush1.bf16.msra.mxu0 %v4492
        %4704 = vmatprep.subr.bf16.mxu0 %v4497
        %4705 = vmatpush1.bf16.msra.mxu0 %v4496
        %4706 = vmatprep.subr.bf16.mxu0 %v4501
        %4707 = vmatpush1.bf16.msra.mxu0 %v4500
        %4708 = vmatprep.subr.bf16.mxu0 %v4505
        %4709 = vmatpush1.bf16.msra.mxu0 %v4504
        %4710 = vmatprep.subr.bf16.mxu0 %v4509
        %4711 = vmatpush1.bf16.msra.mxu0 %v4508
        %4712 = vmatprep.subr.bf16.mxu0 %v4513
        %4713 = vmatpush1.bf16.msra.mxu0 %v4512
        %4714 = vmatprep.subr.bf16.mxu0 %v4517
        %4715 = vmatpush1.bf16.msra.mxu0 %v4516
        %4716 = vmatprep.subr.bf16.mxu0 %v4521
        %4717 = vmatpush1.bf16.msra.mxu0 %v4520
        %4718 = vmatprep.subr.bf16.mxu0 %v4525
        %4719 = vmatpush1.bf16.msra.mxu0 %v4524
        %4720 = vmatprep.subr.bf16.mxu0 %v4529
        %4721 = vmatpush1.bf16.msra.mxu0 %v4528
        %4722 = vmatprep.subr.bf16.mxu0 %v4533
        %4723 = vmatpush1.bf16.msra.mxu0 %v4532
        %4724 = vmatprep.subr.bf16.mxu0 %v4537
        %4725 = vmatpush1.bf16.msra.mxu0 %v4536
        %4726 = vmatprep.mubr.bf16.mxu0 %v4609
        %4727 = vmatmul.mubr.bf16.gmra.mrb[0].mxu0 %v4608
        %v4728 = vpop.f32.mrb[0].mxu0
        %v4729 = vadd.f32 %v4688, %v4728
        %v4730 = vpop.f32.mrb[0].mxu0
        %v4731 = vadd.f32 %v4690, %v4730
        %v4732 = vpop.f32.mrb[0].mxu0
        %v4733 = vpop.f32.mrb[0].mxu0
        %4734 = vdwg.mxu0
        %4735 = vmatprep.subr.bf16.mxu0 %v4541
        %4736 = vmatpush1.bf16.msra.mxu0 %v4540
        %4737 = vmatprep.subr.bf16.mxu0 %v4545
        %4738 = vmatpush1.bf16.msra.mxu0 %v4544
        %4739 = vmatprep.subr.bf16.mxu0 %v4549
        %4740 = vmatpush1.bf16.msra.mxu0 %v4548
        %4741 = vmatprep.subr.bf16.mxu0 %v4553
        %4742 = vmatpush1.bf16.msra.mxu0 %v4552
        %4743 = vmatprep.subr.bf16.mxu0 %v4557
        %4744 = vmatpush1.bf16.msra.mxu0 %v4556
        %4745 = vmatprep.subr.bf16.mxu0 %v4561
        %4746 = vmatpush1.bf16.msra.mxu0 %v4560
        %4747 = vmatprep.subr.bf16.mxu0 %v4565
        %4748 = vmatpush1.bf16.msra.mxu0 %v4564
        %4749 = vmatprep.subr.bf16.mxu0 %v4569
        %4750 = vmatpush1.bf16.msra.mxu0 %v4568
        %4751 = vmatprep.subr.bf16.mxu0 %v4573
        %4752 = vmatpush1.bf16.msra.mxu0 %v4572
        %4753 = vmatprep.subr.bf16.mxu0 %v4577
        %4754 = vmatpush1.bf16.msra.mxu0 %v4576
        %4755 = vmatprep.subr.bf16.mxu0 %v4581
        %4756 = vmatpush1.bf16.msra.mxu0 %v4580
        %4757 = vmatprep.subr.bf16.mxu0 %v4585
        %4758 = vmatpush1.bf16.msra.mxu0 %v4584
        %4759 = vmatprep.subr.bf16.mxu0 %v4589
        %4760 = vmatpush1.bf16.msra.mxu0 %v4588
        %4761 = vmatprep.subr.bf16.mxu0 %v4593
        %4762 = vmatpush1.bf16.msra.mxu0 %v4592
        %4763 = vmatprep.subr.bf16.mxu0 %v4597
        %4764 = vmatpush1.bf16.msra.mxu0 %v4596
        %4765 = vmatprep.subr.bf16.mxu0 %v4601
        %4766 = vmatpush1.bf16.msra.mxu0 %v4600
        %4767 = vmatprep.mubr.bf16.mxu0 %v4611
        %4768 = vmatmul.mubr.bf16.gmra.mrb[0].mxu0 %v4610
        %v4769 = vpop.f32.mrb[0].mxu0
        %v4770 = vadd.f32 %v4729, %v4769
        %v4771 = vpop.f32.mrb[0].mxu0
        %v4772 = vadd.f32 %v4731, %v4771
        %v4773 = vpop.f32.mrb[0].mxu0
        %v4774 = vpop.f32.mrb[0].mxu0
        %4775 = vdwg.mxu0
        %4776 = vmatprep.subr.bf16.mxu0 %v4351
        %4777 = vmatpush1.bf16.msra.mxu0 %v4350
        %4778 = vmatprep.subr.bf16.mxu0 %v4355
        %4779 = vmatpush1.bf16.msra.mxu0 %v4354
        %4780 = vmatprep.subr.bf16.mxu0 %v4359
        %4781 = vmatpush1.bf16.msra.mxu0 %v4358
        %4782 = vmatprep.subr.bf16.mxu0 %v4363
        %4783 = vmatpush1.bf16.msra.mxu0 %v4362
        %4784 = vmatprep.subr.bf16.mxu0 %v4367
        %4785 = vmatpush1.bf16.msra.mxu0 %v4366
        %4786 = vmatprep.subr.bf16.mxu0 %v4371
        %4787 = vmatpush1.bf16.msra.mxu0 %v4370
        %4788 = vmatprep.subr.bf16.mxu0 %v4375
        %4789 = vmatpush1.bf16.msra.mxu0 %v4374
        %4790 = vmatprep.subr.bf16.mxu0 %v4379
        %4791 = vmatpush1.bf16.msra.mxu0 %v4378
        %4792 = vmatprep.subr.bf16.mxu0 %v4383
        %4793 = vmatpush1.bf16.msra.mxu0 %v4382
        %4794 = vmatprep.subr.bf16.mxu0 %v4387
        %4795 = vmatpush1.bf16.msra.mxu0 %v4386
        %4796 = vmatprep.subr.bf16.mxu0 %v4391
        %4797 = vmatpush1.bf16.msra.mxu0 %v4390
        %4798 = vmatprep.subr.bf16.mxu0 %v4395
        %4799 = vmatpush1.bf16.msra.mxu0 %v4394
        %4800 = vmatprep.subr.bf16.mxu0 %v4399
        %4801 = vmatpush1.bf16.msra.mxu0 %v4398
        %4802 = vmatprep.subr.bf16.mxu0 %v4403
        %4803 = vmatpush1.bf16.msra.mxu0 %v4402
        %4804 = vmatprep.subr.bf16.mxu0 %v4407
        %4805 = vmatpush1.bf16.msra.mxu0 %v4406
        %4806 = vmatprep.subr.bf16.mxu0 %v4411
        %4807 = vmatpush1.bf16.msra.mxu0 %v4410
        %4808 = vmatprep.mubr.bf16.mxu0 %v4605
        %4809 = vmatmul.mubr.bf16.gmra.mrb[0].mxu0 %v4604
        %v4810 = vpop.f32.mrb[0].mxu0
        %v4811 = vadd.f32 0.0, %v4810
        %v4812 = vpop.f32.mrb[0].mxu0
        %v4813 = vadd.f32 0.0, %v4812
        %v4814 = vpop.f32.mrb[0].mxu0
        %v4815 = vpop.f32.mrb[0].mxu0
        %4816 = vdwg.mxu0
        %4817 = vmatprep.subr.bf16.mxu0 %v4415
        %4818 = vmatpush1.bf16.msra.mxu0 %v4414
        %4819 = vmatprep.subr.bf16.mxu0 %v4419
        %4820 = vmatpush1.bf16.msra.mxu0 %v4418
        %4821 = vmatprep.subr.bf16.mxu0 %v4423
        %4822 = vmatpush1.bf16.msra.mxu0 %v4422
        %4823 = vmatprep.subr.bf16.mxu0 %v4427
        %4824 = vmatpush1.bf16.msra.mxu0 %v4426
        %4825 = vmatprep.subr.bf16.mxu0 %v4431
        %4826 = vmatpush1.bf16.msra.mxu0 %v4430
        %4827 = vmatprep.subr.bf16.mxu0 %v4435
        %4828 = vmatpush1.bf16.msra.mxu0 %v4434
        %4829 = vmatprep.subr.bf16.mxu0 %v4439
        %4830 = vmatpush1.bf16.msra.mxu0 %v4438
        %4831 = vmatprep.subr.bf16.mxu0 %v4443
        %4832 = vmatpush1.bf16.msra.mxu0 %v4442
        %4833 = vmatprep.subr.bf16.mxu0 %v4447
        %4834 = vmatpush1.bf16.msra.mxu0 %v4446
        %4835 = vmatprep.subr.bf16.mxu0 %v4451
        %4836 = vmatpush1.bf16.msra.mxu0 %v4450
        %4837 = vmatprep.subr.bf16.mxu0 %v4455
        %4838 = vmatpush1.bf16.msra.mxu0 %v4454
        %4839 = vmatprep.subr.bf16.mxu0 %v4459
        %4840 = vmatpush1.bf16.msra.mxu0 %v4458
        %4841 = vmatprep.subr.bf16.mxu0 %v4463
        %4842 = vmatpush1.bf16.msra.mxu0 %v4462
        %4843 = vmatprep.subr.bf16.mxu0 %v4467
        %4844 = vmatpush1.bf16.msra.mxu0 %v4466
        %4845 = vmatprep.subr.bf16.mxu0 %v4471
        %4846 = vmatpush1.bf16.msra.mxu0 %v4470
        %4847 = vmatprep.subr.bf16.mxu0 %v4475
        %4848 = vmatpush1.bf16.msra.mxu0 %v4474
        %4849 = vmatprep.mubr.bf16.mxu0 %v4607
        %4850 = vmatmul.mubr.bf16.gmra.mrb[0].mxu0 %v4606
        %v4851 = vpop.f32.mrb[0].mxu0
        %v4852 = vadd.f32 %v4811, %v4851
        %v4853 = vpop.f32.mrb[0].mxu0
        %v4854 = vadd.f32 %v4813, %v4853
        %v4855 = vpop.f32.mrb[0].mxu0
        %v4856 = vpop.f32.mrb[0].mxu0
        %4857 = vdwg.mxu0
        %4858 = vmatprep.subr.bf16.mxu0 %v4479
        %4859 = vmatpush1.bf16.msra.mxu0 %v4478
        %4860 = vmatprep.subr.bf16.mxu0 %v4483
        %4861 = vmatpush1.bf16.msra.mxu0 %v4482
        %4862 = vmatprep.subr.bf16.mxu0 %v4487
        %4863 = vmatpush1.bf16.msra.mxu0 %v4486
        %4864 = vmatprep.subr.bf16.mxu0 %v4491
        %4865 = vmatpush1.bf16.msra.mxu0 %v4490
        %4866 = vmatprep.subr.bf16.mxu0 %v4495
        %4867 = vmatpush1.bf16.msra.mxu0 %v4494
        %4868 = vmatprep.subr.bf16.mxu0 %v4499
        %4869 = vmatpush1.bf16.msra.mxu0 %v4498
        %4870 = vmatprep.subr.bf16.mxu0 %v4503
        %4871 = vmatpush1.bf16.msra.mxu0 %v4502
        %4872 = vmatprep.subr.bf16.mxu0 %v4507
        %4873 = vmatpush1.bf16.msra.mxu0 %v4506
        %4874 = vmatprep.subr.bf16.mxu0 %v4511
        %4875 = vmatpush1.bf16.msra.mxu0 %v4510
        %4876 = vmatprep.subr.bf16.mxu0 %v4515
        %4877 = vmatpush1.bf16.msra.mxu0 %v4514
        %4878 = vmatprep.subr.bf16.mxu0 %v4519
        %4879 = vmatpush1.bf16.msra.mxu0 %v4518
        %4880 = vmatprep.subr.bf16.mxu0 %v4523
        %4881 = vmatpush1.bf16.msra.mxu0 %v4522
        %4882 = vmatprep.subr.bf16.mxu0 %v4527
        %4883 = vmatpush1.bf16.msra.mxu0 %v4526
        %4884 = vmatprep.subr.bf16.mxu0 %v4531
        %4885 = vmatpush1.bf16.msra.mxu0 %v4530
        %4886 = vmatprep.subr.bf16.mxu0 %v4535
        %4887 = vmatpush1.bf16.msra.mxu0 %v4534
        %4888 = vmatprep.subr.bf16.mxu0 %v4539
        %4889 = vmatpush1.bf16.msra.mxu0 %v4538
        %4890 = vmatprep.mubr.bf16.mxu0 %v4609
        %4891 = vmatmul.mubr.bf16.gmra.mrb[0].mxu0 %v4608
        %v4892 = vpop.f32.mrb[0].mxu0
        %v4893 = vadd.f32 %v4852, %v4892
        %v4894 = vpop.f32.mrb[0].mxu0
        %v4895 = vadd.f32 %v4854, %v4894
        %v4896 = vpop.f32.mrb[0].mxu0
        %v4897 = vpop.f32.mrb[0].mxu0
        %4898 = vdwg.mxu0
        %4899 = vmatprep.subr.bf16.mxu0 %v4543
        %4900 = vmatpush1.bf16.msra.mxu0 %v4542
        %4901 = vmatprep.subr.bf16.mxu0 %v4547
        %4902 = vmatpush1.bf16.msra.mxu0 %v4546
        %4903 = vmatprep.subr.bf16.mxu0 %v4551
        %4904 = vmatpush1.bf16.msra.mxu0 %v4550
        %4905 = vmatprep.subr.bf16.mxu0 %v4555
        %4906 = vmatpush1.bf16.msra.mxu0 %v4554
        %4907 = vmatprep.subr.bf16.mxu0 %v4559
        %4908 = vmatpush1.bf16.msra.mxu0 %v4558
        %4909 = vmatprep.subr.bf16.mxu0 %v4563
        %4910 = vmatpush1.bf16.msra.mxu0 %v4562
        %4911 = vmatprep.subr.bf16.mxu0 %v4567
        %4912 = vmatpush1.bf16.msra.mxu0 %v4566
        %4913 = vmatprep.subr.bf16.mxu0 %v4571
        %4914 = vmatpush1.bf16.msra.mxu0 %v4570
        %4915 = vmatprep.subr.bf16.mxu0 %v4575
        %4916 = vmatpush1.bf16.msra.mxu0 %v4574
        %4917 = vmatprep.subr.bf16.mxu0 %v4579
        %4918 = vmatpush1.bf16.msra.mxu0 %v4578
        %4919 = vmatprep.subr.bf16.mxu0 %v4583
        %4920 = vmatpush1.bf16.msra.mxu0 %v4582
        %4921 = vmatprep.subr.bf16.mxu0 %v4587
        %4922 = vmatpush1.bf16.msra.mxu0 %v4586
        %4923 = vmatprep.subr.bf16.mxu0 %v4591
        %4924 = vmatpush1.bf16.msra.mxu0 %v4590
        %4925 = vmatprep.subr.bf16.mxu0 %v4595
        %4926 = vmatpush1.bf16.msra.mxu0 %v4594
        %4927 = vmatprep.subr.bf16.mxu0 %v4599
        %4928 = vmatpush1.bf16.msra.mxu0 %v4598
        %4929 = vmatprep.subr.bf16.mxu0 %v4603
        %4930 = vmatpush1.bf16.msra.mxu0 %v4602
        %4931 = vmatprep.mubr.bf16.mxu0 %v4611
        %4932 = vmatmul.mubr.bf16.gmra.mrb[0].mxu0 %v4610
        %v4933 = vpop.f32.mrb[0].mxu0
        %v4934 = vadd.f32 %v4893, %v4933
        %v4935 = vpop.f32.mrb[0].mxu0
        %v4936 = vadd.f32 %v4895, %v4935
        %v4937 = vpop.f32.mrb[0].mxu0
        %v4938 = vpop.f32.mrb[0].mxu0
        %4939 = vdwg.mxu0
        %v4940 = vld [vmem:[#allocation15] sm:$0xf]
        %v4942 = vlaneseq
        %v4943 = vshrl.u32 %v4942, 7
        %v4944 = vsub.s32 0, %v4943
        %v4945 = vrot.slane %v4940, %v4944
        %v4946 = vlaneseq
        %v4947 = vshrl.u32 %v4946, 7
        %v4948 = vsub.s32 1, %v4947
        %v4949 = vrot.slane %v4940, %v4948
        %v4950 = vlaneseq
        %v4951 = vshrl.u32 %v4950, 7
        %v4952 = vsub.s32 2, %v4951
        %v4953 = vrot.slane %v4940, %v4952
        %v4954 = vlaneseq
        %v4955 = vshrl.u32 %v4954, 7
        %v4956 = vsub.s32 3, %v4955
        %v4957 = vrot.slane %v4940, %v4956
        %v4962 = vmul.f32 %v4770, %v4945
        %v4963 = vmul.f32 %v4772, %v4949
        %v4964 = vmul.f32 %v4934, %v4953
        %v4965 = vmul.f32 %v4936, %v4957
        %v4966 = vld [vmem:[#allocation16] sm:$0xf]
        %v4968 = vlaneseq
        %v4969 = vshrl.u32 %v4968, 7
        %v4970 = vsub.s32 0, %v4969
        %v4971 = vrot.slane %v4966, %v4970
        %v4972 = vlaneseq
        %v4973 = vshrl.u32 %v4972, 7
        %v4974 = vsub.s32 1, %v4973
        %v4975 = vrot.slane %v4966, %v4974
        %v4976 = vlaneseq
        %v4977 = vshrl.u32 %v4976, 7
        %v4978 = vsub.s32 2, %v4977
        %v4979 = vrot.slane %v4966, %v4978
        %v4980 = vlaneseq
        %v4981 = vshrl.u32 %v4980, 7
        %v4982 = vsub.s32 3, %v4981
        %v4983 = vrot.slane %v4966, %v4982
        %v4988 = vadd.f32 %v4962, %v4971
        %v4989 = vadd.f32 %v4963, %v4975
        %v4990 = vadd.f32 %v4964, %v4979
        %v4991 = vadd.f32 %v4965, %v4983
        %v4992 = vmax.f32 %v4988, 0.0
        %v4993 = vmax.f32 %v4989, 0.0
        %v4994 = vmax.f32 %v4990, 0.0
        %v4995 = vmax.f32 %v4991, 0.0
        // Predicated region
        $region165: #{tpu_custom_call.1} parent=71 // pred_check
          %p4996 = pneg %p617
        $region166: #{tpu_custom_call.1} parent=71 // pred_check_branch
          %4998 = sbr.rel (%p4996) target = $region168
        $region167: #{tpu_custom_call.1} parent=71 // pred_region
          %s4999 = scalar_lea.sflag [#allocation6], 5
          %s5000 = smul.u32 4, 64
          %s5001 = smul.u32 %s5000, 2
          %s5002 = sshll.u32 %s5001, 4
          %5003 = dma.done %s4999, %s5002
        $region168: #{tpu_custom_call.1} parent=71 // pred_fallthru
          _
        %v5004 = vpack.c.bf16 %v4992, %v4992
        %v5005 = vpack.c.bf16 %v4993, %v4993
        %v5006 = vpack.c.bf16 %v4994, %v4994
        %v5007 = vpack.c.bf16 %v4995, %v4995
        %v5008 = vld [vmem:[#allocation4] sm:$0xff]
        %v5009 = vld [vmem:[#allocation4 + $0x8] sm:$0xff]
        %v5010 = vld [vmem:[#allocation4 + $0x10] sm:$0xff]
        %v5011 = vld [vmem:[#allocation4 + $0x18] sm:$0xff]
        %v5012 = vld [vmem:[#allocation4 + $0x20] sm:$0xff]
        %v5013 = vld [vmem:[#allocation4 + $0x28] sm:$0xff]
        %v5014 = vld [vmem:[#allocation4 + $0x30] sm:$0xff]
        %v5015 = vld [vmem:[#allocation4 + $0x38] sm:$0xff]
        %v5016 = vld [vmem:[#allocation4 + $0x40] sm:$0xff]
        %v5017 = vld [vmem:[#allocation4 + $0x48] sm:$0xff]
        %v5018 = vld [vmem:[#allocation4 + $0x50] sm:$0xff]
        %v5019 = vld [vmem:[#allocation4 + $0x58] sm:$0xff]
        %v5020 = vld [vmem:[#allocation4 + $0x60] sm:$0xff]
        %v5021 = vld [vmem:[#allocation4 + $0x68] sm:$0xff]
        %v5022 = vld [vmem:[#allocation4 + $0x70] sm:$0xff]
        %v5023 = vld [vmem:[#allocation4 + $0x78] sm:$0xff]
        %v5024 = vld [vmem:[#allocation4 + $0x80] sm:$0xff]
        %v5025 = vld [vmem:[#allocation4 + $0x88] sm:$0xff]
        %v5026 = vld [vmem:[#allocation4 + $0x90] sm:$0xff]
        %v5027 = vld [vmem:[#allocation4 + $0x98] sm:$0xff]
        %v5028 = vld [vmem:[#allocation4 + $0xa0] sm:$0xff]
        %v5029 = vld [vmem:[#allocation4 + $0xa8] sm:$0xff]
        %v5030 = vld [vmem:[#allocation4 + $0xb0] sm:$0xff]
        %v5031 = vld [vmem:[#allocation4 + $0xb8] sm:$0xff]
        %v5032 = vld [vmem:[#allocation4 + $0xc0] sm:$0xff]
        %v5033 = vld [vmem:[#allocation4 + $0xc8] sm:$0xff]
        %v5034 = vld [vmem:[#allocation4 + $0xd0] sm:$0xff]
        %v5035 = vld [vmem:[#allocation4 + $0xd8] sm:$0xff]
        %v5036 = vld [vmem:[#allocation4 + $0xe0] sm:$0xff]
        %v5037 = vld [vmem:[#allocation4 + $0xe8] sm:$0xff]
        %v5038 = vld [vmem:[#allocation4 + $0xf0] sm:$0xff]
        %v5039 = vld [vmem:[#allocation4 + $0xf8] sm:$0xff]
        %v5040 = vld [vmem:[#allocation4 + $0x100] sm:$0xff]
        %v5041 = vld [vmem:[#allocation4 + $0x108] sm:$0xff]
        %v5042 = vld [vmem:[#allocation4 + $0x110] sm:$0xff]
        %v5043 = vld [vmem:[#allocation4 + $0x118] sm:$0xff]
        %v5044 = vld [vmem:[#allocation4 + $0x120] sm:$0xff]
        %v5045 = vld [vmem:[#allocation4 + $0x128] sm:$0xff]
        %v5046 = vld [vmem:[#allocation4 + $0x130] sm:$0xff]
        %v5047 = vld [vmem:[#allocation4 + $0x138] sm:$0xff]
        %v5048 = vld [vmem:[#allocation4 + $0x140] sm:$0xff]
        %v5049 = vld [vmem:[#allocation4 + $0x148] sm:$0xff]
        %v5050 = vld [vmem:[#allocation4 + $0x150] sm:$0xff]
        %v5051 = vld [vmem:[#allocation4 + $0x158] sm:$0xff]
        %v5052 = vld [vmem:[#allocation4 + $0x160] sm:$0xff]
        %v5053 = vld [vmem:[#allocation4 + $0x168] sm:$0xff]
        %v5054 = vld [vmem:[#allocation4 + $0x170] sm:$0xff]
        %v5055 = vld [vmem:[#allocation4 + $0x178] sm:$0xff]
        %v5056 = vld [vmem:[#allocation4 + $0x180] sm:$0xff]
        %v5057 = vld [vmem:[#allocation4 + $0x188] sm:$0xff]
        %v5058 = vld [vmem:[#allocation4 + $0x190] sm:$0xff]
        %v5059 = vld [vmem:[#allocation4 + $0x198] sm:$0xff]
        %v5060 = vld [vmem:[#allocation4 + $0x1a0] sm:$0xff]
        %v5061 = vld [vmem:[#allocation4 + $0x1a8] sm:$0xff]
        %v5062 = vld [vmem:[#allocation4 + $0x1b0] sm:$0xff]
        %v5063 = vld [vmem:[#allocation4 + $0x1b8] sm:$0xff]
        %v5064 = vld [vmem:[#allocation4 + $0x1c0] sm:$0xff]
        %v5065 = vld [vmem:[#allocation4 + $0x1c8] sm:$0xff]
        %v5066 = vld [vmem:[#allocation4 + $0x1d0] sm:$0xff]
        %v5067 = vld [vmem:[#allocation4 + $0x1d8] sm:$0xff]
        %v5068 = vld [vmem:[#allocation4 + $0x1e0] sm:$0xff]
        %v5069 = vld [vmem:[#allocation4 + $0x1e8] sm:$0xff]
        %v5070 = vld [vmem:[#allocation4 + $0x1f0] sm:$0xff]
        %v5071 = vld [vmem:[#allocation4 + $0x1f8] sm:$0xff]
        %v5072 = vld [vmem:[#allocation18] sm:$0x3]
        %v5074 = vlaneseq
        %v5075 = vshrl.u32 %v5074, 7
        %v5076 = vsub.s32 0, %v5075
        %v5077 = vrot.slane %v5072, %v5076
        %v5078 = vlaneseq
        %v5079 = vshrl.u32 %v5078, 7
        %v5080 = vsub.s32 1, %v5079
        %v5081 = vrot.slane %v5072, %v5080
        %5084 = vmatprep.subr.bf16.mxu0 %v5009
        %5085 = vmatpush1.bf16.msra.mxu0 %v5008
        %5086 = vmatprep.subr.bf16.mxu0 %v5011
        %5087 = vmatpush1.bf16.msra.mxu0 %v5010
        %5088 = vmatprep.subr.bf16.mxu0 %v5013
        %5089 = vmatpush1.bf16.msra.mxu0 %v5012
        %5090 = vmatprep.subr.bf16.mxu0 %v5015
        %5091 = vmatpush1.bf16.msra.mxu0 %v5014
        %5092 = vmatprep.subr.bf16.mxu0 %v5017
        %5093 = vmatpush1.bf16.msra.mxu0 %v5016
        %5094 = vmatprep.subr.bf16.mxu0 %v5019
        %5095 = vmatpush1.bf16.msra.mxu0 %v5018
        %5096 = vmatprep.subr.bf16.mxu0 %v5021
        %5097 = vmatpush1.bf16.msra.mxu0 %v5020
        %5098 = vmatprep.subr.bf16.mxu0 %v5023
        %5099 = vmatpush1.bf16.msra.mxu0 %v5022
        %5100 = vmatprep.subr.bf16.mxu0 %v5025
        %5101 = vmatpush1.bf16.msra.mxu0 %v5024
        %5102 = vmatprep.subr.bf16.mxu0 %v5027
        %5103 = vmatpush1.bf16.msra.mxu0 %v5026
        %5104 = vmatprep.subr.bf16.mxu0 %v5029
        %5105 = vmatpush1.bf16.msra.mxu0 %v5028
        %5106 = vmatprep.subr.bf16.mxu0 %v5031
        %5107 = vmatpush1.bf16.msra.mxu0 %v5030
        %5108 = vmatprep.subr.bf16.mxu0 %v5033
        %5109 = vmatpush1.bf16.msra.mxu0 %v5032
        %5110 = vmatprep.subr.bf16.mxu0 %v5035
        %5111 = vmatpush1.bf16.msra.mxu0 %v5034
        %5112 = vmatprep.subr.bf16.mxu0 %v5037
        %5113 = vmatpush1.bf16.msra.mxu0 %v5036
        %5114 = vmatprep.subr.bf16.mxu0 %v5039
        %5115 = vmatpush1.bf16.msra.mxu0 %v5038
        %5116 = vmatprep.mubr.bf16.mxu0 %v5005
        %5117 = vmatmul.mubr.bf16.gmra.mrb[0].mxu0 %v5004
        %v5118 = vpop.f32.mrb[0].mxu0
        %v5119 = vadd.f32 %v5077, %v5118
        %v5120 = vpop.f32.mrb[0].mxu0
        %v5121 = vadd.f32 %v5081, %v5120
        %v5122 = vpop.f32.mrb[0].mxu0
        %v5123 = vpop.f32.mrb[0].mxu0
        %5124 = vdwg.mxu0
        %5125 = vmatprep.subr.bf16.mxu0 %v5041
        %5126 = vmatpush1.bf16.msra.mxu0 %v5040
        %5127 = vmatprep.subr.bf16.mxu0 %v5043
        %5128 = vmatpush1.bf16.msra.mxu0 %v5042
        %5129 = vmatprep.subr.bf16.mxu0 %v5045
        %5130 = vmatpush1.bf16.msra.mxu0 %v5044
        %5131 = vmatprep.subr.bf16.mxu0 %v5047
        %5132 = vmatpush1.bf16.msra.mxu0 %v5046
        %5133 = vmatprep.subr.bf16.mxu0 %v5049
        %5134 = vmatpush1.bf16.msra.mxu0 %v5048
        %5135 = vmatprep.subr.bf16.mxu0 %v5051
        %5136 = vmatpush1.bf16.msra.mxu0 %v5050
        %5137 = vmatprep.subr.bf16.mxu0 %v5053
        %5138 = vmatpush1.bf16.msra.mxu0 %v5052
        %5139 = vmatprep.subr.bf16.mxu0 %v5055
        %5140 = vmatpush1.bf16.msra.mxu0 %v5054
        %5141 = vmatprep.subr.bf16.mxu0 %v5057
        %5142 = vmatpush1.bf16.msra.mxu0 %v5056
        %5143 = vmatprep.subr.bf16.mxu0 %v5059
        %5144 = vmatpush1.bf16.msra.mxu0 %v5058
        %5145 = vmatprep.subr.bf16.mxu0 %v5061
        %5146 = vmatpush1.bf16.msra.mxu0 %v5060
        %5147 = vmatprep.subr.bf16.mxu0 %v5063
        %5148 = vmatpush1.bf16.msra.mxu0 %v5062
        %5149 = vmatprep.subr.bf16.mxu0 %v5065
        %5150 = vmatpush1.bf16.msra.mxu0 %v5064
        %5151 = vmatprep.subr.bf16.mxu0 %v5067
        %5152 = vmatpush1.bf16.msra.mxu0 %v5066
        %5153 = vmatprep.subr.bf16.mxu0 %v5069
        %5154 = vmatpush1.bf16.msra.mxu0 %v5068
        %5155 = vmatprep.subr.bf16.mxu0 %v5071
        %5156 = vmatpush1.bf16.msra.mxu0 %v5070
        %5157 = vmatprep.mubr.bf16.mxu0 %v5007
        %5158 = vmatmul.mubr.bf16.gmra.mrb[0].mxu0 %v5006
        %v5159 = vpop.f32.mrb[0].mxu0
        %v5160 = vadd.f32 %v5119, %v5159
        %v5161 = vpop.f32.mrb[0].mxu0
        %v5162 = vadd.f32 %v5121, %v5161
        %v5163 = vpop.f32.mrb[0].mxu0
        %v5164 = vpop.f32.mrb[0].mxu0
        %5165 = vdwg.mxu0
        %v5166 = vmax.f32 %v5160, 0.0
        %v5167 = vmax.f32 %v5162, 0.0
        // Predicated region
        $region169: #{tpu_custom_call.1} parent=71 // pred_check
          %p5168 = pneg %p617
        $region170: #{tpu_custom_call.1} parent=71 // pred_check_branch
          %5170 = sbr.rel (%p5168) target = $region172
        $region171: #{tpu_custom_call.1} parent=71 // pred_region
          %s5171 = scalar_lea.sflag [#allocation6], 6
          %s5172 = smul.u32 4, 32
          %s5173 = smul.u32 %s5172, 1
          %s5174 = sshll.u32 %s5173, 4
          %5175 = dma.done %s5171, %s5174
        $region172: #{tpu_custom_call.1} parent=71 // pred_fallthru
          _
        %v5176 = vpack.c.bf16 %v5166, %v5166
        %v5177 = vpack.c.bf16 %v5167, %v5167
        %v5178 = vld [vmem:[#allocation5] sm:$0xff]
        %v5179 = vld [vmem:[#allocation5 + $0x8] sm:$0xff]
        %v5180 = vld [vmem:[#allocation5 + $0x10] sm:$0xff]
        %v5181 = vld [vmem:[#allocation5 + $0x18] sm:$0xff]
        %v5182 = vld [vmem:[#allocation5 + $0x20] sm:$0xff]
        %v5183 = vld [vmem:[#allocation5 + $0x28] sm:$0xff]
        %v5184 = vld [vmem:[#allocation5 + $0x30] sm:$0xff]
        %v5185 = vld [vmem:[#allocation5 + $0x38] sm:$0xff]
        %v5186 = vld [vmem:[#allocation5 + $0x40] sm:$0xff]
        %v5187 = vld [vmem:[#allocation5 + $0x48] sm:$0xff]
        %v5188 = vld [vmem:[#allocation5 + $0x50] sm:$0xff]
        %v5189 = vld [vmem:[#allocation5 + $0x58] sm:$0xff]
        %v5190 = vld [vmem:[#allocation5 + $0x60] sm:$0xff]
        %v5191 = vld [vmem:[#allocation5 + $0x68] sm:$0xff]
        %v5192 = vld [vmem:[#allocation5 + $0x70] sm:$0xff]
        %v5193 = vld [vmem:[#allocation5 + $0x78] sm:$0xff]
        %v5194 = vld [vmem:[#allocation19] sm:$0x1]
        %v5196 = vlaneseq
        %v5197 = vshrl.u32 %v5196, 7
        %v5198 = vsub.s32 0, %v5197
        %v5199 = vrot.slane %v5194, %v5198
        %5201 = vmatprep.subr.bf16.mxu0 0
        %5202 = vmatpush1.bf16.msra.mxu0 %v5178
        %5203 = vmatprep.subr.bf16.mxu0 0
        %5204 = vmatpush1.bf16.msra.mxu0 %v5179
        %5205 = vmatprep.subr.bf16.mxu0 0
        %5206 = vmatpush1.bf16.msra.mxu0 %v5180
        %5207 = vmatprep.subr.bf16.mxu0 0
        %5208 = vmatpush1.bf16.msra.mxu0 %v5181
        %5209 = vmatprep.subr.bf16.mxu0 0
        %5210 = vmatpush1.bf16.msra.mxu0 %v5182
        %5211 = vmatprep.subr.bf16.mxu0 0
        %5212 = vmatpush1.bf16.msra.mxu0 %v5183
        %5213 = vmatprep.subr.bf16.mxu0 0
        %5214 = vmatpush1.bf16.msra.mxu0 %v5184
        %5215 = vmatprep.subr.bf16.mxu0 0
        %5216 = vmatpush1.bf16.msra.mxu0 %v5185
        %5217 = vmatprep.subr.bf16.mxu0 0
        %5218 = vmatpush1.bf16.msra.mxu0 %v5186
        %5219 = vmatprep.subr.bf16.mxu0 0
        %5220 = vmatpush1.bf16.msra.mxu0 %v5187
        %5221 = vmatprep.subr.bf16.mxu0 0
        %5222 = vmatpush1.bf16.msra.mxu0 %v5188
        %5223 = vmatprep.subr.bf16.mxu0 0
        %5224 = vmatpush1.bf16.msra.mxu0 %v5189
        %5225 = vmatprep.subr.bf16.mxu0 0
        %5226 = vmatpush1.bf16.msra.mxu0 %v5190
        %5227 = vmatprep.subr.bf16.mxu0 0
        %5228 = vmatpush1.bf16.msra.mxu0 %v5191
        %5229 = vmatprep.subr.bf16.mxu0 0
        %5230 = vmatpush1.bf16.msra.mxu0 %v5192
        %5231 = vmatprep.subr.bf16.mxu0 0
        %5232 = vmatpush1.bf16.msra.mxu0 %v5193
        %5233 = vmatprep.mubr.bf16.mxu0 %v5177
        %5234 = vmatmul.mubr.bf16.gmra.mrb[0].mxu0 %v5176
        %v5235 = vpop.f32.mrb[0].mxu0
        %v5236 = vadd.f32 %v5199, %v5235
        %v5237 = vpop.f32.mrb[0].mxu0
        %v5238 = vpop.f32.mrb[0].mxu0
        %v5239 = vpop.f32.mrb[0].mxu0
        %5240 = vdwg.mxu0
        %v5241 = vmax.f32 %v5236, 0.0
        %v5242 = vpack.c.bf16 %v5241, %v5241
        %v5243 = vld [vmem:[%s13] sm:$0xf]
        %v5244 = vld [vmem:[%s13 + $0x4] sm:$0xf]
        %v5245 = vld [vmem:[%s13 + $0x8] sm:$0xf]
        %v5246 = vld [vmem:[%s13 + $0xc] sm:$0xf]
        %v5247 = vld [vmem:[%s13 + $0x10] sm:$0xf]
        %v5248 = vld [vmem:[%s13 + $0x14] sm:$0xf]
        %v5249 = vld [vmem:[%s13 + $0x18] sm:$0xf]
        %v5250 = vld [vmem:[%s13 + $0x1c] sm:$0xf]
        %v5251 = vld [vmem:[%s13 + $0x20] sm:$0xf]
        %v5252 = vld [vmem:[%s13 + $0x24] sm:$0xf]
        %v5253 = vld [vmem:[%s13 + $0x28] sm:$0xf]
        %v5254 = vld [vmem:[%s13 + $0x2c] sm:$0xf]
        %v5255 = vld [vmem:[%s13 + $0x30] sm:$0xf]
        %v5256 = vld [vmem:[%s13 + $0x34] sm:$0xf]
        %v5257 = vld [vmem:[%s13 + $0x38] sm:$0xf]
        %v5258 = vld [vmem:[%s13 + $0x3c] sm:$0xf]
        %v5259 = vld [vmem:[#allocation21] sm:$0x1]
        %v5261 = vlaneseq
        %v5262 = vshrl.u32 %v5261, 7
        %v5263 = vsub.s32 0, %v5262
        %v5264 = vrot.slane %v5259, %v5263
        %v5282 = vunpack.c.l.b16 %v5243
        %v5283 = vunpack.c.l.b16 %v5244
        %v5284 = vunpack.c.l.b16 %v5245
        %v5285 = vunpack.c.l.b16 %v5246
        %v5286 = vunpack.c.l.b16 %v5247
        %v5287 = vunpack.c.l.b16 %v5248
        %v5288 = vunpack.c.l.b16 %v5249
        %v5289 = vunpack.c.l.b16 %v5250
        %v5290 = vunpack.c.l.b16 %v5251
        %v5291 = vunpack.c.l.b16 %v5252
        %v5292 = vunpack.c.l.b16 %v5253
        %v5293 = vunpack.c.l.b16 %v5254
        %v5294 = vunpack.c.l.b16 %v5255
        %v5295 = vunpack.c.l.b16 %v5256
        %v5296 = vunpack.c.l.b16 %v5257
        %v5297 = vunpack.c.l.b16 %v5258
        %v5298 = vpack.c.b16 %v5283, %v5282
        %v5299 = vpack.c.b16 %v5285, %v5284
        %v5300 = vpack.c.b16 %v5287, %v5286
        %v5301 = vpack.c.b16 %v5289, %v5288
        %v5302 = vpack.c.b16 %v5291, %v5290
        %v5303 = vpack.c.b16 %v5293, %v5292
        %v5304 = vpack.c.b16 %v5295, %v5294
        %v5305 = vpack.c.b16 %v5297, %v5296
        %5314 = vmatprep.subr.bf16.mxu0 0
        %5315 = vmatpush1.bf16.msra.mxu0 %v5298
        %5316 = vmatprep.subr.bf16.mxu0 0
        %5317 = vmatpush1.bf16.msra.mxu0 %v5299
        %5318 = vmatprep.subr.bf16.mxu0 0
        %5319 = vmatpush1.bf16.msra.mxu0 %v5300
        %5320 = vmatprep.subr.bf16.mxu0 0
        %5321 = vmatpush1.bf16.msra.mxu0 %v5301
        %5322 = vmatprep.subr.bf16.mxu0 0
        %5323 = vmatpush1.bf16.msra.mxu0 %v5302
        %5324 = vmatprep.subr.bf16.mxu0 0
        %5325 = vmatpush1.bf16.msra.mxu0 %v5303
        %5326 = vmatprep.subr.bf16.mxu0 0
        %5327 = vmatpush1.bf16.msra.mxu0 %v5304
        %5328 = vmatprep.subr.bf16.mxu0 0
        %5329 = vmatpush1.bf16.msra.mxu0 %v5305
        %5330 = vmatprep.subr.bf16.mxu0 0
        %5331 = vmatpush1.bf16.msra.mxu0 0
        %5332 = vmatprep.subr.bf16.mxu0 0
        %5333 = vmatpush1.bf16.msra.mxu0 0
        %5334 = vmatprep.subr.bf16.mxu0 0
        %5335 = vmatpush1.bf16.msra.mxu0 0
        %5336 = vmatprep.subr.bf16.mxu0 0
        %5337 = vmatpush1.bf16.msra.mxu0 0
        %5338 = vmatprep.subr.bf16.mxu0 0
        %5339 = vmatpush1.bf16.msra.mxu0 0
        %5340 = vmatprep.subr.bf16.mxu0 0
        %5341 = vmatpush1.bf16.msra.mxu0 0
        %5342 = vmatprep.subr.bf16.mxu0 0
        %5343 = vmatpush1.bf16.msra.mxu0 0
        %5344 = vmatprep.subr.bf16.mxu0 0
        %5345 = vmatpush1.bf16.msra.mxu0 0
        %5346 = vmatprep.mubr.bf16.mxu0 0
        %5347 = vmatmul.mubr.bf16.gmra.mrb[0].mxu0 %v5242
        %v5348 = vpop.f32.mrb[0].mxu0
        %v5349 = vadd.f32 %v5264, %v5348
        %v5350 = vpop.f32.mrb[0].mxu0
        %v5351 = vpop.f32.mrb[0].mxu0
        %v5352 = vpop.f32.mrb[0].mxu0
        %5353 = vdwg.mxu0
        %vm5354 = vcmask 15360
        %5355 = vst.msk [vmem:[%s615] sm:$0xff] %vm5354, %v5349
        %v5356 = vld [vmem:[#allocation22] sm:$0x1]
        %v5357 = vunpack.c.l.bf16 %v5356
        %5359 = vset.pattern.permute.xlu0 0
        %5360 = vperm.xlu0 %5359, %v5349
        %v5361 = vpop.permute.xlu0 %5360
        %v5363 = vlaneseq
        %v5364 = vshrl.u32 %v5363, 7
        %v5365 = vsub.s32 0, %v5364
        %v5366 = vrot.slane %v5357, %v5365
        %v5367 = vmul.f32 %v5361, %v5366
        %5368 = vset.pattern.permute.xlu0 1
        %5369 = vperm.xlu0 %5368, %v5349
        %v5370 = vpop.permute.xlu0 %5369
        %v5372 = vlaneseq
        %v5373 = vshrl.u32 %v5372, 7
        %v5374 = vsub.s32 1, %v5373
        %v5375 = vrot.slane %v5357, %v5374
        %v5376 = vmul.f32 %v5370, %v5375
        %v5377 = vadd.f32 %v5367, %v5376
        %v5378 = vld [vmem:[#allocation24] sm:$0x1]
        %v5380 = vlaneseq
        %v5381 = vshrl.u32 %v5380, 7
        %v5382 = vsub.s32 0, %v5381
        %v5383 = vrot.slane %v5378, %v5382
        %v5385 = vadd.f32 %v5377, %v5383
        %vm5386 = vcmask 203776
        %5387 = vst.msk [vmem:[%s601] sm:$0xff] %vm5386, %v5385
        %s5388 = sand.u32 %s325, 1
        %s5389 = scalar_lea.sflag [#allocation9], %s5388
        %s5390 = sand.u32 %s325, 1
        %s5391 = smul.addr %s5390, 8
        %s5392 = scalar_lea.vmem [#allocation25], %s5391
        %p5393 = scmp.lt.s32.totalorder %s39, 1
        %s5394 = scalar_select %p5393, %s39, 1
        %s5395 = smul.addr %s5394, 8
        %s5396 = scalar_lea.vmem %s18, %s5395
        // Predicated region
        $region173: #{tpu_custom_call.1} parent=71 // pred_check
          %p5397 = pneg %p335
        $region174: #{tpu_custom_call.1} parent=71 // pred_check_branch
          %5399 = sbr.rel (%p5397) target = $region176
        $region175: #{tpu_custom_call.1} parent=71 // pred_region
          %s5401 = ssub.s32 128, 128
          %5402 = vsyncadd %s5389, %s5401
          %s5403 = smul.addr %s39, 128
          %s5404 = scalar_lea.hbm %s17, %s5403
          %s5406 = sshll.u32 %s5392, 4
          %s5407 = int_to_ptr.vmem [resolvable:$true] %s5406
          %5409 = dma.vmem_to_hbm [thread:$0]  %s5407, 128, %s5404, %s5389
        $region176: #{tpu_custom_call.1} parent=71 // pred_fallthru
          _
        // Predicated region
        $region177: #{tpu_custom_call.1} parent=71 // pred_check
          %p5410 = pneg %p361
        $region178: #{tpu_custom_call.1} parent=71 // pred_check_branch
          %5412 = sbr.rel (%p5410) target = $region180
        $region179: #{tpu_custom_call.1} parent=71 // pred_region
          _
        $region180: #{tpu_custom_call.1} parent=71 // pred_fallthru
          _
      $region72: #{tpu_custom_call.1} parent=5 // pred_fallthru
        _
      %p5413 = scmp.le.s32.totalorder 2, %s34
      // Predicated region
      $region181: #{tpu_custom_call.1} parent=5 // pred_check
        %p5414 = pneg %p5413
      $region182: #{tpu_custom_call.1} parent=5 // pred_check_branch
        %5416 = sbr.rel (%p5414) target = $region184
      $region183: #{tpu_custom_call.1} parent=5 // pred_region
        %s5417 = ssub.s32 %s34, 2
        // Predicated region
        $region185: #{tpu_custom_call.1} parent=183 // pred_check
          %p5418 = pneg %p341
        $region186: #{tpu_custom_call.1} parent=183 // pred_check_branch
          %5420 = sbr.rel (%p5418) target = $region188
        $region187: #{tpu_custom_call.1} parent=183 // pred_region
          %s5421 = sand.u32 %s326, 1
          %s5422 = scalar_lea.sflag [#allocation9], %s5421
          %s5423 = sand.u32 %s326, 1
          %s5424 = smul.addr %s5423, 8
          %s5425 = scalar_lea.vmem [#allocation25], %s5424
          %5426 = dma.done %s5422, 128
        $region188: #{tpu_custom_call.1} parent=183 // pred_fallthru
          _
        // Predicated region
        $region189: #{tpu_custom_call.1} parent=183 // pred_check
          %p5427 = pneg %p367
        $region190: #{tpu_custom_call.1} parent=183 // pred_check_branch
          %5429 = sbr.rel (%p5427) target = $region192
        $region191: #{tpu_custom_call.1} parent=183 // pred_region
          %p5430 = scmp.lt.s32.totalorder %s40, 1
          %s5431 = scalar_select %p5430, %s40, 1
          %s5432 = smul.addr %s5431, 8
          %s5433 = scalar_lea.vmem %s18, %s5432
        $region192: #{tpu_custom_call.1} parent=183 // pred_fallthru
          _
      $region184: #{tpu_custom_call.1} parent=5 // pred_fallthru
        _
    $region6: #{tpu_custom_call.1} parent=1 // loop_footer
      %s38 = sadd.s32 1, %s34
    $region7: #{tpu_custom_call.1} parent=1 // loop_footer_branch
      %33 = sbr.rel target = $region3
    $region8: #{tpu_custom_call.1} parent=1 // loop_exit
      _
    %5434 = vsyncpa [#allocation8], 1
    %s5435 = scalar_lea.sflag [#allocation8], 1
    %5436 = vsyncpa %s5435, 1
    %5437 = vsyncpa [#allocation11], 1
    %5438 = vsyncpa [#allocation14], 1
    %5439 = vsyncpa [#allocation17], 1
    %5440 = vsyncpa [#allocation20], 1
    %5441 = vsyncpa [#allocation23], 1
    %5442 = vsyncpa [#allocation9], 1
    %s5443 = scalar_lea.sflag [#allocation9], 1
    %5444 = vsyncpa %s5443, 1
  %5445 = vsyncmov [#allocation6]
  %s5446 = vpop.sfrf %5445
  %p5447 = scmp.eq.s32.totalorder %s5446, 0
  %p5448 = pneg %p5447
  %5450 = shalt.err (%p5448)
  %s5451 = scalar_lea.sflag [#allocation6], 1
  %5452 = vsyncmov %s5451
  %s5453 = vpop.sfrf %5452
  %p5454 = scmp.eq.s32.totalorder %s5453, 0
  %p5455 = pneg %p5454
  %5457 = shalt.err (%p5455)
  %s5458 = scalar_lea.sflag [#allocation6], 2
  %5459 = vsyncmov %s5458
  %s5460 = vpop.sfrf %5459
  %p5461 = scmp.eq.s32.totalorder %s5460, 0
  %p5462 = pneg %p5461
  %5464 = shalt.err (%p5462)
  %s5465 = scalar_lea.sflag [#allocation6], 3
  %5466 = vsyncmov %s5465
  %s5467 = vpop.sfrf %5466
  %p5468 = scmp.eq.s32.totalorder %s5467, 0
  %p5469 = pneg %p5468
  %5471 = shalt.err (%p5469)
  %s5472 = scalar_lea.sflag [#allocation6], 4
  %5473 = vsyncmov %s5472
  %s5474 = vpop.sfrf %5473
  %p5475 = scmp.eq.s32.totalorder %s5474, 0
  %p5476 = pneg %p5475
  %5478 = shalt.err (%p5476)
  %s5479 = scalar_lea.sflag [#allocation6], 5
  %5480 = vsyncmov %s5479
  %s5481 = vpop.sfrf %5480
  %p5482 = scmp.eq.s32.totalorder %s5481, 0
  %p5483 = pneg %p5482
  %5485 = shalt.err (%p5483)
  %s5486 = scalar_lea.sflag [#allocation6], 6
  %5487 = vsyncmov %s5486
  %s5488 = vpop.sfrf %5487
  %p5489 = scmp.eq.s32.totalorder %s5488, 0
  %p5490 = pneg %p5489
  %5492 = shalt.err (%p5490)

</llo_original>
